<compile_context>
chip_gen: v7x
topology: tpu7x:2x2x1
jax: 0.10.0
libtpu: 0.0.40
codegen_flags: <defaults>
</compile_context>

<pallas_src>
import functools

import jax
import jax.numpy as jnp
from jax.experimental import pallas as pl
from jax.experimental.pallas import tpu as pltpu


def _round_up(x, m):
    return (x + m - 1) // m * m


def _fused_basic_block_kernel(
    x_hbm,            # (N*(H+4)*Wp, Cp) bf16 flat padded input, left in HBM
    w1_ref, w2_ref,   # (3, 3, Cp, Cp) bf16
    s1_ref, b1_ref,   # (1, Cp) f32  (bn1 scale / shift, zero-padded lanes)
    s2_ref, b2_ref,   # (1, Cp) f32  (bn2 scale / shift)
    mask_ref,         # (1, M1, 1) f32 validity mask for this strip
    out_ref,          # (1, TH, W, Cp) f32
    xbuf,             # VMEM (2, Mx, Cp) bf16 -- double-buffered input strip
    acc1_ref,         # VMEM (M1, Cp) f32     -- conv1 accumulator
    acc2_ref,         # VMEM (M2, Cp) f32     -- conv2 accumulator
    y1_ref,           # VMEM (M1, Cp) bf16    -- conv1 output (+1-row halo)
    sem,              # DMA semaphores (2,)
    *, TH, W, Wp, Cp, M1, M2, Mx, rows_per_image,
):
    n = pl.program_id(0)
    s = pl.program_id(1)
    n_strips = pl.num_programs(1)
    slot = s % 2

    def start_fetch(strip, slot_):
        start = pl.multiple_of(n * rows_per_image + strip * (TH * Wp), 8)
        pltpu.make_async_copy(
            x_hbm.at[pl.ds(start, Mx)], xbuf.at[slot_], sem.at[slot_]
        ).start()

    # Prime the pipeline at the first strip of every image.  (Safe under
    # megacore: the strip axis is "arbitrary", so a core always runs a full
    # image's strips in order.)
    @pl.when(s == 0)
    def _():
        start_fetch(0, 0)

    # Wait for the current strip.
    pltpu.make_async_copy(
        x_hbm.at[pl.ds(0, Mx)], xbuf.at[slot], sem.at[slot]
    ).wait()

    # Prefetch the next strip of the same image while computing this one.
    @pl.when(s + 1 < n_strips)
    def _():
        start_fetch(s + 1, 1 - slot)

    xcur = xbuf.at[slot]

    # ---- conv1 (3x3) over the (TH+2, W+2) extended region, flat layout ----
    # tap (kh, kw) == aligned row-band slice @ w1[kh, kw], rolled by kw (XLU).
    for kw in range(3):
        t = None
        for kh in range(3):
            band = xcur[pl.ds(kh * Wp, M1), :]
            p = jnp.dot(band, w1_ref[kh, kw],
                        preferred_element_type=jnp.float32)
            t = p if t is None else t + p
        if kw == 0:
            acc1_ref[...] = t
        else:
            acc1_ref[...] += pltpu.roll(t, M1 - kw, axis=0)

    # bn1 + relu, then zero everything outside the valid image region: this
    # reproduces conv2's zero padding of conv1's output and kills roll wrap.
    y1 = jnp.maximum(acc1_ref[...] * s1_ref[...] + b1_ref[...], 0.0)
    y1_ref[...] = (y1 * mask_ref[0]).astype(jnp.bfloat16)

    # ---- conv2 (3x3) over the (TH, W) output region ----
    for kw in range(3):
        t = None
        for kh in range(3):
            band = y1_ref[pl.ds(kh * Wp, M2), :]
            p = jnp.dot(band, w2_ref[kh, kw],
                        preferred_element_type=jnp.float32)
            t = p if t is None else t + p
        if kw == 0:
            acc2_ref[...] = t
        else:
            acc2_ref[...] += pltpu.roll(t, M2 - kw, axis=0)

    # ---- bn2 + residual + relu + lane-dense (Cp=128) store ----
    res = xcur[pl.ds(2 * Wp, M2), :].astype(jnp.float32)
    res = pltpu.roll(res, M2 - 2, axis=0)        # flat shift by +2 (row & col)
    y2 = acc2_ref[...] * s2_ref[...] + b2_ref[...] + res
    y2 = jnp.maximum(y2, 0.0)
    out_ref[0] = y2.reshape(TH, Wp, Cp)[:, :W, :].astype(out_ref.dtype)


def basic_block_forward(x, params, *, strip_rows=8):
    """Fused BasicBlock forward (stride=1, downsample=None). x: (N,H,W,C) f32."""
    N, H, W, C = x.shape
    TH = strip_rows if H % strip_rows == 0 else H
    n_strips = H // TH
    Cp = _round_up(C, 128)          # lane-dense channels
    Wp = _round_up(W + 4, 8)        # sublane-friendly padded width
    Mx = (TH + 4) * Wp              # flat rows of one input strip (2-row halo)
    M1 = (TH + 2) * Wp              # flat rows of conv1's extended output
    M2 = TH * Wp                    # flat rows of the final output strip
    rows_per_image = (H + 4) * Wp

    # Spatial (2-pixel halo for two fused 3x3 convs) + width + channel padding
    # and the bf16 cast, all in one pass; then flatten to (rows, Cp).
    xflat = jnp.pad(
        x, ((0, 0), (2, 2), (2, Wp - W - 2), (0, Cp - C))
    ).astype(jnp.bfloat16).reshape(N * rows_per_image, Cp)

    def pad_w(w):
        ci, co = w.shape[2], w.shape[3]
        return jnp.pad(
            w, ((0, 0), (0, 0), (0, Cp - ci), (0, Cp - co))
        ).astype(jnp.bfloat16)

    def pad_v(v):
        return jnp.pad(v, (0, Cp - v.shape[0])).reshape(1, Cp).astype(jnp.float32)

    w1 = pad_w(params["w1"])
    w2 = pad_w(params["w2"])
    s1, b1 = pad_v(params["scale1"]), pad_v(params["shift1"])
    s2, b2 = pad_v(params["scale2"]), pad_v(params["shift2"])

    # Per-strip validity mask over conv1's extended (TH+2, Wp) output grid:
    # 1.0 where the position is a real image pixel, 0.0 for zero-pad border,
    # width slack and out-of-image halo rows.
    e = jnp.arange(TH + 2)[None, :, None]
    f = jnp.arange(Wp)[None, None, :]
    si = jnp.arange(n_strips)[:, None, None]
    r = si * TH - 1 + e
    valid = (r >= 0) & (r < H) & (f >= 1) & (f <= W)
    mask = valid.astype(jnp.float32).reshape(n_strips, M1, 1)

    kernel = functools.partial(
        _fused_basic_block_kernel,
        TH=TH, W=W, Wp=Wp, Cp=Cp, M1=M1, M2=M2, Mx=Mx,
        rows_per_image=rows_per_image,
    )

    out = pl.pallas_call(
        kernel,
        out_shape=jax.ShapeDtypeStruct((N, H, W, Cp), jnp.float32),
        grid=(N, n_strips),
        in_specs=[
            pl.BlockSpec(memory_space=pl.ANY),                        # x (HBM)
            pl.BlockSpec((3, 3, Cp, Cp), lambda n, s: (0, 0, 0, 0)),  # w1
            pl.BlockSpec((3, 3, Cp, Cp), lambda n, s: (0, 0, 0, 0)),  # w2
            pl.BlockSpec((1, Cp), lambda n, s: (0, 0)),               # scale1
            pl.BlockSpec((1, Cp), lambda n, s: (0, 0)),               # shift1
            pl.BlockSpec((1, Cp), lambda n, s: (0, 0)),               # scale2
            pl.BlockSpec((1, Cp), lambda n, s: (0, 0)),               # shift2
            pl.BlockSpec((1, M1, 1), lambda n, s: (s, 0, 0)),         # mask
        ],
        out_specs=pl.BlockSpec((1, TH, W, Cp), lambda n, s: (n, s, 0, 0)),
        scratch_shapes=[
            pltpu.VMEM((2, Mx, Cp), jnp.bfloat16),   # double-buffered input
            pltpu.VMEM((M1, Cp), jnp.float32),       # conv1 accumulator
            pltpu.VMEM((M2, Cp), jnp.float32),       # conv2 accumulator
            pltpu.VMEM((M1, Cp), jnp.bfloat16),      # conv1 output (+halo)
            pltpu.SemaphoreType.DMA((2,)),
        ],
        compiler_params=pltpu.CompilerParams(
            dimension_semantics=("parallel", "arbitrary"),
            vmem_limit_bytes=32 * 1024 * 1024,
        ),
    )(xflat, w1, w2, s1, b1, s2, b2, mask)

    return out[..., :C]


# ----------------------------- reference (plain JAX) -------------------------
def _ref_conv(x, w):
    return jax.lax.conv_general_dilated(
        x, w, window_strides=(1, 1), padding=((1, 1), (1, 1)),
        dimension_numbers=("NHWC", "HWIO", "NHWC"))


def basic_block_reference(x, params):
    # Mirror the kernel's bf16 operand rounding (f32 accumulation) so the
    # comparison isolates structural correctness.
    q = lambda a: a.astype(jnp.bfloat16).astype(jnp.float32)
    xq = q(x)
    out = _ref_conv(xq, q(params["w1"])) * params["scale1"] + params["shift1"]
    out = jnp.maximum(out, 0.0)
    out = _ref_conv(q(out), q(params["w2"])) * params["scale2"] + params["shift2"]
    out = out + xq
    return jnp.maximum(out, 0.0)


# ----------------------------- parameter construction ------------------------
def make_params(key, inplanes, planes, eps=1e-5):
    ks = jax.random.split(key, 10)
    w1 = 0.1 * jax.random.normal(ks[0], (3, 3, inplanes, planes), jnp.float32)
    w2 = 0.1 * jax.random.normal(ks[1], (3, 3, planes, planes), jnp.float32)

    def bn_affine(kg, kb, km, kv):
        gamma = 1.0 + 0.1 * jax.random.normal(kg, (planes,), jnp.float32)
        beta = 0.1 * jax.random.normal(kb, (planes,), jnp.float32)
        rmean = 0.1 * jax.random.normal(km, (planes,), jnp.float32)
        rvar = jnp.abs(jax.random.normal(kv, (planes,), jnp.float32)) + 0.5
        scale = gamma / jnp.sqrt(rvar + eps)
        shift = beta - rmean * scale
        return scale, shift

    scale1, shift1 = bn_affine(ks[2], ks[3], ks[4], ks[5])
    scale2, shift2 = bn_affine(ks[6], ks[7], ks[8], ks[9])
    return dict(w1=w1, w2=w2, scale1=scale1, shift1=shift1,
                scale2=scale2, shift2=shift2)


if __name__ == "__main__":
    # TODO(synk): stride>1 / downsample branch not implemented (module defaults
    # are stride=1, downsample=None, which require inplanes == planes).
    N, C, H, W = 2, 4, 16, 16
    key = jax.random.PRNGKey(0)
    kx, kp = jax.random.split(key)
    x = jax.random.normal(kx, (N, H, W, C), jnp.float32)  # NHWC
    params = make_params(kp, inplanes=C, planes=C)

    out = jax.block_until_ready(basic_block_forward(x, params))
    ref = jax.block_until_ready(basic_block_reference(x, params))

    assert out.shape == (N, H, W, C)
    max_err = float(jnp.max(jnp.abs(out - ref)))
    assert jnp.allclose(out, ref, atol=1e-2, rtol=1e-2), (
        f"mismatch vs reference (max abs err {max_err})")
    print("KERNEL_OK")
</pallas_src>

<mosaic_0001>
module attributes {stable_mosaic.version = 11 : i64} {
  func.func @_fused_basic_block_kernel(%arg0: i32, %arg1: i32, %arg2: memref<960x128xbf16, #tpu.memory_space<any>>, %arg3: memref<3x3x128x128xbf16, #tpu.memory_space<vmem>>, %arg4: memref<3x3x128x128xbf16, #tpu.memory_space<vmem>>, %arg5: memref<1x128xf32, #tpu.memory_space<vmem>>, %arg6: memref<1x128xf32, #tpu.memory_space<vmem>>, %arg7: memref<1x128xf32, #tpu.memory_space<vmem>>, %arg8: memref<1x128xf32, #tpu.memory_space<vmem>>, %arg9: memref<1x240x1xf32, #tpu.memory_space<vmem>>, %arg10: memref<1x8x16x128xf32, #tpu.memory_space<vmem>>, %arg11: memref<2x288x128xbf16, #tpu.memory_space<vmem>>, %arg12: memref<240x128xf32, #tpu.memory_space<vmem>>, %arg13: memref<192x128xf32, #tpu.memory_space<vmem>>, %arg14: memref<240x128xbf16, #tpu.memory_space<vmem>>, %arg15: memref<2x!tpu.dma_semaphore, #tpu.memory_space<semaphore_mem>>) attributes {dimension_semantics = [#tpu.dimension_semantics<parallel>, #tpu.dimension_semantics<arbitrary>], iteration_bounds = array<i64: 2, 2>, scalar_prefetch = 0 : i64, scratch_operands = 5 : i64, tpu.core_type = #tpu.core_type<tc>, window_params = [{}, {pipeline_mode = #tpu.pipeline_mode<synchronous>, transform_indices = @transform_1, window_bounds = array<i64: 3, 3, 128, 128>}, {pipeline_mode = #tpu.pipeline_mode<synchronous>, transform_indices = @transform_2, window_bounds = array<i64: 3, 3, 128, 128>}, {pipeline_mode = #tpu.pipeline_mode<synchronous>, transform_indices = @transform_3, window_bounds = array<i64: 1, 128>}, {pipeline_mode = #tpu.pipeline_mode<synchronous>, transform_indices = @transform_4, window_bounds = array<i64: 1, 128>}, {pipeline_mode = #tpu.pipeline_mode<synchronous>, transform_indices = @transform_5, window_bounds = array<i64: 1, 128>}, {pipeline_mode = #tpu.pipeline_mode<synchronous>, transform_indices = @transform_6, window_bounds = array<i64: 1, 128>}, {transform_indices = @transform_7, window_bounds = array<i64: 1, 240, 1>}, {transform_indices = @transform_8, window_bounds = array<i64: 1, 8, 16, 128>}]} {
    %c2_i32 = arith.constant 2 : i32
    %c0_i32 = arith.constant 0 : i32
    %0 = arith.cmpi eq, %c2_i32, %c0_i32 : i32
    %c1_i32 = arith.constant 1 : i32
    %1 = arith.select %0, %c1_i32, %c2_i32 : i32
    %2 = arith.remsi %arg1, %1 : i32
    %c0_i32_0 = arith.constant 0 : i32
    %3 = arith.cmpi ne, %2, %c0_i32_0 : i32
    %c0_i32_1 = arith.constant 0 : i32
    %4 = arith.cmpi slt, %2, %c0_i32_1 : i32
    %c0_i32_2 = arith.constant 0 : i32
    %5 = arith.cmpi slt, %1, %c0_i32_2 : i32
    %6 = arith.xori %4, %5 : i1
    %7 = arith.andi %6, %3 : i1
    %8 = arith.addi %2, %1 : i32
    %9 = arith.select %7, %8, %2 : i32
    %c0_i32_3 = arith.constant 0 : i32
    %10 = arith.cmpi eq, %arg1, %c0_i32_3 : i32
    %11 = arith.extui %10 : i1 to i32
    %c0_i32_4 = arith.constant 0 : i32
    %12 = arith.cmpi ne, %11, %c0_i32_4 : i32
    scf.if %12 {
      %c480_i32 = arith.constant 480 : i32
      %177 = arith.muli %arg0, %c480_i32 : i32
      %c0_i32_198 = arith.constant 0 : i32
      %178 = arith.addi %177, %c0_i32_198 : i32
      %179 = tpu.assume_multiple %178, 8 : i32
      %c0_i32_199 = arith.constant 0 : i32
      %c0_i32_200 = arith.constant 0 : i32
      %c0_i32_201 = arith.constant 0 : i32
      %180 = tpu.memref_slice %arg2[%179, %c0_i32_201] : memref<960x128xbf16, #tpu.memory_space<any>> -> memref<288x128xbf16, #tpu.memory_space<any>>
      %c0_i32_202 = arith.constant 0 : i32
      %c0_i32_203 = arith.constant 0 : i32
      %181 = tpu.memref_slice %arg11[%c0_i32_199, %c0_i32_202, %c0_i32_203] : memref<2x288x128xbf16, #tpu.memory_space<vmem>> -> memref<1x288x128xbf16, #tpu.memory_space<vmem>>
      %182 = tpu.memref_squeeze %181 : memref<1x288x128xbf16, #tpu.memory_space<vmem>> -> memref<288x128xbf16, #tpu.memory_space<vmem>>
      %183 = tpu.memref_slice %arg15[%c0_i32_200] : memref<2x!tpu.dma_semaphore, #tpu.memory_space<semaphore_mem>> -> memref<1x!tpu.dma_semaphore, #tpu.memory_space<semaphore_mem>>
      %184 = tpu.memref_squeeze %183 : memref<1x!tpu.dma_semaphore, #tpu.memory_space<semaphore_mem>> -> memref<!tpu.dma_semaphore, #tpu.memory_space<semaphore_mem>>
      tpu.enqueue_dma source(%180 : memref<288x128xbf16, #tpu.memory_space<any>>) target(%182 : memref<288x128xbf16, #tpu.memory_space<vmem>>) target_semaphore(%184 : memref<!tpu.dma_semaphore, #tpu.memory_space<semaphore_mem>>)
    } else {
    }
    %c0_i32_5 = arith.constant 0 : i32
    %c0_i32_6 = arith.constant 0 : i32
    %13 = tpu.memref_slice %arg2[%c0_i32_5, %c0_i32_6] : memref<960x128xbf16, #tpu.memory_space<any>> -> memref<288x128xbf16, #tpu.memory_space<any>>
    %c0_i32_7 = arith.constant 0 : i32
    %c0_i32_8 = arith.constant 0 : i32
    %14 = tpu.memref_slice %arg11[%9, %c0_i32_7, %c0_i32_8] : memref<2x288x128xbf16, #tpu.memory_space<vmem>> -> memref<1x288x128xbf16, #tpu.memory_space<vmem>>
    %15 = tpu.memref_squeeze %14 : memref<1x288x128xbf16, #tpu.memory_space<vmem>> -> memref<288x128xbf16, #tpu.memory_space<vmem>>
    %16 = tpu.memref_slice %arg15[%9] : memref<2x!tpu.dma_semaphore, #tpu.memory_space<semaphore_mem>> -> memref<1x!tpu.dma_semaphore, #tpu.memory_space<semaphore_mem>>
    %17 = tpu.memref_squeeze %16 : memref<1x!tpu.dma_semaphore, #tpu.memory_space<semaphore_mem>> -> memref<!tpu.dma_semaphore, #tpu.memory_space<semaphore_mem>>
    tpu.wait_dma2 semaphore(%17 : memref<!tpu.dma_semaphore, #tpu.memory_space<semaphore_mem>>) src(%13 : memref<288x128xbf16, #tpu.memory_space<any>>) dst(%15 : memref<288x128xbf16, #tpu.memory_space<vmem>>)
    %c1_i32_9 = arith.constant 1 : i32
    %18 = arith.addi %arg1, %c1_i32_9 : i32
    %c2_i32_10 = arith.constant 2 : i32
    %19 = arith.cmpi slt, %18, %c2_i32_10 : i32
    %20 = arith.extui %19 : i1 to i32
    %c0_i32_11 = arith.constant 0 : i32
    %21 = arith.cmpi ne, %20, %c0_i32_11 : i32
    scf.if %21 {
      %c1_i32_198 = arith.constant 1 : i32
      %177 = arith.addi %arg1, %c1_i32_198 : i32
      %c1_i32_199 = arith.constant 1 : i32
      %178 = arith.subi %c1_i32_199, %9 : i32
      %c480_i32 = arith.constant 480 : i32
      %179 = arith.muli %arg0, %c480_i32 : i32
      %c192_i32 = arith.constant 192 : i32
      %180 = arith.muli %177, %c192_i32 : i32
      %181 = arith.addi %179, %180 : i32
      %182 = tpu.assume_multiple %181, 8 : i32
      %c0_i32_200 = arith.constant 0 : i32
      %183 = tpu.memref_slice %arg2[%182, %c0_i32_200] : memref<960x128xbf16, #tpu.memory_space<any>> -> memref<288x128xbf16, #tpu.memory_space<any>>
      %c0_i32_201 = arith.constant 0 : i32
      %c0_i32_202 = arith.constant 0 : i32
      %184 = tpu.memref_slice %arg11[%178, %c0_i32_201, %c0_i32_202] : memref<2x288x128xbf16, #tpu.memory_space<vmem>> -> memref<1x288x128xbf16, #tpu.memory_space<vmem>>
      %185 = tpu.memref_squeeze %184 : memref<1x288x128xbf16, #tpu.memory_space<vmem>> -> memref<288x128xbf16, #tpu.memory_space<vmem>>
      %186 = tpu.memref_slice %arg15[%178] : memref<2x!tpu.dma_semaphore, #tpu.memory_space<semaphore_mem>> -> memref<1x!tpu.dma_semaphore, #tpu.memory_space<semaphore_mem>>
      %187 = tpu.memref_squeeze %186 : memref<1x!tpu.dma_semaphore, #tpu.memory_space<semaphore_mem>> -> memref<!tpu.dma_semaphore, #tpu.memory_space<semaphore_mem>>
      tpu.enqueue_dma source(%183 : memref<288x128xbf16, #tpu.memory_space<any>>) target(%185 : memref<288x128xbf16, #tpu.memory_space<vmem>>) target_semaphore(%187 : memref<!tpu.dma_semaphore, #tpu.memory_space<semaphore_mem>>)
    } else {
    }
    %c0_i32_12 = arith.constant 0 : i32
    %c0_i32_13 = arith.constant 0 : i32
    %22 = tpu.memref_slice %arg11[%9, %c0_i32_12, %c0_i32_13] : memref<2x288x128xbf16, #tpu.memory_space<vmem>> -> memref<1x288x128xbf16, #tpu.memory_space<vmem>>
    %23 = tpu.memref_squeeze %22 : memref<1x288x128xbf16, #tpu.memory_space<vmem>> -> memref<288x128xbf16, #tpu.memory_space<vmem>>
    %c0 = arith.constant 0 : index
    %c0_14 = arith.constant 0 : index
    %24 = vector.load %23[%c0, %c0_14] : memref<288x128xbf16, #tpu.memory_space<vmem>>, vector<240x128xbf16>
    %c0_15 = arith.constant 0 : index
    %c0_16 = arith.constant 0 : index
    %c0_17 = arith.constant 0 : index
    %c0_18 = arith.constant 0 : index
    %25 = vector.load %arg3[%c0_15, %c0_16, %c0_17, %c0_18] : memref<3x3x128x128xbf16, #tpu.memory_space<vmem>>, vector<1x1x128x128xbf16>
    %26 = vector.shape_cast %25 : vector<1x1x128x128xbf16> to vector<128x128xbf16>
    %cst = arith.constant dense<0.000000e+00> : vector<240x128xf32>
    %27 = tpu.matmul %24, %26, %cst {dimension_numbers = #tpu.dot_dimension_numbers<[1], [0], [0], [1], [0, 0, 1, 1], [], []>} : vector<240x128xbf16>, vector<128x128xbf16>, vector<240x128xf32> -> vector<240x128xf32>
    %c0_i32_19 = arith.constant 0 : i32
    %c0_i32_20 = arith.constant 0 : i32
    %28 = tpu.memref_slice %arg11[%9, %c0_i32_19, %c0_i32_20] : memref<2x288x128xbf16, #tpu.memory_space<vmem>> -> memref<1x288x128xbf16, #tpu.memory_space<vmem>>
    %29 = tpu.memref_squeeze %28 : memref<1x288x128xbf16, #tpu.memory_space<vmem>> -> memref<288x128xbf16, #tpu.memory_space<vmem>>
    %c24 = arith.constant 24 : index
    %c0_21 = arith.constant 0 : index
    %30 = vector.load %29[%c24, %c0_21] : memref<288x128xbf16, #tpu.memory_space<vmem>>, vector<240x128xbf16>
    %c1 = arith.constant 1 : index
    %c0_22 = arith.constant 0 : index
    %c0_23 = arith.constant 0 : index
    %c0_24 = arith.constant 0 : index
    %31 = vector.load %arg3[%c1, %c0_22, %c0_23, %c0_24] : memref<3x3x128x128xbf16, #tpu.memory_space<vmem>>, vector<1x1x128x128xbf16>
    %32 = vector.shape_cast %31 : vector<1x1x128x128xbf16> to vector<128x128xbf16>
    %cst_25 = arith.constant dense<0.000000e+00> : vector<240x128xf32>
    %33 = tpu.matmul %30, %32, %cst_25 {dimension_numbers = #tpu.dot_dimension_numbers<[1], [0], [0], [1], [0, 0, 1, 1], [], []>} : vector<240x128xbf16>, vector<128x128xbf16>, vector<240x128xf32> -> vector<240x128xf32>
    %34 = arith.addf %27, %33 : vector<240x128xf32>
    %c0_i32_26 = arith.constant 0 : i32
    %c0_i32_27 = arith.constant 0 : i32
    %35 = tpu.memref_slice %arg11[%9, %c0_i32_26, %c0_i32_27] : memref<2x288x128xbf16, #tpu.memory_space<vmem>> -> memref<1x288x128xbf16, #tpu.memory_space<vmem>>
    %36 = tpu.memref_squeeze %35 : memref<1x288x128xbf16, #tpu.memory_space<vmem>> -> memref<288x128xbf16, #tpu.memory_space<vmem>>
    %c48 = arith.constant 48 : index
    %c0_28 = arith.constant 0 : index
    %37 = vector.load %36[%c48, %c0_28] : memref<288x128xbf16, #tpu.memory_space<vmem>>, vector<240x128xbf16>
    %c2 = arith.constant 2 : index
    %c0_29 = arith.constant 0 : index
    %c0_30 = arith.constant 0 : index
    %c0_31 = arith.constant 0 : index
    %38 = vector.load %arg3[%c2, %c0_29, %c0_30, %c0_31] : memref<3x3x128x128xbf16, #tpu.memory_space<vmem>>, vector<1x1x128x128xbf16>
    %39 = vector.shape_cast %38 : vector<1x1x128x128xbf16> to vector<128x128xbf16>
    %cst_32 = arith.constant dense<0.000000e+00> : vector<240x128xf32>
    %40 = tpu.matmul %37, %39, %cst_32 {dimension_numbers = #tpu.dot_dimension_numbers<[1], [0], [0], [1], [0, 0, 1, 1], [], []>} : vector<240x128xbf16>, vector<128x128xbf16>, vector<240x128xf32> -> vector<240x128xf32>
    %41 = arith.addf %34, %40 : vector<240x128xf32>
    %c0_33 = arith.constant 0 : index
    %c0_34 = arith.constant 0 : index
    %42 = vector.load %arg12[%c0_33, %c0_34] : memref<240x128xf32, #tpu.memory_space<vmem>>, vector<240x128xf32>
    tpu.vector_store %arg12[%c0_33, %c0_34], %41 {strides = array<i32>} : memref<240x128xf32, #tpu.memory_space<vmem>>, vector<240x128xf32>,
    %c0_i32_35 = arith.constant 0 : i32
    %c0_i32_36 = arith.constant 0 : i32
    %43 = tpu.memref_slice %arg11[%9, %c0_i32_35, %c0_i32_36] : memref<2x288x128xbf16, #tpu.memory_space<vmem>> -> memref<1x288x128xbf16, #tpu.memory_space<vmem>>
    %44 = tpu.memref_squeeze %43 : memref<1x288x128xbf16, #tpu.memory_space<vmem>> -> memref<288x128xbf16, #tpu.memory_space<vmem>>
    %c0_37 = arith.constant 0 : index
    %c0_38 = arith.constant 0 : index
    %45 = vector.load %44[%c0_37, %c0_38] : memref<288x128xbf16, #tpu.memory_space<vmem>>, vector<240x128xbf16>
    %c0_39 = arith.constant 0 : index
    %c1_40 = arith.constant 1 : index
    %c0_41 = arith.constant 0 : index
    %c0_42 = arith.constant 0 : index
    %46 = vector.load %arg3[%c0_39, %c1_40, %c0_41, %c0_42] : memref<3x3x128x128xbf16, #tpu.memory_space<vmem>>, vector<1x1x128x128xbf16>
    %47 = vector.shape_cast %46 : vector<1x1x128x128xbf16> to vector<128x128xbf16>
    %cst_43 = arith.constant dense<0.000000e+00> : vector<240x128xf32>
    %48 = tpu.matmul %45, %47, %cst_43 {dimension_numbers = #tpu.dot_dimension_numbers<[1], [0], [0], [1], [0, 0, 1, 1], [], []>} : vector<240x128xbf16>, vector<128x128xbf16>, vector<240x128xf32> -> vector<240x128xf32>
    %c0_i32_44 = arith.constant 0 : i32
    %c0_i32_45 = arith.constant 0 : i32
    %49 = tpu.memref_slice %arg11[%9, %c0_i32_44, %c0_i32_45] : memref<2x288x128xbf16, #tpu.memory_space<vmem>> -> memref<1x288x128xbf16, #tpu.memory_space<vmem>>
    %50 = tpu.memref_squeeze %49 : memref<1x288x128xbf16, #tpu.memory_space<vmem>> -> memref<288x128xbf16, #tpu.memory_space<vmem>>
    %c24_46 = arith.constant 24 : index
    %c0_47 = arith.constant 0 : index
    %51 = vector.load %50[%c24_46, %c0_47] : memref<288x128xbf16, #tpu.memory_space<vmem>>, vector<240x128xbf16>
    %c1_48 = arith.constant 1 : index
    %c1_49 = arith.constant 1 : index
    %c0_50 = arith.constant 0 : index
    %c0_51 = arith.constant 0 : index
    %52 = vector.load %arg3[%c1_48, %c1_49, %c0_50, %c0_51] : memref<3x3x128x128xbf16, #tpu.memory_space<vmem>>, vector<1x1x128x128xbf16>
    %53 = vector.shape_cast %52 : vector<1x1x128x128xbf16> to vector<128x128xbf16>
    %cst_52 = arith.constant dense<0.000000e+00> : vector<240x128xf32>
    %54 = tpu.matmul %51, %53, %cst_52 {dimension_numbers = #tpu.dot_dimension_numbers<[1], [0], [0], [1], [0, 0, 1, 1], [], []>} : vector<240x128xbf16>, vector<128x128xbf16>, vector<240x128xf32> -> vector<240x128xf32>
    %55 = arith.addf %48, %54 : vector<240x128xf32>
    %c0_i32_53 = arith.constant 0 : i32
    %c0_i32_54 = arith.constant 0 : i32
    %56 = tpu.memref_slice %arg11[%9, %c0_i32_53, %c0_i32_54] : memref<2x288x128xbf16, #tpu.memory_space<vmem>> -> memref<1x288x128xbf16, #tpu.memory_space<vmem>>
    %57 = tpu.memref_squeeze %56 : memref<1x288x128xbf16, #tpu.memory_space<vmem>> -> memref<288x128xbf16, #tpu.memory_space<vmem>>
    %c48_55 = arith.constant 48 : index
    %c0_56 = arith.constant 0 : index
    %58 = vector.load %57[%c48_55, %c0_56] : memref<288x128xbf16, #tpu.memory_space<vmem>>, vector<240x128xbf16>
    %c2_57 = arith.constant 2 : index
    %c1_58 = arith.constant 1 : index
    %c0_59 = arith.constant 0 : index
    %c0_60 = arith.constant 0 : index
    %59 = vector.load %arg3[%c2_57, %c1_58, %c0_59, %c0_60] : memref<3x3x128x128xbf16, #tpu.memory_space<vmem>>, vector<1x1x128x128xbf16>
    %60 = vector.shape_cast %59 : vector<1x1x128x128xbf16> to vector<128x128xbf16>
    %cst_61 = arith.constant dense<0.000000e+00> : vector<240x128xf32>
    %61 = tpu.matmul %58, %60, %cst_61 {dimension_numbers = #tpu.dot_dimension_numbers<[1], [0], [0], [1], [0, 0, 1, 1], [], []>} : vector<240x128xbf16>, vector<128x128xbf16>, vector<240x128xf32> -> vector<240x128xf32>
    %62 = arith.addf %55, %61 : vector<240x128xf32>
    %c0_62 = arith.constant 0 : index
    %c0_63 = arith.constant 0 : index
    %63 = vector.load %arg12[%c0_62, %c0_63] : memref<240x128xf32, #tpu.memory_space<vmem>>, vector<240x128xf32>
    %c239_i32 = arith.constant 239 : i32
    %64 = tpu.dynamic_rotate %62 by %c239_i32 dim 0 : vector<240x128xf32>, i32 -> vector<240x128xf32>
    %65 = arith.addf %63, %64 : vector<240x128xf32>
    %c0_64 = arith.constant 0 : index
    %c0_65 = arith.constant 0 : index
    %66 = vector.load %arg12[%c0_64, %c0_65] : memref<240x128xf32, #tpu.memory_space<vmem>>, vector<240x128xf32>
    tpu.vector_store %arg12[%c0_64, %c0_65], %65 {strides = array<i32>} : memref<240x128xf32, #tpu.memory_space<vmem>>, vector<240x128xf32>,
    %c0_i32_66 = arith.constant 0 : i32
    %c0_i32_67 = arith.constant 0 : i32
    %67 = tpu.memref_slice %arg11[%9, %c0_i32_66, %c0_i32_67] : memref<2x288x128xbf16, #tpu.memory_space<vmem>> -> memref<1x288x128xbf16, #tpu.memory_space<vmem>>
    %68 = tpu.memref_squeeze %67 : memref<1x288x128xbf16, #tpu.memory_space<vmem>> -> memref<288x128xbf16, #tpu.memory_space<vmem>>
    %c0_68 = arith.constant 0 : index
    %c0_69 = arith.constant 0 : index
    %69 = vector.load %68[%c0_68, %c0_69] : memref<288x128xbf16, #tpu.memory_space<vmem>>, vector<240x128xbf16>
    %c0_70 = arith.constant 0 : index
    %c2_71 = arith.constant 2 : index
    %c0_72 = arith.constant 0 : index
    %c0_73 = arith.constant 0 : index
    %70 = vector.load %arg3[%c0_70, %c2_71, %c0_72, %c0_73] : memref<3x3x128x128xbf16, #tpu.memory_space<vmem>>, vector<1x1x128x128xbf16>
    %71 = vector.shape_cast %70 : vector<1x1x128x128xbf16> to vector<128x128xbf16>
    %cst_74 = arith.constant dense<0.000000e+00> : vector<240x128xf32>
    %72 = tpu.matmul %69, %71, %cst_74 {dimension_numbers = #tpu.dot_dimension_numbers<[1], [0], [0], [1], [0, 0, 1, 1], [], []>} : vector<240x128xbf16>, vector<128x128xbf16>, vector<240x128xf32> -> vector<240x128xf32>
    %c0_i32_75 = arith.constant 0 : i32
    %c0_i32_76 = arith.constant 0 : i32
    %73 = tpu.memref_slice %arg11[%9, %c0_i32_75, %c0_i32_76] : memref<2x288x128xbf16, #tpu.memory_space<vmem>> -> memref<1x288x128xbf16, #tpu.memory_space<vmem>>
    %74 = tpu.memref_squeeze %73 : memref<1x288x128xbf16, #tpu.memory_space<vmem>> -> memref<288x128xbf16, #tpu.memory_space<vmem>>
    %c24_77 = arith.constant 24 : index
    %c0_78 = arith.constant 0 : index
    %75 = vector.load %74[%c24_77, %c0_78] : memref<288x128xbf16, #tpu.memory_space<vmem>>, vector<240x128xbf16>
    %c1_79 = arith.constant 1 : index
    %c2_80 = arith.constant 2 : index
    %c0_81 = arith.constant 0 : index
    %c0_82 = arith.constant 0 : index
    %76 = vector.load %arg3[%c1_79, %c2_80, %c0_81, %c0_82] : memref<3x3x128x128xbf16, #tpu.memory_space<vmem>>, vector<1x1x128x128xbf16>
    %77 = vector.shape_cast %76 : vector<1x1x128x128xbf16> to vector<128x128xbf16>
    %cst_83 = arith.constant dense<0.000000e+00> : vector<240x128xf32>
    %78 = tpu.matmul %75, %77, %cst_83 {dimension_numbers = #tpu.dot_dimension_numbers<[1], [0], [0], [1], [0, 0, 1, 1], [], []>} : vector<240x128xbf16>, vector<128x128xbf16>, vector<240x128xf32> -> vector<240x128xf32>
    %79 = arith.addf %72, %78 : vector<240x128xf32>
    %c0_i32_84 = arith.constant 0 : i32
    %c0_i32_85 = arith.constant 0 : i32
    %80 = tpu.memref_slice %arg11[%9, %c0_i32_84, %c0_i32_85] : memref<2x288x128xbf16, #tpu.memory_space<vmem>> -> memref<1x288x128xbf16, #tpu.memory_space<vmem>>
    %81 = tpu.memref_squeeze %80 : memref<1x288x128xbf16, #tpu.memory_space<vmem>> -> memref<288x128xbf16, #tpu.memory_space<vmem>>
    %c48_86 = arith.constant 48 : index
    %c0_87 = arith.constant 0 : index
    %82 = vector.load %81[%c48_86, %c0_87] : memref<288x128xbf16, #tpu.memory_space<vmem>>, vector<240x128xbf16>
    %c2_88 = arith.constant 2 : index
    %c2_89 = arith.constant 2 : index
    %c0_90 = arith.constant 0 : index
    %c0_91 = arith.constant 0 : index
    %83 = vector.load %arg3[%c2_88, %c2_89, %c0_90, %c0_91] : memref<3x3x128x128xbf16, #tpu.memory_space<vmem>>, vector<1x1x128x128xbf16>
    %84 = vector.shape_cast %83 : vector<1x1x128x128xbf16> to vector<128x128xbf16>
    %cst_92 = arith.constant dense<0.000000e+00> : vector<240x128xf32>
    %85 = tpu.matmul %82, %84, %cst_92 {dimension_numbers = #tpu.dot_dimension_numbers<[1], [0], [0], [1], [0, 0, 1, 1], [], []>} : vector<240x128xbf16>, vector<128x128xbf16>, vector<240x128xf32> -> vector<240x128xf32>
    %86 = arith.addf %79, %85 : vector<240x128xf32>
    %c0_93 = arith.constant 0 : index
    %c0_94 = arith.constant 0 : index
    %87 = vector.load %arg12[%c0_93, %c0_94] : memref<240x128xf32, #tpu.memory_space<vmem>>, vector<240x128xf32>
    %c238_i32 = arith.constant 238 : i32
    %88 = tpu.dynamic_rotate %86 by %c238_i32 dim 0 : vector<240x128xf32>, i32 -> vector<240x128xf32>
    %89 = arith.addf %87, %88 : vector<240x128xf32>
    %c0_95 = arith.constant 0 : index
    %c0_96 = arith.constant 0 : index
    %90 = vector.load %arg12[%c0_95, %c0_96] : memref<240x128xf32, #tpu.memory_space<vmem>>, vector<240x128xf32>
    tpu.vector_store %arg12[%c0_95, %c0_96], %89 {strides = array<i32>} : memref<240x128xf32, #tpu.memory_space<vmem>>, vector<240x128xf32>,
    %c0_97 = arith.constant 0 : index
    %c0_98 = arith.constant 0 : index
    %91 = vector.load %arg12[%c0_97, %c0_98] : memref<240x128xf32, #tpu.memory_space<vmem>>, vector<240x128xf32>
    %c0_99 = arith.constant 0 : index
    %c0_100 = arith.constant 0 : index
    %92 = vector.load %arg5[%c0_99, %c0_100] : memref<1x128xf32, #tpu.memory_space<vmem>>, vector<1x128xf32>
    %93 = vector.broadcast %92 : vector<1x128xf32> to vector<240x128xf32>
    %94 = arith.mulf %91, %93 : vector<240x128xf32>
    %c0_101 = arith.constant 0 : index
    %c0_102 = arith.constant 0 : index
    %95 = vector.load %arg6[%c0_101, %c0_102] : memref<1x128xf32, #tpu.memory_space<vmem>>, vector<1x128xf32>
    %96 = vector.broadcast %95 : vector<1x128xf32> to vector<240x128xf32>
    %97 = arith.addf %94, %96 : vector<240x128xf32>
    %cst_103 = arith.constant 0.000000e+00 : f32
    %98 = vector.broadcast %cst_103 : f32 to vector<240x128xf32>
    %99 = arith.maximumf %97, %98 : vector<240x128xf32>
    %c0_104 = arith.constant 0 : index
    %c0_105 = arith.constant 0 : index
    %c0_106 = arith.constant 0 : index
    %100 = vector.load %arg9[%c0_104, %c0_105, %c0_106] : memref<1x240x1xf32, #tpu.memory_space<vmem>>, vector<1x240x1xf32>
    %101 = vector.shape_cast %100 : vector<1x240x1xf32> to vector<240x1xf32>
    %102 = vector.broadcast %101 : vector<240x1xf32> to vector<240x128xf32>
    %103 = arith.mulf %99, %102 : vector<240x128xf32>
    %104 = arith.truncf %103 : vector<240x128xf32> to vector<240x128xbf16>
    %c0_107 = arith.constant 0 : index
    %c0_108 = arith.constant 0 : index
    %105 = vector.load %arg14[%c0_107, %c0_108] : memref<240x128xbf16, #tpu.memory_space<vmem>>, vector<240x128xbf16>
    tpu.vector_store %arg14[%c0_107, %c0_108], %104 {strides = array<i32>} : memref<240x128xbf16, #tpu.memory_space<vmem>>, vector<240x128xbf16>,
    %c0_109 = arith.constant 0 : index
    %c0_110 = arith.constant 0 : index
    %106 = vector.load %arg14[%c0_109, %c0_110] : memref<240x128xbf16, #tpu.memory_space<vmem>>, vector<192x128xbf16>
    %c0_111 = arith.constant 0 : index
    %c0_112 = arith.constant 0 : index
    %c0_113 = arith.constant 0 : index
    %c0_114 = arith.constant 0 : index
    %107 = vector.load %arg4[%c0_111, %c0_112, %c0_113, %c0_114] : memref<3x3x128x128xbf16, #tpu.memory_space<vmem>>, vector<1x1x128x128xbf16>
    %108 = vector.shape_cast %107 : vector<1x1x128x128xbf16> to vector<128x128xbf16>
    %cst_115 = arith.constant dense<0.000000e+00> : vector<192x128xf32>
    %109 = tpu.matmul %106, %108, %cst_115 {dimension_numbers = #tpu.dot_dimension_numbers<[1], [0], [0], [1], [0, 0, 1, 1], [], []>} : vector<192x128xbf16>, vector<128x128xbf16>, vector<192x128xf32> -> vector<192x128xf32>
    %c24_116 = arith.constant 24 : index
    %c0_117 = arith.constant 0 : index
    %110 = vector.load %arg14[%c24_116, %c0_117] : memref<240x128xbf16, #tpu.memory_space<vmem>>, vector<192x128xbf16>
    %c1_118 = arith.constant 1 : index
    %c0_119 = arith.constant 0 : index
    %c0_120 = arith.constant 0 : index
    %c0_121 = arith.constant 0 : index
    %111 = vector.load %arg4[%c1_118, %c0_119, %c0_120, %c0_121] : memref<3x3x128x128xbf16, #tpu.memory_space<vmem>>, vector<1x1x128x128xbf16>
    %112 = vector.shape_cast %111 : vector<1x1x128x128xbf16> to vector<128x128xbf16>
    %cst_122 = arith.constant dense<0.000000e+00> : vector<192x128xf32>
    %113 = tpu.matmul %110, %112, %cst_122 {dimension_numbers = #tpu.dot_dimension_numbers<[1], [0], [0], [1], [0, 0, 1, 1], [], []>} : vector<192x128xbf16>, vector<128x128xbf16>, vector<192x128xf32> -> vector<192x128xf32>
    %114 = arith.addf %109, %113 : vector<192x128xf32>
    %c48_123 = arith.constant 48 : index
    %c0_124 = arith.constant 0 : index
    %115 = vector.load %arg14[%c48_123, %c0_124] : memref<240x128xbf16, #tpu.memory_space<vmem>>, vector<192x128xbf16>
    %c2_125 = arith.constant 2 : index
    %c0_126 = arith.constant 0 : index
    %c0_127 = arith.constant 0 : index
    %c0_128 = arith.constant 0 : index
    %116 = vector.load %arg4[%c2_125, %c0_126, %c0_127, %c0_128] : memref<3x3x128x128xbf16, #tpu.memory_space<vmem>>, vector<1x1x128x128xbf16>
    %117 = vector.shape_cast %116 : vector<1x1x128x128xbf16> to vector<128x128xbf16>
    %cst_129 = arith.constant dense<0.000000e+00> : vector<192x128xf32>
    %118 = tpu.matmul %115, %117, %cst_129 {dimension_numbers = #tpu.dot_dimension_numbers<[1], [0], [0], [1], [0, 0, 1, 1], [], []>} : vector<192x128xbf16>, vector<128x128xbf16>, vector<192x128xf32> -> vector<192x128xf32>
    %119 = arith.addf %114, %118 : vector<192x128xf32>
    %c0_130 = arith.constant 0 : index
    %c0_131 = arith.constant 0 : index
    %120 = vector.load %arg13[%c0_130, %c0_131] : memref<192x128xf32, #tpu.memory_space<vmem>>, vector<192x128xf32>
    tpu.vector_store %arg13[%c0_130, %c0_131], %119 {strides = array<i32>} : memref<192x128xf32, #tpu.memory_space<vmem>>, vector<192x128xf32>,
    %c0_132 = arith.constant 0 : index
    %c0_133 = arith.constant 0 : index
    %121 = vector.load %arg14[%c0_132, %c0_133] : memref<240x128xbf16, #tpu.memory_space<vmem>>, vector<192x128xbf16>
    %c0_134 = arith.constant 0 : index
    %c1_135 = arith.constant 1 : index
    %c0_136 = arith.constant 0 : index
    %c0_137 = arith.constant 0 : index
    %122 = vector.load %arg4[%c0_134, %c1_135, %c0_136, %c0_137] : memref<3x3x128x128xbf16, #tpu.memory_space<vmem>>, vector<1x1x128x128xbf16>
    %123 = vector.shape_cast %122 : vector<1x1x128x128xbf16> to vector<128x128xbf16>
    %cst_138 = arith.constant dense<0.000000e+00> : vector<192x128xf32>
    %124 = tpu.matmul %121, %123, %cst_138 {dimension_numbers = #tpu.dot_dimension_numbers<[1], [0], [0], [1], [0, 0, 1, 1], [], []>} : vector<192x128xbf16>, vector<128x128xbf16>, vector<192x128xf32> -> vector<192x128xf32>
    %c24_139 = arith.constant 24 : index
    %c0_140 = arith.constant 0 : index
    %125 = vector.load %arg14[%c24_139, %c0_140] : memref<240x128xbf16, #tpu.memory_space<vmem>>, vector<192x128xbf16>
    %c1_141 = arith.constant 1 : index
    %c1_142 = arith.constant 1 : index
    %c0_143 = arith.constant 0 : index
    %c0_144 = arith.constant 0 : index
    %126 = vector.load %arg4[%c1_141, %c1_142, %c0_143, %c0_144] : memref<3x3x128x128xbf16, #tpu.memory_space<vmem>>, vector<1x1x128x128xbf16>
    %127 = vector.shape_cast %126 : vector<1x1x128x128xbf16> to vector<128x128xbf16>
    %cst_145 = arith.constant dense<0.000000e+00> : vector<192x128xf32>
    %128 = tpu.matmul %125, %127, %cst_145 {dimension_numbers = #tpu.dot_dimension_numbers<[1], [0], [0], [1], [0, 0, 1, 1], [], []>} : vector<192x128xbf16>, vector<128x128xbf16>, vector<192x128xf32> -> vector<192x128xf32>
    %129 = arith.addf %124, %128 : vector<192x128xf32>
    %c48_146 = arith.constant 48 : index
    %c0_147 = arith.constant 0 : index
    %130 = vector.load %arg14[%c48_146, %c0_147] : memref<240x128xbf16, #tpu.memory_space<vmem>>, vector<192x128xbf16>
    %c2_148 = arith.constant 2 : index
    %c1_149 = arith.constant 1 : index
    %c0_150 = arith.constant 0 : index
    %c0_151 = arith.constant 0 : index
    %131 = vector.load %arg4[%c2_148, %c1_149, %c0_150, %c0_151] : memref<3x3x128x128xbf16, #tpu.memory_space<vmem>>, vector<1x1x128x128xbf16>
    %132 = vector.shape_cast %131 : vector<1x1x128x128xbf16> to vector<128x128xbf16>
    %cst_152 = arith.constant dense<0.000000e+00> : vector<192x128xf32>
    %133 = tpu.matmul %130, %132, %cst_152 {dimension_numbers = #tpu.dot_dimension_numbers<[1], [0], [0], [1], [0, 0, 1, 1], [], []>} : vector<192x128xbf16>, vector<128x128xbf16>, vector<192x128xf32> -> vector<192x128xf32>
    %134 = arith.addf %129, %133 : vector<192x128xf32>
    %c0_153 = arith.constant 0 : index
    %c0_154 = arith.constant 0 : index
    %135 = vector.load %arg13[%c0_153, %c0_154] : memref<192x128xf32, #tpu.memory_space<vmem>>, vector<192x128xf32>
    %c191_i32 = arith.constant 191 : i32
    %136 = tpu.dynamic_rotate %134 by %c191_i32 dim 0 : vector<192x128xf32>, i32 -> vector<192x128xf32>
    %137 = arith.addf %135, %136 : vector<192x128xf32>
    %c0_155 = arith.constant 0 : index
    %c0_156 = arith.constant 0 : index
    %138 = vector.load %arg13[%c0_155, %c0_156] : memref<192x128xf32, #tpu.memory_space<vmem>>, vector<192x128xf32>
    tpu.vector_store %arg13[%c0_155, %c0_156], %137 {strides = array<i32>} : memref<192x128xf32, #tpu.memory_space<vmem>>, vector<192x128xf32>,
    %c0_157 = arith.constant 0 : index
    %c0_158 = arith.constant 0 : index
    %139 = vector.load %arg14[%c0_157, %c0_158] : memref<240x128xbf16, #tpu.memory_space<vmem>>, vector<192x128xbf16>
    %c0_159 = arith.constant 0 : index
    %c2_160 = arith.constant 2 : index
    %c0_161 = arith.constant 0 : index
    %c0_162 = arith.constant 0 : index
    %140 = vector.load %arg4[%c0_159, %c2_160, %c0_161, %c0_162] : memref<3x3x128x128xbf16, #tpu.memory_space<vmem>>, vector<1x1x128x128xbf16>
    %141 = vector.shape_cast %140 : vector<1x1x128x128xbf16> to vector<128x128xbf16>
    %cst_163 = arith.constant dense<0.000000e+00> : vector<192x128xf32>
    %142 = tpu.matmul %139, %141, %cst_163 {dimension_numbers = #tpu.dot_dimension_numbers<[1], [0], [0], [1], [0, 0, 1, 1], [], []>} : vector<192x128xbf16>, vector<128x128xbf16>, vector<192x128xf32> -> vector<192x128xf32>
    %c24_164 = arith.constant 24 : index
    %c0_165 = arith.constant 0 : index
    %143 = vector.load %arg14[%c24_164, %c0_165] : memref<240x128xbf16, #tpu.memory_space<vmem>>, vector<192x128xbf16>
    %c1_166 = arith.constant 1 : index
    %c2_167 = arith.constant 2 : index
    %c0_168 = arith.constant 0 : index
    %c0_169 = arith.constant 0 : index
    %144 = vector.load %arg4[%c1_166, %c2_167, %c0_168, %c0_169] : memref<3x3x128x128xbf16, #tpu.memory_space<vmem>>, vector<1x1x128x128xbf16>
    %145 = vector.shape_cast %144 : vector<1x1x128x128xbf16> to vector<128x128xbf16>
    %cst_170 = arith.constant dense<0.000000e+00> : vector<192x128xf32>
    %146 = tpu.matmul %143, %145, %cst_170 {dimension_numbers = #tpu.dot_dimension_numbers<[1], [0], [0], [1], [0, 0, 1, 1], [], []>} : vector<192x128xbf16>, vector<128x128xbf16>, vector<192x128xf32> -> vector<192x128xf32>
    %147 = arith.addf %142, %146 : vector<192x128xf32>
    %c48_171 = arith.constant 48 : index
    %c0_172 = arith.constant 0 : index
    %148 = vector.load %arg14[%c48_171, %c0_172] : memref<240x128xbf16, #tpu.memory_space<vmem>>, vector<192x128xbf16>
    %c2_173 = arith.constant 2 : index
    %c2_174 = arith.constant 2 : index
    %c0_175 = arith.constant 0 : index
    %c0_176 = arith.constant 0 : index
    %149 = vector.load %arg4[%c2_173, %c2_174, %c0_175, %c0_176] : memref<3x3x128x128xbf16, #tpu.memory_space<vmem>>, vector<1x1x128x128xbf16>
    %150 = vector.shape_cast %149 : vector<1x1x128x128xbf16> to vector<128x128xbf16>
    %cst_177 = arith.constant dense<0.000000e+00> : vector<192x128xf32>
    %151 = tpu.matmul %148, %150, %cst_177 {dimension_numbers = #tpu.dot_dimension_numbers<[1], [0], [0], [1], [0, 0, 1, 1], [], []>} : vector<192x128xbf16>, vector<128x128xbf16>, vector<192x128xf32> -> vector<192x128xf32>
    %152 = arith.addf %147, %151 : vector<192x128xf32>
    %c0_178 = arith.constant 0 : index
    %c0_179 = arith.constant 0 : index
    %153 = vector.load %arg13[%c0_178, %c0_179] : memref<192x128xf32, #tpu.memory_space<vmem>>, vector<192x128xf32>
    %c190_i32 = arith.constant 190 : i32
    %154 = tpu.dynamic_rotate %152 by %c190_i32 dim 0 : vector<192x128xf32>, i32 -> vector<192x128xf32>
    %155 = arith.addf %153, %154 : vector<192x128xf32>
    %c0_180 = arith.constant 0 : index
    %c0_181 = arith.constant 0 : index
    %156 = vector.load %arg13[%c0_180, %c0_181] : memref<192x128xf32, #tpu.memory_space<vmem>>, vector<192x128xf32>
    tpu.vector_store %arg13[%c0_180, %c0_181], %155 {strides = array<i32>} : memref<192x128xf32, #tpu.memory_space<vmem>>, vector<192x128xf32>,
    %c0_i32_182 = arith.constant 0 : i32
    %c0_i32_183 = arith.constant 0 : i32
    %157 = tpu.memref_slice %arg11[%9, %c0_i32_182, %c0_i32_183] : memref<2x288x128xbf16, #tpu.memory_space<vmem>> -> memref<1x288x128xbf16, #tpu.memory_space<vmem>>
    %158 = tpu.memref_squeeze %157 : memref<1x288x128xbf16, #tpu.memory_space<vmem>> -> memref<288x128xbf16, #tpu.memory_space<vmem>>
    %c48_184 = arith.constant 48 : index
    %c0_185 = arith.constant 0 : index
    %159 = vector.load %158[%c48_184, %c0_185] : memref<288x128xbf16, #tpu.memory_space<vmem>>, vector<192x128xbf16>
    %160 = arith.extf %159 : vector<192x128xbf16> to vector<192x128xf32>
    %c190_i32_186 = arith.constant 190 : i32
    %161 = tpu.dynamic_rotate %160 by %c190_i32_186 dim 0 : vector<192x128xf32>, i32 -> vector<192x128xf32>
    %c0_187 = arith.constant 0 : index
    %c0_188 = arith.constant 0 : index
    %162 = vector.load %arg13[%c0_187, %c0_188] : memref<192x128xf32, #tpu.memory_space<vmem>>, vector<192x128xf32>
    %c0_189 = arith.constant 0 : index
    %c0_190 = arith.constant 0 : index
    %163 = vector.load %arg7[%c0_189, %c0_190] : memref<1x128xf32, #tpu.memory_space<vmem>>, vector<1x128xf32>
    %164 = vector.broadcast %163 : vector<1x128xf32> to vector<192x128xf32>
    %165 = arith.mulf %162, %164 : vector<192x128xf32>
    %c0_191 = arith.constant 0 : index
    %c0_192 = arith.constant 0 : index
    %166 = vector.load %arg8[%c0_191, %c0_192] : memref<1x128xf32, #tpu.memory_space<vmem>>, vector<1x128xf32>
    %167 = vector.broadcast %166 : vector<1x128xf32> to vector<192x128xf32>
    %168 = arith.addf %165, %167 : vector<192x128xf32>
    %169 = arith.addf %168, %161 : vector<192x128xf32>
    %cst_193 = arith.constant 0.000000e+00 : f32
    %170 = vector.broadcast %cst_193 : f32 to vector<192x128xf32>
    %171 = arith.maximumf %169, %170 : vector<192x128xf32>
    %172 = vector.shape_cast %171 : vector<192x128xf32> to vector<8x24x128xf32>
    %173 = vector.extract_strided_slice %172 {offsets = [0, 0, 0], sizes = [8, 16, 128], strides = [1, 1, 1]} : vector<8x24x128xf32> to vector<8x16x128xf32>
    %c0_194 = arith.constant 0 : index
    %c0_195 = arith.constant 0 : index
    %c0_196 = arith.constant 0 : index
    %c0_197 = arith.constant 0 : index
    %174 = vector.load %arg10[%c0_194, %c0_195, %c0_196, %c0_197] : memref<1x8x16x128xf32, #tpu.memory_space<vmem>>, vector<1x8x16x128xf32>
    %175 = vector.shape_cast %174 : vector<1x8x16x128xf32> to vector<8x16x128xf32>
    %176 = vector.shape_cast %173 : vector<8x16x128xf32> to vector<1x8x16x128xf32>
    tpu.vector_store %arg10[%c0_194, %c0_195, %c0_196, %c0_197], %176 {strides = array<i32>} : memref<1x8x16x128xf32, #tpu.memory_space<vmem>>, vector<1x8x16x128xf32>,
    return
  }
  func.func @transform_1(%arg0: i32, %arg1: i32) -> (i32, i32, i32, i32) {
    %c0_i32 = arith.constant 0 : i32
    %c0_i32_0 = arith.constant 0 : i32
    %c0_i32_1 = arith.constant 0 : i32
    %c0_i32_2 = arith.constant 0 : i32
    %c0_i32_3 = arith.constant 0 : i32
    return %c0_i32, %c0_i32_0, %c0_i32_1, %c0_i32_2 : i32, i32, i32, i32
  }
  func.func @transform_2(%arg0: i32, %arg1: i32) -> (i32, i32, i32, i32) {
    %c0_i32 = arith.constant 0 : i32
    %c0_i32_0 = arith.constant 0 : i32
    %c0_i32_1 = arith.constant 0 : i32
    %c0_i32_2 = arith.constant 0 : i32
    %c0_i32_3 = arith.constant 0 : i32
    return %c0_i32, %c0_i32_0, %c0_i32_1, %c0_i32_2 : i32, i32, i32, i32
  }
  func.func @transform_3(%arg0: i32, %arg1: i32) -> (i32, i32) {
    %c0_i32 = arith.constant 0 : i32
    %c0_i32_0 = arith.constant 0 : i32
    %c0_i32_1 = arith.constant 0 : i32
    return %c0_i32, %c0_i32_0 : i32, i32
  }
  func.func @transform_4(%arg0: i32, %arg1: i32) -> (i32, i32) {
    %c0_i32 = arith.constant 0 : i32
    %c0_i32_0 = arith.constant 0 : i32
    %c0_i32_1 = arith.constant 0 : i32
    return %c0_i32, %c0_i32_0 : i32, i32
  }
  func.func @transform_5(%arg0: i32, %arg1: i32) -> (i32, i32) {
    %c0_i32 = arith.constant 0 : i32
    %c0_i32_0 = arith.constant 0 : i32
    %c0_i32_1 = arith.constant 0 : i32
    return %c0_i32, %c0_i32_0 : i32, i32
  }
  func.func @transform_6(%arg0: i32, %arg1: i32) -> (i32, i32) {
    %c0_i32 = arith.constant 0 : i32
    %c0_i32_0 = arith.constant 0 : i32
    %c0_i32_1 = arith.constant 0 : i32
    return %c0_i32, %c0_i32_0 : i32, i32
  }
  func.func @transform_7(%arg0: i32, %arg1: i32) -> (i32, i32, i32) {
    %c0_i32 = arith.constant 0 : i32
    %c0_i32_0 = arith.constant 0 : i32
    %c0_i32_1 = arith.constant 0 : i32
    return %arg1, %c0_i32, %c0_i32_0 : i32, i32, i32
  }
  func.func @transform_8(%arg0: i32, %arg1: i32) -> (i32, i32, i32, i32) {
    %c0_i32 = arith.constant 0 : i32
    %c0_i32_0 = arith.constant 0 : i32
    %c0_i32_1 = arith.constant 0 : i32
    return %arg0, %arg1, %c0_i32, %c0_i32_0 : i32, i32, i32, i32
  }
}

</mosaic_0001>

<llo_original>
// kernel: tpu_custom_call.1
$region0: #{tpu_custom_call.1}
  #allocation0 [shape = 'u32[]', space=smem, size = 0x4, offset = 0x4, fixed_abs, tag = 'smem constant byte address 0x4 - core index']
  #allocation1 [shape = 'u32[144,128]{1,0:T(1,128)}', space=vmem, size = 0x12000, scoped, tag = 'internal scratch']
  #allocation2 [shape = 'bf16[2,288,128]{2,1,0:T(16,128)(2,1)}', space=vmem, size = 0x24000, scoped, tag = 'scratch operand']
  #allocation3 [shape = 'f32[240,128]{1,0:T(8,128)}', space=vmem, size = 0x1e000, scoped, tag = 'scratch operand']
  #allocation4 [shape = 'f32[192,128]{1,0:T(8,128)}', space=vmem, size = 0x18000, scoped, tag = 'scratch operand']
  #allocation5 [shape = 'bf16[240,128]{1,0:T(16,128)(2,1)}', space=vmem, size = 0xf000, scoped, tag = 'scratch operand']
  #allocation6 [shape = 's32[2]{0}', space=sflag, size = 0x8, scoped, tag = 'scratch operand']
  #allocation13 [shape = 's32[]', space=sflag, size = 0x4, offset = 0, fixed_abs, tag = 'sflag constant byte address 0x0 - dummy sync flag']
  #allocation14 [shape = 's32[]', space=sflag, size = 0x4, offset = 0, fixed_abs, tag = 'sflag constant byte address 0x0 - dummy sync flag']
  %s0 = inlined_call_operand.vmem [shape: bf16[960,128], index: 0, kind: input, shape index: {}]
  %s1 = inlined_call_operand.hbm [shape: bf16[3,3,128,128], index: 1, kind: input, shape index: {}]
  %s2 = inlined_call_operand.hbm [shape: bf16[3,3,128,128], index: 2, kind: input, shape index: {}]
  %s3 = inlined_call_operand.vmem [shape: f32[1,128], index: 3, kind: input, shape index: {}]
  %s4 = inlined_call_operand.vmem [shape: f32[1,128], index: 4, kind: input, shape index: {}]
  %s5 = inlined_call_operand.vmem [shape: f32[1,128], index: 5, kind: input, shape index: {}]
  %s6 = inlined_call_operand.vmem [shape: f32[1,128], index: 6, kind: input, shape index: {}]
  %s7 = inlined_call_operand.vmem [shape: f32[2,240,1], index: 7, kind: input, shape index: {}]
  %s8 = inlined_call_operand.hbm [shape: f32[2,16,16,128], index: 8, kind: output, shape index: {}]
  %s9 = sld [smem:[#allocation0]]
  $region145: #{tpu_custom_call.1} parent=0
    _
  %s11 = ssub.s32 1, %s9
  %s12 = scalar_select 0, %s11, %s9
  $region1: #{tpu_custom_call.1} parent=0
    #allocation7 [shape = 'u8[294912]{0}', space=vmem, size = 0x48000, scoped, tag = 'input window, operand 1, single buffered']
    #allocation8 [shape = 's32[2]{0}', space=sflag, size = 0x8, scoped, tag = 'scoped memory for tpu_custom_call.1']
    #allocation9 [shape = 's32[2]{0}', space=sflag, size = 0x8, scoped, tag = 'scoped memory for tpu_custom_call.1']
    #allocation10 [shape = 'u8[294912]{0}', space=vmem, size = 0x48000, scoped, tag = 'input window, operand 2, single buffered']
    #allocation11 [shape = 's32[1]{0}', space=sflag, size = 0x4, scoped, tag = 'scoped memory for tpu_custom_call.1']
    #allocation12 [shape = 'u8[131072]{0}', space=vmem, size = 0x20000, scoped, tag = 'output window, operand 0']
    %13 = vsyncpa [#allocation8], 0
    %14 = vsyncpa [#allocation11], 0
    %15 = vsyncpa [#allocation9], 0
    %s16 = scalar_lea.sflag [#allocation9], 1
    %17 = vsyncpa %s16, 0
    loop: start=0, step=1, limit=6
    $region2: #{tpu_custom_call.1} parent=1 // loop_pre_header
      _
    $region3: #{tpu_custom_call.1} parent=1 // loop_header
      %s19 = sphi 0, %s23
      %p20 = scmp.ge.s32.totalorder %s19, 6
      %s26 = sphi 0, %s38
      %s27 = sphi 0, %s34
      %s28 = sphi 0, %s26
      %s29 = sphi 0, %s27
      %s30 = sphi 0, %s28
      %s31 = sphi 0, %s29
      %s39 = sphi 0, %s39
      %s41 = sphi 0, %s39
      %s42 = sphi 0, %s41
      %s56 = sphi 0, %s42
      %s60 = sphi 0, %s60
      %s62 = sphi 0, %s60
      %s63 = sphi 0, %s62
      %s77 = sphi 0, %s63
      %s81 = sphi 0, %s81
      %s83 = sphi 0, %s81
      %s84 = sphi 0, %s83
      %s98 = sphi 0, %s84
      %s102 = sphi 0, %s102
      %s104 = sphi 0, %s102
      %s105 = sphi 0, %s104
      %s119 = sphi 0, %s105
      %s123 = sphi 0, %s123
      %s125 = sphi 0, %s123
      %s126 = sphi 0, %s125
      %s140 = sphi 0, %s126
      %s144 = sphi 0, %s144
      %s146 = sphi 0, %s144
      %s147 = sphi 0, %s146
      %s161 = sphi 0, %s147
      %s167 = sphi 0, %s169
      %s170 = sphi 0, %s167
      %s171 = sphi 0, %s170
      %s187 = sphi 0, %s171
      %s195 = sphi 0, %s197
      %s198 = sphi 0, %s195
      %s199 = sphi 0, %s198
      %s215 = sphi 0, %s199
    $region4: #{tpu_custom_call.1} parent=1 // loop_header_branch
      %22 = sbr.rel (%p20) target = $region8
    $region5: #{tpu_custom_call.1} parent=1 // loop_body
      %s24 = ssub.s32 %s19, 1
      %s25 = ssub.s32 %s19, 2
      %s32 = sadd.s32 1, %s27
      %p33 = scmp.ge.s32.totalorder %s32, 2
      %s34 = scalar_select %p33, 0, %s32
      %s35 = sadd.s32 1, %s26
      %s36 = scalar_select %p33, %s35, %s26
      %p37 = scmp.ge.s32.totalorder %s36, 2
      %s38 = scalar_select %p37, 0, %s36
      %s40 = sadd.s32 %s39, 1
      %p43 = scmp.eq.s32.totalorder %s19, 3
      %p44 = scmp.ne.s32.totalorder %s39, %s41
      %p45 = scmp.eq.s32.totalorder %s19, 0
      %p46 = por %p44, %p45
      %p47 = scmp.ne.s32.totalorder %s39, %s41
      %p48 = scmp.eq.s32.totalorder %s24, 3
      %p49 = por %p47, %p48
      %p50 = scmp.ne.s32.totalorder %s41, %s42
      %p51 = scmp.eq.s32.totalorder %s24, 0
      %p52 = por %p50, %p51
      %p53 = scmp.ne.s32.totalorder %s41, %s42
      %p54 = scmp.eq.s32.totalorder %s25, 3
      %p55 = por %p53, %p54
      %p57 = scmp.ne.s32.totalorder %s42, %s56
      %p58 = scmp.eq.s32.totalorder %s25, 0
      %p59 = por %p57, %p58
      %s61 = sadd.s32 %s60, 1
      %p64 = scmp.eq.s32.totalorder %s19, 3
      %p65 = scmp.ne.s32.totalorder %s60, %s62
      %p66 = scmp.eq.s32.totalorder %s19, 0
      %p67 = por %p65, %p66
      %p68 = scmp.ne.s32.totalorder %s60, %s62
      %p69 = scmp.eq.s32.totalorder %s24, 3
      %p70 = por %p68, %p69
      %p71 = scmp.ne.s32.totalorder %s62, %s63
      %p72 = scmp.eq.s32.totalorder %s24, 0
      %p73 = por %p71, %p72
      %p74 = scmp.ne.s32.totalorder %s62, %s63
      %p75 = scmp.eq.s32.totalorder %s25, 3
      %p76 = por %p74, %p75
      %p78 = scmp.ne.s32.totalorder %s63, %s77
      %p79 = scmp.eq.s32.totalorder %s25, 0
      %p80 = por %p78, %p79
      %s82 = sadd.s32 %s81, 1
      %p85 = scmp.eq.s32.totalorder %s19, 3
      %p86 = scmp.ne.s32.totalorder %s81, %s83
      %p87 = scmp.eq.s32.totalorder %s19, 0
      %p88 = por %p86, %p87
      %p89 = scmp.ne.s32.totalorder %s81, %s83
      %p90 = scmp.eq.s32.totalorder %s24, 3
      %p91 = por %p89, %p90
      %p92 = scmp.ne.s32.totalorder %s83, %s84
      %p93 = scmp.eq.s32.totalorder %s24, 0
      %p94 = por %p92, %p93
      %p95 = scmp.ne.s32.totalorder %s83, %s84
      %p96 = scmp.eq.s32.totalorder %s25, 3
      %p97 = por %p95, %p96
      %p99 = scmp.ne.s32.totalorder %s84, %s98
      %p100 = scmp.eq.s32.totalorder %s25, 0
      %p101 = por %p99, %p100
      %s103 = sadd.s32 %s102, 1
      %p106 = scmp.eq.s32.totalorder %s19, 3
      %p107 = scmp.ne.s32.totalorder %s102, %s104
      %p108 = scmp.eq.s32.totalorder %s19, 0
      %p109 = por %p107, %p108
      %p110 = scmp.ne.s32.totalorder %s102, %s104
      %p111 = scmp.eq.s32.totalorder %s24, 3
      %p112 = por %p110, %p111
      %p113 = scmp.ne.s32.totalorder %s104, %s105
      %p114 = scmp.eq.s32.totalorder %s24, 0
      %p115 = por %p113, %p114
      %p116 = scmp.ne.s32.totalorder %s104, %s105
      %p117 = scmp.eq.s32.totalorder %s25, 3
      %p118 = por %p116, %p117
      %p120 = scmp.ne.s32.totalorder %s105, %s119
      %p121 = scmp.eq.s32.totalorder %s25, 0
      %p122 = por %p120, %p121
      %s124 = sadd.s32 %s123, 1
      %p127 = scmp.eq.s32.totalorder %s19, 3
      %p128 = scmp.ne.s32.totalorder %s123, %s125
      %p129 = scmp.eq.s32.totalorder %s19, 0
      %p130 = por %p128, %p129
      %p131 = scmp.ne.s32.totalorder %s123, %s125
      %p132 = scmp.eq.s32.totalorder %s24, 3
      %p133 = por %p131, %p132
      %p134 = scmp.ne.s32.totalorder %s125, %s126
      %p135 = scmp.eq.s32.totalorder %s24, 0
      %p136 = por %p134, %p135
      %p137 = scmp.ne.s32.totalorder %s125, %s126
      %p138 = scmp.eq.s32.totalorder %s25, 3
      %p139 = por %p137, %p138
      %p141 = scmp.ne.s32.totalorder %s126, %s140
      %p142 = scmp.eq.s32.totalorder %s25, 0
      %p143 = por %p141, %p142
      %s145 = sadd.s32 %s144, 1
      %p148 = scmp.eq.s32.totalorder %s19, 3
      %p149 = scmp.ne.s32.totalorder %s144, %s146
      %p150 = scmp.eq.s32.totalorder %s19, 0
      %p151 = por %p149, %p150
      %p152 = scmp.ne.s32.totalorder %s144, %s146
      %p153 = scmp.eq.s32.totalorder %s24, 3
      %p154 = por %p152, %p153
      %p155 = scmp.ne.s32.totalorder %s146, %s147
      %p156 = scmp.eq.s32.totalorder %s24, 0
      %p157 = por %p155, %p156
      %p158 = scmp.ne.s32.totalorder %s146, %s147
      %p159 = scmp.eq.s32.totalorder %s25, 3
      %p160 = por %p158, %p159
      %p162 = scmp.ne.s32.totalorder %s147, %s161
      %p163 = scmp.eq.s32.totalorder %s25, 0
      %p164 = por %p162, %p163
      %s165 = ssub.s32 %s27, %s34
      %p166 = scmp.eq.s32.totalorder %s165, 0
      %s168 = sadd.s32 %s167, 1
      %s169 = scalar_select %p166, %s167, %s168
      %p172 = pneg %p166
      %p173 = scmp.eq.s32.totalorder %s19, 3
      %p174 = por %p172, %p173
      %p175 = scmp.ne.s32.totalorder %s167, %s170
      %p176 = scmp.eq.s32.totalorder %s19, 0
      %p177 = por %p175, %p176
      %p178 = scmp.ne.s32.totalorder %s167, %s170
      %p179 = scmp.eq.s32.totalorder %s24, 3
      %p180 = por %p178, %p179
      %p181 = scmp.ne.s32.totalorder %s170, %s171
      %p182 = scmp.eq.s32.totalorder %s24, 0
      %p183 = por %p181, %p182
      %p184 = scmp.ne.s32.totalorder %s170, %s171
      %p185 = scmp.eq.s32.totalorder %s25, 3
      %p186 = por %p184, %p185
      %p188 = scmp.ne.s32.totalorder %s171, %s187
      %p189 = scmp.eq.s32.totalorder %s25, 0
      %p190 = por %p188, %p189
      %s191 = ssub.s32 %s26, %s38
      %s192 = ssub.s32 %s27, %s34
      %s193 = sor.u32 %s191, %s192
      %p194 = scmp.eq.s32.totalorder %s193, 0
      %s196 = sadd.s32 %s195, 1
      %s197 = scalar_select %p194, %s195, %s196
      %p200 = pneg %p194
      %p201 = scmp.eq.s32.totalorder %s19, 3
      %p202 = por %p200, %p201
      %p203 = scmp.ne.s32.totalorder %s195, %s198
      %p204 = scmp.eq.s32.totalorder %s19, 0
      %p205 = por %p203, %p204
      %p206 = scmp.ne.s32.totalorder %s195, %s198
      %p207 = scmp.eq.s32.totalorder %s24, 3
      %p208 = por %p206, %p207
      %p209 = scmp.ne.s32.totalorder %s198, %s199
      %p210 = scmp.eq.s32.totalorder %s24, 0
      %p211 = por %p209, %p210
      %p212 = scmp.ne.s32.totalorder %s198, %s199
      %p213 = scmp.eq.s32.totalorder %s25, 3
      %p214 = por %p212, %p213
      %p216 = scmp.ne.s32.totalorder %s199, %s215
      %p217 = scmp.eq.s32.totalorder %s25, 0
      %p218 = por %p216, %p217
      %p219 = scmp.le.s32.totalorder 1, %s19
      %p220 = scmp.lt.s32.totalorder %s19, 5
      %p221 = pnand %p219, %p220
      %p222 = pneg %p221
      // Predicated region
      $region9: #{tpu_custom_call.1} parent=5 // pred_check
        _
      $region10: #{tpu_custom_call.1} parent=5 // pred_check_branch
        %224 = sbr.rel (%p221) target = $region12
      $region11: #{tpu_custom_call.1} parent=5 // pred_region
        %s225 = ssub.s32 %s19, 1
        // Predicated region
        $region13: #{tpu_custom_call.1} parent=11 // pred_check
          %p226 = pneg %p52
        $region14: #{tpu_custom_call.1} parent=11 // pred_check_branch
          %228 = sbr.rel (%p226) target = $region16
        $region15: #{tpu_custom_call.1} parent=11 // pred_region
          %s230 = ssub.s32 9216, 9216
          %231 = vsyncadd [#allocation8], %s230
          %s232 = sshll.u32 [#allocation7], 4
          %s233 = int_to_ptr.vmem [resolvable:$true] %s232
          %238 = dma.hbm_to_vmem [thread:$0]  %s1, 9216, %s233, [#allocation8], 64, 64, 4
        $region16: #{tpu_custom_call.1} parent=11 // pred_fallthru
          _
        // Predicated region
        $region17: #{tpu_custom_call.1} parent=11 // pred_check
          %p239 = pneg %p73
        $region18: #{tpu_custom_call.1} parent=11 // pred_check_branch
          %241 = sbr.rel (%p239) target = $region20
        $region19: #{tpu_custom_call.1} parent=11 // pred_region
          %s243 = ssub.s32 9216, 9216
          %244 = vsyncadd [#allocation11], %s243
          %s245 = sshll.u32 [#allocation10], 4
          %s246 = int_to_ptr.vmem [resolvable:$true] %s245
          %251 = dma.hbm_to_vmem [thread:$0]  %s2, 9216, %s246, [#allocation11], 64, 64, 4
        $region20: #{tpu_custom_call.1} parent=11 // pred_fallthru
          _
        // Predicated region
        $region21: #{tpu_custom_call.1} parent=11 // pred_check
          %p252 = pneg %p94
        $region22: #{tpu_custom_call.1} parent=11 // pred_check_branch
          %254 = sbr.rel (%p252) target = $region24
        $region23: #{tpu_custom_call.1} parent=11 // pred_region
          _
        $region24: #{tpu_custom_call.1} parent=11 // pred_fallthru
          _
        // Predicated region
        $region25: #{tpu_custom_call.1} parent=11 // pred_check
          %p255 = pneg %p115
        $region26: #{tpu_custom_call.1} parent=11 // pred_check_branch
          %257 = sbr.rel (%p255) target = $region28
        $region27: #{tpu_custom_call.1} parent=11 // pred_region
          _
        $region28: #{tpu_custom_call.1} parent=11 // pred_fallthru
          _
        // Predicated region
        $region29: #{tpu_custom_call.1} parent=11 // pred_check
          %p258 = pneg %p136
        $region30: #{tpu_custom_call.1} parent=11 // pred_check_branch
          %260 = sbr.rel (%p258) target = $region32
        $region31: #{tpu_custom_call.1} parent=11 // pred_region
          _
        $region32: #{tpu_custom_call.1} parent=11 // pred_fallthru
          _
        // Predicated region
        $region33: #{tpu_custom_call.1} parent=11 // pred_check
          %p261 = pneg %p157
        $region34: #{tpu_custom_call.1} parent=11 // pred_check_branch
          %263 = sbr.rel (%p261) target = $region36
        $region35: #{tpu_custom_call.1} parent=11 // pred_region
          _
        $region36: #{tpu_custom_call.1} parent=11 // pred_fallthru
          _
      $region12: #{tpu_custom_call.1} parent=5 // pred_fallthru
        _
      %p264 = scmp.lt.s32.totalorder %s19, 4
      // Predicated region
      $region37: #{tpu_custom_call.1} parent=5 // pred_check
        %p265 = pneg %p264
      $region38: #{tpu_custom_call.1} parent=5 // pred_check_branch
        %267 = sbr.rel (%p265) target = $region40
      $region39: #{tpu_custom_call.1} parent=5 // pred_region
        // Predicated region
        $region41: #{tpu_custom_call.1} parent=39 // pred_check
          %p268 = pneg %p177
        $region42: #{tpu_custom_call.1} parent=39 // pred_check_branch
          %270 = sbr.rel (%p268) target = $region44
        $region43: #{tpu_custom_call.1} parent=39 // pred_region
          %p271 = scmp.lt.s32.totalorder %s27, 1
          %s272 = scalar_select %p271, %s27, 1
          %s273 = smul.addr %s272, 30
          %s274 = smul.addr %s273, 8
          %s275 = scalar_lea.vmem %s7, %s274
        $region44: #{tpu_custom_call.1} parent=39 // pred_fallthru
          _
      $region40: #{tpu_custom_call.1} parent=5 // pred_fallthru
        _
      %p276 = scmp.le.s32.totalorder 1, %s19
      %p277 = scmp.lt.s32.totalorder %s19, 5
      %p278 = pnand %p276, %p277
      %p279 = pneg %p278
      // Predicated region
      $region45: #{tpu_custom_call.1} parent=5 // pred_check
        _
      $region46: #{tpu_custom_call.1} parent=5 // pred_check_branch
        %281 = sbr.rel (%p278) target = $region48
      $region47: #{tpu_custom_call.1} parent=5 // pred_region
        %s282 = ssub.s32 %s19, 1
        // Predicated region
        $region49: #{tpu_custom_call.1} parent=47 // pred_check
          %p283 = pneg %p52
        $region50: #{tpu_custom_call.1} parent=47 // pred_check_branch
          %285 = sbr.rel (%p283) target = $region52
        $region51: #{tpu_custom_call.1} parent=47 // pred_region
          %286 = dma.done [#allocation8], 9216
        $region52: #{tpu_custom_call.1} parent=47 // pred_fallthru
          _
        // Predicated region
        $region53: #{tpu_custom_call.1} parent=47 // pred_check
          %p287 = pneg %p73
        $region54: #{tpu_custom_call.1} parent=47 // pred_check_branch
          %289 = sbr.rel (%p287) target = $region56
        $region55: #{tpu_custom_call.1} parent=47 // pred_region
          %290 = dma.done [#allocation11], 9216
        $region56: #{tpu_custom_call.1} parent=47 // pred_fallthru
          _
        %p291 = pneg %p52
        %p292 = pneg %p49
        %p293 = pneg %p73
        %p294 = pneg %p70
        %p295 = pneg %p94
        %p296 = pneg %p91
        %p297 = pneg %p115
        %p298 = pneg %p112
        %p299 = pneg %p136
        %p300 = pneg %p133
        %p301 = pneg %p157
        %p302 = pneg %p154
        %p303 = scmp.lt.s32.totalorder %s29, 1
        %s304 = scalar_select %p303, %s29, 1
        %s305 = smul.addr %s304, 30
        %s306 = smul.addr %s305, 8
        %s307 = scalar_lea.vmem %s7, %s306
        %p308 = pneg %p183
        %p309 = pneg %p180
        %p310 = pneg %p211
        %p311 = pneg %p208
        %s312 = sand.u32 %s198, 1
        %s313 = scalar_lea.sflag [#allocation9], %s312
        %s314 = sand.u32 %s198, 1
        %s315 = smul.addr %s314, 128
        %s316 = scalar_lea.vmem [#allocation12], %s315
        %p317 = scmp.lt.s32.totalorder %s29, 1
        %s318 = scalar_select %p317, %s29, 1
        %s319 = smul.addr %s318, 30
        %s320 = smul.addr %s319, 8
        %s321 = scalar_lea.vmem %s7, %s320
        %s322 = smul.u32 8, %s29
        %p324 = scmp.lt.s32.totalorder %s29, 0
        %s325 = ssub.s32 0, %s29
        %s326 = scalar_select %p324, %s325, %s29
        %s327 = sand.u32 %s326, 1
        %s328 = ssub.s32 0, %s327
        %s329 = scalar_select %p324, %s328, %s327
        %p330 = scmp.ne.s32.totalorder %s329, 0
        %p331 = scmp.lt.s32.totalorder %s329, 0
        %p332 = pnand %p331, %p330
        %p333 = pneg %p332
        %s334 = sadd.s32 %s329, 2
        %s335 = scalar_select %p333, %s334, %s329
        %p336 = scmp.eq.s32.totalorder %s29, 0
        // Predicated region
        $region57: #{tpu_custom_call.1} parent=47 // pred_check
          %p337 = pneg %p336
        $region58: #{tpu_custom_call.1} parent=47 // pred_check_branch
          %339 = sbr.rel (%p337) target = $region60
        $region59: #{tpu_custom_call.1} parent=47 // pred_region
          %s340 = smul.u32 %s28, 480
          %s341 = sshra.s32 %s340, 3
          %s342 = sand.u32 %s340, 7
          %s343 = smul.addr %s341, 4
          %s344 = scalar_lea.vmem %s0, %s343
          %p346 = scmp.lt.u32.totalorder 144, 8
          %p347 = pneg %p346
          // Predicated region
          $region61: #{tpu_custom_call.1} parent=59 // pred_check
            _
          $region62: #{tpu_custom_call.1} parent=59 // pred_check_branch
            %349 = sbr.rel (%p346) target = $region64
          $region63: #{tpu_custom_call.1} parent=59 // pred_region
            %s364 = sand.u32 144, 7
            %p365 = scmp.eq.s32.totalorder %s364, 0
            // Predicated region
            $region76: #{tpu_custom_call.1} parent=63 // pred_check
              %p366 = pneg %p365
            $region77: #{tpu_custom_call.1} parent=63 // pred_check_branch
              %368 = sbr.rel (%p366) target = $region79
            $region78: #{tpu_custom_call.1} parent=63 // pred_region
              loop: start=0, step=1, limit=1
              $region80: #{tpu_custom_call.1} parent=78 // loop_pre_header
                _
              $region81: #{tpu_custom_call.1} parent=78 // loop_header
                %s370 = sphi 0, %s374
                %p371 = scmp.ge.s32.totalorder %s370, 1
                %s375 = sphi %s344, %s344
                %s376 = sphi [#allocation2], [#allocation2]
              $region82: #{tpu_custom_call.1} parent=78 // loop_header_branch
                %373 = sbr.rel (%p371) target = $region86
              $region83: #{tpu_custom_call.1} parent=78 // loop_body
                %v377 = vld [vmem:[%s375] sm:$0xff]
                %378 = vst [vmem:[%s376] sm:$0xff] %v377
                %v379 = vld [vmem:[%s375 + $0x8] sm:$0xff]
                %380 = vst [vmem:[%s376 + $0x8] sm:$0xff] %v379
                %v381 = vld [vmem:[%s375 + $0x10] sm:$0xff]
                %382 = vst [vmem:[%s376 + $0x10] sm:$0xff] %v381
                %v383 = vld [vmem:[%s375 + $0x18] sm:$0xff]
                %384 = vst [vmem:[%s376 + $0x18] sm:$0xff] %v383
                %v385 = vld [vmem:[%s375 + $0x20] sm:$0xff]
                %386 = vst [vmem:[%s376 + $0x20] sm:$0xff] %v385
                %v387 = vld [vmem:[%s375 + $0x28] sm:$0xff]
                %388 = vst [vmem:[%s376 + $0x28] sm:$0xff] %v387
                %v389 = vld [vmem:[%s375 + $0x30] sm:$0xff]
                %390 = vst [vmem:[%s376 + $0x30] sm:$0xff] %v389
                %v391 = vld [vmem:[%s375 + $0x38] sm:$0xff]
                %392 = vst [vmem:[%s376 + $0x38] sm:$0xff] %v391
                %v393 = vld [vmem:[%s375 + $0x40] sm:$0xff]
                %394 = vst [vmem:[%s376 + $0x40] sm:$0xff] %v393
                %v395 = vld [vmem:[%s375 + $0x48] sm:$0xff]
                %396 = vst [vmem:[%s376 + $0x48] sm:$0xff] %v395
                %v397 = vld [vmem:[%s375 + $0x50] sm:$0xff]
                %398 = vst [vmem:[%s376 + $0x50] sm:$0xff] %v397
                %v399 = vld [vmem:[%s375 + $0x58] sm:$0xff]
                %400 = vst [vmem:[%s376 + $0x58] sm:$0xff] %v399
                %v401 = vld [vmem:[%s375 + $0x60] sm:$0xff]
                %402 = vst [vmem:[%s376 + $0x60] sm:$0xff] %v401
                %v403 = vld [vmem:[%s375 + $0x68] sm:$0xff]
                %404 = vst [vmem:[%s376 + $0x68] sm:$0xff] %v403
                %v405 = vld [vmem:[%s375 + $0x70] sm:$0xff]
                %406 = vst [vmem:[%s376 + $0x70] sm:$0xff] %v405
                %v407 = vld [vmem:[%s375 + $0x78] sm:$0xff]
                %408 = vst [vmem:[%s376 + $0x78] sm:$0xff] %v407
                %v409 = vld [vmem:[%s375 + $0x80] sm:$0xff]
                %410 = vst [vmem:[%s376 + $0x80] sm:$0xff] %v409
                %v411 = vld [vmem:[%s375 + $0x88] sm:$0xff]
                %412 = vst [vmem:[%s376 + $0x88] sm:$0xff] %v411
              $region84: #{tpu_custom_call.1} parent=78 // loop_footer
                %s374 = sadd.s32 1, %s370
              $region85: #{tpu_custom_call.1} parent=78 // loop_footer_branch
                %369 = sbr.rel target = $region81
              $region86: #{tpu_custom_call.1} parent=78 // loop_exit
                _
            $region79: #{tpu_custom_call.1} parent=63 // pred_fallthru
              _
            %p413 = pneg %p365
            // Predicated region
            $region87: #{tpu_custom_call.1} parent=63 // pred_check
              _
            $region88: #{tpu_custom_call.1} parent=63 // pred_check_branch
              %415 = sbr.rel (%p365) target = $region90
            $region89: #{tpu_custom_call.1} parent=63 // pred_region
              %s416 = sand.u32 144, 7
            $region90: #{tpu_custom_call.1} parent=63 // pred_fallthru
              _
          $region64: #{tpu_custom_call.1} parent=59 // pred_fallthru
            _
          // Predicated region
          $region65: #{tpu_custom_call.1} parent=59 // pred_check
            %p350 = pneg %p346
          $region66: #{tpu_custom_call.1} parent=59 // pred_check_branch
            %352 = sbr.rel (%p350) target = $region68
          $region67: #{tpu_custom_call.1} parent=59 // pred_region
            %s353 = sshllo.u32 0, 144
            loop: start=0, step=1, limit=1
            $region69: #{tpu_custom_call.1} parent=67 // loop_pre_header
              _
            $region70: #{tpu_custom_call.1} parent=67 // loop_header
              %s355 = sphi 0, %s359
              %p356 = scmp.ge.s32.totalorder %s355, 1
              %s360 = sphi %s344, %s344
              %s361 = sphi [#allocation2], [#allocation2]
            $region71: #{tpu_custom_call.1} parent=67 // loop_header_branch
              %358 = sbr.rel (%p356) target = $region75
            $region72: #{tpu_custom_call.1} parent=67 // loop_body
              %v362 = vld [vmem:[%s360] sm:%s353]
              %363 = vst [vmem:[%s361] sm:%s353] %v362
            $region73: #{tpu_custom_call.1} parent=67 // loop_footer
              %s359 = sadd.s32 1, %s355
            $region74: #{tpu_custom_call.1} parent=67 // loop_footer_branch
              %354 = sbr.rel target = $region70
            $region75: #{tpu_custom_call.1} parent=67 // loop_exit
              _
          $region68: #{tpu_custom_call.1} parent=59 // pred_fallthru
            _
          // Predicated region
          $region91: #{tpu_custom_call.1} parent=59 // pred_check
            _
          $region92: #{tpu_custom_call.1} parent=59 // pred_check_branch
            %419 = sbr.rel (0) target = $region94
          $region93: #{tpu_custom_call.1} parent=59 // pred_region
            %420 = vsyncadd [#allocation6], 2304
          $region94: #{tpu_custom_call.1} parent=59 // pred_fallthru
            _
        $region60: #{tpu_custom_call.1} parent=47 // pred_fallthru
          _
        %s421 = smul.u32 %s335, 18
        %s422 = smul.addr %s421, 8
        %s423 = scalar_lea.vmem [#allocation2], %s422
        %s424 = scalar_lea.sflag [#allocation6], %s335
        %s425 = smul.u32 4, 36
        %s426 = smul.u32 %s425, 1
        %s427 = sshll.u32 %s426, 4
        %428 = dma.done %s424, %s427
        %s429 = sadd.s32 %s29, 1
        %p430 = scmp.lt.s32.totalorder %s429, 2
        // Predicated region
        $region95: #{tpu_custom_call.1} parent=47 // pred_check
          %p431 = pneg %p430
        $region96: #{tpu_custom_call.1} parent=47 // pred_check_branch
          %433 = sbr.rel (%p431) target = $region98
        $region97: #{tpu_custom_call.1} parent=47 // pred_region
          %s434 = ssub.s32 1, %s335
          %s435 = smul.u32 %s28, 480
          %s436 = smul.u32 %s429, 192
          %s437 = sadd.s32 %s435, %s436
          %s438 = sshra.s32 %s437, 3
          %s439 = sand.u32 %s437, 7
          %s440 = smul.addr %s438, 4
          %s441 = scalar_lea.vmem %s0, %s440
          %s442 = smul.u32 %s434, 18
          %s443 = smul.addr %s442, 8
          %s444 = scalar_lea.vmem [#allocation2], %s443
          %s445 = scalar_lea.sflag [#allocation6], %s434
          %p447 = scmp.lt.u32.totalorder 144, 8
          %p448 = pneg %p447
          // Predicated region
          $region99: #{tpu_custom_call.1} parent=97 // pred_check
            _
          $region100: #{tpu_custom_call.1} parent=97 // pred_check_branch
            %450 = sbr.rel (%p447) target = $region102
          $region101: #{tpu_custom_call.1} parent=97 // pred_region
            %s465 = sand.u32 144, 7
            %p466 = scmp.eq.s32.totalorder %s465, 0
            // Predicated region
            $region114: #{tpu_custom_call.1} parent=101 // pred_check
              %p467 = pneg %p466
            $region115: #{tpu_custom_call.1} parent=101 // pred_check_branch
              %469 = sbr.rel (%p467) target = $region117
            $region116: #{tpu_custom_call.1} parent=101 // pred_region
              loop: start=0, step=1, limit=1
              $region118: #{tpu_custom_call.1} parent=116 // loop_pre_header
                _
              $region119: #{tpu_custom_call.1} parent=116 // loop_header
                %s471 = sphi 0, %s475
                %p472 = scmp.ge.s32.totalorder %s471, 1
                %s476 = sphi %s441, %s441
                %s477 = sphi %s444, %s444
              $region120: #{tpu_custom_call.1} parent=116 // loop_header_branch
                %474 = sbr.rel (%p472) target = $region124
              $region121: #{tpu_custom_call.1} parent=116 // loop_body
                %v478 = vld [vmem:[%s476] sm:$0xff]
                %479 = vst [vmem:[%s477] sm:$0xff] %v478
                %v480 = vld [vmem:[%s476 + $0x8] sm:$0xff]
                %481 = vst [vmem:[%s477 + $0x8] sm:$0xff] %v480
                %v482 = vld [vmem:[%s476 + $0x10] sm:$0xff]
                %483 = vst [vmem:[%s477 + $0x10] sm:$0xff] %v482
                %v484 = vld [vmem:[%s476 + $0x18] sm:$0xff]
                %485 = vst [vmem:[%s477 + $0x18] sm:$0xff] %v484
                %v486 = vld [vmem:[%s476 + $0x20] sm:$0xff]
                %487 = vst [vmem:[%s477 + $0x20] sm:$0xff] %v486
                %v488 = vld [vmem:[%s476 + $0x28] sm:$0xff]
                %489 = vst [vmem:[%s477 + $0x28] sm:$0xff] %v488
                %v490 = vld [vmem:[%s476 + $0x30] sm:$0xff]
                %491 = vst [vmem:[%s477 + $0x30] sm:$0xff] %v490
                %v492 = vld [vmem:[%s476 + $0x38] sm:$0xff]
                %493 = vst [vmem:[%s477 + $0x38] sm:$0xff] %v492
                %v494 = vld [vmem:[%s476 + $0x40] sm:$0xff]
                %495 = vst [vmem:[%s477 + $0x40] sm:$0xff] %v494
                %v496 = vld [vmem:[%s476 + $0x48] sm:$0xff]
                %497 = vst [vmem:[%s477 + $0x48] sm:$0xff] %v496
                %v498 = vld [vmem:[%s476 + $0x50] sm:$0xff]
                %499 = vst [vmem:[%s477 + $0x50] sm:$0xff] %v498
                %v500 = vld [vmem:[%s476 + $0x58] sm:$0xff]
                %501 = vst [vmem:[%s477 + $0x58] sm:$0xff] %v500
                %v502 = vld [vmem:[%s476 + $0x60] sm:$0xff]
                %503 = vst [vmem:[%s477 + $0x60] sm:$0xff] %v502
                %v504 = vld [vmem:[%s476 + $0x68] sm:$0xff]
                %505 = vst [vmem:[%s477 + $0x68] sm:$0xff] %v504
                %v506 = vld [vmem:[%s476 + $0x70] sm:$0xff]
                %507 = vst [vmem:[%s477 + $0x70] sm:$0xff] %v506
                %v508 = vld [vmem:[%s476 + $0x78] sm:$0xff]
                %509 = vst [vmem:[%s477 + $0x78] sm:$0xff] %v508
                %v510 = vld [vmem:[%s476 + $0x80] sm:$0xff]
                %511 = vst [vmem:[%s477 + $0x80] sm:$0xff] %v510
                %v512 = vld [vmem:[%s476 + $0x88] sm:$0xff]
                %513 = vst [vmem:[%s477 + $0x88] sm:$0xff] %v512
              $region122: #{tpu_custom_call.1} parent=116 // loop_footer
                %s475 = sadd.s32 1, %s471
              $region123: #{tpu_custom_call.1} parent=116 // loop_footer_branch
                %470 = sbr.rel target = $region119
              $region124: #{tpu_custom_call.1} parent=116 // loop_exit
                _
            $region117: #{tpu_custom_call.1} parent=101 // pred_fallthru
              _
            %p514 = pneg %p466
            // Predicated region
            $region125: #{tpu_custom_call.1} parent=101 // pred_check
              _
            $region126: #{tpu_custom_call.1} parent=101 // pred_check_branch
              %516 = sbr.rel (%p466) target = $region128
            $region127: #{tpu_custom_call.1} parent=101 // pred_region
              %s517 = sand.u32 144, 7
            $region128: #{tpu_custom_call.1} parent=101 // pred_fallthru
              _
          $region102: #{tpu_custom_call.1} parent=97 // pred_fallthru
            _
          // Predicated region
          $region103: #{tpu_custom_call.1} parent=97 // pred_check
            %p451 = pneg %p447
          $region104: #{tpu_custom_call.1} parent=97 // pred_check_branch
            %453 = sbr.rel (%p451) target = $region106
          $region105: #{tpu_custom_call.1} parent=97 // pred_region
            %s454 = sshllo.u32 0, 144
            loop: start=0, step=1, limit=1
            $region107: #{tpu_custom_call.1} parent=105 // loop_pre_header
              _
            $region108: #{tpu_custom_call.1} parent=105 // loop_header
              %s456 = sphi 0, %s460
              %p457 = scmp.ge.s32.totalorder %s456, 1
              %s461 = sphi %s441, %s441
              %s462 = sphi %s444, %s444
            $region109: #{tpu_custom_call.1} parent=105 // loop_header_branch
              %459 = sbr.rel (%p457) target = $region113
            $region110: #{tpu_custom_call.1} parent=105 // loop_body
              %v463 = vld [vmem:[%s461] sm:%s454]
              %464 = vst [vmem:[%s462] sm:%s454] %v463
            $region111: #{tpu_custom_call.1} parent=105 // loop_footer
              %s460 = sadd.s32 1, %s456
            $region112: #{tpu_custom_call.1} parent=105 // loop_footer_branch
              %455 = sbr.rel target = $region108
            $region113: #{tpu_custom_call.1} parent=105 // loop_exit
              _
          $region106: #{tpu_custom_call.1} parent=97 // pred_fallthru
            _
          // Predicated region
          $region129: #{tpu_custom_call.1} parent=97 // pred_check
            _
          $region130: #{tpu_custom_call.1} parent=97 // pred_check_branch
            %520 = sbr.rel (0) target = $region132
          $region131: #{tpu_custom_call.1} parent=97 // pred_region
            %521 = vsyncadd %s445, 2304
          $region132: #{tpu_custom_call.1} parent=97 // pred_fallthru
            _
        $region98: #{tpu_custom_call.1} parent=47 // pred_fallthru
          _
        %v522 = vld [vmem:[%s423] sm:$0xff]
        %v523 = vld [vmem:[%s423 + $0x8] sm:$0xff]
        %v524 = vld [vmem:[%s423 + $0x10] sm:$0xff]
        %v525 = vld [vmem:[%s423 + $0x18] sm:$0xff]
        %v526 = vld [vmem:[%s423 + $0x20] sm:$0xff]
        %v527 = vld [vmem:[%s423 + $0x28] sm:$0xff]
        %v528 = vld [vmem:[%s423 + $0x30] sm:$0xff]
        %v529 = vld [vmem:[%s423 + $0x38] sm:$0xff]
        %v530 = vld [vmem:[%s423 + $0x40] sm:$0xff]
        %v531 = vld [vmem:[%s423 + $0x48] sm:$0xff]
        %v532 = vld [vmem:[%s423 + $0x50] sm:$0xff]
        %v533 = vld [vmem:[%s423 + $0x58] sm:$0xff]
        %v534 = vld [vmem:[%s423 + $0x60] sm:$0xff]
        %v535 = vld [vmem:[%s423 + $0x68] sm:$0xff]
        %v536 = vld [vmem:[%s423 + $0x70] sm:$0xff]
        %v537 = vld [vmem:[#allocation7] sm:$0xf]
        %v538 = vld [vmem:[#allocation7 + $0x4] sm:$0xf]
        %v539 = vld [vmem:[#allocation7 + $0x8] sm:$0xf]
        %v540 = vld [vmem:[#allocation7 + $0xc] sm:$0xf]
        %v541 = vld [vmem:[#allocation7 + $0x10] sm:$0xf]
        %v542 = vld [vmem:[#allocation7 + $0x14] sm:$0xf]
        %v543 = vld [vmem:[#allocation7 + $0x18] sm:$0xf]
        %v544 = vld [vmem:[#allocation7 + $0x1c] sm:$0xf]
        %v545 = vld [vmem:[#allocation7 + $0x20] sm:$0xf]
        %v546 = vld [vmem:[#allocation7 + $0x24] sm:$0xf]
        %v547 = vld [vmem:[#allocation7 + $0x28] sm:$0xf]
        %v548 = vld [vmem:[#allocation7 + $0x2c] sm:$0xf]
        %v549 = vld [vmem:[#allocation7 + $0x30] sm:$0xf]
        %v550 = vld [vmem:[#allocation7 + $0x34] sm:$0xf]
        %v551 = vld [vmem:[#allocation7 + $0x38] sm:$0xf]
        %v552 = vld [vmem:[#allocation7 + $0x3c] sm:$0xf]
        %v553 = vld [vmem:[%s423 + $0x8] sm:$0xf0]
        %v554 = vld [vmem:[%s423 + $0x78] sm:$0xff]
        %v555 = vld [vmem:[%s423 + $0x80] sm:$0xf]
        %s556 = scalar_lea.vmem [#allocation7], 192
        %v557 = vld [vmem:[%s556] sm:$0xf]
        %v558 = vld [vmem:[%s556 + $0x4] sm:$0xf]
        %v559 = vld [vmem:[%s556 + $0x8] sm:$0xf]
        %v560 = vld [vmem:[%s556 + $0xc] sm:$0xf]
        %v561 = vld [vmem:[%s556 + $0x10] sm:$0xf]
        %v562 = vld [vmem:[%s556 + $0x14] sm:$0xf]
        %v563 = vld [vmem:[%s556 + $0x18] sm:$0xf]
        %v564 = vld [vmem:[%s556 + $0x1c] sm:$0xf]
        %v565 = vld [vmem:[%s556 + $0x20] sm:$0xf]
        %v566 = vld [vmem:[%s556 + $0x24] sm:$0xf]
        %v567 = vld [vmem:[%s556 + $0x28] sm:$0xf]
        %v568 = vld [vmem:[%s556 + $0x2c] sm:$0xf]
        %v569 = vld [vmem:[%s556 + $0x30] sm:$0xf]
        %v570 = vld [vmem:[%s556 + $0x34] sm:$0xf]
        %v571 = vld [vmem:[%s556 + $0x38] sm:$0xf]
        %v572 = vld [vmem:[%s556 + $0x3c] sm:$0xf]
        %vm589 = vcmask 1043456
        %v590 = vrot.slane %v553, 4
        %v591 = vrot.slane %v524, 4
        %v592 = vsel %vm589, %v590, %v591
        %v593 = vrot.slane %v525, 4
        %v594 = vsel %vm589, %v591, %v593
        %v595 = vrot.slane %v526, 4
        %v596 = vsel %vm589, %v593, %v595
        %v597 = vrot.slane %v527, 4
        %v598 = vsel %vm589, %v595, %v597
        %v599 = vrot.slane %v528, 4
        %v600 = vsel %vm589, %v597, %v599
        %v601 = vrot.slane %v529, 4
        %v602 = vsel %vm589, %v599, %v601
        %v603 = vrot.slane %v530, 4
        %v604 = vsel %vm589, %v601, %v603
        %v605 = vrot.slane %v531, 4
        %v606 = vsel %vm589, %v603, %v605
        %v607 = vrot.slane %v532, 4
        %v608 = vsel %vm589, %v605, %v607
        %v609 = vrot.slane %v533, 4
        %v610 = vsel %vm589, %v607, %v609
        %v611 = vrot.slane %v534, 4
        %v612 = vsel %vm589, %v609, %v611
        %v613 = vrot.slane %v535, 4
        %v614 = vsel %vm589, %v611, %v613
        %v615 = vrot.slane %v536, 4
        %v616 = vsel %vm589, %v613, %v615
        %v617 = vrot.slane %v554, 4
        %v618 = vsel %vm589, %v615, %v617
        %v619 = vrot.slane %v555, 4
        %v620 = vsel %vm589, %v617, %v619
        %v652 = vunpack.c.l.b16 %v557
        %v653 = vunpack.c.l.b16 %v558
        %v654 = vunpack.c.l.b16 %v559
        %v655 = vunpack.c.l.b16 %v560
        %v656 = vunpack.c.l.b16 %v561
        %v657 = vunpack.c.l.b16 %v562
        %v658 = vunpack.c.l.b16 %v563
        %v659 = vunpack.c.l.b16 %v564
        %v660 = vunpack.c.l.b16 %v565
        %v661 = vunpack.c.l.b16 %v566
        %v662 = vunpack.c.l.b16 %v567
        %v663 = vunpack.c.l.b16 %v568
        %v664 = vunpack.c.l.b16 %v569
        %v665 = vunpack.c.l.b16 %v570
        %v666 = vunpack.c.l.b16 %v571
        %v667 = vunpack.c.l.b16 %v572
        %v668 = vpack.c.b16 %v653, %v652
        %v669 = vpack.c.b16 %v655, %v654
        %v670 = vpack.c.b16 %v657, %v656
        %v671 = vpack.c.b16 %v659, %v658
        %v672 = vpack.c.b16 %v661, %v660
        %v673 = vpack.c.b16 %v663, %v662
        %v674 = vpack.c.b16 %v665, %v664
        %v675 = vpack.c.b16 %v667, %v666
        %684 = vmatprep.subr.bf16.mxu0 0
        %685 = vmatpush1.bf16.msra.mxu0 %v668
        %686 = vmatprep.subr.bf16.mxu0 0
        %687 = vmatpush1.bf16.msra.mxu0 %v669
        %688 = vmatprep.subr.bf16.mxu0 0
        %689 = vmatpush1.bf16.msra.mxu0 %v670
        %690 = vmatprep.subr.bf16.mxu0 0
        %691 = vmatpush1.bf16.msra.mxu0 %v671
        %692 = vmatprep.subr.bf16.mxu0 0
        %693 = vmatpush1.bf16.msra.mxu0 %v672
        %694 = vmatprep.subr.bf16.mxu0 0
        %695 = vmatpush1.bf16.msra.mxu0 %v673
        %696 = vmatprep.subr.bf16.mxu0 0
        %697 = vmatpush1.bf16.msra.mxu0 %v674
        %698 = vmatprep.subr.bf16.mxu0 0
        %699 = vmatpush1.bf16.msra.mxu0 %v675
        %700 = vmatprep.subr.bf16.mxu0 0
        %701 = vmatpush1.bf16.msra.mxu0 0
        %702 = vmatprep.subr.bf16.mxu0 0
        %703 = vmatpush1.bf16.msra.mxu0 0
        %704 = vmatprep.subr.bf16.mxu0 0
        %705 = vmatpush1.bf16.msra.mxu0 0
        %706 = vmatprep.subr.bf16.mxu0 0
        %707 = vmatpush1.bf16.msra.mxu0 0
        %708 = vmatprep.subr.bf16.mxu0 0
        %709 = vmatpush1.bf16.msra.mxu0 0
        %710 = vmatprep.subr.bf16.mxu0 0
        %711 = vmatpush1.bf16.msra.mxu0 0
        %712 = vmatprep.subr.bf16.mxu0 0
        %713 = vmatpush1.bf16.msra.mxu0 0
        %714 = vmatprep.subr.bf16.mxu0 0
        %715 = vmatpush1.bf16.msra.mxu0 0
        %716 = vmatprep.mubr.bf16.mxu0 0
        %717 = vmatmul.mubr.bf16.gmra.mrb[0].mxu0 %v592
        %v718 = vpop.f32.mrb[0].mxu0
        %v719 = vadd.f32 0.0, %v718
        %v720 = vpop.f32.mrb[0].mxu0
        %v721 = vpop.f32.mrb[0].mxu0
        %v722 = vadd.f32 0.0, %v721
        %v723 = vpop.f32.mrb[0].mxu0
        %724 = vmatprep.mubr.bf16.mxu0 0
        %725 = vmatmul.mubr.bf16.gmra.mrb[0].mxu0 %v594
        %v726 = vpop.f32.mrb[0].mxu0
        %v727 = vadd.f32 0.0, %v726
        %v728 = vpop.f32.mrb[0].mxu0
        %v729 = vpop.f32.mrb[0].mxu0
        %v730 = vadd.f32 0.0, %v729
        %v731 = vpop.f32.mrb[0].mxu0
        %732 = vmatprep.mubr.bf16.mxu0 0
        %733 = vmatmul.mubr.bf16.gmra.mrb[0].mxu0 %v596
        %v734 = vpop.f32.mrb[0].mxu0
        %v735 = vadd.f32 0.0, %v734
        %v736 = vpop.f32.mrb[0].mxu0
        %v737 = vpop.f32.mrb[0].mxu0
        %v738 = vadd.f32 0.0, %v737
        %v739 = vpop.f32.mrb[0].mxu0
        %740 = vmatprep.mubr.bf16.mxu0 0
        %741 = vmatmul.mubr.bf16.gmra.mrb[0].mxu0 %v598
        %v742 = vpop.f32.mrb[0].mxu0
        %v743 = vadd.f32 0.0, %v742
        %v744 = vpop.f32.mrb[0].mxu0
        %v745 = vpop.f32.mrb[0].mxu0
        %v746 = vadd.f32 0.0, %v745
        %v747 = vpop.f32.mrb[0].mxu0
        %748 = vmatprep.mubr.bf16.mxu0 0
        %749 = vmatmul.mubr.bf16.gmra.mrb[0].mxu0 %v600
        %v750 = vpop.f32.mrb[0].mxu0
        %v751 = vadd.f32 0.0, %v750
        %v752 = vpop.f32.mrb[0].mxu0
        %v753 = vpop.f32.mrb[0].mxu0
        %v754 = vadd.f32 0.0, %v753
        %v755 = vpop.f32.mrb[0].mxu0
        %756 = vmatprep.mubr.bf16.mxu0 0
        %757 = vmatmul.mubr.bf16.gmra.mrb[0].mxu0 %v602
        %v758 = vpop.f32.mrb[0].mxu0
        %v759 = vadd.f32 0.0, %v758
        %v760 = vpop.f32.mrb[0].mxu0
        %v761 = vpop.f32.mrb[0].mxu0
        %v762 = vadd.f32 0.0, %v761
        %v763 = vpop.f32.mrb[0].mxu0
        %764 = vmatprep.mubr.bf16.mxu0 0
        %765 = vmatmul.mubr.bf16.gmra.mrb[0].mxu0 %v604
        %v766 = vpop.f32.mrb[0].mxu0
        %v767 = vadd.f32 0.0, %v766
        %v768 = vpop.f32.mrb[0].mxu0
        %v769 = vpop.f32.mrb[0].mxu0
        %v770 = vadd.f32 0.0, %v769
        %v771 = vpop.f32.mrb[0].mxu0
        %772 = vmatprep.mubr.bf16.mxu0 0
        %773 = vmatmul.mubr.bf16.gmra.mrb[0].mxu0 %v606
        %v774 = vpop.f32.mrb[0].mxu0
        %v775 = vadd.f32 0.0, %v774
        %v776 = vpop.f32.mrb[0].mxu0
        %v777 = vpop.f32.mrb[0].mxu0
        %v778 = vadd.f32 0.0, %v777
        %v779 = vpop.f32.mrb[0].mxu0
        %780 = vmatprep.mubr.bf16.mxu0 0
        %781 = vmatmul.mubr.bf16.gmra.mrb[0].mxu0 %v608
        %v782 = vpop.f32.mrb[0].mxu0
        %v783 = vadd.f32 0.0, %v782
        %v784 = vpop.f32.mrb[0].mxu0
        %v785 = vpop.f32.mrb[0].mxu0
        %v786 = vadd.f32 0.0, %v785
        %v787 = vpop.f32.mrb[0].mxu0
        %788 = vmatprep.mubr.bf16.mxu0 0
        %789 = vmatmul.mubr.bf16.gmra.mrb[0].mxu0 %v610
        %v790 = vpop.f32.mrb[0].mxu0
        %v791 = vadd.f32 0.0, %v790
        %v792 = vpop.f32.mrb[0].mxu0
        %v793 = vpop.f32.mrb[0].mxu0
        %v794 = vadd.f32 0.0, %v793
        %v795 = vpop.f32.mrb[0].mxu0
        %796 = vmatprep.mubr.bf16.mxu0 0
        %797 = vmatmul.mubr.bf16.gmra.mrb[0].mxu0 %v612
        %v798 = vpop.f32.mrb[0].mxu0
        %v799 = vadd.f32 0.0, %v798
        %v800 = vpop.f32.mrb[0].mxu0
        %v801 = vpop.f32.mrb[0].mxu0
        %v802 = vadd.f32 0.0, %v801
        %v803 = vpop.f32.mrb[0].mxu0
        %804 = vmatprep.mubr.bf16.mxu0 0
        %805 = vmatmul.mubr.bf16.gmra.mrb[0].mxu0 %v614
        %v806 = vpop.f32.mrb[0].mxu0
        %v807 = vadd.f32 0.0, %v806
        %v808 = vpop.f32.mrb[0].mxu0
        %v809 = vpop.f32.mrb[0].mxu0
        %v810 = vadd.f32 0.0, %v809
        %v811 = vpop.f32.mrb[0].mxu0
        %812 = vmatprep.mubr.bf16.mxu0 0
        %813 = vmatmul.mubr.bf16.gmra.mrb[0].mxu0 %v616
        %v814 = vpop.f32.mrb[0].mxu0
        %v815 = vadd.f32 0.0, %v814
        %v816 = vpop.f32.mrb[0].mxu0
        %v817 = vpop.f32.mrb[0].mxu0
        %v818 = vadd.f32 0.0, %v817
        %v819 = vpop.f32.mrb[0].mxu0
        %820 = vmatprep.mubr.bf16.mxu0 0
        %821 = vmatmul.mubr.bf16.gmra.mrb[0].mxu0 %v618
        %v822 = vpop.f32.mrb[0].mxu0
        %v823 = vadd.f32 0.0, %v822
        %v824 = vpop.f32.mrb[0].mxu0
        %v825 = vpop.f32.mrb[0].mxu0
        %v826 = vadd.f32 0.0, %v825
        %v827 = vpop.f32.mrb[0].mxu0
        %828 = vmatprep.mubr.bf16.mxu0 0
        %829 = vmatmul.mubr.bf16.gmra.mrb[0].mxu0 %v620
        %v830 = vpop.f32.mrb[0].mxu0
        %v831 = vadd.f32 0.0, %v830
        %v832 = vpop.f32.mrb[0].mxu0
        %v833 = vpop.f32.mrb[0].mxu0
        %v834 = vadd.f32 0.0, %v833
        %v835 = vpop.f32.mrb[0].mxu0
        %836 = vdwg.mxu0
        %v853 = vunpack.c.l.b16 %v537
        %v854 = vunpack.c.l.b16 %v538
        %v855 = vunpack.c.l.b16 %v539
        %v856 = vunpack.c.l.b16 %v540
        %v857 = vunpack.c.l.b16 %v541
        %v858 = vunpack.c.l.b16 %v542
        %v859 = vunpack.c.l.b16 %v543
        %v860 = vunpack.c.l.b16 %v544
        %v861 = vunpack.c.l.b16 %v545
        %v862 = vunpack.c.l.b16 %v546
        %v863 = vunpack.c.l.b16 %v547
        %v864 = vunpack.c.l.b16 %v548
        %v865 = vunpack.c.l.b16 %v549
        %v866 = vunpack.c.l.b16 %v550
        %v867 = vunpack.c.l.b16 %v551
        %v868 = vunpack.c.l.b16 %v552
        %v869 = vpack.c.b16 %v854, %v853
        %v870 = vpack.c.b16 %v856, %v855
        %v871 = vpack.c.b16 %v858, %v857
        %v872 = vpack.c.b16 %v860, %v859
        %v873 = vpack.c.b16 %v862, %v861
        %v874 = vpack.c.b16 %v864, %v863
        %v875 = vpack.c.b16 %v866, %v865
        %v876 = vpack.c.b16 %v868, %v867
        %885 = vmatprep.subr.bf16.mxu0 0
        %886 = vmatpush1.bf16.msra.mxu0 %v869
        %887 = vmatprep.subr.bf16.mxu0 0
        %888 = vmatpush1.bf16.msra.mxu0 %v870
        %889 = vmatprep.subr.bf16.mxu0 0
        %890 = vmatpush1.bf16.msra.mxu0 %v871
        %891 = vmatprep.subr.bf16.mxu0 0
        %892 = vmatpush1.bf16.msra.mxu0 %v872
        %893 = vmatprep.subr.bf16.mxu0 0
        %894 = vmatpush1.bf16.msra.mxu0 %v873
        %895 = vmatprep.subr.bf16.mxu0 0
        %896 = vmatpush1.bf16.msra.mxu0 %v874
        %897 = vmatprep.subr.bf16.mxu0 0
        %898 = vmatpush1.bf16.msra.mxu0 %v875
        %899 = vmatprep.subr.bf16.mxu0 0
        %900 = vmatpush1.bf16.msra.mxu0 %v876
        %901 = vmatprep.subr.bf16.mxu0 0
        %902 = vmatpush1.bf16.msra.mxu0 0
        %903 = vmatprep.subr.bf16.mxu0 0
        %904 = vmatpush1.bf16.msra.mxu0 0
        %905 = vmatprep.subr.bf16.mxu0 0
        %906 = vmatpush1.bf16.msra.mxu0 0
        %907 = vmatprep.subr.bf16.mxu0 0
        %908 = vmatpush1.bf16.msra.mxu0 0
        %909 = vmatprep.subr.bf16.mxu0 0
        %910 = vmatpush1.bf16.msra.mxu0 0
        %911 = vmatprep.subr.bf16.mxu0 0
        %912 = vmatpush1.bf16.msra.mxu0 0
        %913 = vmatprep.subr.bf16.mxu0 0
        %914 = vmatpush1.bf16.msra.mxu0 0
        %915 = vmatprep.subr.bf16.mxu0 0
        %916 = vmatpush1.bf16.msra.mxu0 0
        %917 = vmatprep.mubr.bf16.mxu0 0
        %918 = vmatmul.mubr.bf16.gmra.mrb[0].mxu0 %v522
        %v919 = vpop.f32.mrb[0].mxu0
        %v920 = vadd.f32 %v719, %v919
        %v921 = vpop.f32.mrb[0].mxu0
        %v922 = vpop.f32.mrb[0].mxu0
        %v923 = vadd.f32 %v722, %v922
        %v924 = vpop.f32.mrb[0].mxu0
        %925 = vmatprep.mubr.bf16.mxu0 0
        %926 = vmatmul.mubr.bf16.gmra.mrb[0].mxu0 %v523
        %v927 = vpop.f32.mrb[0].mxu0
        %v928 = vadd.f32 %v727, %v927
        %v929 = vpop.f32.mrb[0].mxu0
        %v930 = vpop.f32.mrb[0].mxu0
        %v931 = vadd.f32 %v730, %v930
        %v932 = vpop.f32.mrb[0].mxu0
        %933 = vmatprep.mubr.bf16.mxu0 0
        %934 = vmatmul.mubr.bf16.gmra.mrb[0].mxu0 %v524
        %v935 = vpop.f32.mrb[0].mxu0
        %v936 = vadd.f32 %v735, %v935
        %v937 = vpop.f32.mrb[0].mxu0
        %v938 = vpop.f32.mrb[0].mxu0
        %v939 = vadd.f32 %v738, %v938
        %v940 = vpop.f32.mrb[0].mxu0
        %941 = vmatprep.mubr.bf16.mxu0 0
        %942 = vmatmul.mubr.bf16.gmra.mrb[0].mxu0 %v525
        %v943 = vpop.f32.mrb[0].mxu0
        %v944 = vadd.f32 %v743, %v943
        %v945 = vpop.f32.mrb[0].mxu0
        %v946 = vpop.f32.mrb[0].mxu0
        %v947 = vadd.f32 %v746, %v946
        %v948 = vpop.f32.mrb[0].mxu0
        %949 = vmatprep.mubr.bf16.mxu0 0
        %950 = vmatmul.mubr.bf16.gmra.mrb[0].mxu0 %v526
        %v951 = vpop.f32.mrb[0].mxu0
        %v952 = vadd.f32 %v751, %v951
        %v953 = vpop.f32.mrb[0].mxu0
        %v954 = vpop.f32.mrb[0].mxu0
        %v955 = vadd.f32 %v754, %v954
        %v956 = vpop.f32.mrb[0].mxu0
        %957 = vmatprep.mubr.bf16.mxu0 0
        %958 = vmatmul.mubr.bf16.gmra.mrb[0].mxu0 %v527
        %v959 = vpop.f32.mrb[0].mxu0
        %v960 = vadd.f32 %v759, %v959
        %v961 = vpop.f32.mrb[0].mxu0
        %v962 = vpop.f32.mrb[0].mxu0
        %v963 = vadd.f32 %v762, %v962
        %v964 = vpop.f32.mrb[0].mxu0
        %965 = vmatprep.mubr.bf16.mxu0 0
        %966 = vmatmul.mubr.bf16.gmra.mrb[0].mxu0 %v528
        %v967 = vpop.f32.mrb[0].mxu0
        %v968 = vadd.f32 %v767, %v967
        %v969 = vpop.f32.mrb[0].mxu0
        %v970 = vpop.f32.mrb[0].mxu0
        %v971 = vadd.f32 %v770, %v970
        %v972 = vpop.f32.mrb[0].mxu0
        %973 = vmatprep.mubr.bf16.mxu0 0
        %974 = vmatmul.mubr.bf16.gmra.mrb[0].mxu0 %v529
        %v975 = vpop.f32.mrb[0].mxu0
        %v976 = vadd.f32 %v775, %v975
        %v977 = vpop.f32.mrb[0].mxu0
        %v978 = vpop.f32.mrb[0].mxu0
        %v979 = vadd.f32 %v778, %v978
        %v980 = vpop.f32.mrb[0].mxu0
        %981 = vmatprep.mubr.bf16.mxu0 0
        %982 = vmatmul.mubr.bf16.gmra.mrb[0].mxu0 %v530
        %v983 = vpop.f32.mrb[0].mxu0
        %v984 = vadd.f32 %v783, %v983
        %v985 = vpop.f32.mrb[0].mxu0
        %v986 = vpop.f32.mrb[0].mxu0
        %v987 = vadd.f32 %v786, %v986
        %v988 = vpop.f32.mrb[0].mxu0
        %989 = vmatprep.mubr.bf16.mxu0 0
        %990 = vmatmul.mubr.bf16.gmra.mrb[0].mxu0 %v531
        %v991 = vpop.f32.mrb[0].mxu0
        %v992 = vadd.f32 %v791, %v991
        %v993 = vpop.f32.mrb[0].mxu0
        %v994 = vpop.f32.mrb[0].mxu0
        %v995 = vadd.f32 %v794, %v994
        %v996 = vpop.f32.mrb[0].mxu0
        %997 = vmatprep.mubr.bf16.mxu0 0
        %998 = vmatmul.mubr.bf16.gmra.mrb[0].mxu0 %v532
        %v999 = vpop.f32.mrb[0].mxu0
        %v1000 = vadd.f32 %v799, %v999
        %v1001 = vpop.f32.mrb[0].mxu0
        %v1002 = vpop.f32.mrb[0].mxu0
        %v1003 = vadd.f32 %v802, %v1002
        %v1004 = vpop.f32.mrb[0].mxu0
        %1005 = vmatprep.mubr.bf16.mxu0 0
        %1006 = vmatmul.mubr.bf16.gmra.mrb[0].mxu0 %v533
        %v1007 = vpop.f32.mrb[0].mxu0
        %v1008 = vadd.f32 %v807, %v1007
        %v1009 = vpop.f32.mrb[0].mxu0
        %v1010 = vpop.f32.mrb[0].mxu0
        %v1011 = vadd.f32 %v810, %v1010
        %v1012 = vpop.f32.mrb[0].mxu0
        %1013 = vmatprep.mubr.bf16.mxu0 0
        %1014 = vmatmul.mubr.bf16.gmra.mrb[0].mxu0 %v534
        %v1015 = vpop.f32.mrb[0].mxu0
        %v1016 = vadd.f32 %v815, %v1015
        %v1017 = vpop.f32.mrb[0].mxu0
        %v1018 = vpop.f32.mrb[0].mxu0
        %v1019 = vadd.f32 %v818, %v1018
        %v1020 = vpop.f32.mrb[0].mxu0
        %1021 = vmatprep.mubr.bf16.mxu0 0
        %1022 = vmatmul.mubr.bf16.gmra.mrb[0].mxu0 %v535
        %v1023 = vpop.f32.mrb[0].mxu0
        %v1024 = vadd.f32 %v823, %v1023
        %v1025 = vpop.f32.mrb[0].mxu0
        %v1026 = vpop.f32.mrb[0].mxu0
        %v1027 = vadd.f32 %v826, %v1026
        %v1028 = vpop.f32.mrb[0].mxu0
        %1029 = vmatprep.mubr.bf16.mxu0 0
        %1030 = vmatmul.mubr.bf16.gmra.mrb[0].mxu0 %v536
        %v1031 = vpop.f32.mrb[0].mxu0
        %v1032 = vadd.f32 %v831, %v1031
        %v1033 = vpop.f32.mrb[0].mxu0
        %v1034 = vpop.f32.mrb[0].mxu0
        %v1035 = vadd.f32 %v834, %v1034
        %v1036 = vpop.f32.mrb[0].mxu0
        %1037 = vdwg.mxu0
        %v1038 = vld [vmem:[%s423 + $0x18] sm:$0xff]
        %v1039 = vld [vmem:[%s423 + $0x20] sm:$0xff]
        %v1040 = vld [vmem:[%s423 + $0x28] sm:$0xff]
        %v1041 = vld [vmem:[%s423 + $0x30] sm:$0xff]
        %v1042 = vld [vmem:[%s423 + $0x38] sm:$0xff]
        %v1043 = vld [vmem:[%s423 + $0x40] sm:$0xff]
        %v1044 = vld [vmem:[%s423 + $0x48] sm:$0xff]
        %v1045 = vld [vmem:[%s423 + $0x50] sm:$0xff]
        %v1046 = vld [vmem:[%s423 + $0x58] sm:$0xff]
        %v1047 = vld [vmem:[%s423 + $0x60] sm:$0xff]
        %v1048 = vld [vmem:[%s423 + $0x68] sm:$0xff]
        %v1049 = vld [vmem:[%s423 + $0x70] sm:$0xff]
        %v1050 = vld [vmem:[%s423 + $0x78] sm:$0xff]
        %v1051 = vld [vmem:[%s423 + $0x80] sm:$0xff]
        %v1052 = vld [vmem:[%s423 + $0x88] sm:$0xff]
        %s1053 = scalar_lea.vmem [#allocation7], 384
        %v1054 = vld [vmem:[%s1053] sm:$0xf]
        %v1055 = vld [vmem:[%s1053 + $0x4] sm:$0xf]
        %v1056 = vld [vmem:[%s1053 + $0x8] sm:$0xf]
        %v1057 = vld [vmem:[%s1053 + $0xc] sm:$0xf]
        %v1058 = vld [vmem:[%s1053 + $0x10] sm:$0xf]
        %v1059 = vld [vmem:[%s1053 + $0x14] sm:$0xf]
        %v1060 = vld [vmem:[%s1053 + $0x18] sm:$0xf]
        %v1061 = vld [vmem:[%s1053 + $0x1c] sm:$0xf]
        %v1062 = vld [vmem:[%s1053 + $0x20] sm:$0xf]
        %v1063 = vld [vmem:[%s1053 + $0x24] sm:$0xf]
        %v1064 = vld [vmem:[%s1053 + $0x28] sm:$0xf]
        %v1065 = vld [vmem:[%s1053 + $0x2c] sm:$0xf]
        %v1066 = vld [vmem:[%s1053 + $0x30] sm:$0xf]
        %v1067 = vld [vmem:[%s1053 + $0x34] sm:$0xf]
        %v1068 = vld [vmem:[%s1053 + $0x38] sm:$0xf]
        %v1069 = vld [vmem:[%s1053 + $0x3c] sm:$0xf]
        %v1086 = vunpack.c.l.b16 %v1054
        %v1087 = vunpack.c.l.b16 %v1055
        %v1088 = vunpack.c.l.b16 %v1056
        %v1089 = vunpack.c.l.b16 %v1057
        %v1090 = vunpack.c.l.b16 %v1058
        %v1091 = vunpack.c.l.b16 %v1059
        %v1092 = vunpack.c.l.b16 %v1060
        %v1093 = vunpack.c.l.b16 %v1061
        %v1094 = vunpack.c.l.b16 %v1062
        %v1095 = vunpack.c.l.b16 %v1063
        %v1096 = vunpack.c.l.b16 %v1064
        %v1097 = vunpack.c.l.b16 %v1065
        %v1098 = vunpack.c.l.b16 %v1066
        %v1099 = vunpack.c.l.b16 %v1067
        %v1100 = vunpack.c.l.b16 %v1068
        %v1101 = vunpack.c.l.b16 %v1069
        %v1102 = vpack.c.b16 %v1087, %v1086
        %v1103 = vpack.c.b16 %v1089, %v1088
        %v1104 = vpack.c.b16 %v1091, %v1090
        %v1105 = vpack.c.b16 %v1093, %v1092
        %v1106 = vpack.c.b16 %v1095, %v1094
        %v1107 = vpack.c.b16 %v1097, %v1096
        %v1108 = vpack.c.b16 %v1099, %v1098
        %v1109 = vpack.c.b16 %v1101, %v1100
        %1118 = vmatprep.subr.bf16.mxu0 0
        %1119 = vmatpush1.bf16.msra.mxu0 %v1102
        %1120 = vmatprep.subr.bf16.mxu0 0
        %1121 = vmatpush1.bf16.msra.mxu0 %v1103
        %1122 = vmatprep.subr.bf16.mxu0 0
        %1123 = vmatpush1.bf16.msra.mxu0 %v1104
        %1124 = vmatprep.subr.bf16.mxu0 0
        %1125 = vmatpush1.bf16.msra.mxu0 %v1105
        %1126 = vmatprep.subr.bf16.mxu0 0
        %1127 = vmatpush1.bf16.msra.mxu0 %v1106
        %1128 = vmatprep.subr.bf16.mxu0 0
        %1129 = vmatpush1.bf16.msra.mxu0 %v1107
        %1130 = vmatprep.subr.bf16.mxu0 0
        %1131 = vmatpush1.bf16.msra.mxu0 %v1108
        %1132 = vmatprep.subr.bf16.mxu0 0
        %1133 = vmatpush1.bf16.msra.mxu0 %v1109
        %1134 = vmatprep.subr.bf16.mxu0 0
        %1135 = vmatpush1.bf16.msra.mxu0 0
        %1136 = vmatprep.subr.bf16.mxu0 0
        %1137 = vmatpush1.bf16.msra.mxu0 0
        %1138 = vmatprep.subr.bf16.mxu0 0
        %1139 = vmatpush1.bf16.msra.mxu0 0
        %1140 = vmatprep.subr.bf16.mxu0 0
        %1141 = vmatpush1.bf16.msra.mxu0 0
        %1142 = vmatprep.subr.bf16.mxu0 0
        %1143 = vmatpush1.bf16.msra.mxu0 0
        %1144 = vmatprep.subr.bf16.mxu0 0
        %1145 = vmatpush1.bf16.msra.mxu0 0
        %1146 = vmatprep.subr.bf16.mxu0 0
        %1147 = vmatpush1.bf16.msra.mxu0 0
        %1148 = vmatprep.subr.bf16.mxu0 0
        %1149 = vmatpush1.bf16.msra.mxu0 0
        %1150 = vmatprep.mubr.bf16.mxu0 0
        %1151 = vmatmul.mubr.bf16.gmra.mrb[0].mxu0 %v1038
        %v1152 = vpop.f32.mrb[0].mxu0
        %v1153 = vadd.f32 0.0, %v1152
        %v1154 = vpop.f32.mrb[0].mxu0
        %v1155 = vpop.f32.mrb[0].mxu0
        %v1156 = vadd.f32 0.0, %v1155
        %v1157 = vpop.f32.mrb[0].mxu0
        %1158 = vmatprep.mubr.bf16.mxu0 0
        %1159 = vmatmul.mubr.bf16.gmra.mrb[0].mxu0 %v1039
        %v1160 = vpop.f32.mrb[0].mxu0
        %v1161 = vadd.f32 0.0, %v1160
        %v1162 = vpop.f32.mrb[0].mxu0
        %v1163 = vpop.f32.mrb[0].mxu0
        %v1164 = vadd.f32 0.0, %v1163
        %v1165 = vpop.f32.mrb[0].mxu0
        %1166 = vmatprep.mubr.bf16.mxu0 0
        %1167 = vmatmul.mubr.bf16.gmra.mrb[0].mxu0 %v1040
        %v1168 = vpop.f32.mrb[0].mxu0
        %v1169 = vadd.f32 0.0, %v1168
        %v1170 = vpop.f32.mrb[0].mxu0
        %v1171 = vpop.f32.mrb[0].mxu0
        %v1172 = vadd.f32 0.0, %v1171
        %v1173 = vpop.f32.mrb[0].mxu0
        %1174 = vmatprep.mubr.bf16.mxu0 0
        %1175 = vmatmul.mubr.bf16.gmra.mrb[0].mxu0 %v1041
        %v1176 = vpop.f32.mrb[0].mxu0
        %v1177 = vadd.f32 0.0, %v1176
        %v1178 = vpop.f32.mrb[0].mxu0
        %v1179 = vpop.f32.mrb[0].mxu0
        %v1180 = vadd.f32 0.0, %v1179
        %v1181 = vpop.f32.mrb[0].mxu0
        %1182 = vmatprep.mubr.bf16.mxu0 0
        %1183 = vmatmul.mubr.bf16.gmra.mrb[0].mxu0 %v1042
        %v1184 = vpop.f32.mrb[0].mxu0
        %v1185 = vadd.f32 0.0, %v1184
        %v1186 = vpop.f32.mrb[0].mxu0
        %v1187 = vpop.f32.mrb[0].mxu0
        %v1188 = vadd.f32 0.0, %v1187
        %v1189 = vpop.f32.mrb[0].mxu0
        %1190 = vmatprep.mubr.bf16.mxu0 0
        %1191 = vmatmul.mubr.bf16.gmra.mrb[0].mxu0 %v1043
        %v1192 = vpop.f32.mrb[0].mxu0
        %v1193 = vadd.f32 0.0, %v1192
        %v1194 = vpop.f32.mrb[0].mxu0
        %v1195 = vpop.f32.mrb[0].mxu0
        %v1196 = vadd.f32 0.0, %v1195
        %v1197 = vpop.f32.mrb[0].mxu0
        %1198 = vmatprep.mubr.bf16.mxu0 0
        %1199 = vmatmul.mubr.bf16.gmra.mrb[0].mxu0 %v1044
        %v1200 = vpop.f32.mrb[0].mxu0
        %v1201 = vadd.f32 0.0, %v1200
        %v1202 = vpop.f32.mrb[0].mxu0
        %v1203 = vpop.f32.mrb[0].mxu0
        %v1204 = vadd.f32 0.0, %v1203
        %v1205 = vpop.f32.mrb[0].mxu0
        %1206 = vmatprep.mubr.bf16.mxu0 0
        %1207 = vmatmul.mubr.bf16.gmra.mrb[0].mxu0 %v1045
        %v1208 = vpop.f32.mrb[0].mxu0
        %v1209 = vadd.f32 0.0, %v1208
        %v1210 = vpop.f32.mrb[0].mxu0
        %v1211 = vpop.f32.mrb[0].mxu0
        %v1212 = vadd.f32 0.0, %v1211
        %v1213 = vpop.f32.mrb[0].mxu0
        %1214 = vmatprep.mubr.bf16.mxu0 0
        %1215 = vmatmul.mubr.bf16.gmra.mrb[0].mxu0 %v1046
        %v1216 = vpop.f32.mrb[0].mxu0
        %v1217 = vadd.f32 0.0, %v1216
        %v1218 = vpop.f32.mrb[0].mxu0
        %v1219 = vpop.f32.mrb[0].mxu0
        %v1220 = vadd.f32 0.0, %v1219
        %v1221 = vpop.f32.mrb[0].mxu0
        %1222 = vmatprep.mubr.bf16.mxu0 0
        %1223 = vmatmul.mubr.bf16.gmra.mrb[0].mxu0 %v1047
        %v1224 = vpop.f32.mrb[0].mxu0
        %v1225 = vadd.f32 0.0, %v1224
        %v1226 = vpop.f32.mrb[0].mxu0
        %v1227 = vpop.f32.mrb[0].mxu0
        %v1228 = vadd.f32 0.0, %v1227
        %v1229 = vpop.f32.mrb[0].mxu0
        %1230 = vmatprep.mubr.bf16.mxu0 0
        %1231 = vmatmul.mubr.bf16.gmra.mrb[0].mxu0 %v1048
        %v1232 = vpop.f32.mrb[0].mxu0
        %v1233 = vadd.f32 0.0, %v1232
        %v1234 = vpop.f32.mrb[0].mxu0
        %v1235 = vpop.f32.mrb[0].mxu0
        %v1236 = vadd.f32 0.0, %v1235
        %v1237 = vpop.f32.mrb[0].mxu0
        %1238 = vmatprep.mubr.bf16.mxu0 0
        %1239 = vmatmul.mubr.bf16.gmra.mrb[0].mxu0 %v1049
        %v1240 = vpop.f32.mrb[0].mxu0
        %v1241 = vadd.f32 0.0, %v1240
        %v1242 = vpop.f32.mrb[0].mxu0
        %v1243 = vpop.f32.mrb[0].mxu0
        %v1244 = vadd.f32 0.0, %v1243
        %v1245 = vpop.f32.mrb[0].mxu0
        %1246 = vmatprep.mubr.bf16.mxu0 0
        %1247 = vmatmul.mubr.bf16.gmra.mrb[0].mxu0 %v1050
        %v1248 = vpop.f32.mrb[0].mxu0
        %v1249 = vadd.f32 0.0, %v1248
        %v1250 = vpop.f32.mrb[0].mxu0
        %v1251 = vpop.f32.mrb[0].mxu0
        %v1252 = vadd.f32 0.0, %v1251
        %v1253 = vpop.f32.mrb[0].mxu0
        %1254 = vmatprep.mubr.bf16.mxu0 0
        %1255 = vmatmul.mubr.bf16.gmra.mrb[0].mxu0 %v1051
        %v1256 = vpop.f32.mrb[0].mxu0
        %v1257 = vadd.f32 0.0, %v1256
        %v1258 = vpop.f32.mrb[0].mxu0
        %v1259 = vpop.f32.mrb[0].mxu0
        %v1260 = vadd.f32 0.0, %v1259
        %v1261 = vpop.f32.mrb[0].mxu0
        %1262 = vmatprep.mubr.bf16.mxu0 0
        %1263 = vmatmul.mubr.bf16.gmra.mrb[0].mxu0 %v1052
        %v1264 = vpop.f32.mrb[0].mxu0
        %v1265 = vadd.f32 0.0, %v1264
        %v1266 = vpop.f32.mrb[0].mxu0
        %v1267 = vpop.f32.mrb[0].mxu0
        %v1268 = vadd.f32 0.0, %v1267
        %v1269 = vpop.f32.mrb[0].mxu0
        %1270 = vdwg.mxu0
        %v1271 = vadd.f32 %v920, %v1153
        %v1272 = vadd.f32 %v923, %v1156
        %v1273 = vadd.f32 %v928, %v1161
        %v1274 = vadd.f32 %v931, %v1164
        %v1275 = vadd.f32 %v936, %v1169
        %v1276 = vadd.f32 %v939, %v1172
        %v1277 = vadd.f32 %v944, %v1177
        %v1278 = vadd.f32 %v947, %v1180
        %v1279 = vadd.f32 %v952, %v1185
        %v1280 = vadd.f32 %v955, %v1188
        %v1281 = vadd.f32 %v960, %v1193
        %v1282 = vadd.f32 %v963, %v1196
        %v1283 = vadd.f32 %v968, %v1201
        %v1284 = vadd.f32 %v971, %v1204
        %v1285 = vadd.f32 %v976, %v1209
        %v1286 = vadd.f32 %v979, %v1212
        %v1287 = vadd.f32 %v984, %v1217
        %v1288 = vadd.f32 %v987, %v1220
        %v1289 = vadd.f32 %v992, %v1225
        %v1290 = vadd.f32 %v995, %v1228
        %v1291 = vadd.f32 %v1000, %v1233
        %v1292 = vadd.f32 %v1003, %v1236
        %v1293 = vadd.f32 %v1008, %v1241
        %v1294 = vadd.f32 %v1011, %v1244
        %v1295 = vadd.f32 %v1016, %v1249
        %v1296 = vadd.f32 %v1019, %v1252
        %v1297 = vadd.f32 %v1024, %v1257
        %v1298 = vadd.f32 %v1027, %v1260
        %v1299 = vadd.f32 %v1032, %v1265
        %v1300 = vadd.f32 %v1035, %v1268
        %1301 = vst [vmem:[#allocation3] sm:$0xff] %v1271
        %1302 = vst [vmem:[#allocation3 + $0x8] sm:$0xff] %v1272
        %1303 = vst [vmem:[#allocation3 + $0x10] sm:$0xff] %v1273
        %1304 = vst [vmem:[#allocation3 + $0x18] sm:$0xff] %v1274
        %1305 = vst [vmem:[#allocation3 + $0x20] sm:$0xff] %v1275
        %1306 = vst [vmem:[#allocation3 + $0x28] sm:$0xff] %v1276
        %1307 = vst [vmem:[#allocation3 + $0x30] sm:$0xff] %v1277
        %1308 = vst [vmem:[#allocation3 + $0x38] sm:$0xff] %v1278
        %1309 = vst [vmem:[#allocation3 + $0x40] sm:$0xff] %v1279
        %1310 = vst [vmem:[#allocation3 + $0x48] sm:$0xff] %v1280
        %1311 = vst [vmem:[#allocation3 + $0x50] sm:$0xff] %v1281
        %1312 = vst [vmem:[#allocation3 + $0x58] sm:$0xff] %v1282
        %1313 = vst [vmem:[#allocation3 + $0x60] sm:$0xff] %v1283
        %1314 = vst [vmem:[#allocation3 + $0x68] sm:$0xff] %v1284
        %1315 = vst [vmem:[#allocation3 + $0x70] sm:$0xff] %v1285
        %1316 = vst [vmem:[#allocation3 + $0x78] sm:$0xff] %v1286
        %1317 = vst [vmem:[#allocation3 + $0x80] sm:$0xff] %v1287
        %1318 = vst [vmem:[#allocation3 + $0x88] sm:$0xff] %v1288
        %1319 = vst [vmem:[#allocation3 + $0x90] sm:$0xff] %v1289
        %1320 = vst [vmem:[#allocation3 + $0x98] sm:$0xff] %v1290
        %1321 = vst [vmem:[#allocation3 + $0xa0] sm:$0xff] %v1291
        %1322 = vst [vmem:[#allocation3 + $0xa8] sm:$0xff] %v1292
        %1323 = vst [vmem:[#allocation3 + $0xb0] sm:$0xff] %v1293
        %1324 = vst [vmem:[#allocation3 + $0xb8] sm:$0xff] %v1294
        %1325 = vst [vmem:[#allocation3 + $0xc0] sm:$0xff] %v1295
        %1326 = vst [vmem:[#allocation3 + $0xc8] sm:$0xff] %v1296
        %1327 = vst [vmem:[#allocation3 + $0xd0] sm:$0xff] %v1297
        %1328 = vst [vmem:[#allocation3 + $0xd8] sm:$0xff] %v1298
        %1329 = vst [vmem:[#allocation3 + $0xe0] sm:$0xff] %v1299
        %1330 = vst [vmem:[#allocation3 + $0xe8] sm:$0xff] %v1300
        %v1331 = vld [vmem:[%s423] sm:$0xff]
        %v1332 = vld [vmem:[%s423 + $0x8] sm:$0xff]
        %v1333 = vld [vmem:[%s423 + $0x10] sm:$0xff]
        %v1334 = vld [vmem:[%s423 + $0x18] sm:$0xff]
        %v1335 = vld [vmem:[%s423 + $0x20] sm:$0xff]
        %v1336 = vld [vmem:[%s423 + $0x28] sm:$0xff]
        %v1337 = vld [vmem:[%s423 + $0x30] sm:$0xff]
        %v1338 = vld [vmem:[%s423 + $0x38] sm:$0xff]
        %v1339 = vld [vmem:[%s423 + $0x40] sm:$0xff]
        %v1340 = vld [vmem:[%s423 + $0x48] sm:$0xff]
        %v1341 = vld [vmem:[%s423 + $0x50] sm:$0xff]
        %v1342 = vld [vmem:[%s423 + $0x58] sm:$0xff]
        %v1343 = vld [vmem:[%s423 + $0x60] sm:$0xff]
        %v1344 = vld [vmem:[%s423 + $0x68] sm:$0xff]
        %v1345 = vld [vmem:[%s423 + $0x70] sm:$0xff]
        %s1346 = scalar_lea.vmem [#allocation7], 64
        %v1347 = vld [vmem:[%s1346] sm:$0xf]
        %v1348 = vld [vmem:[%s1346 + $0x4] sm:$0xf]
        %v1349 = vld [vmem:[%s1346 + $0x8] sm:$0xf]
        %v1350 = vld [vmem:[%s1346 + $0xc] sm:$0xf]
        %v1351 = vld [vmem:[%s1346 + $0x10] sm:$0xf]
        %v1352 = vld [vmem:[%s1346 + $0x14] sm:$0xf]
        %v1353 = vld [vmem:[%s1346 + $0x18] sm:$0xf]
        %v1354 = vld [vmem:[%s1346 + $0x1c] sm:$0xf]
        %v1355 = vld [vmem:[%s1346 + $0x20] sm:$0xf]
        %v1356 = vld [vmem:[%s1346 + $0x24] sm:$0xf]
        %v1357 = vld [vmem:[%s1346 + $0x28] sm:$0xf]
        %v1358 = vld [vmem:[%s1346 + $0x2c] sm:$0xf]
        %v1359 = vld [vmem:[%s1346 + $0x30] sm:$0xf]
        %v1360 = vld [vmem:[%s1346 + $0x34] sm:$0xf]
        %v1361 = vld [vmem:[%s1346 + $0x38] sm:$0xf]
        %v1362 = vld [vmem:[%s1346 + $0x3c] sm:$0xf]
        %v1363 = vld [vmem:[%s423 + $0x8] sm:$0xf0]
        %v1364 = vld [vmem:[%s423 + $0x78] sm:$0xff]
        %v1365 = vld [vmem:[%s423 + $0x80] sm:$0xf]
        %s1366 = scalar_lea.vmem [#allocation7], 256
        %v1367 = vld [vmem:[%s1366] sm:$0xf]
        %v1368 = vld [vmem:[%s1366 + $0x4] sm:$0xf]
        %v1369 = vld [vmem:[%s1366 + $0x8] sm:$0xf]
        %v1370 = vld [vmem:[%s1366 + $0xc] sm:$0xf]
        %v1371 = vld [vmem:[%s1366 + $0x10] sm:$0xf]
        %v1372 = vld [vmem:[%s1366 + $0x14] sm:$0xf]
        %v1373 = vld [vmem:[%s1366 + $0x18] sm:$0xf]
        %v1374 = vld [vmem:[%s1366 + $0x1c] sm:$0xf]
        %v1375 = vld [vmem:[%s1366 + $0x20] sm:$0xf]
        %v1376 = vld [vmem:[%s1366 + $0x24] sm:$0xf]
        %v1377 = vld [vmem:[%s1366 + $0x28] sm:$0xf]
        %v1378 = vld [vmem:[%s1366 + $0x2c] sm:$0xf]
        %v1379 = vld [vmem:[%s1366 + $0x30] sm:$0xf]
        %v1380 = vld [vmem:[%s1366 + $0x34] sm:$0xf]
        %v1381 = vld [vmem:[%s1366 + $0x38] sm:$0xf]
        %v1382 = vld [vmem:[%s1366 + $0x3c] sm:$0xf]
        %v1399 = vrot.slane %v1363, 4
        %v1400 = vrot.slane %v1333, 4
        %v1401 = vsel %vm589, %v1399, %v1400
        %v1402 = vrot.slane %v1334, 4
        %v1403 = vsel %vm589, %v1400, %v1402
        %v1404 = vrot.slane %v1335, 4
        %v1405 = vsel %vm589, %v1402, %v1404
        %v1406 = vrot.slane %v1336, 4
        %v1407 = vsel %vm589, %v1404, %v1406
        %v1408 = vrot.slane %v1337, 4
        %v1409 = vsel %vm589, %v1406, %v1408
        %v1410 = vrot.slane %v1338, 4
        %v1411 = vsel %vm589, %v1408, %v1410
        %v1412 = vrot.slane %v1339, 4
        %v1413 = vsel %vm589, %v1410, %v1412
        %v1414 = vrot.slane %v1340, 4
        %v1415 = vsel %vm589, %v1412, %v1414
        %v1416 = vrot.slane %v1341, 4
        %v1417 = vsel %vm589, %v1414, %v1416
        %v1418 = vrot.slane %v1342, 4
        %v1419 = vsel %vm589, %v1416, %v1418
        %v1420 = vrot.slane %v1343, 4
        %v1421 = vsel %vm589, %v1418, %v1420
        %v1422 = vrot.slane %v1344, 4
        %v1423 = vsel %vm589, %v1420, %v1422
        %v1424 = vrot.slane %v1345, 4
        %v1425 = vsel %vm589, %v1422, %v1424
        %v1426 = vrot.slane %v1364, 4
        %v1427 = vsel %vm589, %v1424, %v1426
        %v1428 = vrot.slane %v1365, 4
        %v1429 = vsel %vm589, %v1426, %v1428
        %v1461 = vunpack.c.l.b16 %v1367
        %v1462 = vunpack.c.l.b16 %v1368
        %v1463 = vunpack.c.l.b16 %v1369
        %v1464 = vunpack.c.l.b16 %v1370
        %v1465 = vunpack.c.l.b16 %v1371
        %v1466 = vunpack.c.l.b16 %v1372
        %v1467 = vunpack.c.l.b16 %v1373
        %v1468 = vunpack.c.l.b16 %v1374
        %v1469 = vunpack.c.l.b16 %v1375
        %v1470 = vunpack.c.l.b16 %v1376
        %v1471 = vunpack.c.l.b16 %v1377
        %v1472 = vunpack.c.l.b16 %v1378
        %v1473 = vunpack.c.l.b16 %v1379
        %v1474 = vunpack.c.l.b16 %v1380
        %v1475 = vunpack.c.l.b16 %v1381
        %v1476 = vunpack.c.l.b16 %v1382
        %v1477 = vpack.c.b16 %v1462, %v1461
        %v1478 = vpack.c.b16 %v1464, %v1463
        %v1479 = vpack.c.b16 %v1466, %v1465
        %v1480 = vpack.c.b16 %v1468, %v1467
        %v1481 = vpack.c.b16 %v1470, %v1469
        %v1482 = vpack.c.b16 %v1472, %v1471
        %v1483 = vpack.c.b16 %v1474, %v1473
        %v1484 = vpack.c.b16 %v1476, %v1475
        %1493 = vmatprep.subr.bf16.mxu0 0
        %1494 = vmatpush1.bf16.msra.mxu0 %v1477
        %1495 = vmatprep.subr.bf16.mxu0 0
        %1496 = vmatpush1.bf16.msra.mxu0 %v1478
        %1497 = vmatprep.subr.bf16.mxu0 0
        %1498 = vmatpush1.bf16.msra.mxu0 %v1479
        %1499 = vmatprep.subr.bf16.mxu0 0
        %1500 = vmatpush1.bf16.msra.mxu0 %v1480
        %1501 = vmatprep.subr.bf16.mxu0 0
        %1502 = vmatpush1.bf16.msra.mxu0 %v1481
        %1503 = vmatprep.subr.bf16.mxu0 0
        %1504 = vmatpush1.bf16.msra.mxu0 %v1482
        %1505 = vmatprep.subr.bf16.mxu0 0
        %1506 = vmatpush1.bf16.msra.mxu0 %v1483
        %1507 = vmatprep.subr.bf16.mxu0 0
        %1508 = vmatpush1.bf16.msra.mxu0 %v1484
        %1509 = vmatprep.subr.bf16.mxu0 0
        %1510 = vmatpush1.bf16.msra.mxu0 0
        %1511 = vmatprep.subr.bf16.mxu0 0
        %1512 = vmatpush1.bf16.msra.mxu0 0
        %1513 = vmatprep.subr.bf16.mxu0 0
        %1514 = vmatpush1.bf16.msra.mxu0 0
        %1515 = vmatprep.subr.bf16.mxu0 0
        %1516 = vmatpush1.bf16.msra.mxu0 0
        %1517 = vmatprep.subr.bf16.mxu0 0
        %1518 = vmatpush1.bf16.msra.mxu0 0
        %1519 = vmatprep.subr.bf16.mxu0 0
        %1520 = vmatpush1.bf16.msra.mxu0 0
        %1521 = vmatprep.subr.bf16.mxu0 0
        %1522 = vmatpush1.bf16.msra.mxu0 0
        %1523 = vmatprep.subr.bf16.mxu0 0
        %1524 = vmatpush1.bf16.msra.mxu0 0
        %1525 = vmatprep.mubr.bf16.mxu0 0
        %1526 = vmatmul.mubr.bf16.gmra.mrb[0].mxu0 %v1401
        %v1527 = vpop.f32.mrb[0].mxu0
        %v1528 = vadd.f32 0.0, %v1527
        %v1529 = vpop.f32.mrb[0].mxu0
        %v1530 = vpop.f32.mrb[0].mxu0
        %v1531 = vadd.f32 0.0, %v1530
        %v1532 = vpop.f32.mrb[0].mxu0
        %1533 = vmatprep.mubr.bf16.mxu0 0
        %1534 = vmatmul.mubr.bf16.gmra.mrb[0].mxu0 %v1403
        %v1535 = vpop.f32.mrb[0].mxu0
        %v1536 = vadd.f32 0.0, %v1535
        %v1537 = vpop.f32.mrb[0].mxu0
        %v1538 = vpop.f32.mrb[0].mxu0
        %v1539 = vadd.f32 0.0, %v1538
        %v1540 = vpop.f32.mrb[0].mxu0
        %1541 = vmatprep.mubr.bf16.mxu0 0
        %1542 = vmatmul.mubr.bf16.gmra.mrb[0].mxu0 %v1405
        %v1543 = vpop.f32.mrb[0].mxu0
        %v1544 = vadd.f32 0.0, %v1543
        %v1545 = vpop.f32.mrb[0].mxu0
        %v1546 = vpop.f32.mrb[0].mxu0
        %v1547 = vadd.f32 0.0, %v1546
        %v1548 = vpop.f32.mrb[0].mxu0
        %1549 = vmatprep.mubr.bf16.mxu0 0
        %1550 = vmatmul.mubr.bf16.gmra.mrb[0].mxu0 %v1407
        %v1551 = vpop.f32.mrb[0].mxu0
        %v1552 = vadd.f32 0.0, %v1551
        %v1553 = vpop.f32.mrb[0].mxu0
        %v1554 = vpop.f32.mrb[0].mxu0
        %v1555 = vadd.f32 0.0, %v1554
        %v1556 = vpop.f32.mrb[0].mxu0
        %1557 = vmatprep.mubr.bf16.mxu0 0
        %1558 = vmatmul.mubr.bf16.gmra.mrb[0].mxu0 %v1409
        %v1559 = vpop.f32.mrb[0].mxu0
        %v1560 = vadd.f32 0.0, %v1559
        %v1561 = vpop.f32.mrb[0].mxu0
        %v1562 = vpop.f32.mrb[0].mxu0
        %v1563 = vadd.f32 0.0, %v1562
        %v1564 = vpop.f32.mrb[0].mxu0
        %1565 = vmatprep.mubr.bf16.mxu0 0
        %1566 = vmatmul.mubr.bf16.gmra.mrb[0].mxu0 %v1411
        %v1567 = vpop.f32.mrb[0].mxu0
        %v1568 = vadd.f32 0.0, %v1567
        %v1569 = vpop.f32.mrb[0].mxu0
        %v1570 = vpop.f32.mrb[0].mxu0
        %v1571 = vadd.f32 0.0, %v1570
        %v1572 = vpop.f32.mrb[0].mxu0
        %1573 = vmatprep.mubr.bf16.mxu0 0
        %1574 = vmatmul.mubr.bf16.gmra.mrb[0].mxu0 %v1413
        %v1575 = vpop.f32.mrb[0].mxu0
        %v1576 = vadd.f32 0.0, %v1575
        %v1577 = vpop.f32.mrb[0].mxu0
        %v1578 = vpop.f32.mrb[0].mxu0
        %v1579 = vadd.f32 0.0, %v1578
        %v1580 = vpop.f32.mrb[0].mxu0
        %1581 = vmatprep.mubr.bf16.mxu0 0
        %1582 = vmatmul.mubr.bf16.gmra.mrb[0].mxu0 %v1415
        %v1583 = vpop.f32.mrb[0].mxu0
        %v1584 = vadd.f32 0.0, %v1583
        %v1585 = vpop.f32.mrb[0].mxu0
        %v1586 = vpop.f32.mrb[0].mxu0
        %v1587 = vadd.f32 0.0, %v1586
        %v1588 = vpop.f32.mrb[0].mxu0
        %1589 = vmatprep.mubr.bf16.mxu0 0
        %1590 = vmatmul.mubr.bf16.gmra.mrb[0].mxu0 %v1417
        %v1591 = vpop.f32.mrb[0].mxu0
        %v1592 = vadd.f32 0.0, %v1591
        %v1593 = vpop.f32.mrb[0].mxu0
        %v1594 = vpop.f32.mrb[0].mxu0
        %v1595 = vadd.f32 0.0, %v1594
        %v1596 = vpop.f32.mrb[0].mxu0
        %1597 = vmatprep.mubr.bf16.mxu0 0
        %1598 = vmatmul.mubr.bf16.gmra.mrb[0].mxu0 %v1419
        %v1599 = vpop.f32.mrb[0].mxu0
        %v1600 = vadd.f32 0.0, %v1599
        %v1601 = vpop.f32.mrb[0].mxu0
        %v1602 = vpop.f32.mrb[0].mxu0
        %v1603 = vadd.f32 0.0, %v1602
        %v1604 = vpop.f32.mrb[0].mxu0
        %1605 = vmatprep.mubr.bf16.mxu0 0
        %1606 = vmatmul.mubr.bf16.gmra.mrb[0].mxu0 %v1421
        %v1607 = vpop.f32.mrb[0].mxu0
        %v1608 = vadd.f32 0.0, %v1607
        %v1609 = vpop.f32.mrb[0].mxu0
        %v1610 = vpop.f32.mrb[0].mxu0
        %v1611 = vadd.f32 0.0, %v1610
        %v1612 = vpop.f32.mrb[0].mxu0
        %1613 = vmatprep.mubr.bf16.mxu0 0
        %1614 = vmatmul.mubr.bf16.gmra.mrb[0].mxu0 %v1423
        %v1615 = vpop.f32.mrb[0].mxu0
        %v1616 = vadd.f32 0.0, %v1615
        %v1617 = vpop.f32.mrb[0].mxu0
        %v1618 = vpop.f32.mrb[0].mxu0
        %v1619 = vadd.f32 0.0, %v1618
        %v1620 = vpop.f32.mrb[0].mxu0
        %1621 = vmatprep.mubr.bf16.mxu0 0
        %1622 = vmatmul.mubr.bf16.gmra.mrb[0].mxu0 %v1425
        %v1623 = vpop.f32.mrb[0].mxu0
        %v1624 = vadd.f32 0.0, %v1623
        %v1625 = vpop.f32.mrb[0].mxu0
        %v1626 = vpop.f32.mrb[0].mxu0
        %v1627 = vadd.f32 0.0, %v1626
        %v1628 = vpop.f32.mrb[0].mxu0
        %1629 = vmatprep.mubr.bf16.mxu0 0
        %1630 = vmatmul.mubr.bf16.gmra.mrb[0].mxu0 %v1427
        %v1631 = vpop.f32.mrb[0].mxu0
        %v1632 = vadd.f32 0.0, %v1631
        %v1633 = vpop.f32.mrb[0].mxu0
        %v1634 = vpop.f32.mrb[0].mxu0
        %v1635 = vadd.f32 0.0, %v1634
        %v1636 = vpop.f32.mrb[0].mxu0
        %1637 = vmatprep.mubr.bf16.mxu0 0
        %1638 = vmatmul.mubr.bf16.gmra.mrb[0].mxu0 %v1429
        %v1639 = vpop.f32.mrb[0].mxu0
        %v1640 = vadd.f32 0.0, %v1639
        %v1641 = vpop.f32.mrb[0].mxu0
        %v1642 = vpop.f32.mrb[0].mxu0
        %v1643 = vadd.f32 0.0, %v1642
        %v1644 = vpop.f32.mrb[0].mxu0
        %1645 = vdwg.mxu0
        %v1662 = vunpack.c.l.b16 %v1347
        %v1663 = vunpack.c.l.b16 %v1348
        %v1664 = vunpack.c.l.b16 %v1349
        %v1665 = vunpack.c.l.b16 %v1350
        %v1666 = vunpack.c.l.b16 %v1351
        %v1667 = vunpack.c.l.b16 %v1352
        %v1668 = vunpack.c.l.b16 %v1353
        %v1669 = vunpack.c.l.b16 %v1354
        %v1670 = vunpack.c.l.b16 %v1355
        %v1671 = vunpack.c.l.b16 %v1356
        %v1672 = vunpack.c.l.b16 %v1357
        %v1673 = vunpack.c.l.b16 %v1358
        %v1674 = vunpack.c.l.b16 %v1359
        %v1675 = vunpack.c.l.b16 %v1360
        %v1676 = vunpack.c.l.b16 %v1361
        %v1677 = vunpack.c.l.b16 %v1362
        %v1678 = vpack.c.b16 %v1663, %v1662
        %v1679 = vpack.c.b16 %v1665, %v1664
        %v1680 = vpack.c.b16 %v1667, %v1666
        %v1681 = vpack.c.b16 %v1669, %v1668
        %v1682 = vpack.c.b16 %v1671, %v1670
        %v1683 = vpack.c.b16 %v1673, %v1672
        %v1684 = vpack.c.b16 %v1675, %v1674
        %v1685 = vpack.c.b16 %v1677, %v1676
        %1694 = vmatprep.subr.bf16.mxu0 0
        %1695 = vmatpush1.bf16.msra.mxu0 %v1678
        %1696 = vmatprep.subr.bf16.mxu0 0
        %1697 = vmatpush1.bf16.msra.mxu0 %v1679
        %1698 = vmatprep.subr.bf16.mxu0 0
        %1699 = vmatpush1.bf16.msra.mxu0 %v1680
        %1700 = vmatprep.subr.bf16.mxu0 0
        %1701 = vmatpush1.bf16.msra.mxu0 %v1681
        %1702 = vmatprep.subr.bf16.mxu0 0
        %1703 = vmatpush1.bf16.msra.mxu0 %v1682
        %1704 = vmatprep.subr.bf16.mxu0 0
        %1705 = vmatpush1.bf16.msra.mxu0 %v1683
        %1706 = vmatprep.subr.bf16.mxu0 0
        %1707 = vmatpush1.bf16.msra.mxu0 %v1684
        %1708 = vmatprep.subr.bf16.mxu0 0
        %1709 = vmatpush1.bf16.msra.mxu0 %v1685
        %1710 = vmatprep.subr.bf16.mxu0 0
        %1711 = vmatpush1.bf16.msra.mxu0 0
        %1712 = vmatprep.subr.bf16.mxu0 0
        %1713 = vmatpush1.bf16.msra.mxu0 0
        %1714 = vmatprep.subr.bf16.mxu0 0
        %1715 = vmatpush1.bf16.msra.mxu0 0
        %1716 = vmatprep.subr.bf16.mxu0 0
        %1717 = vmatpush1.bf16.msra.mxu0 0
        %1718 = vmatprep.subr.bf16.mxu0 0
        %1719 = vmatpush1.bf16.msra.mxu0 0
        %1720 = vmatprep.subr.bf16.mxu0 0
        %1721 = vmatpush1.bf16.msra.mxu0 0
        %1722 = vmatprep.subr.bf16.mxu0 0
        %1723 = vmatpush1.bf16.msra.mxu0 0
        %1724 = vmatprep.subr.bf16.mxu0 0
        %1725 = vmatpush1.bf16.msra.mxu0 0
        %1726 = vmatprep.mubr.bf16.mxu0 0
        %1727 = vmatmul.mubr.bf16.gmra.mrb[0].mxu0 %v1331
        %v1728 = vpop.f32.mrb[0].mxu0
        %v1729 = vadd.f32 %v1528, %v1728
        %v1730 = vpop.f32.mrb[0].mxu0
        %v1731 = vpop.f32.mrb[0].mxu0
        %v1732 = vadd.f32 %v1531, %v1731
        %v1733 = vpop.f32.mrb[0].mxu0
        %1734 = vmatprep.mubr.bf16.mxu0 0
        %1735 = vmatmul.mubr.bf16.gmra.mrb[0].mxu0 %v1332
        %v1736 = vpop.f32.mrb[0].mxu0
        %v1737 = vadd.f32 %v1536, %v1736
        %v1738 = vpop.f32.mrb[0].mxu0
        %v1739 = vpop.f32.mrb[0].mxu0
        %v1740 = vadd.f32 %v1539, %v1739
        %v1741 = vpop.f32.mrb[0].mxu0
        %1742 = vmatprep.mubr.bf16.mxu0 0
        %1743 = vmatmul.mubr.bf16.gmra.mrb[0].mxu0 %v1333
        %v1744 = vpop.f32.mrb[0].mxu0
        %v1745 = vadd.f32 %v1544, %v1744
        %v1746 = vpop.f32.mrb[0].mxu0
        %v1747 = vpop.f32.mrb[0].mxu0
        %v1748 = vadd.f32 %v1547, %v1747
        %v1749 = vpop.f32.mrb[0].mxu0
        %1750 = vmatprep.mubr.bf16.mxu0 0
        %1751 = vmatmul.mubr.bf16.gmra.mrb[0].mxu0 %v1334
        %v1752 = vpop.f32.mrb[0].mxu0
        %v1753 = vadd.f32 %v1552, %v1752
        %v1754 = vpop.f32.mrb[0].mxu0
        %v1755 = vpop.f32.mrb[0].mxu0
        %v1756 = vadd.f32 %v1555, %v1755
        %v1757 = vpop.f32.mrb[0].mxu0
        %1758 = vmatprep.mubr.bf16.mxu0 0
        %1759 = vmatmul.mubr.bf16.gmra.mrb[0].mxu0 %v1335
        %v1760 = vpop.f32.mrb[0].mxu0
        %v1761 = vadd.f32 %v1560, %v1760
        %v1762 = vpop.f32.mrb[0].mxu0
        %v1763 = vpop.f32.mrb[0].mxu0
        %v1764 = vadd.f32 %v1563, %v1763
        %v1765 = vpop.f32.mrb[0].mxu0
        %1766 = vmatprep.mubr.bf16.mxu0 0
        %1767 = vmatmul.mubr.bf16.gmra.mrb[0].mxu0 %v1336
        %v1768 = vpop.f32.mrb[0].mxu0
        %v1769 = vadd.f32 %v1568, %v1768
        %v1770 = vpop.f32.mrb[0].mxu0
        %v1771 = vpop.f32.mrb[0].mxu0
        %v1772 = vadd.f32 %v1571, %v1771
        %v1773 = vpop.f32.mrb[0].mxu0
        %1774 = vmatprep.mubr.bf16.mxu0 0
        %1775 = vmatmul.mubr.bf16.gmra.mrb[0].mxu0 %v1337
        %v1776 = vpop.f32.mrb[0].mxu0
        %v1777 = vadd.f32 %v1576, %v1776
        %v1778 = vpop.f32.mrb[0].mxu0
        %v1779 = vpop.f32.mrb[0].mxu0
        %v1780 = vadd.f32 %v1579, %v1779
        %v1781 = vpop.f32.mrb[0].mxu0
        %1782 = vmatprep.mubr.bf16.mxu0 0
        %1783 = vmatmul.mubr.bf16.gmra.mrb[0].mxu0 %v1338
        %v1784 = vpop.f32.mrb[0].mxu0
        %v1785 = vadd.f32 %v1584, %v1784
        %v1786 = vpop.f32.mrb[0].mxu0
        %v1787 = vpop.f32.mrb[0].mxu0
        %v1788 = vadd.f32 %v1587, %v1787
        %v1789 = vpop.f32.mrb[0].mxu0
        %1790 = vmatprep.mubr.bf16.mxu0 0
        %1791 = vmatmul.mubr.bf16.gmra.mrb[0].mxu0 %v1339
        %v1792 = vpop.f32.mrb[0].mxu0
        %v1793 = vadd.f32 %v1592, %v1792
        %v1794 = vpop.f32.mrb[0].mxu0
        %v1795 = vpop.f32.mrb[0].mxu0
        %v1796 = vadd.f32 %v1595, %v1795
        %v1797 = vpop.f32.mrb[0].mxu0
        %1798 = vmatprep.mubr.bf16.mxu0 0
        %1799 = vmatmul.mubr.bf16.gmra.mrb[0].mxu0 %v1340
        %v1800 = vpop.f32.mrb[0].mxu0
        %v1801 = vadd.f32 %v1600, %v1800
        %v1802 = vpop.f32.mrb[0].mxu0
        %v1803 = vpop.f32.mrb[0].mxu0
        %v1804 = vadd.f32 %v1603, %v1803
        %v1805 = vpop.f32.mrb[0].mxu0
        %1806 = vmatprep.mubr.bf16.mxu0 0
        %1807 = vmatmul.mubr.bf16.gmra.mrb[0].mxu0 %v1341
        %v1808 = vpop.f32.mrb[0].mxu0
        %v1809 = vadd.f32 %v1608, %v1808
        %v1810 = vpop.f32.mrb[0].mxu0
        %v1811 = vpop.f32.mrb[0].mxu0
        %v1812 = vadd.f32 %v1611, %v1811
        %v1813 = vpop.f32.mrb[0].mxu0
        %1814 = vmatprep.mubr.bf16.mxu0 0
        %1815 = vmatmul.mubr.bf16.gmra.mrb[0].mxu0 %v1342
        %v1816 = vpop.f32.mrb[0].mxu0
        %v1817 = vadd.f32 %v1616, %v1816
        %v1818 = vpop.f32.mrb[0].mxu0
        %v1819 = vpop.f32.mrb[0].mxu0
        %v1820 = vadd.f32 %v1619, %v1819
        %v1821 = vpop.f32.mrb[0].mxu0
        %1822 = vmatprep.mubr.bf16.mxu0 0
        %1823 = vmatmul.mubr.bf16.gmra.mrb[0].mxu0 %v1343
        %v1824 = vpop.f32.mrb[0].mxu0
        %v1825 = vadd.f32 %v1624, %v1824
        %v1826 = vpop.f32.mrb[0].mxu0
        %v1827 = vpop.f32.mrb[0].mxu0
        %v1828 = vadd.f32 %v1627, %v1827
        %v1829 = vpop.f32.mrb[0].mxu0
        %1830 = vmatprep.mubr.bf16.mxu0 0
        %1831 = vmatmul.mubr.bf16.gmra.mrb[0].mxu0 %v1344
        %v1832 = vpop.f32.mrb[0].mxu0
        %v1833 = vadd.f32 %v1632, %v1832
        %v1834 = vpop.f32.mrb[0].mxu0
        %v1835 = vpop.f32.mrb[0].mxu0
        %v1836 = vadd.f32 %v1635, %v1835
        %v1837 = vpop.f32.mrb[0].mxu0
        %1838 = vmatprep.mubr.bf16.mxu0 0
        %1839 = vmatmul.mubr.bf16.gmra.mrb[0].mxu0 %v1345
        %v1840 = vpop.f32.mrb[0].mxu0
        %v1841 = vadd.f32 %v1640, %v1840
        %v1842 = vpop.f32.mrb[0].mxu0
        %v1843 = vpop.f32.mrb[0].mxu0
        %v1844 = vadd.f32 %v1643, %v1843
        %v1845 = vpop.f32.mrb[0].mxu0
        %1846 = vdwg.mxu0
        %v1847 = vld [vmem:[%s423 + $0x18] sm:$0xff]
        %v1848 = vld [vmem:[%s423 + $0x20] sm:$0xff]
        %v1849 = vld [vmem:[%s423 + $0x28] sm:$0xff]
        %v1850 = vld [vmem:[%s423 + $0x30] sm:$0xff]
        %v1851 = vld [vmem:[%s423 + $0x38] sm:$0xff]
        %v1852 = vld [vmem:[%s423 + $0x40] sm:$0xff]
        %v1853 = vld [vmem:[%s423 + $0x48] sm:$0xff]
        %v1854 = vld [vmem:[%s423 + $0x50] sm:$0xff]
        %v1855 = vld [vmem:[%s423 + $0x58] sm:$0xff]
        %v1856 = vld [vmem:[%s423 + $0x60] sm:$0xff]
        %v1857 = vld [vmem:[%s423 + $0x68] sm:$0xff]
        %v1858 = vld [vmem:[%s423 + $0x70] sm:$0xff]
        %v1859 = vld [vmem:[%s423 + $0x78] sm:$0xff]
        %v1860 = vld [vmem:[%s423 + $0x80] sm:$0xff]
        %v1861 = vld [vmem:[%s423 + $0x88] sm:$0xff]
        %s1862 = scalar_lea.vmem [#allocation7], 448
        %v1863 = vld [vmem:[%s1862] sm:$0xf]
        %v1864 = vld [vmem:[%s1862 + $0x4] sm:$0xf]
        %v1865 = vld [vmem:[%s1862 + $0x8] sm:$0xf]
        %v1866 = vld [vmem:[%s1862 + $0xc] sm:$0xf]
        %v1867 = vld [vmem:[%s1862 + $0x10] sm:$0xf]
        %v1868 = vld [vmem:[%s1862 + $0x14] sm:$0xf]
        %v1869 = vld [vmem:[%s1862 + $0x18] sm:$0xf]
        %v1870 = vld [vmem:[%s1862 + $0x1c] sm:$0xf]
        %v1871 = vld [vmem:[%s1862 + $0x20] sm:$0xf]
        %v1872 = vld [vmem:[%s1862 + $0x24] sm:$0xf]
        %v1873 = vld [vmem:[%s1862 + $0x28] sm:$0xf]
        %v1874 = vld [vmem:[%s1862 + $0x2c] sm:$0xf]
        %v1875 = vld [vmem:[%s1862 + $0x30] sm:$0xf]
        %v1876 = vld [vmem:[%s1862 + $0x34] sm:$0xf]
        %v1877 = vld [vmem:[%s1862 + $0x38] sm:$0xf]
        %v1878 = vld [vmem:[%s1862 + $0x3c] sm:$0xf]
        %v1895 = vunpack.c.l.b16 %v1863
        %v1896 = vunpack.c.l.b16 %v1864
        %v1897 = vunpack.c.l.b16 %v1865
        %v1898 = vunpack.c.l.b16 %v1866
        %v1899 = vunpack.c.l.b16 %v1867
        %v1900 = vunpack.c.l.b16 %v1868
        %v1901 = vunpack.c.l.b16 %v1869
        %v1902 = vunpack.c.l.b16 %v1870
        %v1903 = vunpack.c.l.b16 %v1871
        %v1904 = vunpack.c.l.b16 %v1872
        %v1905 = vunpack.c.l.b16 %v1873
        %v1906 = vunpack.c.l.b16 %v1874
        %v1907 = vunpack.c.l.b16 %v1875
        %v1908 = vunpack.c.l.b16 %v1876
        %v1909 = vunpack.c.l.b16 %v1877
        %v1910 = vunpack.c.l.b16 %v1878
        %v1911 = vpack.c.b16 %v1896, %v1895
        %v1912 = vpack.c.b16 %v1898, %v1897
        %v1913 = vpack.c.b16 %v1900, %v1899
        %v1914 = vpack.c.b16 %v1902, %v1901
        %v1915 = vpack.c.b16 %v1904, %v1903
        %v1916 = vpack.c.b16 %v1906, %v1905
        %v1917 = vpack.c.b16 %v1908, %v1907
        %v1918 = vpack.c.b16 %v1910, %v1909
        %1927 = vmatprep.subr.bf16.mxu0 0
        %1928 = vmatpush1.bf16.msra.mxu0 %v1911
        %1929 = vmatprep.subr.bf16.mxu0 0
        %1930 = vmatpush1.bf16.msra.mxu0 %v1912
        %1931 = vmatprep.subr.bf16.mxu0 0
        %1932 = vmatpush1.bf16.msra.mxu0 %v1913
        %1933 = vmatprep.subr.bf16.mxu0 0
        %1934 = vmatpush1.bf16.msra.mxu0 %v1914
        %1935 = vmatprep.subr.bf16.mxu0 0
        %1936 = vmatpush1.bf16.msra.mxu0 %v1915
        %1937 = vmatprep.subr.bf16.mxu0 0
        %1938 = vmatpush1.bf16.msra.mxu0 %v1916
        %1939 = vmatprep.subr.bf16.mxu0 0
        %1940 = vmatpush1.bf16.msra.mxu0 %v1917
        %1941 = vmatprep.subr.bf16.mxu0 0
        %1942 = vmatpush1.bf16.msra.mxu0 %v1918
        %1943 = vmatprep.subr.bf16.mxu0 0
        %1944 = vmatpush1.bf16.msra.mxu0 0
        %1945 = vmatprep.subr.bf16.mxu0 0
        %1946 = vmatpush1.bf16.msra.mxu0 0
        %1947 = vmatprep.subr.bf16.mxu0 0
        %1948 = vmatpush1.bf16.msra.mxu0 0
        %1949 = vmatprep.subr.bf16.mxu0 0
        %1950 = vmatpush1.bf16.msra.mxu0 0
        %1951 = vmatprep.subr.bf16.mxu0 0
        %1952 = vmatpush1.bf16.msra.mxu0 0
        %1953 = vmatprep.subr.bf16.mxu0 0
        %1954 = vmatpush1.bf16.msra.mxu0 0
        %1955 = vmatprep.subr.bf16.mxu0 0
        %1956 = vmatpush1.bf16.msra.mxu0 0
        %1957 = vmatprep.subr.bf16.mxu0 0
        %1958 = vmatpush1.bf16.msra.mxu0 0
        %1959 = vmatprep.mubr.bf16.mxu0 0
        %1960 = vmatmul.mubr.bf16.gmra.mrb[0].mxu0 %v1847
        %v1961 = vpop.f32.mrb[0].mxu0
        %v1962 = vadd.f32 0.0, %v1961
        %v1963 = vpop.f32.mrb[0].mxu0
        %v1964 = vpop.f32.mrb[0].mxu0
        %v1965 = vadd.f32 0.0, %v1964
        %v1966 = vpop.f32.mrb[0].mxu0
        %1967 = vmatprep.mubr.bf16.mxu0 0
        %1968 = vmatmul.mubr.bf16.gmra.mrb[0].mxu0 %v1848
        %v1969 = vpop.f32.mrb[0].mxu0
        %v1970 = vadd.f32 0.0, %v1969
        %v1971 = vpop.f32.mrb[0].mxu0
        %v1972 = vpop.f32.mrb[0].mxu0
        %v1973 = vadd.f32 0.0, %v1972
        %v1974 = vpop.f32.mrb[0].mxu0
        %1975 = vmatprep.mubr.bf16.mxu0 0
        %1976 = vmatmul.mubr.bf16.gmra.mrb[0].mxu0 %v1849
        %v1977 = vpop.f32.mrb[0].mxu0
        %v1978 = vadd.f32 0.0, %v1977
        %v1979 = vpop.f32.mrb[0].mxu0
        %v1980 = vpop.f32.mrb[0].mxu0
        %v1981 = vadd.f32 0.0, %v1980
        %v1982 = vpop.f32.mrb[0].mxu0
        %1983 = vmatprep.mubr.bf16.mxu0 0
        %1984 = vmatmul.mubr.bf16.gmra.mrb[0].mxu0 %v1850
        %v1985 = vpop.f32.mrb[0].mxu0
        %v1986 = vadd.f32 0.0, %v1985
        %v1987 = vpop.f32.mrb[0].mxu0
        %v1988 = vpop.f32.mrb[0].mxu0
        %v1989 = vadd.f32 0.0, %v1988
        %v1990 = vpop.f32.mrb[0].mxu0
        %1991 = vmatprep.mubr.bf16.mxu0 0
        %1992 = vmatmul.mubr.bf16.gmra.mrb[0].mxu0 %v1851
        %v1993 = vpop.f32.mrb[0].mxu0
        %v1994 = vadd.f32 0.0, %v1993
        %v1995 = vpop.f32.mrb[0].mxu0
        %v1996 = vpop.f32.mrb[0].mxu0
        %v1997 = vadd.f32 0.0, %v1996
        %v1998 = vpop.f32.mrb[0].mxu0
        %1999 = vmatprep.mubr.bf16.mxu0 0
        %2000 = vmatmul.mubr.bf16.gmra.mrb[0].mxu0 %v1852
        %v2001 = vpop.f32.mrb[0].mxu0
        %v2002 = vadd.f32 0.0, %v2001
        %v2003 = vpop.f32.mrb[0].mxu0
        %v2004 = vpop.f32.mrb[0].mxu0
        %v2005 = vadd.f32 0.0, %v2004
        %v2006 = vpop.f32.mrb[0].mxu0
        %2007 = vmatprep.mubr.bf16.mxu0 0
        %2008 = vmatmul.mubr.bf16.gmra.mrb[0].mxu0 %v1853
        %v2009 = vpop.f32.mrb[0].mxu0
        %v2010 = vadd.f32 0.0, %v2009
        %v2011 = vpop.f32.mrb[0].mxu0
        %v2012 = vpop.f32.mrb[0].mxu0
        %v2013 = vadd.f32 0.0, %v2012
        %v2014 = vpop.f32.mrb[0].mxu0
        %2015 = vmatprep.mubr.bf16.mxu0 0
        %2016 = vmatmul.mubr.bf16.gmra.mrb[0].mxu0 %v1854
        %v2017 = vpop.f32.mrb[0].mxu0
        %v2018 = vadd.f32 0.0, %v2017
        %v2019 = vpop.f32.mrb[0].mxu0
        %v2020 = vpop.f32.mrb[0].mxu0
        %v2021 = vadd.f32 0.0, %v2020
        %v2022 = vpop.f32.mrb[0].mxu0
        %2023 = vmatprep.mubr.bf16.mxu0 0
        %2024 = vmatmul.mubr.bf16.gmra.mrb[0].mxu0 %v1855
        %v2025 = vpop.f32.mrb[0].mxu0
        %v2026 = vadd.f32 0.0, %v2025
        %v2027 = vpop.f32.mrb[0].mxu0
        %v2028 = vpop.f32.mrb[0].mxu0
        %v2029 = vadd.f32 0.0, %v2028
        %v2030 = vpop.f32.mrb[0].mxu0
        %2031 = vmatprep.mubr.bf16.mxu0 0
        %2032 = vmatmul.mubr.bf16.gmra.mrb[0].mxu0 %v1856
        %v2033 = vpop.f32.mrb[0].mxu0
        %v2034 = vadd.f32 0.0, %v2033
        %v2035 = vpop.f32.mrb[0].mxu0
        %v2036 = vpop.f32.mrb[0].mxu0
        %v2037 = vadd.f32 0.0, %v2036
        %v2038 = vpop.f32.mrb[0].mxu0
        %2039 = vmatprep.mubr.bf16.mxu0 0
        %2040 = vmatmul.mubr.bf16.gmra.mrb[0].mxu0 %v1857
        %v2041 = vpop.f32.mrb[0].mxu0
        %v2042 = vadd.f32 0.0, %v2041
        %v2043 = vpop.f32.mrb[0].mxu0
        %v2044 = vpop.f32.mrb[0].mxu0
        %v2045 = vadd.f32 0.0, %v2044
        %v2046 = vpop.f32.mrb[0].mxu0
        %2047 = vmatprep.mubr.bf16.mxu0 0
        %2048 = vmatmul.mubr.bf16.gmra.mrb[0].mxu0 %v1858
        %v2049 = vpop.f32.mrb[0].mxu0
        %v2050 = vadd.f32 0.0, %v2049
        %v2051 = vpop.f32.mrb[0].mxu0
        %v2052 = vpop.f32.mrb[0].mxu0
        %v2053 = vadd.f32 0.0, %v2052
        %v2054 = vpop.f32.mrb[0].mxu0
        %2055 = vmatprep.mubr.bf16.mxu0 0
        %2056 = vmatmul.mubr.bf16.gmra.mrb[0].mxu0 %v1859
        %v2057 = vpop.f32.mrb[0].mxu0
        %v2058 = vadd.f32 0.0, %v2057
        %v2059 = vpop.f32.mrb[0].mxu0
        %v2060 = vpop.f32.mrb[0].mxu0
        %v2061 = vadd.f32 0.0, %v2060
        %v2062 = vpop.f32.mrb[0].mxu0
        %2063 = vmatprep.mubr.bf16.mxu0 0
        %2064 = vmatmul.mubr.bf16.gmra.mrb[0].mxu0 %v1860
        %v2065 = vpop.f32.mrb[0].mxu0
        %v2066 = vadd.f32 0.0, %v2065
        %v2067 = vpop.f32.mrb[0].mxu0
        %v2068 = vpop.f32.mrb[0].mxu0
        %v2069 = vadd.f32 0.0, %v2068
        %v2070 = vpop.f32.mrb[0].mxu0
        %2071 = vmatprep.mubr.bf16.mxu0 0
        %2072 = vmatmul.mubr.bf16.gmra.mrb[0].mxu0 %v1861
        %v2073 = vpop.f32.mrb[0].mxu0
        %v2074 = vadd.f32 0.0, %v2073
        %v2075 = vpop.f32.mrb[0].mxu0
        %v2076 = vpop.f32.mrb[0].mxu0
        %v2077 = vadd.f32 0.0, %v2076
        %v2078 = vpop.f32.mrb[0].mxu0
        %2079 = vdwg.mxu0
        %v2080 = vadd.f32 %v1729, %v1962
        %v2081 = vadd.f32 %v1732, %v1965
        %v2082 = vadd.f32 %v1737, %v1970
        %v2083 = vadd.f32 %v1740, %v1973
        %v2084 = vadd.f32 %v1745, %v1978
        %v2085 = vadd.f32 %v1748, %v1981
        %v2086 = vadd.f32 %v1753, %v1986
        %v2087 = vadd.f32 %v1756, %v1989
        %v2088 = vadd.f32 %v1761, %v1994
        %v2089 = vadd.f32 %v1764, %v1997
        %v2090 = vadd.f32 %v1769, %v2002
        %v2091 = vadd.f32 %v1772, %v2005
        %v2092 = vadd.f32 %v1777, %v2010
        %v2093 = vadd.f32 %v1780, %v2013
        %v2094 = vadd.f32 %v1785, %v2018
        %v2095 = vadd.f32 %v1788, %v2021
        %v2096 = vadd.f32 %v1793, %v2026
        %v2097 = vadd.f32 %v1796, %v2029
        %v2098 = vadd.f32 %v1801, %v2034
        %v2099 = vadd.f32 %v1804, %v2037
        %v2100 = vadd.f32 %v1809, %v2042
        %v2101 = vadd.f32 %v1812, %v2045
        %v2102 = vadd.f32 %v1817, %v2050
        %v2103 = vadd.f32 %v1820, %v2053
        %v2104 = vadd.f32 %v1825, %v2058
        %v2105 = vadd.f32 %v1828, %v2061
        %v2106 = vadd.f32 %v1833, %v2066
        %v2107 = vadd.f32 %v1836, %v2069
        %v2108 = vadd.f32 %v1841, %v2074
        %v2109 = vadd.f32 %v1844, %v2077
        %v2110 = vld [vmem:[#allocation3] sm:$0xff]
        %v2111 = vld [vmem:[#allocation3 + $0x8] sm:$0xff]
        %v2112 = vld [vmem:[#allocation3 + $0x10] sm:$0xff]
        %v2113 = vld [vmem:[#allocation3 + $0x18] sm:$0xff]
        %v2114 = vld [vmem:[#allocation3 + $0x20] sm:$0xff]
        %v2115 = vld [vmem:[#allocation3 + $0x28] sm:$0xff]
        %v2116 = vld [vmem:[#allocation3 + $0x30] sm:$0xff]
        %v2117 = vld [vmem:[#allocation3 + $0x38] sm:$0xff]
        %v2118 = vld [vmem:[#allocation3 + $0x40] sm:$0xff]
        %v2119 = vld [vmem:[#allocation3 + $0x48] sm:$0xff]
        %v2120 = vld [vmem:[#allocation3 + $0x50] sm:$0xff]
        %v2121 = vld [vmem:[#allocation3 + $0x58] sm:$0xff]
        %v2122 = vld [vmem:[#allocation3 + $0x60] sm:$0xff]
        %v2123 = vld [vmem:[#allocation3 + $0x68] sm:$0xff]
        %v2124 = vld [vmem:[#allocation3 + $0x70] sm:$0xff]
        %v2125 = vld [vmem:[#allocation3 + $0x78] sm:$0xff]
        %v2126 = vld [vmem:[#allocation3 + $0x80] sm:$0xff]
        %v2127 = vld [vmem:[#allocation3 + $0x88] sm:$0xff]
        %v2128 = vld [vmem:[#allocation3 + $0x90] sm:$0xff]
        %v2129 = vld [vmem:[#allocation3 + $0x98] sm:$0xff]
        %v2130 = vld [vmem:[#allocation3 + $0xa0] sm:$0xff]
        %v2131 = vld [vmem:[#allocation3 + $0xa8] sm:$0xff]
        %v2132 = vld [vmem:[#allocation3 + $0xb0] sm:$0xff]
        %v2133 = vld [vmem:[#allocation3 + $0xb8] sm:$0xff]
        %v2134 = vld [vmem:[#allocation3 + $0xc0] sm:$0xff]
        %v2135 = vld [vmem:[#allocation3 + $0xc8] sm:$0xff]
        %v2136 = vld [vmem:[#allocation3 + $0xd0] sm:$0xff]
        %v2137 = vld [vmem:[#allocation3 + $0xd8] sm:$0xff]
        %v2138 = vld [vmem:[#allocation3 + $0xe0] sm:$0xff]
        %v2139 = vld [vmem:[#allocation3 + $0xe8] sm:$0xff]
        %v2140 = vrot.slane %v2080, 1
        %v2141 = vrot.slane %v2081, 1
        %v2142 = vrot.slane %v2082, 1
        %v2143 = vrot.slane %v2083, 1
        %v2144 = vrot.slane %v2084, 1
        %v2145 = vrot.slane %v2085, 1
        %v2146 = vrot.slane %v2086, 1
        %v2147 = vrot.slane %v2087, 1
        %v2148 = vrot.slane %v2088, 1
        %v2149 = vrot.slane %v2089, 1
        %v2150 = vrot.slane %v2090, 1
        %v2151 = vrot.slane %v2091, 1
        %v2152 = vrot.slane %v2092, 1
        %v2153 = vrot.slane %v2093, 1
        %v2154 = vrot.slane %v2094, 1
        %v2155 = vrot.slane %v2095, 1
        %v2156 = vrot.slane %v2096, 1
        %v2157 = vrot.slane %v2097, 1
        %v2158 = vrot.slane %v2098, 1
        %v2159 = vrot.slane %v2099, 1
        %v2160 = vrot.slane %v2100, 1
        %v2161 = vrot.slane %v2101, 1
        %v2162 = vrot.slane %v2102, 1
        %v2163 = vrot.slane %v2103, 1
        %v2164 = vrot.slane %v2104, 1
        %v2165 = vrot.slane %v2105, 1
        %v2166 = vrot.slane %v2106, 1
        %v2167 = vrot.slane %v2107, 1
        %v2168 = vrot.slane %v2108, 1
        %v2169 = vrot.slane %v2109, 1
        %v2170 = vlaneseq
        %v2171 = vshrl.u32 %v2170, 7
        %vm2172 = vcmp.lt.s32.totalorder %v2171, 7
        %v2173 = vsel %vm2172, %v2168, %v2169
        %v2174 = vsel %vm2172, %v2167, %v2168
        %v2175 = vsel %vm2172, %v2166, %v2167
        %v2176 = vsel %vm2172, %v2165, %v2166
        %v2177 = vsel %vm2172, %v2164, %v2165
        %v2178 = vsel %vm2172, %v2163, %v2164
        %v2179 = vsel %vm2172, %v2162, %v2163
        %v2180 = vsel %vm2172, %v2161, %v2162
        %v2181 = vsel %vm2172, %v2160, %v2161
        %v2182 = vsel %vm2172, %v2159, %v2160
        %v2183 = vsel %vm2172, %v2158, %v2159
        %v2184 = vsel %vm2172, %v2157, %v2158
        %v2185 = vsel %vm2172, %v2156, %v2157
        %v2186 = vsel %vm2172, %v2155, %v2156
        %v2187 = vsel %vm2172, %v2154, %v2155
        %v2188 = vsel %vm2172, %v2153, %v2154
        %v2189 = vsel %vm2172, %v2152, %v2153
        %v2190 = vsel %vm2172, %v2151, %v2152
        %v2191 = vsel %vm2172, %v2150, %v2151
        %v2192 = vsel %vm2172, %v2149, %v2150
        %v2193 = vsel %vm2172, %v2148, %v2149
        %v2194 = vsel %vm2172, %v2147, %v2148
        %v2195 = vsel %vm2172, %v2146, %v2147
        %v2196 = vsel %vm2172, %v2145, %v2146
        %v2197 = vsel %vm2172, %v2144, %v2145
        %v2198 = vsel %vm2172, %v2143, %v2144
        %v2199 = vsel %vm2172, %v2142, %v2143
        %v2200 = vsel %vm2172, %v2141, %v2142
        %v2201 = vsel %vm2172, %v2140, %v2141
        %v2202 = vsel %vm2172, %v2169, %v2140
        %v2203 = vadd.f32 %v2110, %v2201
        %v2204 = vadd.f32 %v2111, %v2200
        %v2205 = vadd.f32 %v2112, %v2199
        %v2206 = vadd.f32 %v2113, %v2198
        %v2207 = vadd.f32 %v2114, %v2197
        %v2208 = vadd.f32 %v2115, %v2196
        %v2209 = vadd.f32 %v2116, %v2195
        %v2210 = vadd.f32 %v2117, %v2194
        %v2211 = vadd.f32 %v2118, %v2193
        %v2212 = vadd.f32 %v2119, %v2192
        %v2213 = vadd.f32 %v2120, %v2191
        %v2214 = vadd.f32 %v2121, %v2190
        %v2215 = vadd.f32 %v2122, %v2189
        %v2216 = vadd.f32 %v2123, %v2188
        %v2217 = vadd.f32 %v2124, %v2187
        %v2218 = vadd.f32 %v2125, %v2186
        %v2219 = vadd.f32 %v2126, %v2185
        %v2220 = vadd.f32 %v2127, %v2184
        %v2221 = vadd.f32 %v2128, %v2183
        %v2222 = vadd.f32 %v2129, %v2182
        %v2223 = vadd.f32 %v2130, %v2181
        %v2224 = vadd.f32 %v2131, %v2180
        %v2225 = vadd.f32 %v2132, %v2179
        %v2226 = vadd.f32 %v2133, %v2178
        %v2227 = vadd.f32 %v2134, %v2177
        %v2228 = vadd.f32 %v2135, %v2176
        %v2229 = vadd.f32 %v2136, %v2175
        %v2230 = vadd.f32 %v2137, %v2174
        %v2231 = vadd.f32 %v2138, %v2173
        %v2232 = vadd.f32 %v2139, %v2202
        %2233 = vst [vmem:[#allocation3] sm:$0xff] %v2203
        %2234 = vst [vmem:[#allocation3 + $0x8] sm:$0xff] %v2204
        %2235 = vst [vmem:[#allocation3 + $0x10] sm:$0xff] %v2205
        %2236 = vst [vmem:[#allocation3 + $0x18] sm:$0xff] %v2206
        %2237 = vst [vmem:[#allocation3 + $0x20] sm:$0xff] %v2207
        %2238 = vst [vmem:[#allocation3 + $0x28] sm:$0xff] %v2208
        %2239 = vst [vmem:[#allocation3 + $0x30] sm:$0xff] %v2209
        %2240 = vst [vmem:[#allocation3 + $0x38] sm:$0xff] %v2210
        %2241 = vst [vmem:[#allocation3 + $0x40] sm:$0xff] %v2211
        %2242 = vst [vmem:[#allocation3 + $0x48] sm:$0xff] %v2212
        %2243 = vst [vmem:[#allocation3 + $0x50] sm:$0xff] %v2213
        %2244 = vst [vmem:[#allocation3 + $0x58] sm:$0xff] %v2214
        %2245 = vst [vmem:[#allocation3 + $0x60] sm:$0xff] %v2215
        %2246 = vst [vmem:[#allocation3 + $0x68] sm:$0xff] %v2216
        %2247 = vst [vmem:[#allocation3 + $0x70] sm:$0xff] %v2217
        %2248 = vst [vmem:[#allocation3 + $0x78] sm:$0xff] %v2218
        %2249 = vst [vmem:[#allocation3 + $0x80] sm:$0xff] %v2219
        %2250 = vst [vmem:[#allocation3 + $0x88] sm:$0xff] %v2220
        %2251 = vst [vmem:[#allocation3 + $0x90] sm:$0xff] %v2221
        %2252 = vst [vmem:[#allocation3 + $0x98] sm:$0xff] %v2222
        %2253 = vst [vmem:[#allocation3 + $0xa0] sm:$0xff] %v2223
        %2254 = vst [vmem:[#allocation3 + $0xa8] sm:$0xff] %v2224
        %2255 = vst [vmem:[#allocation3 + $0xb0] sm:$0xff] %v2225
        %2256 = vst [vmem:[#allocation3 + $0xb8] sm:$0xff] %v2226
        %2257 = vst [vmem:[#allocation3 + $0xc0] sm:$0xff] %v2227
        %2258 = vst [vmem:[#allocation3 + $0xc8] sm:$0xff] %v2228
        %2259 = vst [vmem:[#allocation3 + $0xd0] sm:$0xff] %v2229
        %2260 = vst [vmem:[#allocation3 + $0xd8] sm:$0xff] %v2230
        %2261 = vst [vmem:[#allocation3 + $0xe0] sm:$0xff] %v2231
        %2262 = vst [vmem:[#allocation3 + $0xe8] sm:$0xff] %v2232
        %v2263 = vld [vmem:[%s423] sm:$0xff]
        %v2264 = vld [vmem:[%s423 + $0x8] sm:$0xff]
        %v2265 = vld [vmem:[%s423 + $0x10] sm:$0xff]
        %v2266 = vld [vmem:[%s423 + $0x18] sm:$0xff]
        %v2267 = vld [vmem:[%s423 + $0x20] sm:$0xff]
        %v2268 = vld [vmem:[%s423 + $0x28] sm:$0xff]
        %v2269 = vld [vmem:[%s423 + $0x30] sm:$0xff]
        %v2270 = vld [vmem:[%s423 + $0x38] sm:$0xff]
        %v2271 = vld [vmem:[%s423 + $0x40] sm:$0xff]
        %v2272 = vld [vmem:[%s423 + $0x48] sm:$0xff]
        %v2273 = vld [vmem:[%s423 + $0x50] sm:$0xff]
        %v2274 = vld [vmem:[%s423 + $0x58] sm:$0xff]
        %v2275 = vld [vmem:[%s423 + $0x60] sm:$0xff]
        %v2276 = vld [vmem:[%s423 + $0x68] sm:$0xff]
        %v2277 = vld [vmem:[%s423 + $0x70] sm:$0xff]
        %s2278 = scalar_lea.vmem [#allocation7], 128
        %v2279 = vld [vmem:[%s2278] sm:$0xf]
        %v2280 = vld [vmem:[%s2278 + $0x4] sm:$0xf]
        %v2281 = vld [vmem:[%s2278 + $0x8] sm:$0xf]
        %v2282 = vld [vmem:[%s2278 + $0xc] sm:$0xf]
        %v2283 = vld [vmem:[%s2278 + $0x10] sm:$0xf]
        %v2284 = vld [vmem:[%s2278 + $0x14] sm:$0xf]
        %v2285 = vld [vmem:[%s2278 + $0x18] sm:$0xf]
        %v2286 = vld [vmem:[%s2278 + $0x1c] sm:$0xf]
        %v2287 = vld [vmem:[%s2278 + $0x20] sm:$0xf]
        %v2288 = vld [vmem:[%s2278 + $0x24] sm:$0xf]
        %v2289 = vld [vmem:[%s2278 + $0x28] sm:$0xf]
        %v2290 = vld [vmem:[%s2278 + $0x2c] sm:$0xf]
        %v2291 = vld [vmem:[%s2278 + $0x30] sm:$0xf]
        %v2292 = vld [vmem:[%s2278 + $0x34] sm:$0xf]
        %v2293 = vld [vmem:[%s2278 + $0x38] sm:$0xf]
        %v2294 = vld [vmem:[%s2278 + $0x3c] sm:$0xf]
        %v2295 = vld [vmem:[%s423 + $0x8] sm:$0xf0]
        %v2296 = vld [vmem:[%s423 + $0x78] sm:$0xff]
        %v2297 = vld [vmem:[%s423 + $0x80] sm:$0xf]
        %s2298 = scalar_lea.vmem [#allocation7], 320
        %v2299 = vld [vmem:[%s2298] sm:$0xf]
        %v2300 = vld [vmem:[%s2298 + $0x4] sm:$0xf]
        %v2301 = vld [vmem:[%s2298 + $0x8] sm:$0xf]
        %v2302 = vld [vmem:[%s2298 + $0xc] sm:$0xf]
        %v2303 = vld [vmem:[%s2298 + $0x10] sm:$0xf]
        %v2304 = vld [vmem:[%s2298 + $0x14] sm:$0xf]
        %v2305 = vld [vmem:[%s2298 + $0x18] sm:$0xf]
        %v2306 = vld [vmem:[%s2298 + $0x1c] sm:$0xf]
        %v2307 = vld [vmem:[%s2298 + $0x20] sm:$0xf]
        %v2308 = vld [vmem:[%s2298 + $0x24] sm:$0xf]
        %v2309 = vld [vmem:[%s2298 + $0x28] sm:$0xf]
        %v2310 = vld [vmem:[%s2298 + $0x2c] sm:$0xf]
        %v2311 = vld [vmem:[%s2298 + $0x30] sm:$0xf]
        %v2312 = vld [vmem:[%s2298 + $0x34] sm:$0xf]
        %v2313 = vld [vmem:[%s2298 + $0x38] sm:$0xf]
        %v2314 = vld [vmem:[%s2298 + $0x3c] sm:$0xf]
        %v2331 = vrot.slane %v2295, 4
        %v2332 = vrot.slane %v2265, 4
        %v2333 = vsel %vm589, %v2331, %v2332
        %v2334 = vrot.slane %v2266, 4
        %v2335 = vsel %vm589, %v2332, %v2334
        %v2336 = vrot.slane %v2267, 4
        %v2337 = vsel %vm589, %v2334, %v2336
        %v2338 = vrot.slane %v2268, 4
        %v2339 = vsel %vm589, %v2336, %v2338
        %v2340 = vrot.slane %v2269, 4
        %v2341 = vsel %vm589, %v2338, %v2340
        %v2342 = vrot.slane %v2270, 4
        %v2343 = vsel %vm589, %v2340, %v2342
        %v2344 = vrot.slane %v2271, 4
        %v2345 = vsel %vm589, %v2342, %v2344
        %v2346 = vrot.slane %v2272, 4
        %v2347 = vsel %vm589, %v2344, %v2346
        %v2348 = vrot.slane %v2273, 4
        %v2349 = vsel %vm589, %v2346, %v2348
        %v2350 = vrot.slane %v2274, 4
        %v2351 = vsel %vm589, %v2348, %v2350
        %v2352 = vrot.slane %v2275, 4
        %v2353 = vsel %vm589, %v2350, %v2352
        %v2354 = vrot.slane %v2276, 4
        %v2355 = vsel %vm589, %v2352, %v2354
        %v2356 = vrot.slane %v2277, 4
        %v2357 = vsel %vm589, %v2354, %v2356
        %v2358 = vrot.slane %v2296, 4
        %v2359 = vsel %vm589, %v2356, %v2358
        %v2360 = vrot.slane %v2297, 4
        %v2361 = vsel %vm589, %v2358, %v2360
        %v2393 = vunpack.c.l.b16 %v2299
        %v2394 = vunpack.c.l.b16 %v2300
        %v2395 = vunpack.c.l.b16 %v2301
        %v2396 = vunpack.c.l.b16 %v2302
        %v2397 = vunpack.c.l.b16 %v2303
        %v2398 = vunpack.c.l.b16 %v2304
        %v2399 = vunpack.c.l.b16 %v2305
        %v2400 = vunpack.c.l.b16 %v2306
        %v2401 = vunpack.c.l.b16 %v2307
        %v2402 = vunpack.c.l.b16 %v2308
        %v2403 = vunpack.c.l.b16 %v2309
        %v2404 = vunpack.c.l.b16 %v2310
        %v2405 = vunpack.c.l.b16 %v2311
        %v2406 = vunpack.c.l.b16 %v2312
        %v2407 = vunpack.c.l.b16 %v2313
        %v2408 = vunpack.c.l.b16 %v2314
        %v2409 = vpack.c.b16 %v2394, %v2393
        %v2410 = vpack.c.b16 %v2396, %v2395
        %v2411 = vpack.c.b16 %v2398, %v2397
        %v2412 = vpack.c.b16 %v2400, %v2399
        %v2413 = vpack.c.b16 %v2402, %v2401
        %v2414 = vpack.c.b16 %v2404, %v2403
        %v2415 = vpack.c.b16 %v2406, %v2405
        %v2416 = vpack.c.b16 %v2408, %v2407
        %2425 = vmatprep.subr.bf16.mxu0 0
        %2426 = vmatpush1.bf16.msra.mxu0 %v2409
        %2427 = vmatprep.subr.bf16.mxu0 0
        %2428 = vmatpush1.bf16.msra.mxu0 %v2410
        %2429 = vmatprep.subr.bf16.mxu0 0
        %2430 = vmatpush1.bf16.msra.mxu0 %v2411
        %2431 = vmatprep.subr.bf16.mxu0 0
        %2432 = vmatpush1.bf16.msra.mxu0 %v2412
        %2433 = vmatprep.subr.bf16.mxu0 0
        %2434 = vmatpush1.bf16.msra.mxu0 %v2413
        %2435 = vmatprep.subr.bf16.mxu0 0
        %2436 = vmatpush1.bf16.msra.mxu0 %v2414
        %2437 = vmatprep.subr.bf16.mxu0 0
        %2438 = vmatpush1.bf16.msra.mxu0 %v2415
        %2439 = vmatprep.subr.bf16.mxu0 0
        %2440 = vmatpush1.bf16.msra.mxu0 %v2416
        %2441 = vmatprep.subr.bf16.mxu0 0
        %2442 = vmatpush1.bf16.msra.mxu0 0
        %2443 = vmatprep.subr.bf16.mxu0 0
        %2444 = vmatpush1.bf16.msra.mxu0 0
        %2445 = vmatprep.subr.bf16.mxu0 0
        %2446 = vmatpush1.bf16.msra.mxu0 0
        %2447 = vmatprep.subr.bf16.mxu0 0
        %2448 = vmatpush1.bf16.msra.mxu0 0
        %2449 = vmatprep.subr.bf16.mxu0 0
        %2450 = vmatpush1.bf16.msra.mxu0 0
        %2451 = vmatprep.subr.bf16.mxu0 0
        %2452 = vmatpush1.bf16.msra.mxu0 0
        %2453 = vmatprep.subr.bf16.mxu0 0
        %2454 = vmatpush1.bf16.msra.mxu0 0
        %2455 = vmatprep.subr.bf16.mxu0 0
        %2456 = vmatpush1.bf16.msra.mxu0 0
        %2457 = vmatprep.mubr.bf16.mxu0 0
        %2458 = vmatmul.mubr.bf16.gmra.mrb[0].mxu0 %v2333
        %v2459 = vpop.f32.mrb[0].mxu0
        %v2460 = vadd.f32 0.0, %v2459
        %v2461 = vpop.f32.mrb[0].mxu0
        %v2462 = vpop.f32.mrb[0].mxu0
        %v2463 = vadd.f32 0.0, %v2462
        %v2464 = vpop.f32.mrb[0].mxu0
        %2465 = vmatprep.mubr.bf16.mxu0 0
        %2466 = vmatmul.mubr.bf16.gmra.mrb[0].mxu0 %v2335
        %v2467 = vpop.f32.mrb[0].mxu0
        %v2468 = vadd.f32 0.0, %v2467
        %v2469 = vpop.f32.mrb[0].mxu0
        %v2470 = vpop.f32.mrb[0].mxu0
        %v2471 = vadd.f32 0.0, %v2470
        %v2472 = vpop.f32.mrb[0].mxu0
        %2473 = vmatprep.mubr.bf16.mxu0 0
        %2474 = vmatmul.mubr.bf16.gmra.mrb[0].mxu0 %v2337
        %v2475 = vpop.f32.mrb[0].mxu0
        %v2476 = vadd.f32 0.0, %v2475
        %v2477 = vpop.f32.mrb[0].mxu0
        %v2478 = vpop.f32.mrb[0].mxu0
        %v2479 = vadd.f32 0.0, %v2478
        %v2480 = vpop.f32.mrb[0].mxu0
        %2481 = vmatprep.mubr.bf16.mxu0 0
        %2482 = vmatmul.mubr.bf16.gmra.mrb[0].mxu0 %v2339
        %v2483 = vpop.f32.mrb[0].mxu0
        %v2484 = vadd.f32 0.0, %v2483
        %v2485 = vpop.f32.mrb[0].mxu0
        %v2486 = vpop.f32.mrb[0].mxu0
        %v2487 = vadd.f32 0.0, %v2486
        %v2488 = vpop.f32.mrb[0].mxu0
        %2489 = vmatprep.mubr.bf16.mxu0 0
        %2490 = vmatmul.mubr.bf16.gmra.mrb[0].mxu0 %v2341
        %v2491 = vpop.f32.mrb[0].mxu0
        %v2492 = vadd.f32 0.0, %v2491
        %v2493 = vpop.f32.mrb[0].mxu0
        %v2494 = vpop.f32.mrb[0].mxu0
        %v2495 = vadd.f32 0.0, %v2494
        %v2496 = vpop.f32.mrb[0].mxu0
        %2497 = vmatprep.mubr.bf16.mxu0 0
        %2498 = vmatmul.mubr.bf16.gmra.mrb[0].mxu0 %v2343
        %v2499 = vpop.f32.mrb[0].mxu0
        %v2500 = vadd.f32 0.0, %v2499
        %v2501 = vpop.f32.mrb[0].mxu0
        %v2502 = vpop.f32.mrb[0].mxu0
        %v2503 = vadd.f32 0.0, %v2502
        %v2504 = vpop.f32.mrb[0].mxu0
        %2505 = vmatprep.mubr.bf16.mxu0 0
        %2506 = vmatmul.mubr.bf16.gmra.mrb[0].mxu0 %v2345
        %v2507 = vpop.f32.mrb[0].mxu0
        %v2508 = vadd.f32 0.0, %v2507
        %v2509 = vpop.f32.mrb[0].mxu0
        %v2510 = vpop.f32.mrb[0].mxu0
        %v2511 = vadd.f32 0.0, %v2510
        %v2512 = vpop.f32.mrb[0].mxu0
        %2513 = vmatprep.mubr.bf16.mxu0 0
        %2514 = vmatmul.mubr.bf16.gmra.mrb[0].mxu0 %v2347
        %v2515 = vpop.f32.mrb[0].mxu0
        %v2516 = vadd.f32 0.0, %v2515
        %v2517 = vpop.f32.mrb[0].mxu0
        %v2518 = vpop.f32.mrb[0].mxu0
        %v2519 = vadd.f32 0.0, %v2518
        %v2520 = vpop.f32.mrb[0].mxu0
        %2521 = vmatprep.mubr.bf16.mxu0 0
        %2522 = vmatmul.mubr.bf16.gmra.mrb[0].mxu0 %v2349
        %v2523 = vpop.f32.mrb[0].mxu0
        %v2524 = vadd.f32 0.0, %v2523
        %v2525 = vpop.f32.mrb[0].mxu0
        %v2526 = vpop.f32.mrb[0].mxu0
        %v2527 = vadd.f32 0.0, %v2526
        %v2528 = vpop.f32.mrb[0].mxu0
        %2529 = vmatprep.mubr.bf16.mxu0 0
        %2530 = vmatmul.mubr.bf16.gmra.mrb[0].mxu0 %v2351
        %v2531 = vpop.f32.mrb[0].mxu0
        %v2532 = vadd.f32 0.0, %v2531
        %v2533 = vpop.f32.mrb[0].mxu0
        %v2534 = vpop.f32.mrb[0].mxu0
        %v2535 = vadd.f32 0.0, %v2534
        %v2536 = vpop.f32.mrb[0].mxu0
        %2537 = vmatprep.mubr.bf16.mxu0 0
        %2538 = vmatmul.mubr.bf16.gmra.mrb[0].mxu0 %v2353
        %v2539 = vpop.f32.mrb[0].mxu0
        %v2540 = vadd.f32 0.0, %v2539
        %v2541 = vpop.f32.mrb[0].mxu0
        %v2542 = vpop.f32.mrb[0].mxu0
        %v2543 = vadd.f32 0.0, %v2542
        %v2544 = vpop.f32.mrb[0].mxu0
        %2545 = vmatprep.mubr.bf16.mxu0 0
        %2546 = vmatmul.mubr.bf16.gmra.mrb[0].mxu0 %v2355
        %v2547 = vpop.f32.mrb[0].mxu0
        %v2548 = vadd.f32 0.0, %v2547
        %v2549 = vpop.f32.mrb[0].mxu0
        %v2550 = vpop.f32.mrb[0].mxu0
        %v2551 = vadd.f32 0.0, %v2550
        %v2552 = vpop.f32.mrb[0].mxu0
        %2553 = vmatprep.mubr.bf16.mxu0 0
        %2554 = vmatmul.mubr.bf16.gmra.mrb[0].mxu0 %v2357
        %v2555 = vpop.f32.mrb[0].mxu0
        %v2556 = vadd.f32 0.0, %v2555
        %v2557 = vpop.f32.mrb[0].mxu0
        %v2558 = vpop.f32.mrb[0].mxu0
        %v2559 = vadd.f32 0.0, %v2558
        %v2560 = vpop.f32.mrb[0].mxu0
        %2561 = vmatprep.mubr.bf16.mxu0 0
        %2562 = vmatmul.mubr.bf16.gmra.mrb[0].mxu0 %v2359
        %v2563 = vpop.f32.mrb[0].mxu0
        %v2564 = vadd.f32 0.0, %v2563
        %v2565 = vpop.f32.mrb[0].mxu0
        %v2566 = vpop.f32.mrb[0].mxu0
        %v2567 = vadd.f32 0.0, %v2566
        %v2568 = vpop.f32.mrb[0].mxu0
        %2569 = vmatprep.mubr.bf16.mxu0 0
        %2570 = vmatmul.mubr.bf16.gmra.mrb[0].mxu0 %v2361
        %v2571 = vpop.f32.mrb[0].mxu0
        %v2572 = vadd.f32 0.0, %v2571
        %v2573 = vpop.f32.mrb[0].mxu0
        %v2574 = vpop.f32.mrb[0].mxu0
        %v2575 = vadd.f32 0.0, %v2574
        %v2576 = vpop.f32.mrb[0].mxu0
        %2577 = vdwg.mxu0
        %v2594 = vunpack.c.l.b16 %v2279
        %v2595 = vunpack.c.l.b16 %v2280
        %v2596 = vunpack.c.l.b16 %v2281
        %v2597 = vunpack.c.l.b16 %v2282
        %v2598 = vunpack.c.l.b16 %v2283
        %v2599 = vunpack.c.l.b16 %v2284
        %v2600 = vunpack.c.l.b16 %v2285
        %v2601 = vunpack.c.l.b16 %v2286
        %v2602 = vunpack.c.l.b16 %v2287
        %v2603 = vunpack.c.l.b16 %v2288
        %v2604 = vunpack.c.l.b16 %v2289
        %v2605 = vunpack.c.l.b16 %v2290
        %v2606 = vunpack.c.l.b16 %v2291
        %v2607 = vunpack.c.l.b16 %v2292
        %v2608 = vunpack.c.l.b16 %v2293
        %v2609 = vunpack.c.l.b16 %v2294
        %v2610 = vpack.c.b16 %v2595, %v2594
        %v2611 = vpack.c.b16 %v2597, %v2596
        %v2612 = vpack.c.b16 %v2599, %v2598
        %v2613 = vpack.c.b16 %v2601, %v2600
        %v2614 = vpack.c.b16 %v2603, %v2602
        %v2615 = vpack.c.b16 %v2605, %v2604
        %v2616 = vpack.c.b16 %v2607, %v2606
        %v2617 = vpack.c.b16 %v2609, %v2608
        %2626 = vmatprep.subr.bf16.mxu0 0
        %2627 = vmatpush1.bf16.msra.mxu0 %v2610
        %2628 = vmatprep.subr.bf16.mxu0 0
        %2629 = vmatpush1.bf16.msra.mxu0 %v2611
        %2630 = vmatprep.subr.bf16.mxu0 0
        %2631 = vmatpush1.bf16.msra.mxu0 %v2612
        %2632 = vmatprep.subr.bf16.mxu0 0
        %2633 = vmatpush1.bf16.msra.mxu0 %v2613
        %2634 = vmatprep.subr.bf16.mxu0 0
        %2635 = vmatpush1.bf16.msra.mxu0 %v2614
        %2636 = vmatprep.subr.bf16.mxu0 0
        %2637 = vmatpush1.bf16.msra.mxu0 %v2615
        %2638 = vmatprep.subr.bf16.mxu0 0
        %2639 = vmatpush1.bf16.msra.mxu0 %v2616
        %2640 = vmatprep.subr.bf16.mxu0 0
        %2641 = vmatpush1.bf16.msra.mxu0 %v2617
        %2642 = vmatprep.subr.bf16.mxu0 0
        %2643 = vmatpush1.bf16.msra.mxu0 0
        %2644 = vmatprep.subr.bf16.mxu0 0
        %2645 = vmatpush1.bf16.msra.mxu0 0
        %2646 = vmatprep.subr.bf16.mxu0 0
        %2647 = vmatpush1.bf16.msra.mxu0 0
        %2648 = vmatprep.subr.bf16.mxu0 0
        %2649 = vmatpush1.bf16.msra.mxu0 0
        %2650 = vmatprep.subr.bf16.mxu0 0
        %2651 = vmatpush1.bf16.msra.mxu0 0
        %2652 = vmatprep.subr.bf16.mxu0 0
        %2653 = vmatpush1.bf16.msra.mxu0 0
        %2654 = vmatprep.subr.bf16.mxu0 0
        %2655 = vmatpush1.bf16.msra.mxu0 0
        %2656 = vmatprep.subr.bf16.mxu0 0
        %2657 = vmatpush1.bf16.msra.mxu0 0
        %2658 = vmatprep.mubr.bf16.mxu0 0
        %2659 = vmatmul.mubr.bf16.gmra.mrb[0].mxu0 %v2263
        %v2660 = vpop.f32.mrb[0].mxu0
        %v2661 = vadd.f32 %v2460, %v2660
        %v2662 = vpop.f32.mrb[0].mxu0
        %v2663 = vpop.f32.mrb[0].mxu0
        %v2664 = vadd.f32 %v2463, %v2663
        %v2665 = vpop.f32.mrb[0].mxu0
        %2666 = vmatprep.mubr.bf16.mxu0 0
        %2667 = vmatmul.mubr.bf16.gmra.mrb[0].mxu0 %v2264
        %v2668 = vpop.f32.mrb[0].mxu0
        %v2669 = vadd.f32 %v2468, %v2668
        %v2670 = vpop.f32.mrb[0].mxu0
        %v2671 = vpop.f32.mrb[0].mxu0
        %v2672 = vadd.f32 %v2471, %v2671
        %v2673 = vpop.f32.mrb[0].mxu0
        %2674 = vmatprep.mubr.bf16.mxu0 0
        %2675 = vmatmul.mubr.bf16.gmra.mrb[0].mxu0 %v2265
        %v2676 = vpop.f32.mrb[0].mxu0
        %v2677 = vadd.f32 %v2476, %v2676
        %v2678 = vpop.f32.mrb[0].mxu0
        %v2679 = vpop.f32.mrb[0].mxu0
        %v2680 = vadd.f32 %v2479, %v2679
        %v2681 = vpop.f32.mrb[0].mxu0
        %2682 = vmatprep.mubr.bf16.mxu0 0
        %2683 = vmatmul.mubr.bf16.gmra.mrb[0].mxu0 %v2266
        %v2684 = vpop.f32.mrb[0].mxu0
        %v2685 = vadd.f32 %v2484, %v2684
        %v2686 = vpop.f32.mrb[0].mxu0
        %v2687 = vpop.f32.mrb[0].mxu0
        %v2688 = vadd.f32 %v2487, %v2687
        %v2689 = vpop.f32.mrb[0].mxu0
        %2690 = vmatprep.mubr.bf16.mxu0 0
        %2691 = vmatmul.mubr.bf16.gmra.mrb[0].mxu0 %v2267
        %v2692 = vpop.f32.mrb[0].mxu0
        %v2693 = vadd.f32 %v2492, %v2692
        %v2694 = vpop.f32.mrb[0].mxu0
        %v2695 = vpop.f32.mrb[0].mxu0
        %v2696 = vadd.f32 %v2495, %v2695
        %v2697 = vpop.f32.mrb[0].mxu0
        %2698 = vmatprep.mubr.bf16.mxu0 0
        %2699 = vmatmul.mubr.bf16.gmra.mrb[0].mxu0 %v2268
        %v2700 = vpop.f32.mrb[0].mxu0
        %v2701 = vadd.f32 %v2500, %v2700
        %v2702 = vpop.f32.mrb[0].mxu0
        %v2703 = vpop.f32.mrb[0].mxu0
        %v2704 = vadd.f32 %v2503, %v2703
        %v2705 = vpop.f32.mrb[0].mxu0
        %2706 = vmatprep.mubr.bf16.mxu0 0
        %2707 = vmatmul.mubr.bf16.gmra.mrb[0].mxu0 %v2269
        %v2708 = vpop.f32.mrb[0].mxu0
        %v2709 = vadd.f32 %v2508, %v2708
        %v2710 = vpop.f32.mrb[0].mxu0
        %v2711 = vpop.f32.mrb[0].mxu0
        %v2712 = vadd.f32 %v2511, %v2711
        %v2713 = vpop.f32.mrb[0].mxu0
        %2714 = vmatprep.mubr.bf16.mxu0 0
        %2715 = vmatmul.mubr.bf16.gmra.mrb[0].mxu0 %v2270
        %v2716 = vpop.f32.mrb[0].mxu0
        %v2717 = vadd.f32 %v2516, %v2716
        %v2718 = vpop.f32.mrb[0].mxu0
        %v2719 = vpop.f32.mrb[0].mxu0
        %v2720 = vadd.f32 %v2519, %v2719
        %v2721 = vpop.f32.mrb[0].mxu0
        %2722 = vmatprep.mubr.bf16.mxu0 0
        %2723 = vmatmul.mubr.bf16.gmra.mrb[0].mxu0 %v2271
        %v2724 = vpop.f32.mrb[0].mxu0
        %v2725 = vadd.f32 %v2524, %v2724
        %v2726 = vpop.f32.mrb[0].mxu0
        %v2727 = vpop.f32.mrb[0].mxu0
        %v2728 = vadd.f32 %v2527, %v2727
        %v2729 = vpop.f32.mrb[0].mxu0
        %2730 = vmatprep.mubr.bf16.mxu0 0
        %2731 = vmatmul.mubr.bf16.gmra.mrb[0].mxu0 %v2272
        %v2732 = vpop.f32.mrb[0].mxu0
        %v2733 = vadd.f32 %v2532, %v2732
        %v2734 = vpop.f32.mrb[0].mxu0
        %v2735 = vpop.f32.mrb[0].mxu0
        %v2736 = vadd.f32 %v2535, %v2735
        %v2737 = vpop.f32.mrb[0].mxu0
        %2738 = vmatprep.mubr.bf16.mxu0 0
        %2739 = vmatmul.mubr.bf16.gmra.mrb[0].mxu0 %v2273
        %v2740 = vpop.f32.mrb[0].mxu0
        %v2741 = vadd.f32 %v2540, %v2740
        %v2742 = vpop.f32.mrb[0].mxu0
        %v2743 = vpop.f32.mrb[0].mxu0
        %v2744 = vadd.f32 %v2543, %v2743
        %v2745 = vpop.f32.mrb[0].mxu0
        %2746 = vmatprep.mubr.bf16.mxu0 0
        %2747 = vmatmul.mubr.bf16.gmra.mrb[0].mxu0 %v2274
        %v2748 = vpop.f32.mrb[0].mxu0
        %v2749 = vadd.f32 %v2548, %v2748
        %v2750 = vpop.f32.mrb[0].mxu0
        %v2751 = vpop.f32.mrb[0].mxu0
        %v2752 = vadd.f32 %v2551, %v2751
        %v2753 = vpop.f32.mrb[0].mxu0
        %2754 = vmatprep.mubr.bf16.mxu0 0
        %2755 = vmatmul.mubr.bf16.gmra.mrb[0].mxu0 %v2275
        %v2756 = vpop.f32.mrb[0].mxu0
        %v2757 = vadd.f32 %v2556, %v2756
        %v2758 = vpop.f32.mrb[0].mxu0
        %v2759 = vpop.f32.mrb[0].mxu0
        %v2760 = vadd.f32 %v2559, %v2759
        %v2761 = vpop.f32.mrb[0].mxu0
        %2762 = vmatprep.mubr.bf16.mxu0 0
        %2763 = vmatmul.mubr.bf16.gmra.mrb[0].mxu0 %v2276
        %v2764 = vpop.f32.mrb[0].mxu0
        %v2765 = vadd.f32 %v2564, %v2764
        %v2766 = vpop.f32.mrb[0].mxu0
        %v2767 = vpop.f32.mrb[0].mxu0
        %v2768 = vadd.f32 %v2567, %v2767
        %v2769 = vpop.f32.mrb[0].mxu0
        %2770 = vmatprep.mubr.bf16.mxu0 0
        %2771 = vmatmul.mubr.bf16.gmra.mrb[0].mxu0 %v2277
        %v2772 = vpop.f32.mrb[0].mxu0
        %v2773 = vadd.f32 %v2572, %v2772
        %v2774 = vpop.f32.mrb[0].mxu0
        %v2775 = vpop.f32.mrb[0].mxu0
        %v2776 = vadd.f32 %v2575, %v2775
        %v2777 = vpop.f32.mrb[0].mxu0
        %2778 = vdwg.mxu0
        %v2779 = vld [vmem:[%s423 + $0x18] sm:$0xff]
        %v2780 = vld [vmem:[%s423 + $0x20] sm:$0xff]
        %v2781 = vld [vmem:[%s423 + $0x28] sm:$0xff]
        %v2782 = vld [vmem:[%s423 + $0x30] sm:$0xff]
        %v2783 = vld [vmem:[%s423 + $0x38] sm:$0xff]
        %v2784 = vld [vmem:[%s423 + $0x40] sm:$0xff]
        %v2785 = vld [vmem:[%s423 + $0x48] sm:$0xff]
        %v2786 = vld [vmem:[%s423 + $0x50] sm:$0xff]
        %v2787 = vld [vmem:[%s423 + $0x58] sm:$0xff]
        %v2788 = vld [vmem:[%s423 + $0x60] sm:$0xff]
        %v2789 = vld [vmem:[%s423 + $0x68] sm:$0xff]
        %v2790 = vld [vmem:[%s423 + $0x70] sm:$0xff]
        %v2791 = vld [vmem:[%s423 + $0x78] sm:$0xff]
        %v2792 = vld [vmem:[%s423 + $0x80] sm:$0xff]
        %v2793 = vld [vmem:[%s423 + $0x88] sm:$0xff]
        %s2794 = scalar_lea.vmem [#allocation7], 512
        %v2795 = vld [vmem:[%s2794] sm:$0xf]
        %v2796 = vld [vmem:[%s2794 + $0x4] sm:$0xf]
        %v2797 = vld [vmem:[%s2794 + $0x8] sm:$0xf]
        %v2798 = vld [vmem:[%s2794 + $0xc] sm:$0xf]
        %v2799 = vld [vmem:[%s2794 + $0x10] sm:$0xf]
        %v2800 = vld [vmem:[%s2794 + $0x14] sm:$0xf]
        %v2801 = vld [vmem:[%s2794 + $0x18] sm:$0xf]
        %v2802 = vld [vmem:[%s2794 + $0x1c] sm:$0xf]
        %v2803 = vld [vmem:[%s2794 + $0x20] sm:$0xf]
        %v2804 = vld [vmem:[%s2794 + $0x24] sm:$0xf]
        %v2805 = vld [vmem:[%s2794 + $0x28] sm:$0xf]
        %v2806 = vld [vmem:[%s2794 + $0x2c] sm:$0xf]
        %v2807 = vld [vmem:[%s2794 + $0x30] sm:$0xf]
        %v2808 = vld [vmem:[%s2794 + $0x34] sm:$0xf]
        %v2809 = vld [vmem:[%s2794 + $0x38] sm:$0xf]
        %v2810 = vld [vmem:[%s2794 + $0x3c] sm:$0xf]
        %v2827 = vunpack.c.l.b16 %v2795
        %v2828 = vunpack.c.l.b16 %v2796
        %v2829 = vunpack.c.l.b16 %v2797
        %v2830 = vunpack.c.l.b16 %v2798
        %v2831 = vunpack.c.l.b16 %v2799
        %v2832 = vunpack.c.l.b16 %v2800
        %v2833 = vunpack.c.l.b16 %v2801
        %v2834 = vunpack.c.l.b16 %v2802
        %v2835 = vunpack.c.l.b16 %v2803
        %v2836 = vunpack.c.l.b16 %v2804
        %v2837 = vunpack.c.l.b16 %v2805
        %v2838 = vunpack.c.l.b16 %v2806
        %v2839 = vunpack.c.l.b16 %v2807
        %v2840 = vunpack.c.l.b16 %v2808
        %v2841 = vunpack.c.l.b16 %v2809
        %v2842 = vunpack.c.l.b16 %v2810
        %v2843 = vpack.c.b16 %v2828, %v2827
        %v2844 = vpack.c.b16 %v2830, %v2829
        %v2845 = vpack.c.b16 %v2832, %v2831
        %v2846 = vpack.c.b16 %v2834, %v2833
        %v2847 = vpack.c.b16 %v2836, %v2835
        %v2848 = vpack.c.b16 %v2838, %v2837
        %v2849 = vpack.c.b16 %v2840, %v2839
        %v2850 = vpack.c.b16 %v2842, %v2841
        %2859 = vmatprep.subr.bf16.mxu0 0
        %2860 = vmatpush1.bf16.msra.mxu0 %v2843
        %2861 = vmatprep.subr.bf16.mxu0 0
        %2862 = vmatpush1.bf16.msra.mxu0 %v2844
        %2863 = vmatprep.subr.bf16.mxu0 0
        %2864 = vmatpush1.bf16.msra.mxu0 %v2845
        %2865 = vmatprep.subr.bf16.mxu0 0
        %2866 = vmatpush1.bf16.msra.mxu0 %v2846
        %2867 = vmatprep.subr.bf16.mxu0 0
        %2868 = vmatpush1.bf16.msra.mxu0 %v2847
        %2869 = vmatprep.subr.bf16.mxu0 0
        %2870 = vmatpush1.bf16.msra.mxu0 %v2848
        %2871 = vmatprep.subr.bf16.mxu0 0
        %2872 = vmatpush1.bf16.msra.mxu0 %v2849
        %2873 = vmatprep.subr.bf16.mxu0 0
        %2874 = vmatpush1.bf16.msra.mxu0 %v2850
        %2875 = vmatprep.subr.bf16.mxu0 0
        %2876 = vmatpush1.bf16.msra.mxu0 0
        %2877 = vmatprep.subr.bf16.mxu0 0
        %2878 = vmatpush1.bf16.msra.mxu0 0
        %2879 = vmatprep.subr.bf16.mxu0 0
        %2880 = vmatpush1.bf16.msra.mxu0 0
        %2881 = vmatprep.subr.bf16.mxu0 0
        %2882 = vmatpush1.bf16.msra.mxu0 0
        %2883 = vmatprep.subr.bf16.mxu0 0
        %2884 = vmatpush1.bf16.msra.mxu0 0
        %2885 = vmatprep.subr.bf16.mxu0 0
        %2886 = vmatpush1.bf16.msra.mxu0 0
        %2887 = vmatprep.subr.bf16.mxu0 0
        %2888 = vmatpush1.bf16.msra.mxu0 0
        %2889 = vmatprep.subr.bf16.mxu0 0
        %2890 = vmatpush1.bf16.msra.mxu0 0
        %2891 = vmatprep.mubr.bf16.mxu0 0
        %2892 = vmatmul.mubr.bf16.gmra.mrb[0].mxu0 %v2779
        %v2893 = vpop.f32.mrb[0].mxu0
        %v2894 = vadd.f32 0.0, %v2893
        %v2895 = vpop.f32.mrb[0].mxu0
        %v2896 = vpop.f32.mrb[0].mxu0
        %v2897 = vadd.f32 0.0, %v2896
        %v2898 = vpop.f32.mrb[0].mxu0
        %2899 = vmatprep.mubr.bf16.mxu0 0
        %2900 = vmatmul.mubr.bf16.gmra.mrb[0].mxu0 %v2780
        %v2901 = vpop.f32.mrb[0].mxu0
        %v2902 = vadd.f32 0.0, %v2901
        %v2903 = vpop.f32.mrb[0].mxu0
        %v2904 = vpop.f32.mrb[0].mxu0
        %v2905 = vadd.f32 0.0, %v2904
        %v2906 = vpop.f32.mrb[0].mxu0
        %2907 = vmatprep.mubr.bf16.mxu0 0
        %2908 = vmatmul.mubr.bf16.gmra.mrb[0].mxu0 %v2781
        %v2909 = vpop.f32.mrb[0].mxu0
        %v2910 = vadd.f32 0.0, %v2909
        %v2911 = vpop.f32.mrb[0].mxu0
        %v2912 = vpop.f32.mrb[0].mxu0
        %v2913 = vadd.f32 0.0, %v2912
        %v2914 = vpop.f32.mrb[0].mxu0
        %2915 = vmatprep.mubr.bf16.mxu0 0
        %2916 = vmatmul.mubr.bf16.gmra.mrb[0].mxu0 %v2782
        %v2917 = vpop.f32.mrb[0].mxu0
        %v2918 = vadd.f32 0.0, %v2917
        %v2919 = vpop.f32.mrb[0].mxu0
        %v2920 = vpop.f32.mrb[0].mxu0
        %v2921 = vadd.f32 0.0, %v2920
        %v2922 = vpop.f32.mrb[0].mxu0
        %2923 = vmatprep.mubr.bf16.mxu0 0
        %2924 = vmatmul.mubr.bf16.gmra.mrb[0].mxu0 %v2783
        %v2925 = vpop.f32.mrb[0].mxu0
        %v2926 = vadd.f32 0.0, %v2925
        %v2927 = vpop.f32.mrb[0].mxu0
        %v2928 = vpop.f32.mrb[0].mxu0
        %v2929 = vadd.f32 0.0, %v2928
        %v2930 = vpop.f32.mrb[0].mxu0
        %2931 = vmatprep.mubr.bf16.mxu0 0
        %2932 = vmatmul.mubr.bf16.gmra.mrb[0].mxu0 %v2784
        %v2933 = vpop.f32.mrb[0].mxu0
        %v2934 = vadd.f32 0.0, %v2933
        %v2935 = vpop.f32.mrb[0].mxu0
        %v2936 = vpop.f32.mrb[0].mxu0
        %v2937 = vadd.f32 0.0, %v2936
        %v2938 = vpop.f32.mrb[0].mxu0
        %2939 = vmatprep.mubr.bf16.mxu0 0
        %2940 = vmatmul.mubr.bf16.gmra.mrb[0].mxu0 %v2785
        %v2941 = vpop.f32.mrb[0].mxu0
        %v2942 = vadd.f32 0.0, %v2941
        %v2943 = vpop.f32.mrb[0].mxu0
        %v2944 = vpop.f32.mrb[0].mxu0
        %v2945 = vadd.f32 0.0, %v2944
        %v2946 = vpop.f32.mrb[0].mxu0
        %2947 = vmatprep.mubr.bf16.mxu0 0
        %2948 = vmatmul.mubr.bf16.gmra.mrb[0].mxu0 %v2786
        %v2949 = vpop.f32.mrb[0].mxu0
        %v2950 = vadd.f32 0.0, %v2949
        %v2951 = vpop.f32.mrb[0].mxu0
        %v2952 = vpop.f32.mrb[0].mxu0
        %v2953 = vadd.f32 0.0, %v2952
        %v2954 = vpop.f32.mrb[0].mxu0
        %2955 = vmatprep.mubr.bf16.mxu0 0
        %2956 = vmatmul.mubr.bf16.gmra.mrb[0].mxu0 %v2787
        %v2957 = vpop.f32.mrb[0].mxu0
        %v2958 = vadd.f32 0.0, %v2957
        %v2959 = vpop.f32.mrb[0].mxu0
        %v2960 = vpop.f32.mrb[0].mxu0
        %v2961 = vadd.f32 0.0, %v2960
        %v2962 = vpop.f32.mrb[0].mxu0
        %2963 = vmatprep.mubr.bf16.mxu0 0
        %2964 = vmatmul.mubr.bf16.gmra.mrb[0].mxu0 %v2788
        %v2965 = vpop.f32.mrb[0].mxu0
        %v2966 = vadd.f32 0.0, %v2965
        %v2967 = vpop.f32.mrb[0].mxu0
        %v2968 = vpop.f32.mrb[0].mxu0
        %v2969 = vadd.f32 0.0, %v2968
        %v2970 = vpop.f32.mrb[0].mxu0
        %2971 = vmatprep.mubr.bf16.mxu0 0
        %2972 = vmatmul.mubr.bf16.gmra.mrb[0].mxu0 %v2789
        %v2973 = vpop.f32.mrb[0].mxu0
        %v2974 = vadd.f32 0.0, %v2973
        %v2975 = vpop.f32.mrb[0].mxu0
        %v2976 = vpop.f32.mrb[0].mxu0
        %v2977 = vadd.f32 0.0, %v2976
        %v2978 = vpop.f32.mrb[0].mxu0
        %2979 = vmatprep.mubr.bf16.mxu0 0
        %2980 = vmatmul.mubr.bf16.gmra.mrb[0].mxu0 %v2790
        %v2981 = vpop.f32.mrb[0].mxu0
        %v2982 = vadd.f32 0.0, %v2981
        %v2983 = vpop.f32.mrb[0].mxu0
        %v2984 = vpop.f32.mrb[0].mxu0
        %v2985 = vadd.f32 0.0, %v2984
        %v2986 = vpop.f32.mrb[0].mxu0
        %2987 = vmatprep.mubr.bf16.mxu0 0
        %2988 = vmatmul.mubr.bf16.gmra.mrb[0].mxu0 %v2791
        %v2989 = vpop.f32.mrb[0].mxu0
        %v2990 = vadd.f32 0.0, %v2989
        %v2991 = vpop.f32.mrb[0].mxu0
        %v2992 = vpop.f32.mrb[0].mxu0
        %v2993 = vadd.f32 0.0, %v2992
        %v2994 = vpop.f32.mrb[0].mxu0
        %2995 = vmatprep.mubr.bf16.mxu0 0
        %2996 = vmatmul.mubr.bf16.gmra.mrb[0].mxu0 %v2792
        %v2997 = vpop.f32.mrb[0].mxu0
        %v2998 = vadd.f32 0.0, %v2997
        %v2999 = vpop.f32.mrb[0].mxu0
        %v3000 = vpop.f32.mrb[0].mxu0
        %v3001 = vadd.f32 0.0, %v3000
        %v3002 = vpop.f32.mrb[0].mxu0
        %3003 = vmatprep.mubr.bf16.mxu0 0
        %3004 = vmatmul.mubr.bf16.gmra.mrb[0].mxu0 %v2793
        %v3005 = vpop.f32.mrb[0].mxu0
        %v3006 = vadd.f32 0.0, %v3005
        %v3007 = vpop.f32.mrb[0].mxu0
        %v3008 = vpop.f32.mrb[0].mxu0
        %v3009 = vadd.f32 0.0, %v3008
        %v3010 = vpop.f32.mrb[0].mxu0
        %3011 = vdwg.mxu0
        %v3012 = vadd.f32 %v2661, %v2894
        %v3013 = vadd.f32 %v2664, %v2897
        %v3014 = vadd.f32 %v2669, %v2902
        %v3015 = vadd.f32 %v2672, %v2905
        %v3016 = vadd.f32 %v2677, %v2910
        %v3017 = vadd.f32 %v2680, %v2913
        %v3018 = vadd.f32 %v2685, %v2918
        %v3019 = vadd.f32 %v2688, %v2921
        %v3020 = vadd.f32 %v2693, %v2926
        %v3021 = vadd.f32 %v2696, %v2929
        %v3022 = vadd.f32 %v2701, %v2934
        %v3023 = vadd.f32 %v2704, %v2937
        %v3024 = vadd.f32 %v2709, %v2942
        %v3025 = vadd.f32 %v2712, %v2945
        %v3026 = vadd.f32 %v2717, %v2950
        %v3027 = vadd.f32 %v2720, %v2953
        %v3028 = vadd.f32 %v2725, %v2958
        %v3029 = vadd.f32 %v2728, %v2961
        %v3030 = vadd.f32 %v2733, %v2966
        %v3031 = vadd.f32 %v2736, %v2969
        %v3032 = vadd.f32 %v2741, %v2974
        %v3033 = vadd.f32 %v2744, %v2977
        %v3034 = vadd.f32 %v2749, %v2982
        %v3035 = vadd.f32 %v2752, %v2985
        %v3036 = vadd.f32 %v2757, %v2990
        %v3037 = vadd.f32 %v2760, %v2993
        %v3038 = vadd.f32 %v2765, %v2998
        %v3039 = vadd.f32 %v2768, %v3001
        %v3040 = vadd.f32 %v2773, %v3006
        %v3041 = vadd.f32 %v2776, %v3009
        %v3042 = vld [vmem:[#allocation3] sm:$0xff]
        %v3043 = vld [vmem:[#allocation3 + $0x8] sm:$0xff]
        %v3044 = vld [vmem:[#allocation3 + $0x10] sm:$0xff]
        %v3045 = vld [vmem:[#allocation3 + $0x18] sm:$0xff]
        %v3046 = vld [vmem:[#allocation3 + $0x20] sm:$0xff]
        %v3047 = vld [vmem:[#allocation3 + $0x28] sm:$0xff]
        %v3048 = vld [vmem:[#allocation3 + $0x30] sm:$0xff]
        %v3049 = vld [vmem:[#allocation3 + $0x38] sm:$0xff]
        %v3050 = vld [vmem:[#allocation3 + $0x40] sm:$0xff]
        %v3051 = vld [vmem:[#allocation3 + $0x48] sm:$0xff]
        %v3052 = vld [vmem:[#allocation3 + $0x50] sm:$0xff]
        %v3053 = vld [vmem:[#allocation3 + $0x58] sm:$0xff]
        %v3054 = vld [vmem:[#allocation3 + $0x60] sm:$0xff]
        %v3055 = vld [vmem:[#allocation3 + $0x68] sm:$0xff]
        %v3056 = vld [vmem:[#allocation3 + $0x70] sm:$0xff]
        %v3057 = vld [vmem:[#allocation3 + $0x78] sm:$0xff]
        %v3058 = vld [vmem:[#allocation3 + $0x80] sm:$0xff]
        %v3059 = vld [vmem:[#allocation3 + $0x88] sm:$0xff]
        %v3060 = vld [vmem:[#allocation3 + $0x90] sm:$0xff]
        %v3061 = vld [vmem:[#allocation3 + $0x98] sm:$0xff]
        %v3062 = vld [vmem:[#allocation3 + $0xa0] sm:$0xff]
        %v3063 = vld [vmem:[#allocation3 + $0xa8] sm:$0xff]
        %v3064 = vld [vmem:[#allocation3 + $0xb0] sm:$0xff]
        %v3065 = vld [vmem:[#allocation3 + $0xb8] sm:$0xff]
        %v3066 = vld [vmem:[#allocation3 + $0xc0] sm:$0xff]
        %v3067 = vld [vmem:[#allocation3 + $0xc8] sm:$0xff]
        %v3068 = vld [vmem:[#allocation3 + $0xd0] sm:$0xff]
        %v3069 = vld [vmem:[#allocation3 + $0xd8] sm:$0xff]
        %v3070 = vld [vmem:[#allocation3 + $0xe0] sm:$0xff]
        %v3071 = vld [vmem:[#allocation3 + $0xe8] sm:$0xff]
        %v3072 = vrot.slane %v3012, 2
        %v3073 = vrot.slane %v3013, 2
        %v3074 = vrot.slane %v3014, 2
        %v3075 = vrot.slane %v3015, 2
        %v3076 = vrot.slane %v3016, 2
        %v3077 = vrot.slane %v3017, 2
        %v3078 = vrot.slane %v3018, 2
        %v3079 = vrot.slane %v3019, 2
        %v3080 = vrot.slane %v3020, 2
        %v3081 = vrot.slane %v3021, 2
        %v3082 = vrot.slane %v3022, 2
        %v3083 = vrot.slane %v3023, 2
        %v3084 = vrot.slane %v3024, 2
        %v3085 = vrot.slane %v3025, 2
        %v3086 = vrot.slane %v3026, 2
        %v3087 = vrot.slane %v3027, 2
        %v3088 = vrot.slane %v3028, 2
        %v3089 = vrot.slane %v3029, 2
        %v3090 = vrot.slane %v3030, 2
        %v3091 = vrot.slane %v3031, 2
        %v3092 = vrot.slane %v3032, 2
        %v3093 = vrot.slane %v3033, 2
        %v3094 = vrot.slane %v3034, 2
        %v3095 = vrot.slane %v3035, 2
        %v3096 = vrot.slane %v3036, 2
        %v3097 = vrot.slane %v3037, 2
        %v3098 = vrot.slane %v3038, 2
        %v3099 = vrot.slane %v3039, 2
        %v3100 = vrot.slane %v3040, 2
        %v3101 = vrot.slane %v3041, 2
        %vm3102 = vcmp.lt.s32.totalorder %v2171, 6
        %v3103 = vsel %vm3102, %v3100, %v3101
        %v3104 = vsel %vm3102, %v3099, %v3100
        %v3105 = vsel %vm3102, %v3098, %v3099
        %v3106 = vsel %vm3102, %v3097, %v3098
        %v3107 = vsel %vm3102, %v3096, %v3097
        %v3108 = vsel %vm3102, %v3095, %v3096
        %v3109 = vsel %vm3102, %v3094, %v3095
        %v3110 = vsel %vm3102, %v3093, %v3094
        %v3111 = vsel %vm3102, %v3092, %v3093
        %v3112 = vsel %vm3102, %v3091, %v3092
        %v3113 = vsel %vm3102, %v3090, %v3091
        %v3114 = vsel %vm3102, %v3089, %v3090
        %v3115 = vsel %vm3102, %v3088, %v3089
        %v3116 = vsel %vm3102, %v3087, %v3088
        %v3117 = vsel %vm3102, %v3086, %v3087
        %v3118 = vsel %vm3102, %v3085, %v3086
        %v3119 = vsel %vm3102, %v3084, %v3085
        %v3120 = vsel %vm3102, %v3083, %v3084
        %v3121 = vsel %vm3102, %v3082, %v3083
        %v3122 = vsel %vm3102, %v3081, %v3082
        %v3123 = vsel %vm3102, %v3080, %v3081
        %v3124 = vsel %vm3102, %v3079, %v3080
        %v3125 = vsel %vm3102, %v3078, %v3079
        %v3126 = vsel %vm3102, %v3077, %v3078
        %v3127 = vsel %vm3102, %v3076, %v3077
        %v3128 = vsel %vm3102, %v3075, %v3076
        %v3129 = vsel %vm3102, %v3074, %v3075
        %v3130 = vsel %vm3102, %v3073, %v3074
        %v3131 = vsel %vm3102, %v3072, %v3073
        %v3132 = vsel %vm3102, %v3101, %v3072
        %v3133 = vadd.f32 %v3042, %v3131
        %v3134 = vadd.f32 %v3043, %v3130
        %v3135 = vadd.f32 %v3044, %v3129
        %v3136 = vadd.f32 %v3045, %v3128
        %v3137 = vadd.f32 %v3046, %v3127
        %v3138 = vadd.f32 %v3047, %v3126
        %v3139 = vadd.f32 %v3048, %v3125
        %v3140 = vadd.f32 %v3049, %v3124
        %v3141 = vadd.f32 %v3050, %v3123
        %v3142 = vadd.f32 %v3051, %v3122
        %v3143 = vadd.f32 %v3052, %v3121
        %v3144 = vadd.f32 %v3053, %v3120
        %v3145 = vadd.f32 %v3054, %v3119
        %v3146 = vadd.f32 %v3055, %v3118
        %v3147 = vadd.f32 %v3056, %v3117
        %v3148 = vadd.f32 %v3057, %v3116
        %v3149 = vadd.f32 %v3058, %v3115
        %v3150 = vadd.f32 %v3059, %v3114
        %v3151 = vadd.f32 %v3060, %v3113
        %v3152 = vadd.f32 %v3061, %v3112
        %v3153 = vadd.f32 %v3062, %v3111
        %v3154 = vadd.f32 %v3063, %v3110
        %v3155 = vadd.f32 %v3064, %v3109
        %v3156 = vadd.f32 %v3065, %v3108
        %v3157 = vadd.f32 %v3066, %v3107
        %v3158 = vadd.f32 %v3067, %v3106
        %v3159 = vadd.f32 %v3068, %v3105
        %v3160 = vadd.f32 %v3069, %v3104
        %v3161 = vadd.f32 %v3070, %v3103
        %v3162 = vadd.f32 %v3071, %v3132
        %3163 = vst [vmem:[#allocation3] sm:$0xff] %v3133
        %3164 = vst [vmem:[#allocation3 + $0x8] sm:$0xff] %v3134
        %3165 = vst [vmem:[#allocation3 + $0x10] sm:$0xff] %v3135
        %3166 = vst [vmem:[#allocation3 + $0x18] sm:$0xff] %v3136
        %3167 = vst [vmem:[#allocation3 + $0x20] sm:$0xff] %v3137
        %3168 = vst [vmem:[#allocation3 + $0x28] sm:$0xff] %v3138
        %3169 = vst [vmem:[#allocation3 + $0x30] sm:$0xff] %v3139
        %3170 = vst [vmem:[#allocation3 + $0x38] sm:$0xff] %v3140
        %3171 = vst [vmem:[#allocation3 + $0x40] sm:$0xff] %v3141
        %3172 = vst [vmem:[#allocation3 + $0x48] sm:$0xff] %v3142
        %3173 = vst [vmem:[#allocation3 + $0x50] sm:$0xff] %v3143
        %3174 = vst [vmem:[#allocation3 + $0x58] sm:$0xff] %v3144
        %3175 = vst [vmem:[#allocation3 + $0x60] sm:$0xff] %v3145
        %3176 = vst [vmem:[#allocation3 + $0x68] sm:$0xff] %v3146
        %3177 = vst [vmem:[#allocation3 + $0x70] sm:$0xff] %v3147
        %3178 = vst [vmem:[#allocation3 + $0x78] sm:$0xff] %v3148
        %3179 = vst [vmem:[#allocation3 + $0x80] sm:$0xff] %v3149
        %3180 = vst [vmem:[#allocation3 + $0x88] sm:$0xff] %v3150
        %3181 = vst [vmem:[#allocation3 + $0x90] sm:$0xff] %v3151
        %3182 = vst [vmem:[#allocation3 + $0x98] sm:$0xff] %v3152
        %3183 = vst [vmem:[#allocation3 + $0xa0] sm:$0xff] %v3153
        %3184 = vst [vmem:[#allocation3 + $0xa8] sm:$0xff] %v3154
        %3185 = vst [vmem:[#allocation3 + $0xb0] sm:$0xff] %v3155
        %3186 = vst [vmem:[#allocation3 + $0xb8] sm:$0xff] %v3156
        %3187 = vst [vmem:[#allocation3 + $0xc0] sm:$0xff] %v3157
        %3188 = vst [vmem:[#allocation3 + $0xc8] sm:$0xff] %v3158
        %3189 = vst [vmem:[#allocation3 + $0xd0] sm:$0xff] %v3159
        %3190 = vst [vmem:[#allocation3 + $0xd8] sm:$0xff] %v3160
        %3191 = vst [vmem:[#allocation3 + $0xe0] sm:$0xff] %v3161
        %3192 = vst [vmem:[#allocation3 + $0xe8] sm:$0xff] %v3162
        %v3193 = vld [vmem:[#allocation3] sm:$0xff]
        %v3194 = vld [vmem:[#allocation3 + $0x8] sm:$0xff]
        %v3195 = vld [vmem:[#allocation3 + $0x10] sm:$0xff]
        %v3196 = vld [vmem:[#allocation3 + $0x18] sm:$0xff]
        %v3197 = vld [vmem:[#allocation3 + $0x20] sm:$0xff]
        %v3198 = vld [vmem:[#allocation3 + $0x28] sm:$0xff]
        %v3199 = vld [vmem:[#allocation3 + $0x30] sm:$0xff]
        %v3200 = vld [vmem:[#allocation3 + $0x38] sm:$0xff]
        %v3201 = vld [vmem:[#allocation3 + $0x40] sm:$0xff]
        %v3202 = vld [vmem:[#allocation3 + $0x48] sm:$0xff]
        %v3203 = vld [vmem:[#allocation3 + $0x50] sm:$0xff]
        %v3204 = vld [vmem:[#allocation3 + $0x58] sm:$0xff]
        %v3205 = vld [vmem:[#allocation3 + $0x60] sm:$0xff]
        %v3206 = vld [vmem:[#allocation3 + $0x68] sm:$0xff]
        %v3207 = vld [vmem:[#allocation3 + $0x70] sm:$0xff]
        %v3208 = vld [vmem:[#allocation3 + $0x78] sm:$0xff]
        %v3209 = vld [vmem:[#allocation3 + $0x80] sm:$0xff]
        %v3210 = vld [vmem:[#allocation3 + $0x88] sm:$0xff]
        %v3211 = vld [vmem:[#allocation3 + $0x90] sm:$0xff]
        %v3212 = vld [vmem:[#allocation3 + $0x98] sm:$0xff]
        %v3213 = vld [vmem:[#allocation3 + $0xa0] sm:$0xff]
        %v3214 = vld [vmem:[#allocation3 + $0xa8] sm:$0xff]
        %v3215 = vld [vmem:[#allocation3 + $0xb0] sm:$0xff]
        %v3216 = vld [vmem:[#allocation3 + $0xb8] sm:$0xff]
        %v3217 = vld [vmem:[#allocation3 + $0xc0] sm:$0xff]
        %v3218 = vld [vmem:[#allocation3 + $0xc8] sm:$0xff]
        %v3219 = vld [vmem:[#allocation3 + $0xd0] sm:$0xff]
        %v3220 = vld [vmem:[#allocation3 + $0xd8] sm:$0xff]
        %v3221 = vld [vmem:[#allocation3 + $0xe0] sm:$0xff]
        %v3222 = vld [vmem:[#allocation3 + $0xe8] sm:$0xff]
        %v3223 = vld [vmem:[%s3] sm:$0x1]
        %v3225 = vlaneseq
        %v3226 = vshrl.u32 %v3225, 7
        %v3227 = vsub.s32 0, %v3226
        %v3228 = vrot.slane %v3223, %v3227
        %v3230 = vmul.f32 %v3193, %v3228
        %v3231 = vmul.f32 %v3194, %v3228
        %v3232 = vmul.f32 %v3195, %v3228
        %v3233 = vmul.f32 %v3196, %v3228
        %v3234 = vmul.f32 %v3197, %v3228
        %v3235 = vmul.f32 %v3198, %v3228
        %v3236 = vmul.f32 %v3199, %v3228
        %v3237 = vmul.f32 %v3200, %v3228
        %v3238 = vmul.f32 %v3201, %v3228
        %v3239 = vmul.f32 %v3202, %v3228
        %v3240 = vmul.f32 %v3203, %v3228
        %v3241 = vmul.f32 %v3204, %v3228
        %v3242 = vmul.f32 %v3205, %v3228
        %v3243 = vmul.f32 %v3206, %v3228
        %v3244 = vmul.f32 %v3207, %v3228
        %v3245 = vmul.f32 %v3208, %v3228
        %v3246 = vmul.f32 %v3209, %v3228
        %v3247 = vmul.f32 %v3210, %v3228
        %v3248 = vmul.f32 %v3211, %v3228
        %v3249 = vmul.f32 %v3212, %v3228
        %v3250 = vmul.f32 %v3213, %v3228
        %v3251 = vmul.f32 %v3214, %v3228
        %v3252 = vmul.f32 %v3215, %v3228
        %v3253 = vmul.f32 %v3216, %v3228
        %v3254 = vmul.f32 %v3217, %v3228
        %v3255 = vmul.f32 %v3218, %v3228
        %v3256 = vmul.f32 %v3219, %v3228
        %v3257 = vmul.f32 %v3220, %v3228
        %v3258 = vmul.f32 %v3221, %v3228
        %v3259 = vmul.f32 %v3222, %v3228
        %v3260 = vld [vmem:[%s4] sm:$0x1]
        %v3262 = vlaneseq
        %v3263 = vshrl.u32 %v3262, 7
        %v3264 = vsub.s32 0, %v3263
        %v3265 = vrot.slane %v3260, %v3264
        %v3267 = vadd.f32 %v3230, %v3265
        %v3268 = vadd.f32 %v3231, %v3265
        %v3269 = vadd.f32 %v3232, %v3265
        %v3270 = vadd.f32 %v3233, %v3265
        %v3271 = vadd.f32 %v3234, %v3265
        %v3272 = vadd.f32 %v3235, %v3265
        %v3273 = vadd.f32 %v3236, %v3265
        %v3274 = vadd.f32 %v3237, %v3265
        %v3275 = vadd.f32 %v3238, %v3265
        %v3276 = vadd.f32 %v3239, %v3265
        %v3277 = vadd.f32 %v3240, %v3265
        %v3278 = vadd.f32 %v3241, %v3265
        %v3279 = vadd.f32 %v3242, %v3265
        %v3280 = vadd.f32 %v3243, %v3265
        %v3281 = vadd.f32 %v3244, %v3265
        %v3282 = vadd.f32 %v3245, %v3265
        %v3283 = vadd.f32 %v3246, %v3265
        %v3284 = vadd.f32 %v3247, %v3265
        %v3285 = vadd.f32 %v3248, %v3265
        %v3286 = vadd.f32 %v3249, %v3265
        %v3287 = vadd.f32 %v3250, %v3265
        %v3288 = vadd.f32 %v3251, %v3265
        %v3289 = vadd.f32 %v3252, %v3265
        %v3290 = vadd.f32 %v3253, %v3265
        %v3291 = vadd.f32 %v3254, %v3265
        %v3292 = vadd.f32 %v3255, %v3265
        %v3293 = vadd.f32 %v3256, %v3265
        %v3294 = vadd.f32 %v3257, %v3265
        %v3295 = vadd.f32 %v3258, %v3265
        %v3296 = vadd.f32 %v3259, %v3265
        %v3297 = vmax.f32 %v3267, 0.0
        %v3298 = vmax.f32 %v3268, 0.0
        %v3299 = vmax.f32 %v3269, 0.0
        %v3300 = vmax.f32 %v3270, 0.0
        %v3301 = vmax.f32 %v3271, 0.0
        %v3302 = vmax.f32 %v3272, 0.0
        %v3303 = vmax.f32 %v3273, 0.0
        %v3304 = vmax.f32 %v3274, 0.0
        %v3305 = vmax.f32 %v3275, 0.0
        %v3306 = vmax.f32 %v3276, 0.0
        %v3307 = vmax.f32 %v3277, 0.0
        %v3308 = vmax.f32 %v3278, 0.0
        %v3309 = vmax.f32 %v3279, 0.0
        %v3310 = vmax.f32 %v3280, 0.0
        %v3311 = vmax.f32 %v3281, 0.0
        %v3312 = vmax.f32 %v3282, 0.0
        %v3313 = vmax.f32 %v3283, 0.0
        %v3314 = vmax.f32 %v3284, 0.0
        %v3315 = vmax.f32 %v3285, 0.0
        %v3316 = vmax.f32 %v3286, 0.0
        %v3317 = vmax.f32 %v3287, 0.0
        %v3318 = vmax.f32 %v3288, 0.0
        %v3319 = vmax.f32 %v3289, 0.0
        %v3320 = vmax.f32 %v3290, 0.0
        %v3321 = vmax.f32 %v3291, 0.0
        %v3322 = vmax.f32 %v3292, 0.0
        %v3323 = vmax.f32 %v3293, 0.0
        %v3324 = vmax.f32 %v3294, 0.0
        %v3325 = vmax.f32 %v3295, 0.0
        %v3326 = vmax.f32 %v3296, 0.0
        %v3327 = vld [vmem:[%s321] sm:$0xff]
        %v3328 = vld [vmem:[%s321 + $0x8] sm:$0xff]
        %v3329 = vld [vmem:[%s321 + $0x10] sm:$0xff]
        %v3330 = vld [vmem:[%s321 + $0x18] sm:$0xff]
        %v3331 = vld [vmem:[%s321 + $0x20] sm:$0xff]
        %v3332 = vld [vmem:[%s321 + $0x28] sm:$0xff]
        %v3333 = vld [vmem:[%s321 + $0x30] sm:$0xff]
        %v3334 = vld [vmem:[%s321 + $0x38] sm:$0xff]
        %v3335 = vld [vmem:[%s321 + $0x40] sm:$0xff]
        %v3336 = vld [vmem:[%s321 + $0x48] sm:$0xff]
        %v3337 = vld [vmem:[%s321 + $0x50] sm:$0xff]
        %v3338 = vld [vmem:[%s321 + $0x58] sm:$0xff]
        %v3339 = vld [vmem:[%s321 + $0x60] sm:$0xff]
        %v3340 = vld [vmem:[%s321 + $0x68] sm:$0xff]
        %v3341 = vld [vmem:[%s321 + $0x70] sm:$0xff]
        %v3342 = vld [vmem:[%s321 + $0x78] sm:$0xff]
        %v3343 = vld [vmem:[%s321 + $0x80] sm:$0xff]
        %v3344 = vld [vmem:[%s321 + $0x88] sm:$0xff]
        %v3345 = vld [vmem:[%s321 + $0x90] sm:$0xff]
        %v3346 = vld [vmem:[%s321 + $0x98] sm:$0xff]
        %v3347 = vld [vmem:[%s321 + $0xa0] sm:$0xff]
        %v3348 = vld [vmem:[%s321 + $0xa8] sm:$0xff]
        %v3349 = vld [vmem:[%s321 + $0xb0] sm:$0xff]
        %v3350 = vld [vmem:[%s321 + $0xb8] sm:$0xff]
        %v3351 = vld [vmem:[%s321 + $0xc0] sm:$0xff]
        %v3352 = vld [vmem:[%s321 + $0xc8] sm:$0xff]
        %v3353 = vld [vmem:[%s321 + $0xd0] sm:$0xff]
        %v3354 = vld [vmem:[%s321 + $0xd8] sm:$0xff]
        %v3355 = vld [vmem:[%s321 + $0xe0] sm:$0xff]
        %v3356 = vld [vmem:[%s321 + $0xe8] sm:$0xff]
        %3358 = vset.pattern.permute.xlu0 0
        %3359 = vperm.xlu0 %3358, %v3327
        %v3360 = vpop.permute.xlu0 %3359
        %3363 = vset.pattern.permute.xlu0 0
        %3364 = vperm.xlu0 %3363, %v3328
        %v3365 = vpop.permute.xlu0 %3364
        %3368 = vset.pattern.permute.xlu0 0
        %3369 = vperm.xlu0 %3368, %v3329
        %v3370 = vpop.permute.xlu0 %3369
        %3373 = vset.pattern.permute.xlu0 0
        %3374 = vperm.xlu0 %3373, %v3330
        %v3375 = vpop.permute.xlu0 %3374
        %3378 = vset.pattern.permute.xlu0 0
        %3379 = vperm.xlu0 %3378, %v3331
        %v3380 = vpop.permute.xlu0 %3379
        %3383 = vset.pattern.permute.xlu0 0
        %3384 = vperm.xlu0 %3383, %v3332
        %v3385 = vpop.permute.xlu0 %3384
        %3388 = vset.pattern.permute.xlu0 0
        %3389 = vperm.xlu0 %3388, %v3333
        %v3390 = vpop.permute.xlu0 %3389
        %3393 = vset.pattern.permute.xlu0 0
        %3394 = vperm.xlu0 %3393, %v3334
        %v3395 = vpop.permute.xlu0 %3394
        %3398 = vset.pattern.permute.xlu0 0
        %3399 = vperm.xlu0 %3398, %v3335
        %v3400 = vpop.permute.xlu0 %3399
        %3403 = vset.pattern.permute.xlu0 0
        %3404 = vperm.xlu0 %3403, %v3336
        %v3405 = vpop.permute.xlu0 %3404
        %3408 = vset.pattern.permute.xlu0 0
        %3409 = vperm.xlu0 %3408, %v3337
        %v3410 = vpop.permute.xlu0 %3409
        %3413 = vset.pattern.permute.xlu0 0
        %3414 = vperm.xlu0 %3413, %v3338
        %v3415 = vpop.permute.xlu0 %3414
        %3418 = vset.pattern.permute.xlu0 0
        %3419 = vperm.xlu0 %3418, %v3339
        %v3420 = vpop.permute.xlu0 %3419
        %3423 = vset.pattern.permute.xlu0 0
        %3424 = vperm.xlu0 %3423, %v3340
        %v3425 = vpop.permute.xlu0 %3424
        %3428 = vset.pattern.permute.xlu0 0
        %3429 = vperm.xlu0 %3428, %v3341
        %v3430 = vpop.permute.xlu0 %3429
        %3433 = vset.pattern.permute.xlu0 0
        %3434 = vperm.xlu0 %3433, %v3342
        %v3435 = vpop.permute.xlu0 %3434
        %3438 = vset.pattern.permute.xlu0 0
        %3439 = vperm.xlu0 %3438, %v3343
        %v3440 = vpop.permute.xlu0 %3439
        %3443 = vset.pattern.permute.xlu0 0
        %3444 = vperm.xlu0 %3443, %v3344
        %v3445 = vpop.permute.xlu0 %3444
        %3448 = vset.pattern.permute.xlu0 0
        %3449 = vperm.xlu0 %3448, %v3345
        %v3450 = vpop.permute.xlu0 %3449
        %3453 = vset.pattern.permute.xlu0 0
        %3454 = vperm.xlu0 %3453, %v3346
        %v3455 = vpop.permute.xlu0 %3454
        %3458 = vset.pattern.permute.xlu0 0
        %3459 = vperm.xlu0 %3458, %v3347
        %v3460 = vpop.permute.xlu0 %3459
        %3463 = vset.pattern.permute.xlu0 0
        %3464 = vperm.xlu0 %3463, %v3348
        %v3465 = vpop.permute.xlu0 %3464
        %3468 = vset.pattern.permute.xlu0 0
        %3469 = vperm.xlu0 %3468, %v3349
        %v3470 = vpop.permute.xlu0 %3469
        %3473 = vset.pattern.permute.xlu0 0
        %3474 = vperm.xlu0 %3473, %v3350
        %v3475 = vpop.permute.xlu0 %3474
        %3478 = vset.pattern.permute.xlu0 0
        %3479 = vperm.xlu0 %3478, %v3351
        %v3480 = vpop.permute.xlu0 %3479
        %3483 = vset.pattern.permute.xlu0 0
        %3484 = vperm.xlu0 %3483, %v3352
        %v3485 = vpop.permute.xlu0 %3484
        %3488 = vset.pattern.permute.xlu0 0
        %3489 = vperm.xlu0 %3488, %v3353
        %v3490 = vpop.permute.xlu0 %3489
        %3493 = vset.pattern.permute.xlu0 0
        %3494 = vperm.xlu0 %3493, %v3354
        %v3495 = vpop.permute.xlu0 %3494
        %3498 = vset.pattern.permute.xlu0 0
        %3499 = vperm.xlu0 %3498, %v3355
        %v3500 = vpop.permute.xlu0 %3499
        %3503 = vset.pattern.permute.xlu0 0
        %3504 = vperm.xlu0 %3503, %v3356
        %v3505 = vpop.permute.xlu0 %3504
        %v3507 = vmul.f32 %v3297, %v3360
        %v3508 = vmul.f32 %v3298, %v3365
        %v3509 = vmul.f32 %v3299, %v3370
        %v3510 = vmul.f32 %v3300, %v3375
        %v3511 = vmul.f32 %v3301, %v3380
        %v3512 = vmul.f32 %v3302, %v3385
        %v3513 = vmul.f32 %v3303, %v3390
        %v3514 = vmul.f32 %v3304, %v3395
        %v3515 = vmul.f32 %v3305, %v3400
        %v3516 = vmul.f32 %v3306, %v3405
        %v3517 = vmul.f32 %v3307, %v3410
        %v3518 = vmul.f32 %v3308, %v3415
        %v3519 = vmul.f32 %v3309, %v3420
        %v3520 = vmul.f32 %v3310, %v3425
        %v3521 = vmul.f32 %v3311, %v3430
        %v3522 = vmul.f32 %v3312, %v3435
        %v3523 = vmul.f32 %v3313, %v3440
        %v3524 = vmul.f32 %v3314, %v3445
        %v3525 = vmul.f32 %v3315, %v3450
        %v3526 = vmul.f32 %v3316, %v3455
        %v3527 = vmul.f32 %v3317, %v3460
        %v3528 = vmul.f32 %v3318, %v3465
        %v3529 = vmul.f32 %v3319, %v3470
        %v3530 = vmul.f32 %v3320, %v3475
        %v3531 = vmul.f32 %v3321, %v3480
        %v3532 = vmul.f32 %v3322, %v3485
        %v3533 = vmul.f32 %v3323, %v3490
        %v3534 = vmul.f32 %v3324, %v3495
        %v3535 = vmul.f32 %v3325, %v3500
        %v3536 = vmul.f32 %v3326, %v3505
        %v3537 = vpack.c.bf16 %v3508, %v3507
        %v3538 = vpack.c.bf16 %v3510, %v3509
        %v3539 = vpack.c.bf16 %v3512, %v3511
        %v3540 = vpack.c.bf16 %v3514, %v3513
        %v3541 = vpack.c.bf16 %v3516, %v3515
        %v3542 = vpack.c.bf16 %v3518, %v3517
        %v3543 = vpack.c.bf16 %v3520, %v3519
        %v3544 = vpack.c.bf16 %v3522, %v3521
        %v3545 = vpack.c.bf16 %v3524, %v3523
        %v3546 = vpack.c.bf16 %v3526, %v3525
        %v3547 = vpack.c.bf16 %v3528, %v3527
        %v3548 = vpack.c.bf16 %v3530, %v3529
        %v3549 = vpack.c.bf16 %v3532, %v3531
        %v3550 = vpack.c.bf16 %v3534, %v3533
        %v3551 = vpack.c.bf16 %v3536, %v3535
        %3552 = vst [vmem:[#allocation5] sm:$0xff] %v3537
        %3553 = vst [vmem:[#allocation5 + $0x8] sm:$0xff] %v3538
        %3554 = vst [vmem:[#allocation5 + $0x10] sm:$0xff] %v3539
        %3555 = vst [vmem:[#allocation5 + $0x18] sm:$0xff] %v3540
        %3556 = vst [vmem:[#allocation5 + $0x20] sm:$0xff] %v3541
        %3557 = vst [vmem:[#allocation5 + $0x28] sm:$0xff] %v3542
        %3558 = vst [vmem:[#allocation5 + $0x30] sm:$0xff] %v3543
        %3559 = vst [vmem:[#allocation5 + $0x38] sm:$0xff] %v3544
        %3560 = vst [vmem:[#allocation5 + $0x40] sm:$0xff] %v3545
        %3561 = vst [vmem:[#allocation5 + $0x48] sm:$0xff] %v3546
        %3562 = vst [vmem:[#allocation5 + $0x50] sm:$0xff] %v3547
        %3563 = vst [vmem:[#allocation5 + $0x58] sm:$0xff] %v3548
        %3564 = vst [vmem:[#allocation5 + $0x60] sm:$0xff] %v3549
        %3565 = vst [vmem:[#allocation5 + $0x68] sm:$0xff] %v3550
        %3566 = vst [vmem:[#allocation5 + $0x70] sm:$0xff] %v3551
        %v3567 = vld [vmem:[#allocation5] sm:$0xff]
        %v3568 = vld [vmem:[#allocation5 + $0x8] sm:$0xff]
        %v3569 = vld [vmem:[#allocation5 + $0x10] sm:$0xff]
        %v3570 = vld [vmem:[#allocation5 + $0x18] sm:$0xff]
        %v3571 = vld [vmem:[#allocation5 + $0x20] sm:$0xff]
        %v3572 = vld [vmem:[#allocation5 + $0x28] sm:$0xff]
        %v3573 = vld [vmem:[#allocation5 + $0x30] sm:$0xff]
        %v3574 = vld [vmem:[#allocation5 + $0x38] sm:$0xff]
        %v3575 = vld [vmem:[#allocation5 + $0x40] sm:$0xff]
        %v3576 = vld [vmem:[#allocation5 + $0x48] sm:$0xff]
        %v3577 = vld [vmem:[#allocation5 + $0x50] sm:$0xff]
        %v3578 = vld [vmem:[#allocation5 + $0x58] sm:$0xff]
        %v3579 = vld [vmem:[#allocation10] sm:$0xf]
        %v3580 = vld [vmem:[#allocation10 + $0x4] sm:$0xf]
        %v3581 = vld [vmem:[#allocation10 + $0x8] sm:$0xf]
        %v3582 = vld [vmem:[#allocation10 + $0xc] sm:$0xf]
        %v3583 = vld [vmem:[#allocation10 + $0x10] sm:$0xf]
        %v3584 = vld [vmem:[#allocation10 + $0x14] sm:$0xf]
        %v3585 = vld [vmem:[#allocation10 + $0x18] sm:$0xf]
        %v3586 = vld [vmem:[#allocation10 + $0x1c] sm:$0xf]
        %v3587 = vld [vmem:[#allocation10 + $0x20] sm:$0xf]
        %v3588 = vld [vmem:[#allocation10 + $0x24] sm:$0xf]
        %v3589 = vld [vmem:[#allocation10 + $0x28] sm:$0xf]
        %v3590 = vld [vmem:[#allocation10 + $0x2c] sm:$0xf]
        %v3591 = vld [vmem:[#allocation10 + $0x30] sm:$0xf]
        %v3592 = vld [vmem:[#allocation10 + $0x34] sm:$0xf]
        %v3593 = vld [vmem:[#allocation10 + $0x38] sm:$0xf]
        %v3594 = vld [vmem:[#allocation10 + $0x3c] sm:$0xf]
        %v3595 = vld [vmem:[#allocation5 + $0x8] sm:$0xf0]
        %v3596 = vld [vmem:[#allocation5 + $0x60] sm:$0xff]
        %v3597 = vld [vmem:[#allocation5 + $0x68] sm:$0xf]
        %s3598 = scalar_lea.vmem [#allocation10], 192
        %v3599 = vld [vmem:[%s3598] sm:$0xf]
        %v3600 = vld [vmem:[%s3598 + $0x4] sm:$0xf]
        %v3601 = vld [vmem:[%s3598 + $0x8] sm:$0xf]
        %v3602 = vld [vmem:[%s3598 + $0xc] sm:$0xf]
        %v3603 = vld [vmem:[%s3598 + $0x10] sm:$0xf]
        %v3604 = vld [vmem:[%s3598 + $0x14] sm:$0xf]
        %v3605 = vld [vmem:[%s3598 + $0x18] sm:$0xf]
        %v3606 = vld [vmem:[%s3598 + $0x1c] sm:$0xf]
        %v3607 = vld [vmem:[%s3598 + $0x20] sm:$0xf]
        %v3608 = vld [vmem:[%s3598 + $0x24] sm:$0xf]
        %v3609 = vld [vmem:[%s3598 + $0x28] sm:$0xf]
        %v3610 = vld [vmem:[%s3598 + $0x2c] sm:$0xf]
        %v3611 = vld [vmem:[%s3598 + $0x30] sm:$0xf]
        %v3612 = vld [vmem:[%s3598 + $0x34] sm:$0xf]
        %v3613 = vld [vmem:[%s3598 + $0x38] sm:$0xf]
        %v3614 = vld [vmem:[%s3598 + $0x3c] sm:$0xf]
        %v3628 = vrot.slane %v3595, 4
        %v3629 = vrot.slane %v3569, 4
        %v3630 = vsel %vm589, %v3628, %v3629
        %v3631 = vrot.slane %v3570, 4
        %v3632 = vsel %vm589, %v3629, %v3631
        %v3633 = vrot.slane %v3571, 4
        %v3634 = vsel %vm589, %v3631, %v3633
        %v3635 = vrot.slane %v3572, 4
        %v3636 = vsel %vm589, %v3633, %v3635
        %v3637 = vrot.slane %v3573, 4
        %v3638 = vsel %vm589, %v3635, %v3637
        %v3639 = vrot.slane %v3574, 4
        %v3640 = vsel %vm589, %v3637, %v3639
        %v3641 = vrot.slane %v3575, 4
        %v3642 = vsel %vm589, %v3639, %v3641
        %v3643 = vrot.slane %v3576, 4
        %v3644 = vsel %vm589, %v3641, %v3643
        %v3645 = vrot.slane %v3577, 4
        %v3646 = vsel %vm589, %v3643, %v3645
        %v3647 = vrot.slane %v3578, 4
        %v3648 = vsel %vm589, %v3645, %v3647
        %v3649 = vrot.slane %v3596, 4
        %v3650 = vsel %vm589, %v3647, %v3649
        %v3651 = vrot.slane %v3597, 4
        %v3652 = vsel %vm589, %v3649, %v3651
        %v3681 = vunpack.c.l.b16 %v3599
        %v3682 = vunpack.c.l.b16 %v3600
        %v3683 = vunpack.c.l.b16 %v3601
        %v3684 = vunpack.c.l.b16 %v3602
        %v3685 = vunpack.c.l.b16 %v3603
        %v3686 = vunpack.c.l.b16 %v3604
        %v3687 = vunpack.c.l.b16 %v3605
        %v3688 = vunpack.c.l.b16 %v3606
        %v3689 = vunpack.c.l.b16 %v3607
        %v3690 = vunpack.c.l.b16 %v3608
        %v3691 = vunpack.c.l.b16 %v3609
        %v3692 = vunpack.c.l.b16 %v3610
        %v3693 = vunpack.c.l.b16 %v3611
        %v3694 = vunpack.c.l.b16 %v3612
        %v3695 = vunpack.c.l.b16 %v3613
        %v3696 = vunpack.c.l.b16 %v3614
        %v3697 = vpack.c.b16 %v3682, %v3681
        %v3698 = vpack.c.b16 %v3684, %v3683
        %v3699 = vpack.c.b16 %v3686, %v3685
        %v3700 = vpack.c.b16 %v3688, %v3687
        %v3701 = vpack.c.b16 %v3690, %v3689
        %v3702 = vpack.c.b16 %v3692, %v3691
        %v3703 = vpack.c.b16 %v3694, %v3693
        %v3704 = vpack.c.b16 %v3696, %v3695
        %3713 = vmatprep.subr.bf16.mxu0 0
        %3714 = vmatpush1.bf16.msra.mxu0 %v3697
        %3715 = vmatprep.subr.bf16.mxu0 0
        %3716 = vmatpush1.bf16.msra.mxu0 %v3698
        %3717 = vmatprep.subr.bf16.mxu0 0
        %3718 = vmatpush1.bf16.msra.mxu0 %v3699
        %3719 = vmatprep.subr.bf16.mxu0 0
        %3720 = vmatpush1.bf16.msra.mxu0 %v3700
        %3721 = vmatprep.subr.bf16.mxu0 0
        %3722 = vmatpush1.bf16.msra.mxu0 %v3701
        %3723 = vmatprep.subr.bf16.mxu0 0
        %3724 = vmatpush1.bf16.msra.mxu0 %v3702
        %3725 = vmatprep.subr.bf16.mxu0 0
        %3726 = vmatpush1.bf16.msra.mxu0 %v3703
        %3727 = vmatprep.subr.bf16.mxu0 0
        %3728 = vmatpush1.bf16.msra.mxu0 %v3704
        %3729 = vmatprep.subr.bf16.mxu0 0
        %3730 = vmatpush1.bf16.msra.mxu0 0
        %3731 = vmatprep.subr.bf16.mxu0 0
        %3732 = vmatpush1.bf16.msra.mxu0 0
        %3733 = vmatprep.subr.bf16.mxu0 0
        %3734 = vmatpush1.bf16.msra.mxu0 0
        %3735 = vmatprep.subr.bf16.mxu0 0
        %3736 = vmatpush1.bf16.msra.mxu0 0
        %3737 = vmatprep.subr.bf16.mxu0 0
        %3738 = vmatpush1.bf16.msra.mxu0 0
        %3739 = vmatprep.subr.bf16.mxu0 0
        %3740 = vmatpush1.bf16.msra.mxu0 0
        %3741 = vmatprep.subr.bf16.mxu0 0
        %3742 = vmatpush1.bf16.msra.mxu0 0
        %3743 = vmatprep.subr.bf16.mxu0 0
        %3744 = vmatpush1.bf16.msra.mxu0 0
        %3745 = vmatprep.mubr.bf16.mxu0 0
        %3746 = vmatmul.mubr.bf16.gmra.mrb[0].mxu0 %v3630
        %v3747 = vpop.f32.mrb[0].mxu0
        %v3748 = vadd.f32 0.0, %v3747
        %v3749 = vpop.f32.mrb[0].mxu0
        %v3750 = vpop.f32.mrb[0].mxu0
        %v3751 = vadd.f32 0.0, %v3750
        %v3752 = vpop.f32.mrb[0].mxu0
        %3753 = vmatprep.mubr.bf16.mxu0 0
        %3754 = vmatmul.mubr.bf16.gmra.mrb[0].mxu0 %v3632
        %v3755 = vpop.f32.mrb[0].mxu0
        %v3756 = vadd.f32 0.0, %v3755
        %v3757 = vpop.f32.mrb[0].mxu0
        %v3758 = vpop.f32.mrb[0].mxu0
        %v3759 = vadd.f32 0.0, %v3758
        %v3760 = vpop.f32.mrb[0].mxu0
        %3761 = vmatprep.mubr.bf16.mxu0 0
        %3762 = vmatmul.mubr.bf16.gmra.mrb[0].mxu0 %v3634
        %v3763 = vpop.f32.mrb[0].mxu0
        %v3764 = vadd.f32 0.0, %v3763
        %v3765 = vpop.f32.mrb[0].mxu0
        %v3766 = vpop.f32.mrb[0].mxu0
        %v3767 = vadd.f32 0.0, %v3766
        %v3768 = vpop.f32.mrb[0].mxu0
        %3769 = vmatprep.mubr.bf16.mxu0 0
        %3770 = vmatmul.mubr.bf16.gmra.mrb[0].mxu0 %v3636
        %v3771 = vpop.f32.mrb[0].mxu0
        %v3772 = vadd.f32 0.0, %v3771
        %v3773 = vpop.f32.mrb[0].mxu0
        %v3774 = vpop.f32.mrb[0].mxu0
        %v3775 = vadd.f32 0.0, %v3774
        %v3776 = vpop.f32.mrb[0].mxu0
        %3777 = vmatprep.mubr.bf16.mxu0 0
        %3778 = vmatmul.mubr.bf16.gmra.mrb[0].mxu0 %v3638
        %v3779 = vpop.f32.mrb[0].mxu0
        %v3780 = vadd.f32 0.0, %v3779
        %v3781 = vpop.f32.mrb[0].mxu0
        %v3782 = vpop.f32.mrb[0].mxu0
        %v3783 = vadd.f32 0.0, %v3782
        %v3784 = vpop.f32.mrb[0].mxu0
        %3785 = vmatprep.mubr.bf16.mxu0 0
        %3786 = vmatmul.mubr.bf16.gmra.mrb[0].mxu0 %v3640
        %v3787 = vpop.f32.mrb[0].mxu0
        %v3788 = vadd.f32 0.0, %v3787
        %v3789 = vpop.f32.mrb[0].mxu0
        %v3790 = vpop.f32.mrb[0].mxu0
        %v3791 = vadd.f32 0.0, %v3790
        %v3792 = vpop.f32.mrb[0].mxu0
        %3793 = vmatprep.mubr.bf16.mxu0 0
        %3794 = vmatmul.mubr.bf16.gmra.mrb[0].mxu0 %v3642
        %v3795 = vpop.f32.mrb[0].mxu0
        %v3796 = vadd.f32 0.0, %v3795
        %v3797 = vpop.f32.mrb[0].mxu0
        %v3798 = vpop.f32.mrb[0].mxu0
        %v3799 = vadd.f32 0.0, %v3798
        %v3800 = vpop.f32.mrb[0].mxu0
        %3801 = vmatprep.mubr.bf16.mxu0 0
        %3802 = vmatmul.mubr.bf16.gmra.mrb[0].mxu0 %v3644
        %v3803 = vpop.f32.mrb[0].mxu0
        %v3804 = vadd.f32 0.0, %v3803
        %v3805 = vpop.f32.mrb[0].mxu0
        %v3806 = vpop.f32.mrb[0].mxu0
        %v3807 = vadd.f32 0.0, %v3806
        %v3808 = vpop.f32.mrb[0].mxu0
        %3809 = vmatprep.mubr.bf16.mxu0 0
        %3810 = vmatmul.mubr.bf16.gmra.mrb[0].mxu0 %v3646
        %v3811 = vpop.f32.mrb[0].mxu0
        %v3812 = vadd.f32 0.0, %v3811
        %v3813 = vpop.f32.mrb[0].mxu0
        %v3814 = vpop.f32.mrb[0].mxu0
        %v3815 = vadd.f32 0.0, %v3814
        %v3816 = vpop.f32.mrb[0].mxu0
        %3817 = vmatprep.mubr.bf16.mxu0 0
        %3818 = vmatmul.mubr.bf16.gmra.mrb[0].mxu0 %v3648
        %v3819 = vpop.f32.mrb[0].mxu0
        %v3820 = vadd.f32 0.0, %v3819
        %v3821 = vpop.f32.mrb[0].mxu0
        %v3822 = vpop.f32.mrb[0].mxu0
        %v3823 = vadd.f32 0.0, %v3822
        %v3824 = vpop.f32.mrb[0].mxu0
        %3825 = vmatprep.mubr.bf16.mxu0 0
        %3826 = vmatmul.mubr.bf16.gmra.mrb[0].mxu0 %v3650
        %v3827 = vpop.f32.mrb[0].mxu0
        %v3828 = vadd.f32 0.0, %v3827
        %v3829 = vpop.f32.mrb[0].mxu0
        %v3830 = vpop.f32.mrb[0].mxu0
        %v3831 = vadd.f32 0.0, %v3830
        %v3832 = vpop.f32.mrb[0].mxu0
        %3833 = vmatprep.mubr.bf16.mxu0 0
        %3834 = vmatmul.mubr.bf16.gmra.mrb[0].mxu0 %v3652
        %v3835 = vpop.f32.mrb[0].mxu0
        %v3836 = vadd.f32 0.0, %v3835
        %v3837 = vpop.f32.mrb[0].mxu0
        %v3838 = vpop.f32.mrb[0].mxu0
        %v3839 = vadd.f32 0.0, %v3838
        %v3840 = vpop.f32.mrb[0].mxu0
        %3841 = vdwg.mxu0
        %v3858 = vunpack.c.l.b16 %v3579
        %v3859 = vunpack.c.l.b16 %v3580
        %v3860 = vunpack.c.l.b16 %v3581
        %v3861 = vunpack.c.l.b16 %v3582
        %v3862 = vunpack.c.l.b16 %v3583
        %v3863 = vunpack.c.l.b16 %v3584
        %v3864 = vunpack.c.l.b16 %v3585
        %v3865 = vunpack.c.l.b16 %v3586
        %v3866 = vunpack.c.l.b16 %v3587
        %v3867 = vunpack.c.l.b16 %v3588
        %v3868 = vunpack.c.l.b16 %v3589
        %v3869 = vunpack.c.l.b16 %v3590
        %v3870 = vunpack.c.l.b16 %v3591
        %v3871 = vunpack.c.l.b16 %v3592
        %v3872 = vunpack.c.l.b16 %v3593
        %v3873 = vunpack.c.l.b16 %v3594
        %v3874 = vpack.c.b16 %v3859, %v3858
        %v3875 = vpack.c.b16 %v3861, %v3860
        %v3876 = vpack.c.b16 %v3863, %v3862
        %v3877 = vpack.c.b16 %v3865, %v3864
        %v3878 = vpack.c.b16 %v3867, %v3866
        %v3879 = vpack.c.b16 %v3869, %v3868
        %v3880 = vpack.c.b16 %v3871, %v3870
        %v3881 = vpack.c.b16 %v3873, %v3872
        %3890 = vmatprep.subr.bf16.mxu0 0
        %3891 = vmatpush1.bf16.msra.mxu0 %v3874
        %3892 = vmatprep.subr.bf16.mxu0 0
        %3893 = vmatpush1.bf16.msra.mxu0 %v3875
        %3894 = vmatprep.subr.bf16.mxu0 0
        %3895 = vmatpush1.bf16.msra.mxu0 %v3876
        %3896 = vmatprep.subr.bf16.mxu0 0
        %3897 = vmatpush1.bf16.msra.mxu0 %v3877
        %3898 = vmatprep.subr.bf16.mxu0 0
        %3899 = vmatpush1.bf16.msra.mxu0 %v3878
        %3900 = vmatprep.subr.bf16.mxu0 0
        %3901 = vmatpush1.bf16.msra.mxu0 %v3879
        %3902 = vmatprep.subr.bf16.mxu0 0
        %3903 = vmatpush1.bf16.msra.mxu0 %v3880
        %3904 = vmatprep.subr.bf16.mxu0 0
        %3905 = vmatpush1.bf16.msra.mxu0 %v3881
        %3906 = vmatprep.subr.bf16.mxu0 0
        %3907 = vmatpush1.bf16.msra.mxu0 0
        %3908 = vmatprep.subr.bf16.mxu0 0
        %3909 = vmatpush1.bf16.msra.mxu0 0
        %3910 = vmatprep.subr.bf16.mxu0 0
        %3911 = vmatpush1.bf16.msra.mxu0 0
        %3912 = vmatprep.subr.bf16.mxu0 0
        %3913 = vmatpush1.bf16.msra.mxu0 0
        %3914 = vmatprep.subr.bf16.mxu0 0
        %3915 = vmatpush1.bf16.msra.mxu0 0
        %3916 = vmatprep.subr.bf16.mxu0 0
        %3917 = vmatpush1.bf16.msra.mxu0 0
        %3918 = vmatprep.subr.bf16.mxu0 0
        %3919 = vmatpush1.bf16.msra.mxu0 0
        %3920 = vmatprep.subr.bf16.mxu0 0
        %3921 = vmatpush1.bf16.msra.mxu0 0
        %3922 = vmatprep.mubr.bf16.mxu0 0
        %3923 = vmatmul.mubr.bf16.gmra.mrb[0].mxu0 %v3567
        %v3924 = vpop.f32.mrb[0].mxu0
        %v3925 = vadd.f32 %v3748, %v3924
        %v3926 = vpop.f32.mrb[0].mxu0
        %v3927 = vpop.f32.mrb[0].mxu0
        %v3928 = vadd.f32 %v3751, %v3927
        %v3929 = vpop.f32.mrb[0].mxu0
        %3930 = vmatprep.mubr.bf16.mxu0 0
        %3931 = vmatmul.mubr.bf16.gmra.mrb[0].mxu0 %v3568
        %v3932 = vpop.f32.mrb[0].mxu0
        %v3933 = vadd.f32 %v3756, %v3932
        %v3934 = vpop.f32.mrb[0].mxu0
        %v3935 = vpop.f32.mrb[0].mxu0
        %v3936 = vadd.f32 %v3759, %v3935
        %v3937 = vpop.f32.mrb[0].mxu0
        %3938 = vmatprep.mubr.bf16.mxu0 0
        %3939 = vmatmul.mubr.bf16.gmra.mrb[0].mxu0 %v3569
        %v3940 = vpop.f32.mrb[0].mxu0
        %v3941 = vadd.f32 %v3764, %v3940
        %v3942 = vpop.f32.mrb[0].mxu0
        %v3943 = vpop.f32.mrb[0].mxu0
        %v3944 = vadd.f32 %v3767, %v3943
        %v3945 = vpop.f32.mrb[0].mxu0
        %3946 = vmatprep.mubr.bf16.mxu0 0
        %3947 = vmatmul.mubr.bf16.gmra.mrb[0].mxu0 %v3570
        %v3948 = vpop.f32.mrb[0].mxu0
        %v3949 = vadd.f32 %v3772, %v3948
        %v3950 = vpop.f32.mrb[0].mxu0
        %v3951 = vpop.f32.mrb[0].mxu0
        %v3952 = vadd.f32 %v3775, %v3951
        %v3953 = vpop.f32.mrb[0].mxu0
        %3954 = vmatprep.mubr.bf16.mxu0 0
        %3955 = vmatmul.mubr.bf16.gmra.mrb[0].mxu0 %v3571
        %v3956 = vpop.f32.mrb[0].mxu0
        %v3957 = vadd.f32 %v3780, %v3956
        %v3958 = vpop.f32.mrb[0].mxu0
        %v3959 = vpop.f32.mrb[0].mxu0
        %v3960 = vadd.f32 %v3783, %v3959
        %v3961 = vpop.f32.mrb[0].mxu0
        %3962 = vmatprep.mubr.bf16.mxu0 0
        %3963 = vmatmul.mubr.bf16.gmra.mrb[0].mxu0 %v3572
        %v3964 = vpop.f32.mrb[0].mxu0
        %v3965 = vadd.f32 %v3788, %v3964
        %v3966 = vpop.f32.mrb[0].mxu0
        %v3967 = vpop.f32.mrb[0].mxu0
        %v3968 = vadd.f32 %v3791, %v3967
        %v3969 = vpop.f32.mrb[0].mxu0
        %3970 = vmatprep.mubr.bf16.mxu0 0
        %3971 = vmatmul.mubr.bf16.gmra.mrb[0].mxu0 %v3573
        %v3972 = vpop.f32.mrb[0].mxu0
        %v3973 = vadd.f32 %v3796, %v3972
        %v3974 = vpop.f32.mrb[0].mxu0
        %v3975 = vpop.f32.mrb[0].mxu0
        %v3976 = vadd.f32 %v3799, %v3975
        %v3977 = vpop.f32.mrb[0].mxu0
        %3978 = vmatprep.mubr.bf16.mxu0 0
        %3979 = vmatmul.mubr.bf16.gmra.mrb[0].mxu0 %v3574
        %v3980 = vpop.f32.mrb[0].mxu0
        %v3981 = vadd.f32 %v3804, %v3980
        %v3982 = vpop.f32.mrb[0].mxu0
        %v3983 = vpop.f32.mrb[0].mxu0
        %v3984 = vadd.f32 %v3807, %v3983
        %v3985 = vpop.f32.mrb[0].mxu0
        %3986 = vmatprep.mubr.bf16.mxu0 0
        %3987 = vmatmul.mubr.bf16.gmra.mrb[0].mxu0 %v3575
        %v3988 = vpop.f32.mrb[0].mxu0
        %v3989 = vadd.f32 %v3812, %v3988
        %v3990 = vpop.f32.mrb[0].mxu0
        %v3991 = vpop.f32.mrb[0].mxu0
        %v3992 = vadd.f32 %v3815, %v3991
        %v3993 = vpop.f32.mrb[0].mxu0
        %3994 = vmatprep.mubr.bf16.mxu0 0
        %3995 = vmatmul.mubr.bf16.gmra.mrb[0].mxu0 %v3576
        %v3996 = vpop.f32.mrb[0].mxu0
        %v3997 = vadd.f32 %v3820, %v3996
        %v3998 = vpop.f32.mrb[0].mxu0
        %v3999 = vpop.f32.mrb[0].mxu0
        %v4000 = vadd.f32 %v3823, %v3999
        %v4001 = vpop.f32.mrb[0].mxu0
        %4002 = vmatprep.mubr.bf16.mxu0 0
        %4003 = vmatmul.mubr.bf16.gmra.mrb[0].mxu0 %v3577
        %v4004 = vpop.f32.mrb[0].mxu0
        %v4005 = vadd.f32 %v3828, %v4004
        %v4006 = vpop.f32.mrb[0].mxu0
        %v4007 = vpop.f32.mrb[0].mxu0
        %v4008 = vadd.f32 %v3831, %v4007
        %v4009 = vpop.f32.mrb[0].mxu0
        %4010 = vmatprep.mubr.bf16.mxu0 0
        %4011 = vmatmul.mubr.bf16.gmra.mrb[0].mxu0 %v3578
        %v4012 = vpop.f32.mrb[0].mxu0
        %v4013 = vadd.f32 %v3836, %v4012
        %v4014 = vpop.f32.mrb[0].mxu0
        %v4015 = vpop.f32.mrb[0].mxu0
        %v4016 = vadd.f32 %v3839, %v4015
        %v4017 = vpop.f32.mrb[0].mxu0
        %4018 = vdwg.mxu0
        %v4019 = vld [vmem:[#allocation5 + $0x18] sm:$0xff]
        %v4020 = vld [vmem:[#allocation5 + $0x20] sm:$0xff]
        %v4021 = vld [vmem:[#allocation5 + $0x28] sm:$0xff]
        %v4022 = vld [vmem:[#allocation5 + $0x30] sm:$0xff]
        %v4023 = vld [vmem:[#allocation5 + $0x38] sm:$0xff]
        %v4024 = vld [vmem:[#allocation5 + $0x40] sm:$0xff]
        %v4025 = vld [vmem:[#allocation5 + $0x48] sm:$0xff]
        %v4026 = vld [vmem:[#allocation5 + $0x50] sm:$0xff]
        %v4027 = vld [vmem:[#allocation5 + $0x58] sm:$0xff]
        %v4028 = vld [vmem:[#allocation5 + $0x60] sm:$0xff]
        %v4029 = vld [vmem:[#allocation5 + $0x68] sm:$0xff]
        %v4030 = vld [vmem:[#allocation5 + $0x70] sm:$0xff]
        %s4031 = scalar_lea.vmem [#allocation10], 384
        %v4032 = vld [vmem:[%s4031] sm:$0xf]
        %v4033 = vld [vmem:[%s4031 + $0x4] sm:$0xf]
        %v4034 = vld [vmem:[%s4031 + $0x8] sm:$0xf]
        %v4035 = vld [vmem:[%s4031 + $0xc] sm:$0xf]
        %v4036 = vld [vmem:[%s4031 + $0x10] sm:$0xf]
        %v4037 = vld [vmem:[%s4031 + $0x14] sm:$0xf]
        %v4038 = vld [vmem:[%s4031 + $0x18] sm:$0xf]
        %v4039 = vld [vmem:[%s4031 + $0x1c] sm:$0xf]
        %v4040 = vld [vmem:[%s4031 + $0x20] sm:$0xf]
        %v4041 = vld [vmem:[%s4031 + $0x24] sm:$0xf]
        %v4042 = vld [vmem:[%s4031 + $0x28] sm:$0xf]
        %v4043 = vld [vmem:[%s4031 + $0x2c] sm:$0xf]
        %v4044 = vld [vmem:[%s4031 + $0x30] sm:$0xf]
        %v4045 = vld [vmem:[%s4031 + $0x34] sm:$0xf]
        %v4046 = vld [vmem:[%s4031 + $0x38] sm:$0xf]
        %v4047 = vld [vmem:[%s4031 + $0x3c] sm:$0xf]
        %v4064 = vunpack.c.l.b16 %v4032
        %v4065 = vunpack.c.l.b16 %v4033
        %v4066 = vunpack.c.l.b16 %v4034
        %v4067 = vunpack.c.l.b16 %v4035
        %v4068 = vunpack.c.l.b16 %v4036
        %v4069 = vunpack.c.l.b16 %v4037
        %v4070 = vunpack.c.l.b16 %v4038
        %v4071 = vunpack.c.l.b16 %v4039
        %v4072 = vunpack.c.l.b16 %v4040
        %v4073 = vunpack.c.l.b16 %v4041
        %v4074 = vunpack.c.l.b16 %v4042
        %v4075 = vunpack.c.l.b16 %v4043
        %v4076 = vunpack.c.l.b16 %v4044
        %v4077 = vunpack.c.l.b16 %v4045
        %v4078 = vunpack.c.l.b16 %v4046
        %v4079 = vunpack.c.l.b16 %v4047
        %v4080 = vpack.c.b16 %v4065, %v4064
        %v4081 = vpack.c.b16 %v4067, %v4066
        %v4082 = vpack.c.b16 %v4069, %v4068
        %v4083 = vpack.c.b16 %v4071, %v4070
        %v4084 = vpack.c.b16 %v4073, %v4072
        %v4085 = vpack.c.b16 %v4075, %v4074
        %v4086 = vpack.c.b16 %v4077, %v4076
        %v4087 = vpack.c.b16 %v4079, %v4078
        %4096 = vmatprep.subr.bf16.mxu0 0
        %4097 = vmatpush1.bf16.msra.mxu0 %v4080
        %4098 = vmatprep.subr.bf16.mxu0 0
        %4099 = vmatpush1.bf16.msra.mxu0 %v4081
        %4100 = vmatprep.subr.bf16.mxu0 0
        %4101 = vmatpush1.bf16.msra.mxu0 %v4082
        %4102 = vmatprep.subr.bf16.mxu0 0
        %4103 = vmatpush1.bf16.msra.mxu0 %v4083
        %4104 = vmatprep.subr.bf16.mxu0 0
        %4105 = vmatpush1.bf16.msra.mxu0 %v4084
        %4106 = vmatprep.subr.bf16.mxu0 0
        %4107 = vmatpush1.bf16.msra.mxu0 %v4085
        %4108 = vmatprep.subr.bf16.mxu0 0
        %4109 = vmatpush1.bf16.msra.mxu0 %v4086
        %4110 = vmatprep.subr.bf16.mxu0 0
        %4111 = vmatpush1.bf16.msra.mxu0 %v4087
        %4112 = vmatprep.subr.bf16.mxu0 0
        %4113 = vmatpush1.bf16.msra.mxu0 0
        %4114 = vmatprep.subr.bf16.mxu0 0
        %4115 = vmatpush1.bf16.msra.mxu0 0
        %4116 = vmatprep.subr.bf16.mxu0 0
        %4117 = vmatpush1.bf16.msra.mxu0 0
        %4118 = vmatprep.subr.bf16.mxu0 0
        %4119 = vmatpush1.bf16.msra.mxu0 0
        %4120 = vmatprep.subr.bf16.mxu0 0
        %4121 = vmatpush1.bf16.msra.mxu0 0
        %4122 = vmatprep.subr.bf16.mxu0 0
        %4123 = vmatpush1.bf16.msra.mxu0 0
        %4124 = vmatprep.subr.bf16.mxu0 0
        %4125 = vmatpush1.bf16.msra.mxu0 0
        %4126 = vmatprep.subr.bf16.mxu0 0
        %4127 = vmatpush1.bf16.msra.mxu0 0
        %4128 = vmatprep.mubr.bf16.mxu0 0
        %4129 = vmatmul.mubr.bf16.gmra.mrb[0].mxu0 %v4019
        %v4130 = vpop.f32.mrb[0].mxu0
        %v4131 = vadd.f32 0.0, %v4130
        %v4132 = vpop.f32.mrb[0].mxu0
        %v4133 = vpop.f32.mrb[0].mxu0
        %v4134 = vadd.f32 0.0, %v4133
        %v4135 = vpop.f32.mrb[0].mxu0
        %4136 = vmatprep.mubr.bf16.mxu0 0
        %4137 = vmatmul.mubr.bf16.gmra.mrb[0].mxu0 %v4020
        %v4138 = vpop.f32.mrb[0].mxu0
        %v4139 = vadd.f32 0.0, %v4138
        %v4140 = vpop.f32.mrb[0].mxu0
        %v4141 = vpop.f32.mrb[0].mxu0
        %v4142 = vadd.f32 0.0, %v4141
        %v4143 = vpop.f32.mrb[0].mxu0
        %4144 = vmatprep.mubr.bf16.mxu0 0
        %4145 = vmatmul.mubr.bf16.gmra.mrb[0].mxu0 %v4021
        %v4146 = vpop.f32.mrb[0].mxu0
        %v4147 = vadd.f32 0.0, %v4146
        %v4148 = vpop.f32.mrb[0].mxu0
        %v4149 = vpop.f32.mrb[0].mxu0
        %v4150 = vadd.f32 0.0, %v4149
        %v4151 = vpop.f32.mrb[0].mxu0
        %4152 = vmatprep.mubr.bf16.mxu0 0
        %4153 = vmatmul.mubr.bf16.gmra.mrb[0].mxu0 %v4022
        %v4154 = vpop.f32.mrb[0].mxu0
        %v4155 = vadd.f32 0.0, %v4154
        %v4156 = vpop.f32.mrb[0].mxu0
        %v4157 = vpop.f32.mrb[0].mxu0
        %v4158 = vadd.f32 0.0, %v4157
        %v4159 = vpop.f32.mrb[0].mxu0
        %4160 = vmatprep.mubr.bf16.mxu0 0
        %4161 = vmatmul.mubr.bf16.gmra.mrb[0].mxu0 %v4023
        %v4162 = vpop.f32.mrb[0].mxu0
        %v4163 = vadd.f32 0.0, %v4162
        %v4164 = vpop.f32.mrb[0].mxu0
        %v4165 = vpop.f32.mrb[0].mxu0
        %v4166 = vadd.f32 0.0, %v4165
        %v4167 = vpop.f32.mrb[0].mxu0
        %4168 = vmatprep.mubr.bf16.mxu0 0
        %4169 = vmatmul.mubr.bf16.gmra.mrb[0].mxu0 %v4024
        %v4170 = vpop.f32.mrb[0].mxu0
        %v4171 = vadd.f32 0.0, %v4170
        %v4172 = vpop.f32.mrb[0].mxu0
        %v4173 = vpop.f32.mrb[0].mxu0
        %v4174 = vadd.f32 0.0, %v4173
        %v4175 = vpop.f32.mrb[0].mxu0
        %4176 = vmatprep.mubr.bf16.mxu0 0
        %4177 = vmatmul.mubr.bf16.gmra.mrb[0].mxu0 %v4025
        %v4178 = vpop.f32.mrb[0].mxu0
        %v4179 = vadd.f32 0.0, %v4178
        %v4180 = vpop.f32.mrb[0].mxu0
        %v4181 = vpop.f32.mrb[0].mxu0
        %v4182 = vadd.f32 0.0, %v4181
        %v4183 = vpop.f32.mrb[0].mxu0
        %4184 = vmatprep.mubr.bf16.mxu0 0
        %4185 = vmatmul.mubr.bf16.gmra.mrb[0].mxu0 %v4026
        %v4186 = vpop.f32.mrb[0].mxu0
        %v4187 = vadd.f32 0.0, %v4186
        %v4188 = vpop.f32.mrb[0].mxu0
        %v4189 = vpop.f32.mrb[0].mxu0
        %v4190 = vadd.f32 0.0, %v4189
        %v4191 = vpop.f32.mrb[0].mxu0
        %4192 = vmatprep.mubr.bf16.mxu0 0
        %4193 = vmatmul.mubr.bf16.gmra.mrb[0].mxu0 %v4027
        %v4194 = vpop.f32.mrb[0].mxu0
        %v4195 = vadd.f32 0.0, %v4194
        %v4196 = vpop.f32.mrb[0].mxu0
        %v4197 = vpop.f32.mrb[0].mxu0
        %v4198 = vadd.f32 0.0, %v4197
        %v4199 = vpop.f32.mrb[0].mxu0
        %4200 = vmatprep.mubr.bf16.mxu0 0
        %4201 = vmatmul.mubr.bf16.gmra.mrb[0].mxu0 %v4028
        %v4202 = vpop.f32.mrb[0].mxu0
        %v4203 = vadd.f32 0.0, %v4202
        %v4204 = vpop.f32.mrb[0].mxu0
        %v4205 = vpop.f32.mrb[0].mxu0
        %v4206 = vadd.f32 0.0, %v4205
        %v4207 = vpop.f32.mrb[0].mxu0
        %4208 = vmatprep.mubr.bf16.mxu0 0
        %4209 = vmatmul.mubr.bf16.gmra.mrb[0].mxu0 %v4029
        %v4210 = vpop.f32.mrb[0].mxu0
        %v4211 = vadd.f32 0.0, %v4210
        %v4212 = vpop.f32.mrb[0].mxu0
        %v4213 = vpop.f32.mrb[0].mxu0
        %v4214 = vadd.f32 0.0, %v4213
        %v4215 = vpop.f32.mrb[0].mxu0
        %4216 = vmatprep.mubr.bf16.mxu0 0
        %4217 = vmatmul.mubr.bf16.gmra.mrb[0].mxu0 %v4030
        %v4218 = vpop.f32.mrb[0].mxu0
        %v4219 = vadd.f32 0.0, %v4218
        %v4220 = vpop.f32.mrb[0].mxu0
        %v4221 = vpop.f32.mrb[0].mxu0
        %v4222 = vadd.f32 0.0, %v4221
        %v4223 = vpop.f32.mrb[0].mxu0
        %4224 = vdwg.mxu0
        %v4225 = vadd.f32 %v3925, %v4131
        %v4226 = vadd.f32 %v3928, %v4134
        %v4227 = vadd.f32 %v3933, %v4139
        %v4228 = vadd.f32 %v3936, %v4142
        %v4229 = vadd.f32 %v3941, %v4147
        %v4230 = vadd.f32 %v3944, %v4150
        %v4231 = vadd.f32 %v3949, %v4155
        %v4232 = vadd.f32 %v3952, %v4158
        %v4233 = vadd.f32 %v3957, %v4163
        %v4234 = vadd.f32 %v3960, %v4166
        %v4235 = vadd.f32 %v3965, %v4171
        %v4236 = vadd.f32 %v3968, %v4174
        %v4237 = vadd.f32 %v3973, %v4179
        %v4238 = vadd.f32 %v3976, %v4182
        %v4239 = vadd.f32 %v3981, %v4187
        %v4240 = vadd.f32 %v3984, %v4190
        %v4241 = vadd.f32 %v3989, %v4195
        %v4242 = vadd.f32 %v3992, %v4198
        %v4243 = vadd.f32 %v3997, %v4203
        %v4244 = vadd.f32 %v4000, %v4206
        %v4245 = vadd.f32 %v4005, %v4211
        %v4246 = vadd.f32 %v4008, %v4214
        %v4247 = vadd.f32 %v4013, %v4219
        %v4248 = vadd.f32 %v4016, %v4222
        %4249 = vst [vmem:[#allocation4] sm:$0xff] %v4225
        %4250 = vst [vmem:[#allocation4 + $0x8] sm:$0xff] %v4226
        %4251 = vst [vmem:[#allocation4 + $0x10] sm:$0xff] %v4227
        %4252 = vst [vmem:[#allocation4 + $0x18] sm:$0xff] %v4228
        %4253 = vst [vmem:[#allocation4 + $0x20] sm:$0xff] %v4229
        %4254 = vst [vmem:[#allocation4 + $0x28] sm:$0xff] %v4230
        %4255 = vst [vmem:[#allocation4 + $0x30] sm:$0xff] %v4231
        %4256 = vst [vmem:[#allocation4 + $0x38] sm:$0xff] %v4232
        %4257 = vst [vmem:[#allocation4 + $0x40] sm:$0xff] %v4233
        %4258 = vst [vmem:[#allocation4 + $0x48] sm:$0xff] %v4234
        %4259 = vst [vmem:[#allocation4 + $0x50] sm:$0xff] %v4235
        %4260 = vst [vmem:[#allocation4 + $0x58] sm:$0xff] %v4236
        %4261 = vst [vmem:[#allocation4 + $0x60] sm:$0xff] %v4237
        %4262 = vst [vmem:[#allocation4 + $0x68] sm:$0xff] %v4238
        %4263 = vst [vmem:[#allocation4 + $0x70] sm:$0xff] %v4239
        %4264 = vst [vmem:[#allocation4 + $0x78] sm:$0xff] %v4240
        %4265 = vst [vmem:[#allocation4 + $0x80] sm:$0xff] %v4241
        %4266 = vst [vmem:[#allocation4 + $0x88] sm:$0xff] %v4242
        %4267 = vst [vmem:[#allocation4 + $0x90] sm:$0xff] %v4243
        %4268 = vst [vmem:[#allocation4 + $0x98] sm:$0xff] %v4244
        %4269 = vst [vmem:[#allocation4 + $0xa0] sm:$0xff] %v4245
        %4270 = vst [vmem:[#allocation4 + $0xa8] sm:$0xff] %v4246
        %4271 = vst [vmem:[#allocation4 + $0xb0] sm:$0xff] %v4247
        %4272 = vst [vmem:[#allocation4 + $0xb8] sm:$0xff] %v4248
        %v4273 = vld [vmem:[#allocation5] sm:$0xff]
        %v4274 = vld [vmem:[#allocation5 + $0x8] sm:$0xff]
        %v4275 = vld [vmem:[#allocation5 + $0x10] sm:$0xff]
        %v4276 = vld [vmem:[#allocation5 + $0x18] sm:$0xff]
        %v4277 = vld [vmem:[#allocation5 + $0x20] sm:$0xff]
        %v4278 = vld [vmem:[#allocation5 + $0x28] sm:$0xff]
        %v4279 = vld [vmem:[#allocation5 + $0x30] sm:$0xff]
        %v4280 = vld [vmem:[#allocation5 + $0x38] sm:$0xff]
        %v4281 = vld [vmem:[#allocation5 + $0x40] sm:$0xff]
        %v4282 = vld [vmem:[#allocation5 + $0x48] sm:$0xff]
        %v4283 = vld [vmem:[#allocation5 + $0x50] sm:$0xff]
        %v4284 = vld [vmem:[#allocation5 + $0x58] sm:$0xff]
        %s4285 = scalar_lea.vmem [#allocation10], 64
        %v4286 = vld [vmem:[%s4285] sm:$0xf]
        %v4287 = vld [vmem:[%s4285 + $0x4] sm:$0xf]
        %v4288 = vld [vmem:[%s4285 + $0x8] sm:$0xf]
        %v4289 = vld [vmem:[%s4285 + $0xc] sm:$0xf]
        %v4290 = vld [vmem:[%s4285 + $0x10] sm:$0xf]
        %v4291 = vld [vmem:[%s4285 + $0x14] sm:$0xf]
        %v4292 = vld [vmem:[%s4285 + $0x18] sm:$0xf]
        %v4293 = vld [vmem:[%s4285 + $0x1c] sm:$0xf]
        %v4294 = vld [vmem:[%s4285 + $0x20] sm:$0xf]
        %v4295 = vld [vmem:[%s4285 + $0x24] sm:$0xf]
        %v4296 = vld [vmem:[%s4285 + $0x28] sm:$0xf]
        %v4297 = vld [vmem:[%s4285 + $0x2c] sm:$0xf]
        %v4298 = vld [vmem:[%s4285 + $0x30] sm:$0xf]
        %v4299 = vld [vmem:[%s4285 + $0x34] sm:$0xf]
        %v4300 = vld [vmem:[%s4285 + $0x38] sm:$0xf]
        %v4301 = vld [vmem:[%s4285 + $0x3c] sm:$0xf]
        %v4302 = vld [vmem:[#allocation5 + $0x8] sm:$0xf0]
        %v4303 = vld [vmem:[#allocation5 + $0x60] sm:$0xff]
        %v4304 = vld [vmem:[#allocation5 + $0x68] sm:$0xf]
        %s4305 = scalar_lea.vmem [#allocation10], 256
        %v4306 = vld [vmem:[%s4305] sm:$0xf]
        %v4307 = vld [vmem:[%s4305 + $0x4] sm:$0xf]
        %v4308 = vld [vmem:[%s4305 + $0x8] sm:$0xf]
        %v4309 = vld [vmem:[%s4305 + $0xc] sm:$0xf]
        %v4310 = vld [vmem:[%s4305 + $0x10] sm:$0xf]
        %v4311 = vld [vmem:[%s4305 + $0x14] sm:$0xf]
        %v4312 = vld [vmem:[%s4305 + $0x18] sm:$0xf]
        %v4313 = vld [vmem:[%s4305 + $0x1c] sm:$0xf]
        %v4314 = vld [vmem:[%s4305 + $0x20] sm:$0xf]
        %v4315 = vld [vmem:[%s4305 + $0x24] sm:$0xf]
        %v4316 = vld [vmem:[%s4305 + $0x28] sm:$0xf]
        %v4317 = vld [vmem:[%s4305 + $0x2c] sm:$0xf]
        %v4318 = vld [vmem:[%s4305 + $0x30] sm:$0xf]
        %v4319 = vld [vmem:[%s4305 + $0x34] sm:$0xf]
        %v4320 = vld [vmem:[%s4305 + $0x38] sm:$0xf]
        %v4321 = vld [vmem:[%s4305 + $0x3c] sm:$0xf]
        %v4335 = vrot.slane %v4302, 4
        %v4336 = vrot.slane %v4275, 4
        %v4337 = vsel %vm589, %v4335, %v4336
        %v4338 = vrot.slane %v4276, 4
        %v4339 = vsel %vm589, %v4336, %v4338
        %v4340 = vrot.slane %v4277, 4
        %v4341 = vsel %vm589, %v4338, %v4340
        %v4342 = vrot.slane %v4278, 4
        %v4343 = vsel %vm589, %v4340, %v4342
        %v4344 = vrot.slane %v4279, 4
        %v4345 = vsel %vm589, %v4342, %v4344
        %v4346 = vrot.slane %v4280, 4
        %v4347 = vsel %vm589, %v4344, %v4346
        %v4348 = vrot.slane %v4281, 4
        %v4349 = vsel %vm589, %v4346, %v4348
        %v4350 = vrot.slane %v4282, 4
        %v4351 = vsel %vm589, %v4348, %v4350
        %v4352 = vrot.slane %v4283, 4
        %v4353 = vsel %vm589, %v4350, %v4352
        %v4354 = vrot.slane %v4284, 4
        %v4355 = vsel %vm589, %v4352, %v4354
        %v4356 = vrot.slane %v4303, 4
        %v4357 = vsel %vm589, %v4354, %v4356
        %v4358 = vrot.slane %v4304, 4
        %v4359 = vsel %vm589, %v4356, %v4358
        %v4388 = vunpack.c.l.b16 %v4306
        %v4389 = vunpack.c.l.b16 %v4307
        %v4390 = vunpack.c.l.b16 %v4308
        %v4391 = vunpack.c.l.b16 %v4309
        %v4392 = vunpack.c.l.b16 %v4310
        %v4393 = vunpack.c.l.b16 %v4311
        %v4394 = vunpack.c.l.b16 %v4312
        %v4395 = vunpack.c.l.b16 %v4313
        %v4396 = vunpack.c.l.b16 %v4314
        %v4397 = vunpack.c.l.b16 %v4315
        %v4398 = vunpack.c.l.b16 %v4316
        %v4399 = vunpack.c.l.b16 %v4317
        %v4400 = vunpack.c.l.b16 %v4318
        %v4401 = vunpack.c.l.b16 %v4319
        %v4402 = vunpack.c.l.b16 %v4320
        %v4403 = vunpack.c.l.b16 %v4321
        %v4404 = vpack.c.b16 %v4389, %v4388
        %v4405 = vpack.c.b16 %v4391, %v4390
        %v4406 = vpack.c.b16 %v4393, %v4392
        %v4407 = vpack.c.b16 %v4395, %v4394
        %v4408 = vpack.c.b16 %v4397, %v4396
        %v4409 = vpack.c.b16 %v4399, %v4398
        %v4410 = vpack.c.b16 %v4401, %v4400
        %v4411 = vpack.c.b16 %v4403, %v4402
        %4420 = vmatprep.subr.bf16.mxu0 0
        %4421 = vmatpush1.bf16.msra.mxu0 %v4404
        %4422 = vmatprep.subr.bf16.mxu0 0
        %4423 = vmatpush1.bf16.msra.mxu0 %v4405
        %4424 = vmatprep.subr.bf16.mxu0 0
        %4425 = vmatpush1.bf16.msra.mxu0 %v4406
        %4426 = vmatprep.subr.bf16.mxu0 0
        %4427 = vmatpush1.bf16.msra.mxu0 %v4407
        %4428 = vmatprep.subr.bf16.mxu0 0
        %4429 = vmatpush1.bf16.msra.mxu0 %v4408
        %4430 = vmatprep.subr.bf16.mxu0 0
        %4431 = vmatpush1.bf16.msra.mxu0 %v4409
        %4432 = vmatprep.subr.bf16.mxu0 0
        %4433 = vmatpush1.bf16.msra.mxu0 %v4410
        %4434 = vmatprep.subr.bf16.mxu0 0
        %4435 = vmatpush1.bf16.msra.mxu0 %v4411
        %4436 = vmatprep.subr.bf16.mxu0 0
        %4437 = vmatpush1.bf16.msra.mxu0 0
        %4438 = vmatprep.subr.bf16.mxu0 0
        %4439 = vmatpush1.bf16.msra.mxu0 0
        %4440 = vmatprep.subr.bf16.mxu0 0
        %4441 = vmatpush1.bf16.msra.mxu0 0
        %4442 = vmatprep.subr.bf16.mxu0 0
        %4443 = vmatpush1.bf16.msra.mxu0 0
        %4444 = vmatprep.subr.bf16.mxu0 0
        %4445 = vmatpush1.bf16.msra.mxu0 0
        %4446 = vmatprep.subr.bf16.mxu0 0
        %4447 = vmatpush1.bf16.msra.mxu0 0
        %4448 = vmatprep.subr.bf16.mxu0 0
        %4449 = vmatpush1.bf16.msra.mxu0 0
        %4450 = vmatprep.subr.bf16.mxu0 0
        %4451 = vmatpush1.bf16.msra.mxu0 0
        %4452 = vmatprep.mubr.bf16.mxu0 0
        %4453 = vmatmul.mubr.bf16.gmra.mrb[0].mxu0 %v4337
        %v4454 = vpop.f32.mrb[0].mxu0
        %v4455 = vadd.f32 0.0, %v4454
        %v4456 = vpop.f32.mrb[0].mxu0
        %v4457 = vpop.f32.mrb[0].mxu0
        %v4458 = vadd.f32 0.0, %v4457
        %v4459 = vpop.f32.mrb[0].mxu0
        %4460 = vmatprep.mubr.bf16.mxu0 0
        %4461 = vmatmul.mubr.bf16.gmra.mrb[0].mxu0 %v4339
        %v4462 = vpop.f32.mrb[0].mxu0
        %v4463 = vadd.f32 0.0, %v4462
        %v4464 = vpop.f32.mrb[0].mxu0
        %v4465 = vpop.f32.mrb[0].mxu0
        %v4466 = vadd.f32 0.0, %v4465
        %v4467 = vpop.f32.mrb[0].mxu0
        %4468 = vmatprep.mubr.bf16.mxu0 0
        %4469 = vmatmul.mubr.bf16.gmra.mrb[0].mxu0 %v4341
        %v4470 = vpop.f32.mrb[0].mxu0
        %v4471 = vadd.f32 0.0, %v4470
        %v4472 = vpop.f32.mrb[0].mxu0
        %v4473 = vpop.f32.mrb[0].mxu0
        %v4474 = vadd.f32 0.0, %v4473
        %v4475 = vpop.f32.mrb[0].mxu0
        %4476 = vmatprep.mubr.bf16.mxu0 0
        %4477 = vmatmul.mubr.bf16.gmra.mrb[0].mxu0 %v4343
        %v4478 = vpop.f32.mrb[0].mxu0
        %v4479 = vadd.f32 0.0, %v4478
        %v4480 = vpop.f32.mrb[0].mxu0
        %v4481 = vpop.f32.mrb[0].mxu0
        %v4482 = vadd.f32 0.0, %v4481
        %v4483 = vpop.f32.mrb[0].mxu0
        %4484 = vmatprep.mubr.bf16.mxu0 0
        %4485 = vmatmul.mubr.bf16.gmra.mrb[0].mxu0 %v4345
        %v4486 = vpop.f32.mrb[0].mxu0
        %v4487 = vadd.f32 0.0, %v4486
        %v4488 = vpop.f32.mrb[0].mxu0
        %v4489 = vpop.f32.mrb[0].mxu0
        %v4490 = vadd.f32 0.0, %v4489
        %v4491 = vpop.f32.mrb[0].mxu0
        %4492 = vmatprep.mubr.bf16.mxu0 0
        %4493 = vmatmul.mubr.bf16.gmra.mrb[0].mxu0 %v4347
        %v4494 = vpop.f32.mrb[0].mxu0
        %v4495 = vadd.f32 0.0, %v4494
        %v4496 = vpop.f32.mrb[0].mxu0
        %v4497 = vpop.f32.mrb[0].mxu0
        %v4498 = vadd.f32 0.0, %v4497
        %v4499 = vpop.f32.mrb[0].mxu0
        %4500 = vmatprep.mubr.bf16.mxu0 0
        %4501 = vmatmul.mubr.bf16.gmra.mrb[0].mxu0 %v4349
        %v4502 = vpop.f32.mrb[0].mxu0
        %v4503 = vadd.f32 0.0, %v4502
        %v4504 = vpop.f32.mrb[0].mxu0
        %v4505 = vpop.f32.mrb[0].mxu0
        %v4506 = vadd.f32 0.0, %v4505
        %v4507 = vpop.f32.mrb[0].mxu0
        %4508 = vmatprep.mubr.bf16.mxu0 0
        %4509 = vmatmul.mubr.bf16.gmra.mrb[0].mxu0 %v4351
        %v4510 = vpop.f32.mrb[0].mxu0
        %v4511 = vadd.f32 0.0, %v4510
        %v4512 = vpop.f32.mrb[0].mxu0
        %v4513 = vpop.f32.mrb[0].mxu0
        %v4514 = vadd.f32 0.0, %v4513
        %v4515 = vpop.f32.mrb[0].mxu0
        %4516 = vmatprep.mubr.bf16.mxu0 0
        %4517 = vmatmul.mubr.bf16.gmra.mrb[0].mxu0 %v4353
        %v4518 = vpop.f32.mrb[0].mxu0
        %v4519 = vadd.f32 0.0, %v4518
        %v4520 = vpop.f32.mrb[0].mxu0
        %v4521 = vpop.f32.mrb[0].mxu0
        %v4522 = vadd.f32 0.0, %v4521
        %v4523 = vpop.f32.mrb[0].mxu0
        %4524 = vmatprep.mubr.bf16.mxu0 0
        %4525 = vmatmul.mubr.bf16.gmra.mrb[0].mxu0 %v4355
        %v4526 = vpop.f32.mrb[0].mxu0
        %v4527 = vadd.f32 0.0, %v4526
        %v4528 = vpop.f32.mrb[0].mxu0
        %v4529 = vpop.f32.mrb[0].mxu0
        %v4530 = vadd.f32 0.0, %v4529
        %v4531 = vpop.f32.mrb[0].mxu0
        %4532 = vmatprep.mubr.bf16.mxu0 0
        %4533 = vmatmul.mubr.bf16.gmra.mrb[0].mxu0 %v4357
        %v4534 = vpop.f32.mrb[0].mxu0
        %v4535 = vadd.f32 0.0, %v4534
        %v4536 = vpop.f32.mrb[0].mxu0
        %v4537 = vpop.f32.mrb[0].mxu0
        %v4538 = vadd.f32 0.0, %v4537
        %v4539 = vpop.f32.mrb[0].mxu0
        %4540 = vmatprep.mubr.bf16.mxu0 0
        %4541 = vmatmul.mubr.bf16.gmra.mrb[0].mxu0 %v4359
        %v4542 = vpop.f32.mrb[0].mxu0
        %v4543 = vadd.f32 0.0, %v4542
        %v4544 = vpop.f32.mrb[0].mxu0
        %v4545 = vpop.f32.mrb[0].mxu0
        %v4546 = vadd.f32 0.0, %v4545
        %v4547 = vpop.f32.mrb[0].mxu0
        %4548 = vdwg.mxu0
        %v4565 = vunpack.c.l.b16 %v4286
        %v4566 = vunpack.c.l.b16 %v4287
        %v4567 = vunpack.c.l.b16 %v4288
        %v4568 = vunpack.c.l.b16 %v4289
        %v4569 = vunpack.c.l.b16 %v4290
        %v4570 = vunpack.c.l.b16 %v4291
        %v4571 = vunpack.c.l.b16 %v4292
        %v4572 = vunpack.c.l.b16 %v4293
        %v4573 = vunpack.c.l.b16 %v4294
        %v4574 = vunpack.c.l.b16 %v4295
        %v4575 = vunpack.c.l.b16 %v4296
        %v4576 = vunpack.c.l.b16 %v4297
        %v4577 = vunpack.c.l.b16 %v4298
        %v4578 = vunpack.c.l.b16 %v4299
        %v4579 = vunpack.c.l.b16 %v4300
        %v4580 = vunpack.c.l.b16 %v4301
        %v4581 = vpack.c.b16 %v4566, %v4565
        %v4582 = vpack.c.b16 %v4568, %v4567
        %v4583 = vpack.c.b16 %v4570, %v4569
        %v4584 = vpack.c.b16 %v4572, %v4571
        %v4585 = vpack.c.b16 %v4574, %v4573
        %v4586 = vpack.c.b16 %v4576, %v4575
        %v4587 = vpack.c.b16 %v4578, %v4577
        %v4588 = vpack.c.b16 %v4580, %v4579
        %4597 = vmatprep.subr.bf16.mxu0 0
        %4598 = vmatpush1.bf16.msra.mxu0 %v4581
        %4599 = vmatprep.subr.bf16.mxu0 0
        %4600 = vmatpush1.bf16.msra.mxu0 %v4582
        %4601 = vmatprep.subr.bf16.mxu0 0
        %4602 = vmatpush1.bf16.msra.mxu0 %v4583
        %4603 = vmatprep.subr.bf16.mxu0 0
        %4604 = vmatpush1.bf16.msra.mxu0 %v4584
        %4605 = vmatprep.subr.bf16.mxu0 0
        %4606 = vmatpush1.bf16.msra.mxu0 %v4585
        %4607 = vmatprep.subr.bf16.mxu0 0
        %4608 = vmatpush1.bf16.msra.mxu0 %v4586
        %4609 = vmatprep.subr.bf16.mxu0 0
        %4610 = vmatpush1.bf16.msra.mxu0 %v4587
        %4611 = vmatprep.subr.bf16.mxu0 0
        %4612 = vmatpush1.bf16.msra.mxu0 %v4588
        %4613 = vmatprep.subr.bf16.mxu0 0
        %4614 = vmatpush1.bf16.msra.mxu0 0
        %4615 = vmatprep.subr.bf16.mxu0 0
        %4616 = vmatpush1.bf16.msra.mxu0 0
        %4617 = vmatprep.subr.bf16.mxu0 0
        %4618 = vmatpush1.bf16.msra.mxu0 0
        %4619 = vmatprep.subr.bf16.mxu0 0
        %4620 = vmatpush1.bf16.msra.mxu0 0
        %4621 = vmatprep.subr.bf16.mxu0 0
        %4622 = vmatpush1.bf16.msra.mxu0 0
        %4623 = vmatprep.subr.bf16.mxu0 0
        %4624 = vmatpush1.bf16.msra.mxu0 0
        %4625 = vmatprep.subr.bf16.mxu0 0
        %4626 = vmatpush1.bf16.msra.mxu0 0
        %4627 = vmatprep.subr.bf16.mxu0 0
        %4628 = vmatpush1.bf16.msra.mxu0 0
        %4629 = vmatprep.mubr.bf16.mxu0 0
        %4630 = vmatmul.mubr.bf16.gmra.mrb[0].mxu0 %v4273
        %v4631 = vpop.f32.mrb[0].mxu0
        %v4632 = vadd.f32 %v4455, %v4631
        %v4633 = vpop.f32.mrb[0].mxu0
        %v4634 = vpop.f32.mrb[0].mxu0
        %v4635 = vadd.f32 %v4458, %v4634
        %v4636 = vpop.f32.mrb[0].mxu0
        %4637 = vmatprep.mubr.bf16.mxu0 0
        %4638 = vmatmul.mubr.bf16.gmra.mrb[0].mxu0 %v4274
        %v4639 = vpop.f32.mrb[0].mxu0
        %v4640 = vadd.f32 %v4463, %v4639
        %v4641 = vpop.f32.mrb[0].mxu0
        %v4642 = vpop.f32.mrb[0].mxu0
        %v4643 = vadd.f32 %v4466, %v4642
        %v4644 = vpop.f32.mrb[0].mxu0
        %4645 = vmatprep.mubr.bf16.mxu0 0
        %4646 = vmatmul.mubr.bf16.gmra.mrb[0].mxu0 %v4275
        %v4647 = vpop.f32.mrb[0].mxu0
        %v4648 = vadd.f32 %v4471, %v4647
        %v4649 = vpop.f32.mrb[0].mxu0
        %v4650 = vpop.f32.mrb[0].mxu0
        %v4651 = vadd.f32 %v4474, %v4650
        %v4652 = vpop.f32.mrb[0].mxu0
        %4653 = vmatprep.mubr.bf16.mxu0 0
        %4654 = vmatmul.mubr.bf16.gmra.mrb[0].mxu0 %v4276
        %v4655 = vpop.f32.mrb[0].mxu0
        %v4656 = vadd.f32 %v4479, %v4655
        %v4657 = vpop.f32.mrb[0].mxu0
        %v4658 = vpop.f32.mrb[0].mxu0
        %v4659 = vadd.f32 %v4482, %v4658
        %v4660 = vpop.f32.mrb[0].mxu0
        %4661 = vmatprep.mubr.bf16.mxu0 0
        %4662 = vmatmul.mubr.bf16.gmra.mrb[0].mxu0 %v4277
        %v4663 = vpop.f32.mrb[0].mxu0
        %v4664 = vadd.f32 %v4487, %v4663
        %v4665 = vpop.f32.mrb[0].mxu0
        %v4666 = vpop.f32.mrb[0].mxu0
        %v4667 = vadd.f32 %v4490, %v4666
        %v4668 = vpop.f32.mrb[0].mxu0
        %4669 = vmatprep.mubr.bf16.mxu0 0
        %4670 = vmatmul.mubr.bf16.gmra.mrb[0].mxu0 %v4278
        %v4671 = vpop.f32.mrb[0].mxu0
        %v4672 = vadd.f32 %v4495, %v4671
        %v4673 = vpop.f32.mrb[0].mxu0
        %v4674 = vpop.f32.mrb[0].mxu0
        %v4675 = vadd.f32 %v4498, %v4674
        %v4676 = vpop.f32.mrb[0].mxu0
        %4677 = vmatprep.mubr.bf16.mxu0 0
        %4678 = vmatmul.mubr.bf16.gmra.mrb[0].mxu0 %v4279
        %v4679 = vpop.f32.mrb[0].mxu0
        %v4680 = vadd.f32 %v4503, %v4679
        %v4681 = vpop.f32.mrb[0].mxu0
        %v4682 = vpop.f32.mrb[0].mxu0
        %v4683 = vadd.f32 %v4506, %v4682
        %v4684 = vpop.f32.mrb[0].mxu0
        %4685 = vmatprep.mubr.bf16.mxu0 0
        %4686 = vmatmul.mubr.bf16.gmra.mrb[0].mxu0 %v4280
        %v4687 = vpop.f32.mrb[0].mxu0
        %v4688 = vadd.f32 %v4511, %v4687
        %v4689 = vpop.f32.mrb[0].mxu0
        %v4690 = vpop.f32.mrb[0].mxu0
        %v4691 = vadd.f32 %v4514, %v4690
        %v4692 = vpop.f32.mrb[0].mxu0
        %4693 = vmatprep.mubr.bf16.mxu0 0
        %4694 = vmatmul.mubr.bf16.gmra.mrb[0].mxu0 %v4281
        %v4695 = vpop.f32.mrb[0].mxu0
        %v4696 = vadd.f32 %v4519, %v4695
        %v4697 = vpop.f32.mrb[0].mxu0
        %v4698 = vpop.f32.mrb[0].mxu0
        %v4699 = vadd.f32 %v4522, %v4698
        %v4700 = vpop.f32.mrb[0].mxu0
        %4701 = vmatprep.mubr.bf16.mxu0 0
        %4702 = vmatmul.mubr.bf16.gmra.mrb[0].mxu0 %v4282
        %v4703 = vpop.f32.mrb[0].mxu0
        %v4704 = vadd.f32 %v4527, %v4703
        %v4705 = vpop.f32.mrb[0].mxu0
        %v4706 = vpop.f32.mrb[0].mxu0
        %v4707 = vadd.f32 %v4530, %v4706
        %v4708 = vpop.f32.mrb[0].mxu0
        %4709 = vmatprep.mubr.bf16.mxu0 0
        %4710 = vmatmul.mubr.bf16.gmra.mrb[0].mxu0 %v4283
        %v4711 = vpop.f32.mrb[0].mxu0
        %v4712 = vadd.f32 %v4535, %v4711
        %v4713 = vpop.f32.mrb[0].mxu0
        %v4714 = vpop.f32.mrb[0].mxu0
        %v4715 = vadd.f32 %v4538, %v4714
        %v4716 = vpop.f32.mrb[0].mxu0
        %4717 = vmatprep.mubr.bf16.mxu0 0
        %4718 = vmatmul.mubr.bf16.gmra.mrb[0].mxu0 %v4284
        %v4719 = vpop.f32.mrb[0].mxu0
        %v4720 = vadd.f32 %v4543, %v4719
        %v4721 = vpop.f32.mrb[0].mxu0
        %v4722 = vpop.f32.mrb[0].mxu0
        %v4723 = vadd.f32 %v4546, %v4722
        %v4724 = vpop.f32.mrb[0].mxu0
        %4725 = vdwg.mxu0
        %v4726 = vld [vmem:[#allocation5 + $0x18] sm:$0xff]
        %v4727 = vld [vmem:[#allocation5 + $0x20] sm:$0xff]
        %v4728 = vld [vmem:[#allocation5 + $0x28] sm:$0xff]
        %v4729 = vld [vmem:[#allocation5 + $0x30] sm:$0xff]
        %v4730 = vld [vmem:[#allocation5 + $0x38] sm:$0xff]
        %v4731 = vld [vmem:[#allocation5 + $0x40] sm:$0xff]
        %v4732 = vld [vmem:[#allocation5 + $0x48] sm:$0xff]
        %v4733 = vld [vmem:[#allocation5 + $0x50] sm:$0xff]
        %v4734 = vld [vmem:[#allocation5 + $0x58] sm:$0xff]
        %v4735 = vld [vmem:[#allocation5 + $0x60] sm:$0xff]
        %v4736 = vld [vmem:[#allocation5 + $0x68] sm:$0xff]
        %v4737 = vld [vmem:[#allocation5 + $0x70] sm:$0xff]
        %s4738 = scalar_lea.vmem [#allocation10], 448
        %v4739 = vld [vmem:[%s4738] sm:$0xf]
        %v4740 = vld [vmem:[%s4738 + $0x4] sm:$0xf]
        %v4741 = vld [vmem:[%s4738 + $0x8] sm:$0xf]
        %v4742 = vld [vmem:[%s4738 + $0xc] sm:$0xf]
        %v4743 = vld [vmem:[%s4738 + $0x10] sm:$0xf]
        %v4744 = vld [vmem:[%s4738 + $0x14] sm:$0xf]
        %v4745 = vld [vmem:[%s4738 + $0x18] sm:$0xf]
        %v4746 = vld [vmem:[%s4738 + $0x1c] sm:$0xf]
        %v4747 = vld [vmem:[%s4738 + $0x20] sm:$0xf]
        %v4748 = vld [vmem:[%s4738 + $0x24] sm:$0xf]
        %v4749 = vld [vmem:[%s4738 + $0x28] sm:$0xf]
        %v4750 = vld [vmem:[%s4738 + $0x2c] sm:$0xf]
        %v4751 = vld [vmem:[%s4738 + $0x30] sm:$0xf]
        %v4752 = vld [vmem:[%s4738 + $0x34] sm:$0xf]
        %v4753 = vld [vmem:[%s4738 + $0x38] sm:$0xf]
        %v4754 = vld [vmem:[%s4738 + $0x3c] sm:$0xf]
        %v4771 = vunpack.c.l.b16 %v4739
        %v4772 = vunpack.c.l.b16 %v4740
        %v4773 = vunpack.c.l.b16 %v4741
        %v4774 = vunpack.c.l.b16 %v4742
        %v4775 = vunpack.c.l.b16 %v4743
        %v4776 = vunpack.c.l.b16 %v4744
        %v4777 = vunpack.c.l.b16 %v4745
        %v4778 = vunpack.c.l.b16 %v4746
        %v4779 = vunpack.c.l.b16 %v4747
        %v4780 = vunpack.c.l.b16 %v4748
        %v4781 = vunpack.c.l.b16 %v4749
        %v4782 = vunpack.c.l.b16 %v4750
        %v4783 = vunpack.c.l.b16 %v4751
        %v4784 = vunpack.c.l.b16 %v4752
        %v4785 = vunpack.c.l.b16 %v4753
        %v4786 = vunpack.c.l.b16 %v4754
        %v4787 = vpack.c.b16 %v4772, %v4771
        %v4788 = vpack.c.b16 %v4774, %v4773
        %v4789 = vpack.c.b16 %v4776, %v4775
        %v4790 = vpack.c.b16 %v4778, %v4777
        %v4791 = vpack.c.b16 %v4780, %v4779
        %v4792 = vpack.c.b16 %v4782, %v4781
        %v4793 = vpack.c.b16 %v4784, %v4783
        %v4794 = vpack.c.b16 %v4786, %v4785
        %4803 = vmatprep.subr.bf16.mxu0 0
        %4804 = vmatpush1.bf16.msra.mxu0 %v4787
        %4805 = vmatprep.subr.bf16.mxu0 0
        %4806 = vmatpush1.bf16.msra.mxu0 %v4788
        %4807 = vmatprep.subr.bf16.mxu0 0
        %4808 = vmatpush1.bf16.msra.mxu0 %v4789
        %4809 = vmatprep.subr.bf16.mxu0 0
        %4810 = vmatpush1.bf16.msra.mxu0 %v4790
        %4811 = vmatprep.subr.bf16.mxu0 0
        %4812 = vmatpush1.bf16.msra.mxu0 %v4791
        %4813 = vmatprep.subr.bf16.mxu0 0
        %4814 = vmatpush1.bf16.msra.mxu0 %v4792
        %4815 = vmatprep.subr.bf16.mxu0 0
        %4816 = vmatpush1.bf16.msra.mxu0 %v4793
        %4817 = vmatprep.subr.bf16.mxu0 0
        %4818 = vmatpush1.bf16.msra.mxu0 %v4794
        %4819 = vmatprep.subr.bf16.mxu0 0
        %4820 = vmatpush1.bf16.msra.mxu0 0
        %4821 = vmatprep.subr.bf16.mxu0 0
        %4822 = vmatpush1.bf16.msra.mxu0 0
        %4823 = vmatprep.subr.bf16.mxu0 0
        %4824 = vmatpush1.bf16.msra.mxu0 0
        %4825 = vmatprep.subr.bf16.mxu0 0
        %4826 = vmatpush1.bf16.msra.mxu0 0
        %4827 = vmatprep.subr.bf16.mxu0 0
        %4828 = vmatpush1.bf16.msra.mxu0 0
        %4829 = vmatprep.subr.bf16.mxu0 0
        %4830 = vmatpush1.bf16.msra.mxu0 0
        %4831 = vmatprep.subr.bf16.mxu0 0
        %4832 = vmatpush1.bf16.msra.mxu0 0
        %4833 = vmatprep.subr.bf16.mxu0 0
        %4834 = vmatpush1.bf16.msra.mxu0 0
        %4835 = vmatprep.mubr.bf16.mxu0 0
        %4836 = vmatmul.mubr.bf16.gmra.mrb[0].mxu0 %v4726
        %v4837 = vpop.f32.mrb[0].mxu0
        %v4838 = vadd.f32 0.0, %v4837
        %v4839 = vpop.f32.mrb[0].mxu0
        %v4840 = vpop.f32.mrb[0].mxu0
        %v4841 = vadd.f32 0.0, %v4840
        %v4842 = vpop.f32.mrb[0].mxu0
        %4843 = vmatprep.mubr.bf16.mxu0 0
        %4844 = vmatmul.mubr.bf16.gmra.mrb[0].mxu0 %v4727
        %v4845 = vpop.f32.mrb[0].mxu0
        %v4846 = vadd.f32 0.0, %v4845
        %v4847 = vpop.f32.mrb[0].mxu0
        %v4848 = vpop.f32.mrb[0].mxu0
        %v4849 = vadd.f32 0.0, %v4848
        %v4850 = vpop.f32.mrb[0].mxu0
        %4851 = vmatprep.mubr.bf16.mxu0 0
        %4852 = vmatmul.mubr.bf16.gmra.mrb[0].mxu0 %v4728
        %v4853 = vpop.f32.mrb[0].mxu0
        %v4854 = vadd.f32 0.0, %v4853
        %v4855 = vpop.f32.mrb[0].mxu0
        %v4856 = vpop.f32.mrb[0].mxu0
        %v4857 = vadd.f32 0.0, %v4856
        %v4858 = vpop.f32.mrb[0].mxu0
        %4859 = vmatprep.mubr.bf16.mxu0 0
        %4860 = vmatmul.mubr.bf16.gmra.mrb[0].mxu0 %v4729
        %v4861 = vpop.f32.mrb[0].mxu0
        %v4862 = vadd.f32 0.0, %v4861
        %v4863 = vpop.f32.mrb[0].mxu0
        %v4864 = vpop.f32.mrb[0].mxu0
        %v4865 = vadd.f32 0.0, %v4864
        %v4866 = vpop.f32.mrb[0].mxu0
        %4867 = vmatprep.mubr.bf16.mxu0 0
        %4868 = vmatmul.mubr.bf16.gmra.mrb[0].mxu0 %v4730
        %v4869 = vpop.f32.mrb[0].mxu0
        %v4870 = vadd.f32 0.0, %v4869
        %v4871 = vpop.f32.mrb[0].mxu0
        %v4872 = vpop.f32.mrb[0].mxu0
        %v4873 = vadd.f32 0.0, %v4872
        %v4874 = vpop.f32.mrb[0].mxu0
        %4875 = vmatprep.mubr.bf16.mxu0 0
        %4876 = vmatmul.mubr.bf16.gmra.mrb[0].mxu0 %v4731
        %v4877 = vpop.f32.mrb[0].mxu0
        %v4878 = vadd.f32 0.0, %v4877
        %v4879 = vpop.f32.mrb[0].mxu0
        %v4880 = vpop.f32.mrb[0].mxu0
        %v4881 = vadd.f32 0.0, %v4880
        %v4882 = vpop.f32.mrb[0].mxu0
        %4883 = vmatprep.mubr.bf16.mxu0 0
        %4884 = vmatmul.mubr.bf16.gmra.mrb[0].mxu0 %v4732
        %v4885 = vpop.f32.mrb[0].mxu0
        %v4886 = vadd.f32 0.0, %v4885
        %v4887 = vpop.f32.mrb[0].mxu0
        %v4888 = vpop.f32.mrb[0].mxu0
        %v4889 = vadd.f32 0.0, %v4888
        %v4890 = vpop.f32.mrb[0].mxu0
        %4891 = vmatprep.mubr.bf16.mxu0 0
        %4892 = vmatmul.mubr.bf16.gmra.mrb[0].mxu0 %v4733
        %v4893 = vpop.f32.mrb[0].mxu0
        %v4894 = vadd.f32 0.0, %v4893
        %v4895 = vpop.f32.mrb[0].mxu0
        %v4896 = vpop.f32.mrb[0].mxu0
        %v4897 = vadd.f32 0.0, %v4896
        %v4898 = vpop.f32.mrb[0].mxu0
        %4899 = vmatprep.mubr.bf16.mxu0 0
        %4900 = vmatmul.mubr.bf16.gmra.mrb[0].mxu0 %v4734
        %v4901 = vpop.f32.mrb[0].mxu0
        %v4902 = vadd.f32 0.0, %v4901
        %v4903 = vpop.f32.mrb[0].mxu0
        %v4904 = vpop.f32.mrb[0].mxu0
        %v4905 = vadd.f32 0.0, %v4904
        %v4906 = vpop.f32.mrb[0].mxu0
        %4907 = vmatprep.mubr.bf16.mxu0 0
        %4908 = vmatmul.mubr.bf16.gmra.mrb[0].mxu0 %v4735
        %v4909 = vpop.f32.mrb[0].mxu0
        %v4910 = vadd.f32 0.0, %v4909
        %v4911 = vpop.f32.mrb[0].mxu0
        %v4912 = vpop.f32.mrb[0].mxu0
        %v4913 = vadd.f32 0.0, %v4912
        %v4914 = vpop.f32.mrb[0].mxu0
        %4915 = vmatprep.mubr.bf16.mxu0 0
        %4916 = vmatmul.mubr.bf16.gmra.mrb[0].mxu0 %v4736
        %v4917 = vpop.f32.mrb[0].mxu0
        %v4918 = vadd.f32 0.0, %v4917
        %v4919 = vpop.f32.mrb[0].mxu0
        %v4920 = vpop.f32.mrb[0].mxu0
        %v4921 = vadd.f32 0.0, %v4920
        %v4922 = vpop.f32.mrb[0].mxu0
        %4923 = vmatprep.mubr.bf16.mxu0 0
        %4924 = vmatmul.mubr.bf16.gmra.mrb[0].mxu0 %v4737
        %v4925 = vpop.f32.mrb[0].mxu0
        %v4926 = vadd.f32 0.0, %v4925
        %v4927 = vpop.f32.mrb[0].mxu0
        %v4928 = vpop.f32.mrb[0].mxu0
        %v4929 = vadd.f32 0.0, %v4928
        %v4930 = vpop.f32.mrb[0].mxu0
        %4931 = vdwg.mxu0
        %v4932 = vadd.f32 %v4632, %v4838
        %v4933 = vadd.f32 %v4635, %v4841
        %v4934 = vadd.f32 %v4640, %v4846
        %v4935 = vadd.f32 %v4643, %v4849
        %v4936 = vadd.f32 %v4648, %v4854
        %v4937 = vadd.f32 %v4651, %v4857
        %v4938 = vadd.f32 %v4656, %v4862
        %v4939 = vadd.f32 %v4659, %v4865
        %v4940 = vadd.f32 %v4664, %v4870
        %v4941 = vadd.f32 %v4667, %v4873
        %v4942 = vadd.f32 %v4672, %v4878
        %v4943 = vadd.f32 %v4675, %v4881
        %v4944 = vadd.f32 %v4680, %v4886
        %v4945 = vadd.f32 %v4683, %v4889
        %v4946 = vadd.f32 %v4688, %v4894
        %v4947 = vadd.f32 %v4691, %v4897
        %v4948 = vadd.f32 %v4696, %v4902
        %v4949 = vadd.f32 %v4699, %v4905
        %v4950 = vadd.f32 %v4704, %v4910
        %v4951 = vadd.f32 %v4707, %v4913
        %v4952 = vadd.f32 %v4712, %v4918
        %v4953 = vadd.f32 %v4715, %v4921
        %v4954 = vadd.f32 %v4720, %v4926
        %v4955 = vadd.f32 %v4723, %v4929
        %v4956 = vld [vmem:[#allocation4] sm:$0xff]
        %v4957 = vld [vmem:[#allocation4 + $0x8] sm:$0xff]
        %v4958 = vld [vmem:[#allocation4 + $0x10] sm:$0xff]
        %v4959 = vld [vmem:[#allocation4 + $0x18] sm:$0xff]
        %v4960 = vld [vmem:[#allocation4 + $0x20] sm:$0xff]
        %v4961 = vld [vmem:[#allocation4 + $0x28] sm:$0xff]
        %v4962 = vld [vmem:[#allocation4 + $0x30] sm:$0xff]
        %v4963 = vld [vmem:[#allocation4 + $0x38] sm:$0xff]
        %v4964 = vld [vmem:[#allocation4 + $0x40] sm:$0xff]
        %v4965 = vld [vmem:[#allocation4 + $0x48] sm:$0xff]
        %v4966 = vld [vmem:[#allocation4 + $0x50] sm:$0xff]
        %v4967 = vld [vmem:[#allocation4 + $0x58] sm:$0xff]
        %v4968 = vld [vmem:[#allocation4 + $0x60] sm:$0xff]
        %v4969 = vld [vmem:[#allocation4 + $0x68] sm:$0xff]
        %v4970 = vld [vmem:[#allocation4 + $0x70] sm:$0xff]
        %v4971 = vld [vmem:[#allocation4 + $0x78] sm:$0xff]
        %v4972 = vld [vmem:[#allocation4 + $0x80] sm:$0xff]
        %v4973 = vld [vmem:[#allocation4 + $0x88] sm:$0xff]
        %v4974 = vld [vmem:[#allocation4 + $0x90] sm:$0xff]
        %v4975 = vld [vmem:[#allocation4 + $0x98] sm:$0xff]
        %v4976 = vld [vmem:[#allocation4 + $0xa0] sm:$0xff]
        %v4977 = vld [vmem:[#allocation4 + $0xa8] sm:$0xff]
        %v4978 = vld [vmem:[#allocation4 + $0xb0] sm:$0xff]
        %v4979 = vld [vmem:[#allocation4 + $0xb8] sm:$0xff]
        %v4980 = vrot.slane %v4932, 1
        %v4981 = vrot.slane %v4933, 1
        %v4982 = vrot.slane %v4934, 1
        %v4983 = vrot.slane %v4935, 1
        %v4984 = vrot.slane %v4936, 1
        %v4985 = vrot.slane %v4937, 1
        %v4986 = vrot.slane %v4938, 1
        %v4987 = vrot.slane %v4939, 1
        %v4988 = vrot.slane %v4940, 1
        %v4989 = vrot.slane %v4941, 1
        %v4990 = vrot.slane %v4942, 1
        %v4991 = vrot.slane %v4943, 1
        %v4992 = vrot.slane %v4944, 1
        %v4993 = vrot.slane %v4945, 1
        %v4994 = vrot.slane %v4946, 1
        %v4995 = vrot.slane %v4947, 1
        %v4996 = vrot.slane %v4948, 1
        %v4997 = vrot.slane %v4949, 1
        %v4998 = vrot.slane %v4950, 1
        %v4999 = vrot.slane %v4951, 1
        %v5000 = vrot.slane %v4952, 1
        %v5001 = vrot.slane %v4953, 1
        %v5002 = vrot.slane %v4954, 1
        %v5003 = vrot.slane %v4955, 1
        %v5004 = vsel %vm2172, %v5002, %v5003
        %v5005 = vsel %vm2172, %v5001, %v5002
        %v5006 = vsel %vm2172, %v5000, %v5001
        %v5007 = vsel %vm2172, %v4999, %v5000
        %v5008 = vsel %vm2172, %v4998, %v4999
        %v5009 = vsel %vm2172, %v4997, %v4998
        %v5010 = vsel %vm2172, %v4996, %v4997
        %v5011 = vsel %vm2172, %v4995, %v4996
        %v5012 = vsel %vm2172, %v4994, %v4995
        %v5013 = vsel %vm2172, %v4993, %v4994
        %v5014 = vsel %vm2172, %v4992, %v4993
        %v5015 = vsel %vm2172, %v4991, %v4992
        %v5016 = vsel %vm2172, %v4990, %v4991
        %v5017 = vsel %vm2172, %v4989, %v4990
        %v5018 = vsel %vm2172, %v4988, %v4989
        %v5019 = vsel %vm2172, %v4987, %v4988
        %v5020 = vsel %vm2172, %v4986, %v4987
        %v5021 = vsel %vm2172, %v4985, %v4986
        %v5022 = vsel %vm2172, %v4984, %v4985
        %v5023 = vsel %vm2172, %v4983, %v4984
        %v5024 = vsel %vm2172, %v4982, %v4983
        %v5025 = vsel %vm2172, %v4981, %v4982
        %v5026 = vsel %vm2172, %v4980, %v4981
        %v5027 = vsel %vm2172, %v5003, %v4980
        %v5028 = vadd.f32 %v4956, %v5026
        %v5029 = vadd.f32 %v4957, %v5025
        %v5030 = vadd.f32 %v4958, %v5024
        %v5031 = vadd.f32 %v4959, %v5023
        %v5032 = vadd.f32 %v4960, %v5022
        %v5033 = vadd.f32 %v4961, %v5021
        %v5034 = vadd.f32 %v4962, %v5020
        %v5035 = vadd.f32 %v4963, %v5019
        %v5036 = vadd.f32 %v4964, %v5018
        %v5037 = vadd.f32 %v4965, %v5017
        %v5038 = vadd.f32 %v4966, %v5016
        %v5039 = vadd.f32 %v4967, %v5015
        %v5040 = vadd.f32 %v4968, %v5014
        %v5041 = vadd.f32 %v4969, %v5013
        %v5042 = vadd.f32 %v4970, %v5012
        %v5043 = vadd.f32 %v4971, %v5011
        %v5044 = vadd.f32 %v4972, %v5010
        %v5045 = vadd.f32 %v4973, %v5009
        %v5046 = vadd.f32 %v4974, %v5008
        %v5047 = vadd.f32 %v4975, %v5007
        %v5048 = vadd.f32 %v4976, %v5006
        %v5049 = vadd.f32 %v4977, %v5005
        %v5050 = vadd.f32 %v4978, %v5004
        %v5051 = vadd.f32 %v4979, %v5027
        %5052 = vst [vmem:[#allocation4] sm:$0xff] %v5028
        %5053 = vst [vmem:[#allocation4 + $0x8] sm:$0xff] %v5029
        %5054 = vst [vmem:[#allocation4 + $0x10] sm:$0xff] %v5030
        %5055 = vst [vmem:[#allocation4 + $0x18] sm:$0xff] %v5031
        %5056 = vst [vmem:[#allocation4 + $0x20] sm:$0xff] %v5032
        %5057 = vst [vmem:[#allocation4 + $0x28] sm:$0xff] %v5033
        %5058 = vst [vmem:[#allocation4 + $0x30] sm:$0xff] %v5034
        %5059 = vst [vmem:[#allocation4 + $0x38] sm:$0xff] %v5035
        %5060 = vst [vmem:[#allocation4 + $0x40] sm:$0xff] %v5036
        %5061 = vst [vmem:[#allocation4 + $0x48] sm:$0xff] %v5037
        %5062 = vst [vmem:[#allocation4 + $0x50] sm:$0xff] %v5038
        %5063 = vst [vmem:[#allocation4 + $0x58] sm:$0xff] %v5039
        %5064 = vst [vmem:[#allocation4 + $0x60] sm:$0xff] %v5040
        %5065 = vst [vmem:[#allocation4 + $0x68] sm:$0xff] %v5041
        %5066 = vst [vmem:[#allocation4 + $0x70] sm:$0xff] %v5042
        %5067 = vst [vmem:[#allocation4 + $0x78] sm:$0xff] %v5043
        %5068 = vst [vmem:[#allocation4 + $0x80] sm:$0xff] %v5044
        %5069 = vst [vmem:[#allocation4 + $0x88] sm:$0xff] %v5045
        %5070 = vst [vmem:[#allocation4 + $0x90] sm:$0xff] %v5046
        %5071 = vst [vmem:[#allocation4 + $0x98] sm:$0xff] %v5047
        %5072 = vst [vmem:[#allocation4 + $0xa0] sm:$0xff] %v5048
        %5073 = vst [vmem:[#allocation4 + $0xa8] sm:$0xff] %v5049
        %5074 = vst [vmem:[#allocation4 + $0xb0] sm:$0xff] %v5050
        %5075 = vst [vmem:[#allocation4 + $0xb8] sm:$0xff] %v5051
        %v5076 = vld [vmem:[#allocation5] sm:$0xff]
        %v5077 = vld [vmem:[#allocation5 + $0x8] sm:$0xff]
        %v5078 = vld [vmem:[#allocation5 + $0x10] sm:$0xff]
        %v5079 = vld [vmem:[#allocation5 + $0x18] sm:$0xff]
        %v5080 = vld [vmem:[#allocation5 + $0x20] sm:$0xff]
        %v5081 = vld [vmem:[#allocation5 + $0x28] sm:$0xff]
        %v5082 = vld [vmem:[#allocation5 + $0x30] sm:$0xff]
        %v5083 = vld [vmem:[#allocation5 + $0x38] sm:$0xff]
        %v5084 = vld [vmem:[#allocation5 + $0x40] sm:$0xff]
        %v5085 = vld [vmem:[#allocation5 + $0x48] sm:$0xff]
        %v5086 = vld [vmem:[#allocation5 + $0x50] sm:$0xff]
        %v5087 = vld [vmem:[#allocation5 + $0x58] sm:$0xff]
        %s5088 = scalar_lea.vmem [#allocation10], 128
        %v5089 = vld [vmem:[%s5088] sm:$0xf]
        %v5090 = vld [vmem:[%s5088 + $0x4] sm:$0xf]
        %v5091 = vld [vmem:[%s5088 + $0x8] sm:$0xf]
        %v5092 = vld [vmem:[%s5088 + $0xc] sm:$0xf]
        %v5093 = vld [vmem:[%s5088 + $0x10] sm:$0xf]
        %v5094 = vld [vmem:[%s5088 + $0x14] sm:$0xf]
        %v5095 = vld [vmem:[%s5088 + $0x18] sm:$0xf]
        %v5096 = vld [vmem:[%s5088 + $0x1c] sm:$0xf]
        %v5097 = vld [vmem:[%s5088 + $0x20] sm:$0xf]
        %v5098 = vld [vmem:[%s5088 + $0x24] sm:$0xf]
        %v5099 = vld [vmem:[%s5088 + $0x28] sm:$0xf]
        %v5100 = vld [vmem:[%s5088 + $0x2c] sm:$0xf]
        %v5101 = vld [vmem:[%s5088 + $0x30] sm:$0xf]
        %v5102 = vld [vmem:[%s5088 + $0x34] sm:$0xf]
        %v5103 = vld [vmem:[%s5088 + $0x38] sm:$0xf]
        %v5104 = vld [vmem:[%s5088 + $0x3c] sm:$0xf]
        %v5105 = vld [vmem:[#allocation5 + $0x8] sm:$0xf0]
        %v5106 = vld [vmem:[#allocation5 + $0x60] sm:$0xff]
        %v5107 = vld [vmem:[#allocation5 + $0x68] sm:$0xf]
        %s5108 = scalar_lea.vmem [#allocation10], 320
        %v5109 = vld [vmem:[%s5108] sm:$0xf]
        %v5110 = vld [vmem:[%s5108 + $0x4] sm:$0xf]
        %v5111 = vld [vmem:[%s5108 + $0x8] sm:$0xf]
        %v5112 = vld [vmem:[%s5108 + $0xc] sm:$0xf]
        %v5113 = vld [vmem:[%s5108 + $0x10] sm:$0xf]
        %v5114 = vld [vmem:[%s5108 + $0x14] sm:$0xf]
        %v5115 = vld [vmem:[%s5108 + $0x18] sm:$0xf]
        %v5116 = vld [vmem:[%s5108 + $0x1c] sm:$0xf]
        %v5117 = vld [vmem:[%s5108 + $0x20] sm:$0xf]
        %v5118 = vld [vmem:[%s5108 + $0x24] sm:$0xf]
        %v5119 = vld [vmem:[%s5108 + $0x28] sm:$0xf]
        %v5120 = vld [vmem:[%s5108 + $0x2c] sm:$0xf]
        %v5121 = vld [vmem:[%s5108 + $0x30] sm:$0xf]
        %v5122 = vld [vmem:[%s5108 + $0x34] sm:$0xf]
        %v5123 = vld [vmem:[%s5108 + $0x38] sm:$0xf]
        %v5124 = vld [vmem:[%s5108 + $0x3c] sm:$0xf]
        %v5138 = vrot.slane %v5105, 4
        %v5139 = vrot.slane %v5078, 4
        %v5140 = vsel %vm589, %v5138, %v5139
        %v5141 = vrot.slane %v5079, 4
        %v5142 = vsel %vm589, %v5139, %v5141
        %v5143 = vrot.slane %v5080, 4
        %v5144 = vsel %vm589, %v5141, %v5143
        %v5145 = vrot.slane %v5081, 4
        %v5146 = vsel %vm589, %v5143, %v5145
        %v5147 = vrot.slane %v5082, 4
        %v5148 = vsel %vm589, %v5145, %v5147
        %v5149 = vrot.slane %v5083, 4
        %v5150 = vsel %vm589, %v5147, %v5149
        %v5151 = vrot.slane %v5084, 4
        %v5152 = vsel %vm589, %v5149, %v5151
        %v5153 = vrot.slane %v5085, 4
        %v5154 = vsel %vm589, %v5151, %v5153
        %v5155 = vrot.slane %v5086, 4
        %v5156 = vsel %vm589, %v5153, %v5155
        %v5157 = vrot.slane %v5087, 4
        %v5158 = vsel %vm589, %v5155, %v5157
        %v5159 = vrot.slane %v5106, 4
        %v5160 = vsel %vm589, %v5157, %v5159
        %v5161 = vrot.slane %v5107, 4
        %v5162 = vsel %vm589, %v5159, %v5161
        %v5191 = vunpack.c.l.b16 %v5109
        %v5192 = vunpack.c.l.b16 %v5110
        %v5193 = vunpack.c.l.b16 %v5111
        %v5194 = vunpack.c.l.b16 %v5112
        %v5195 = vunpack.c.l.b16 %v5113
        %v5196 = vunpack.c.l.b16 %v5114
        %v5197 = vunpack.c.l.b16 %v5115
        %v5198 = vunpack.c.l.b16 %v5116
        %v5199 = vunpack.c.l.b16 %v5117
        %v5200 = vunpack.c.l.b16 %v5118
        %v5201 = vunpack.c.l.b16 %v5119
        %v5202 = vunpack.c.l.b16 %v5120
        %v5203 = vunpack.c.l.b16 %v5121
        %v5204 = vunpack.c.l.b16 %v5122
        %v5205 = vunpack.c.l.b16 %v5123
        %v5206 = vunpack.c.l.b16 %v5124
        %v5207 = vpack.c.b16 %v5192, %v5191
        %v5208 = vpack.c.b16 %v5194, %v5193
        %v5209 = vpack.c.b16 %v5196, %v5195
        %v5210 = vpack.c.b16 %v5198, %v5197
        %v5211 = vpack.c.b16 %v5200, %v5199
        %v5212 = vpack.c.b16 %v5202, %v5201
        %v5213 = vpack.c.b16 %v5204, %v5203
        %v5214 = vpack.c.b16 %v5206, %v5205
        %5223 = vmatprep.subr.bf16.mxu0 0
        %5224 = vmatpush1.bf16.msra.mxu0 %v5207
        %5225 = vmatprep.subr.bf16.mxu0 0
        %5226 = vmatpush1.bf16.msra.mxu0 %v5208
        %5227 = vmatprep.subr.bf16.mxu0 0
        %5228 = vmatpush1.bf16.msra.mxu0 %v5209
        %5229 = vmatprep.subr.bf16.mxu0 0
        %5230 = vmatpush1.bf16.msra.mxu0 %v5210
        %5231 = vmatprep.subr.bf16.mxu0 0
        %5232 = vmatpush1.bf16.msra.mxu0 %v5211
        %5233 = vmatprep.subr.bf16.mxu0 0
        %5234 = vmatpush1.bf16.msra.mxu0 %v5212
        %5235 = vmatprep.subr.bf16.mxu0 0
        %5236 = vmatpush1.bf16.msra.mxu0 %v5213
        %5237 = vmatprep.subr.bf16.mxu0 0
        %5238 = vmatpush1.bf16.msra.mxu0 %v5214
        %5239 = vmatprep.subr.bf16.mxu0 0
        %5240 = vmatpush1.bf16.msra.mxu0 0
        %5241 = vmatprep.subr.bf16.mxu0 0
        %5242 = vmatpush1.bf16.msra.mxu0 0
        %5243 = vmatprep.subr.bf16.mxu0 0
        %5244 = vmatpush1.bf16.msra.mxu0 0
        %5245 = vmatprep.subr.bf16.mxu0 0
        %5246 = vmatpush1.bf16.msra.mxu0 0
        %5247 = vmatprep.subr.bf16.mxu0 0
        %5248 = vmatpush1.bf16.msra.mxu0 0
        %5249 = vmatprep.subr.bf16.mxu0 0
        %5250 = vmatpush1.bf16.msra.mxu0 0
        %5251 = vmatprep.subr.bf16.mxu0 0
        %5252 = vmatpush1.bf16.msra.mxu0 0
        %5253 = vmatprep.subr.bf16.mxu0 0
        %5254 = vmatpush1.bf16.msra.mxu0 0
        %5255 = vmatprep.mubr.bf16.mxu0 0
        %5256 = vmatmul.mubr.bf16.gmra.mrb[0].mxu0 %v5140
        %v5257 = vpop.f32.mrb[0].mxu0
        %v5258 = vadd.f32 0.0, %v5257
        %v5259 = vpop.f32.mrb[0].mxu0
        %v5260 = vpop.f32.mrb[0].mxu0
        %v5261 = vadd.f32 0.0, %v5260
        %v5262 = vpop.f32.mrb[0].mxu0
        %5263 = vmatprep.mubr.bf16.mxu0 0
        %5264 = vmatmul.mubr.bf16.gmra.mrb[0].mxu0 %v5142
        %v5265 = vpop.f32.mrb[0].mxu0
        %v5266 = vadd.f32 0.0, %v5265
        %v5267 = vpop.f32.mrb[0].mxu0
        %v5268 = vpop.f32.mrb[0].mxu0
        %v5269 = vadd.f32 0.0, %v5268
        %v5270 = vpop.f32.mrb[0].mxu0
        %5271 = vmatprep.mubr.bf16.mxu0 0
        %5272 = vmatmul.mubr.bf16.gmra.mrb[0].mxu0 %v5144
        %v5273 = vpop.f32.mrb[0].mxu0
        %v5274 = vadd.f32 0.0, %v5273
        %v5275 = vpop.f32.mrb[0].mxu0
        %v5276 = vpop.f32.mrb[0].mxu0
        %v5277 = vadd.f32 0.0, %v5276
        %v5278 = vpop.f32.mrb[0].mxu0
        %5279 = vmatprep.mubr.bf16.mxu0 0
        %5280 = vmatmul.mubr.bf16.gmra.mrb[0].mxu0 %v5146
        %v5281 = vpop.f32.mrb[0].mxu0
        %v5282 = vadd.f32 0.0, %v5281
        %v5283 = vpop.f32.mrb[0].mxu0
        %v5284 = vpop.f32.mrb[0].mxu0
        %v5285 = vadd.f32 0.0, %v5284
        %v5286 = vpop.f32.mrb[0].mxu0
        %5287 = vmatprep.mubr.bf16.mxu0 0
        %5288 = vmatmul.mubr.bf16.gmra.mrb[0].mxu0 %v5148
        %v5289 = vpop.f32.mrb[0].mxu0
        %v5290 = vadd.f32 0.0, %v5289
        %v5291 = vpop.f32.mrb[0].mxu0
        %v5292 = vpop.f32.mrb[0].mxu0
        %v5293 = vadd.f32 0.0, %v5292
        %v5294 = vpop.f32.mrb[0].mxu0
        %5295 = vmatprep.mubr.bf16.mxu0 0
        %5296 = vmatmul.mubr.bf16.gmra.mrb[0].mxu0 %v5150
        %v5297 = vpop.f32.mrb[0].mxu0
        %v5298 = vadd.f32 0.0, %v5297
        %v5299 = vpop.f32.mrb[0].mxu0
        %v5300 = vpop.f32.mrb[0].mxu0
        %v5301 = vadd.f32 0.0, %v5300
        %v5302 = vpop.f32.mrb[0].mxu0
        %5303 = vmatprep.mubr.bf16.mxu0 0
        %5304 = vmatmul.mubr.bf16.gmra.mrb[0].mxu0 %v5152
        %v5305 = vpop.f32.mrb[0].mxu0
        %v5306 = vadd.f32 0.0, %v5305
        %v5307 = vpop.f32.mrb[0].mxu0
        %v5308 = vpop.f32.mrb[0].mxu0
        %v5309 = vadd.f32 0.0, %v5308
        %v5310 = vpop.f32.mrb[0].mxu0
        %5311 = vmatprep.mubr.bf16.mxu0 0
        %5312 = vmatmul.mubr.bf16.gmra.mrb[0].mxu0 %v5154
        %v5313 = vpop.f32.mrb[0].mxu0
        %v5314 = vadd.f32 0.0, %v5313
        %v5315 = vpop.f32.mrb[0].mxu0
        %v5316 = vpop.f32.mrb[0].mxu0
        %v5317 = vadd.f32 0.0, %v5316
        %v5318 = vpop.f32.mrb[0].mxu0
        %5319 = vmatprep.mubr.bf16.mxu0 0
        %5320 = vmatmul.mubr.bf16.gmra.mrb[0].mxu0 %v5156
        %v5321 = vpop.f32.mrb[0].mxu0
        %v5322 = vadd.f32 0.0, %v5321
        %v5323 = vpop.f32.mrb[0].mxu0
        %v5324 = vpop.f32.mrb[0].mxu0
        %v5325 = vadd.f32 0.0, %v5324
        %v5326 = vpop.f32.mrb[0].mxu0
        %5327 = vmatprep.mubr.bf16.mxu0 0
        %5328 = vmatmul.mubr.bf16.gmra.mrb[0].mxu0 %v5158
        %v5329 = vpop.f32.mrb[0].mxu0
        %v5330 = vadd.f32 0.0, %v5329
        %v5331 = vpop.f32.mrb[0].mxu0
        %v5332 = vpop.f32.mrb[0].mxu0
        %v5333 = vadd.f32 0.0, %v5332
        %v5334 = vpop.f32.mrb[0].mxu0
        %5335 = vmatprep.mubr.bf16.mxu0 0
        %5336 = vmatmul.mubr.bf16.gmra.mrb[0].mxu0 %v5160
        %v5337 = vpop.f32.mrb[0].mxu0
        %v5338 = vadd.f32 0.0, %v5337
        %v5339 = vpop.f32.mrb[0].mxu0
        %v5340 = vpop.f32.mrb[0].mxu0
        %v5341 = vadd.f32 0.0, %v5340
        %v5342 = vpop.f32.mrb[0].mxu0
        %5343 = vmatprep.mubr.bf16.mxu0 0
        %5344 = vmatmul.mubr.bf16.gmra.mrb[0].mxu0 %v5162
        %v5345 = vpop.f32.mrb[0].mxu0
        %v5346 = vadd.f32 0.0, %v5345
        %v5347 = vpop.f32.mrb[0].mxu0
        %v5348 = vpop.f32.mrb[0].mxu0
        %v5349 = vadd.f32 0.0, %v5348
        %v5350 = vpop.f32.mrb[0].mxu0
        %5351 = vdwg.mxu0
        %v5368 = vunpack.c.l.b16 %v5089
        %v5369 = vunpack.c.l.b16 %v5090
        %v5370 = vunpack.c.l.b16 %v5091
        %v5371 = vunpack.c.l.b16 %v5092
        %v5372 = vunpack.c.l.b16 %v5093
        %v5373 = vunpack.c.l.b16 %v5094
        %v5374 = vunpack.c.l.b16 %v5095
        %v5375 = vunpack.c.l.b16 %v5096
        %v5376 = vunpack.c.l.b16 %v5097
        %v5377 = vunpack.c.l.b16 %v5098
        %v5378 = vunpack.c.l.b16 %v5099
        %v5379 = vunpack.c.l.b16 %v5100
        %v5380 = vunpack.c.l.b16 %v5101
        %v5381 = vunpack.c.l.b16 %v5102
        %v5382 = vunpack.c.l.b16 %v5103
        %v5383 = vunpack.c.l.b16 %v5104
        %v5384 = vpack.c.b16 %v5369, %v5368
        %v5385 = vpack.c.b16 %v5371, %v5370
        %v5386 = vpack.c.b16 %v5373, %v5372
        %v5387 = vpack.c.b16 %v5375, %v5374
        %v5388 = vpack.c.b16 %v5377, %v5376
        %v5389 = vpack.c.b16 %v5379, %v5378
        %v5390 = vpack.c.b16 %v5381, %v5380
        %v5391 = vpack.c.b16 %v5383, %v5382
        %5400 = vmatprep.subr.bf16.mxu0 0
        %5401 = vmatpush1.bf16.msra.mxu0 %v5384
        %5402 = vmatprep.subr.bf16.mxu0 0
        %5403 = vmatpush1.bf16.msra.mxu0 %v5385
        %5404 = vmatprep.subr.bf16.mxu0 0
        %5405 = vmatpush1.bf16.msra.mxu0 %v5386
        %5406 = vmatprep.subr.bf16.mxu0 0
        %5407 = vmatpush1.bf16.msra.mxu0 %v5387
        %5408 = vmatprep.subr.bf16.mxu0 0
        %5409 = vmatpush1.bf16.msra.mxu0 %v5388
        %5410 = vmatprep.subr.bf16.mxu0 0
        %5411 = vmatpush1.bf16.msra.mxu0 %v5389
        %5412 = vmatprep.subr.bf16.mxu0 0
        %5413 = vmatpush1.bf16.msra.mxu0 %v5390
        %5414 = vmatprep.subr.bf16.mxu0 0
        %5415 = vmatpush1.bf16.msra.mxu0 %v5391
        %5416 = vmatprep.subr.bf16.mxu0 0
        %5417 = vmatpush1.bf16.msra.mxu0 0
        %5418 = vmatprep.subr.bf16.mxu0 0
        %5419 = vmatpush1.bf16.msra.mxu0 0
        %5420 = vmatprep.subr.bf16.mxu0 0
        %5421 = vmatpush1.bf16.msra.mxu0 0
        %5422 = vmatprep.subr.bf16.mxu0 0
        %5423 = vmatpush1.bf16.msra.mxu0 0
        %5424 = vmatprep.subr.bf16.mxu0 0
        %5425 = vmatpush1.bf16.msra.mxu0 0
        %5426 = vmatprep.subr.bf16.mxu0 0
        %5427 = vmatpush1.bf16.msra.mxu0 0
        %5428 = vmatprep.subr.bf16.mxu0 0
        %5429 = vmatpush1.bf16.msra.mxu0 0
        %5430 = vmatprep.subr.bf16.mxu0 0
        %5431 = vmatpush1.bf16.msra.mxu0 0
        %5432 = vmatprep.mubr.bf16.mxu0 0
        %5433 = vmatmul.mubr.bf16.gmra.mrb[0].mxu0 %v5076
        %v5434 = vpop.f32.mrb[0].mxu0
        %v5435 = vadd.f32 %v5258, %v5434
        %v5436 = vpop.f32.mrb[0].mxu0
        %v5437 = vpop.f32.mrb[0].mxu0
        %v5438 = vadd.f32 %v5261, %v5437
        %v5439 = vpop.f32.mrb[0].mxu0
        %5440 = vmatprep.mubr.bf16.mxu0 0
        %5441 = vmatmul.mubr.bf16.gmra.mrb[0].mxu0 %v5077
        %v5442 = vpop.f32.mrb[0].mxu0
        %v5443 = vadd.f32 %v5266, %v5442
        %v5444 = vpop.f32.mrb[0].mxu0
        %v5445 = vpop.f32.mrb[0].mxu0
        %v5446 = vadd.f32 %v5269, %v5445
        %v5447 = vpop.f32.mrb[0].mxu0
        %5448 = vmatprep.mubr.bf16.mxu0 0
        %5449 = vmatmul.mubr.bf16.gmra.mrb[0].mxu0 %v5078
        %v5450 = vpop.f32.mrb[0].mxu0
        %v5451 = vadd.f32 %v5274, %v5450
        %v5452 = vpop.f32.mrb[0].mxu0
        %v5453 = vpop.f32.mrb[0].mxu0
        %v5454 = vadd.f32 %v5277, %v5453
        %v5455 = vpop.f32.mrb[0].mxu0
        %5456 = vmatprep.mubr.bf16.mxu0 0
        %5457 = vmatmul.mubr.bf16.gmra.mrb[0].mxu0 %v5079
        %v5458 = vpop.f32.mrb[0].mxu0
        %v5459 = vadd.f32 %v5282, %v5458
        %v5460 = vpop.f32.mrb[0].mxu0
        %v5461 = vpop.f32.mrb[0].mxu0
        %v5462 = vadd.f32 %v5285, %v5461
        %v5463 = vpop.f32.mrb[0].mxu0
        %5464 = vmatprep.mubr.bf16.mxu0 0
        %5465 = vmatmul.mubr.bf16.gmra.mrb[0].mxu0 %v5080
        %v5466 = vpop.f32.mrb[0].mxu0
        %v5467 = vadd.f32 %v5290, %v5466
        %v5468 = vpop.f32.mrb[0].mxu0
        %v5469 = vpop.f32.mrb[0].mxu0
        %v5470 = vadd.f32 %v5293, %v5469
        %v5471 = vpop.f32.mrb[0].mxu0
        %5472 = vmatprep.mubr.bf16.mxu0 0
        %5473 = vmatmul.mubr.bf16.gmra.mrb[0].mxu0 %v5081
        %v5474 = vpop.f32.mrb[0].mxu0
        %v5475 = vadd.f32 %v5298, %v5474
        %v5476 = vpop.f32.mrb[0].mxu0
        %v5477 = vpop.f32.mrb[0].mxu0
        %v5478 = vadd.f32 %v5301, %v5477
        %v5479 = vpop.f32.mrb[0].mxu0
        %5480 = vmatprep.mubr.bf16.mxu0 0
        %5481 = vmatmul.mubr.bf16.gmra.mrb[0].mxu0 %v5082
        %v5482 = vpop.f32.mrb[0].mxu0
        %v5483 = vadd.f32 %v5306, %v5482
        %v5484 = vpop.f32.mrb[0].mxu0
        %v5485 = vpop.f32.mrb[0].mxu0
        %v5486 = vadd.f32 %v5309, %v5485
        %v5487 = vpop.f32.mrb[0].mxu0
        %5488 = vmatprep.mubr.bf16.mxu0 0
        %5489 = vmatmul.mubr.bf16.gmra.mrb[0].mxu0 %v5083
        %v5490 = vpop.f32.mrb[0].mxu0
        %v5491 = vadd.f32 %v5314, %v5490
        %v5492 = vpop.f32.mrb[0].mxu0
        %v5493 = vpop.f32.mrb[0].mxu0
        %v5494 = vadd.f32 %v5317, %v5493
        %v5495 = vpop.f32.mrb[0].mxu0
        %5496 = vmatprep.mubr.bf16.mxu0 0
        %5497 = vmatmul.mubr.bf16.gmra.mrb[0].mxu0 %v5084
        %v5498 = vpop.f32.mrb[0].mxu0
        %v5499 = vadd.f32 %v5322, %v5498
        %v5500 = vpop.f32.mrb[0].mxu0
        %v5501 = vpop.f32.mrb[0].mxu0
        %v5502 = vadd.f32 %v5325, %v5501
        %v5503 = vpop.f32.mrb[0].mxu0
        %5504 = vmatprep.mubr.bf16.mxu0 0
        %5505 = vmatmul.mubr.bf16.gmra.mrb[0].mxu0 %v5085
        %v5506 = vpop.f32.mrb[0].mxu0
        %v5507 = vadd.f32 %v5330, %v5506
        %v5508 = vpop.f32.mrb[0].mxu0
        %v5509 = vpop.f32.mrb[0].mxu0
        %v5510 = vadd.f32 %v5333, %v5509
        %v5511 = vpop.f32.mrb[0].mxu0
        %5512 = vmatprep.mubr.bf16.mxu0 0
        %5513 = vmatmul.mubr.bf16.gmra.mrb[0].mxu0 %v5086
        %v5514 = vpop.f32.mrb[0].mxu0
        %v5515 = vadd.f32 %v5338, %v5514
        %v5516 = vpop.f32.mrb[0].mxu0
        %v5517 = vpop.f32.mrb[0].mxu0
        %v5518 = vadd.f32 %v5341, %v5517
        %v5519 = vpop.f32.mrb[0].mxu0
        %5520 = vmatprep.mubr.bf16.mxu0 0
        %5521 = vmatmul.mubr.bf16.gmra.mrb[0].mxu0 %v5087
        %v5522 = vpop.f32.mrb[0].mxu0
        %v5523 = vadd.f32 %v5346, %v5522
        %v5524 = vpop.f32.mrb[0].mxu0
        %v5525 = vpop.f32.mrb[0].mxu0
        %v5526 = vadd.f32 %v5349, %v5525
        %v5527 = vpop.f32.mrb[0].mxu0
        %5528 = vdwg.mxu0
        %v5529 = vld [vmem:[#allocation5 + $0x18] sm:$0xff]
        %v5530 = vld [vmem:[#allocation5 + $0x20] sm:$0xff]
        %v5531 = vld [vmem:[#allocation5 + $0x28] sm:$0xff]
        %v5532 = vld [vmem:[#allocation5 + $0x30] sm:$0xff]
        %v5533 = vld [vmem:[#allocation5 + $0x38] sm:$0xff]
        %v5534 = vld [vmem:[#allocation5 + $0x40] sm:$0xff]
        %v5535 = vld [vmem:[#allocation5 + $0x48] sm:$0xff]
        %v5536 = vld [vmem:[#allocation5 + $0x50] sm:$0xff]
        %v5537 = vld [vmem:[#allocation5 + $0x58] sm:$0xff]
        %v5538 = vld [vmem:[#allocation5 + $0x60] sm:$0xff]
        %v5539 = vld [vmem:[#allocation5 + $0x68] sm:$0xff]
        %v5540 = vld [vmem:[#allocation5 + $0x70] sm:$0xff]
        %s5541 = scalar_lea.vmem [#allocation10], 512
        %v5542 = vld [vmem:[%s5541] sm:$0xf]
        %v5543 = vld [vmem:[%s5541 + $0x4] sm:$0xf]
        %v5544 = vld [vmem:[%s5541 + $0x8] sm:$0xf]
        %v5545 = vld [vmem:[%s5541 + $0xc] sm:$0xf]
        %v5546 = vld [vmem:[%s5541 + $0x10] sm:$0xf]
        %v5547 = vld [vmem:[%s5541 + $0x14] sm:$0xf]
        %v5548 = vld [vmem:[%s5541 + $0x18] sm:$0xf]
        %v5549 = vld [vmem:[%s5541 + $0x1c] sm:$0xf]
        %v5550 = vld [vmem:[%s5541 + $0x20] sm:$0xf]
        %v5551 = vld [vmem:[%s5541 + $0x24] sm:$0xf]
        %v5552 = vld [vmem:[%s5541 + $0x28] sm:$0xf]
        %v5553 = vld [vmem:[%s5541 + $0x2c] sm:$0xf]
        %v5554 = vld [vmem:[%s5541 + $0x30] sm:$0xf]
        %v5555 = vld [vmem:[%s5541 + $0x34] sm:$0xf]
        %v5556 = vld [vmem:[%s5541 + $0x38] sm:$0xf]
        %v5557 = vld [vmem:[%s5541 + $0x3c] sm:$0xf]
        %v5574 = vunpack.c.l.b16 %v5542
        %v5575 = vunpack.c.l.b16 %v5543
        %v5576 = vunpack.c.l.b16 %v5544
        %v5577 = vunpack.c.l.b16 %v5545
        %v5578 = vunpack.c.l.b16 %v5546
        %v5579 = vunpack.c.l.b16 %v5547
        %v5580 = vunpack.c.l.b16 %v5548
        %v5581 = vunpack.c.l.b16 %v5549
        %v5582 = vunpack.c.l.b16 %v5550
        %v5583 = vunpack.c.l.b16 %v5551
        %v5584 = vunpack.c.l.b16 %v5552
        %v5585 = vunpack.c.l.b16 %v5553
        %v5586 = vunpack.c.l.b16 %v5554
        %v5587 = vunpack.c.l.b16 %v5555
        %v5588 = vunpack.c.l.b16 %v5556
        %v5589 = vunpack.c.l.b16 %v5557
        %v5590 = vpack.c.b16 %v5575, %v5574
        %v5591 = vpack.c.b16 %v5577, %v5576
        %v5592 = vpack.c.b16 %v5579, %v5578
        %v5593 = vpack.c.b16 %v5581, %v5580
        %v5594 = vpack.c.b16 %v5583, %v5582
        %v5595 = vpack.c.b16 %v5585, %v5584
        %v5596 = vpack.c.b16 %v5587, %v5586
        %v5597 = vpack.c.b16 %v5589, %v5588
        %5606 = vmatprep.subr.bf16.mxu0 0
        %5607 = vmatpush1.bf16.msra.mxu0 %v5590
        %5608 = vmatprep.subr.bf16.mxu0 0
        %5609 = vmatpush1.bf16.msra.mxu0 %v5591
        %5610 = vmatprep.subr.bf16.mxu0 0
        %5611 = vmatpush1.bf16.msra.mxu0 %v5592
        %5612 = vmatprep.subr.bf16.mxu0 0
        %5613 = vmatpush1.bf16.msra.mxu0 %v5593
        %5614 = vmatprep.subr.bf16.mxu0 0
        %5615 = vmatpush1.bf16.msra.mxu0 %v5594
        %5616 = vmatprep.subr.bf16.mxu0 0
        %5617 = vmatpush1.bf16.msra.mxu0 %v5595
        %5618 = vmatprep.subr.bf16.mxu0 0
        %5619 = vmatpush1.bf16.msra.mxu0 %v5596
        %5620 = vmatprep.subr.bf16.mxu0 0
        %5621 = vmatpush1.bf16.msra.mxu0 %v5597
        %5622 = vmatprep.subr.bf16.mxu0 0
        %5623 = vmatpush1.bf16.msra.mxu0 0
        %5624 = vmatprep.subr.bf16.mxu0 0
        %5625 = vmatpush1.bf16.msra.mxu0 0
        %5626 = vmatprep.subr.bf16.mxu0 0
        %5627 = vmatpush1.bf16.msra.mxu0 0
        %5628 = vmatprep.subr.bf16.mxu0 0
        %5629 = vmatpush1.bf16.msra.mxu0 0
        %5630 = vmatprep.subr.bf16.mxu0 0
        %5631 = vmatpush1.bf16.msra.mxu0 0
        %5632 = vmatprep.subr.bf16.mxu0 0
        %5633 = vmatpush1.bf16.msra.mxu0 0
        %5634 = vmatprep.subr.bf16.mxu0 0
        %5635 = vmatpush1.bf16.msra.mxu0 0
        %5636 = vmatprep.subr.bf16.mxu0 0
        %5637 = vmatpush1.bf16.msra.mxu0 0
        %5638 = vmatprep.mubr.bf16.mxu0 0
        %5639 = vmatmul.mubr.bf16.gmra.mrb[0].mxu0 %v5529
        %v5640 = vpop.f32.mrb[0].mxu0
        %v5641 = vadd.f32 0.0, %v5640
        %v5642 = vpop.f32.mrb[0].mxu0
        %v5643 = vpop.f32.mrb[0].mxu0
        %v5644 = vadd.f32 0.0, %v5643
        %v5645 = vpop.f32.mrb[0].mxu0
        %5646 = vmatprep.mubr.bf16.mxu0 0
        %5647 = vmatmul.mubr.bf16.gmra.mrb[0].mxu0 %v5530
        %v5648 = vpop.f32.mrb[0].mxu0
        %v5649 = vadd.f32 0.0, %v5648
        %v5650 = vpop.f32.mrb[0].mxu0
        %v5651 = vpop.f32.mrb[0].mxu0
        %v5652 = vadd.f32 0.0, %v5651
        %v5653 = vpop.f32.mrb[0].mxu0
        %5654 = vmatprep.mubr.bf16.mxu0 0
        %5655 = vmatmul.mubr.bf16.gmra.mrb[0].mxu0 %v5531
        %v5656 = vpop.f32.mrb[0].mxu0
        %v5657 = vadd.f32 0.0, %v5656
        %v5658 = vpop.f32.mrb[0].mxu0
        %v5659 = vpop.f32.mrb[0].mxu0
        %v5660 = vadd.f32 0.0, %v5659
        %v5661 = vpop.f32.mrb[0].mxu0
        %5662 = vmatprep.mubr.bf16.mxu0 0
        %5663 = vmatmul.mubr.bf16.gmra.mrb[0].mxu0 %v5532
        %v5664 = vpop.f32.mrb[0].mxu0
        %v5665 = vadd.f32 0.0, %v5664
        %v5666 = vpop.f32.mrb[0].mxu0
        %v5667 = vpop.f32.mrb[0].mxu0
        %v5668 = vadd.f32 0.0, %v5667
        %v5669 = vpop.f32.mrb[0].mxu0
        %5670 = vmatprep.mubr.bf16.mxu0 0
        %5671 = vmatmul.mubr.bf16.gmra.mrb[0].mxu0 %v5533
        %v5672 = vpop.f32.mrb[0].mxu0
        %v5673 = vadd.f32 0.0, %v5672
        %v5674 = vpop.f32.mrb[0].mxu0
        %v5675 = vpop.f32.mrb[0].mxu0
        %v5676 = vadd.f32 0.0, %v5675
        %v5677 = vpop.f32.mrb[0].mxu0
        %5678 = vmatprep.mubr.bf16.mxu0 0
        %5679 = vmatmul.mubr.bf16.gmra.mrb[0].mxu0 %v5534
        %v5680 = vpop.f32.mrb[0].mxu0
        %v5681 = vadd.f32 0.0, %v5680
        %v5682 = vpop.f32.mrb[0].mxu0
        %v5683 = vpop.f32.mrb[0].mxu0
        %v5684 = vadd.f32 0.0, %v5683
        %v5685 = vpop.f32.mrb[0].mxu0
        %5686 = vmatprep.mubr.bf16.mxu0 0
        %5687 = vmatmul.mubr.bf16.gmra.mrb[0].mxu0 %v5535
        %v5688 = vpop.f32.mrb[0].mxu0
        %v5689 = vadd.f32 0.0, %v5688
        %v5690 = vpop.f32.mrb[0].mxu0
        %v5691 = vpop.f32.mrb[0].mxu0
        %v5692 = vadd.f32 0.0, %v5691
        %v5693 = vpop.f32.mrb[0].mxu0
        %5694 = vmatprep.mubr.bf16.mxu0 0
        %5695 = vmatmul.mubr.bf16.gmra.mrb[0].mxu0 %v5536
        %v5696 = vpop.f32.mrb[0].mxu0
        %v5697 = vadd.f32 0.0, %v5696
        %v5698 = vpop.f32.mrb[0].mxu0
        %v5699 = vpop.f32.mrb[0].mxu0
        %v5700 = vadd.f32 0.0, %v5699
        %v5701 = vpop.f32.mrb[0].mxu0
        %5702 = vmatprep.mubr.bf16.mxu0 0
        %5703 = vmatmul.mubr.bf16.gmra.mrb[0].mxu0 %v5537
        %v5704 = vpop.f32.mrb[0].mxu0
        %v5705 = vadd.f32 0.0, %v5704
        %v5706 = vpop.f32.mrb[0].mxu0
        %v5707 = vpop.f32.mrb[0].mxu0
        %v5708 = vadd.f32 0.0, %v5707
        %v5709 = vpop.f32.mrb[0].mxu0
        %5710 = vmatprep.mubr.bf16.mxu0 0
        %5711 = vmatmul.mubr.bf16.gmra.mrb[0].mxu0 %v5538
        %v5712 = vpop.f32.mrb[0].mxu0
        %v5713 = vadd.f32 0.0, %v5712
        %v5714 = vpop.f32.mrb[0].mxu0
        %v5715 = vpop.f32.mrb[0].mxu0
        %v5716 = vadd.f32 0.0, %v5715
        %v5717 = vpop.f32.mrb[0].mxu0
        %5718 = vmatprep.mubr.bf16.mxu0 0
        %5719 = vmatmul.mubr.bf16.gmra.mrb[0].mxu0 %v5539
        %v5720 = vpop.f32.mrb[0].mxu0
        %v5721 = vadd.f32 0.0, %v5720
        %v5722 = vpop.f32.mrb[0].mxu0
        %v5723 = vpop.f32.mrb[0].mxu0
        %v5724 = vadd.f32 0.0, %v5723
        %v5725 = vpop.f32.mrb[0].mxu0
        %5726 = vmatprep.mubr.bf16.mxu0 0
        %5727 = vmatmul.mubr.bf16.gmra.mrb[0].mxu0 %v5540
        %v5728 = vpop.f32.mrb[0].mxu0
        %v5729 = vadd.f32 0.0, %v5728
        %v5730 = vpop.f32.mrb[0].mxu0
        %v5731 = vpop.f32.mrb[0].mxu0
        %v5732 = vadd.f32 0.0, %v5731
        %v5733 = vpop.f32.mrb[0].mxu0
        %5734 = vdwg.mxu0
        %v5735 = vadd.f32 %v5435, %v5641
        %v5736 = vadd.f32 %v5438, %v5644
        %v5737 = vadd.f32 %v5443, %v5649
        %v5738 = vadd.f32 %v5446, %v5652
        %v5739 = vadd.f32 %v5451, %v5657
        %v5740 = vadd.f32 %v5454, %v5660
        %v5741 = vadd.f32 %v5459, %v5665
        %v5742 = vadd.f32 %v5462, %v5668
        %v5743 = vadd.f32 %v5467, %v5673
        %v5744 = vadd.f32 %v5470, %v5676
        %v5745 = vadd.f32 %v5475, %v5681
        %v5746 = vadd.f32 %v5478, %v5684
        %v5747 = vadd.f32 %v5483, %v5689
        %v5748 = vadd.f32 %v5486, %v5692
        %v5749 = vadd.f32 %v5491, %v5697
        %v5750 = vadd.f32 %v5494, %v5700
        %v5751 = vadd.f32 %v5499, %v5705
        %v5752 = vadd.f32 %v5502, %v5708
        %v5753 = vadd.f32 %v5507, %v5713
        %v5754 = vadd.f32 %v5510, %v5716
        %v5755 = vadd.f32 %v5515, %v5721
        %v5756 = vadd.f32 %v5518, %v5724
        %v5757 = vadd.f32 %v5523, %v5729
        %v5758 = vadd.f32 %v5526, %v5732
        %v5759 = vld [vmem:[#allocation4] sm:$0xff]
        %v5760 = vld [vmem:[#allocation4 + $0x8] sm:$0xff]
        %v5761 = vld [vmem:[#allocation4 + $0x10] sm:$0xff]
        %v5762 = vld [vmem:[#allocation4 + $0x18] sm:$0xff]
        %v5763 = vld [vmem:[#allocation4 + $0x20] sm:$0xff]
        %v5764 = vld [vmem:[#allocation4 + $0x28] sm:$0xff]
        %v5765 = vld [vmem:[#allocation4 + $0x30] sm:$0xff]
        %v5766 = vld [vmem:[#allocation4 + $0x38] sm:$0xff]
        %v5767 = vld [vmem:[#allocation4 + $0x40] sm:$0xff]
        %v5768 = vld [vmem:[#allocation4 + $0x48] sm:$0xff]
        %v5769 = vld [vmem:[#allocation4 + $0x50] sm:$0xff]
        %v5770 = vld [vmem:[#allocation4 + $0x58] sm:$0xff]
        %v5771 = vld [vmem:[#allocation4 + $0x60] sm:$0xff]
        %v5772 = vld [vmem:[#allocation4 + $0x68] sm:$0xff]
        %v5773 = vld [vmem:[#allocation4 + $0x70] sm:$0xff]
        %v5774 = vld [vmem:[#allocation4 + $0x78] sm:$0xff]
        %v5775 = vld [vmem:[#allocation4 + $0x80] sm:$0xff]
        %v5776 = vld [vmem:[#allocation4 + $0x88] sm:$0xff]
        %v5777 = vld [vmem:[#allocation4 + $0x90] sm:$0xff]
        %v5778 = vld [vmem:[#allocation4 + $0x98] sm:$0xff]
        %v5779 = vld [vmem:[#allocation4 + $0xa0] sm:$0xff]
        %v5780 = vld [vmem:[#allocation4 + $0xa8] sm:$0xff]
        %v5781 = vld [vmem:[#allocation4 + $0xb0] sm:$0xff]
        %v5782 = vld [vmem:[#allocation4 + $0xb8] sm:$0xff]
        %v5783 = vrot.slane %v5735, 2
        %v5784 = vrot.slane %v5736, 2
        %v5785 = vrot.slane %v5737, 2
        %v5786 = vrot.slane %v5738, 2
        %v5787 = vrot.slane %v5739, 2
        %v5788 = vrot.slane %v5740, 2
        %v5789 = vrot.slane %v5741, 2
        %v5790 = vrot.slane %v5742, 2
        %v5791 = vrot.slane %v5743, 2
        %v5792 = vrot.slane %v5744, 2
        %v5793 = vrot.slane %v5745, 2
        %v5794 = vrot.slane %v5746, 2
        %v5795 = vrot.slane %v5747, 2
        %v5796 = vrot.slane %v5748, 2
        %v5797 = vrot.slane %v5749, 2
        %v5798 = vrot.slane %v5750, 2
        %v5799 = vrot.slane %v5751, 2
        %v5800 = vrot.slane %v5752, 2
        %v5801 = vrot.slane %v5753, 2
        %v5802 = vrot.slane %v5754, 2
        %v5803 = vrot.slane %v5755, 2
        %v5804 = vrot.slane %v5756, 2
        %v5805 = vrot.slane %v5757, 2
        %v5806 = vrot.slane %v5758, 2
        %v5807 = vsel %vm3102, %v5805, %v5806
        %v5808 = vsel %vm3102, %v5804, %v5805
        %v5809 = vsel %vm3102, %v5803, %v5804
        %v5810 = vsel %vm3102, %v5802, %v5803
        %v5811 = vsel %vm3102, %v5801, %v5802
        %v5812 = vsel %vm3102, %v5800, %v5801
        %v5813 = vsel %vm3102, %v5799, %v5800
        %v5814 = vsel %vm3102, %v5798, %v5799
        %v5815 = vsel %vm3102, %v5797, %v5798
        %v5816 = vsel %vm3102, %v5796, %v5797
        %v5817 = vsel %vm3102, %v5795, %v5796
        %v5818 = vsel %vm3102, %v5794, %v5795
        %v5819 = vsel %vm3102, %v5793, %v5794
        %v5820 = vsel %vm3102, %v5792, %v5793
        %v5821 = vsel %vm3102, %v5791, %v5792
        %v5822 = vsel %vm3102, %v5790, %v5791
        %v5823 = vsel %vm3102, %v5789, %v5790
        %v5824 = vsel %vm3102, %v5788, %v5789
        %v5825 = vsel %vm3102, %v5787, %v5788
        %v5826 = vsel %vm3102, %v5786, %v5787
        %v5827 = vsel %vm3102, %v5785, %v5786
        %v5828 = vsel %vm3102, %v5784, %v5785
        %v5829 = vsel %vm3102, %v5783, %v5784
        %v5830 = vsel %vm3102, %v5806, %v5783
        %v5831 = vadd.f32 %v5759, %v5829
        %v5832 = vadd.f32 %v5760, %v5828
        %v5833 = vadd.f32 %v5761, %v5827
        %v5834 = vadd.f32 %v5762, %v5826
        %v5835 = vadd.f32 %v5763, %v5825
        %v5836 = vadd.f32 %v5764, %v5824
        %v5837 = vadd.f32 %v5765, %v5823
        %v5838 = vadd.f32 %v5766, %v5822
        %v5839 = vadd.f32 %v5767, %v5821
        %v5840 = vadd.f32 %v5768, %v5820
        %v5841 = vadd.f32 %v5769, %v5819
        %v5842 = vadd.f32 %v5770, %v5818
        %v5843 = vadd.f32 %v5771, %v5817
        %v5844 = vadd.f32 %v5772, %v5816
        %v5845 = vadd.f32 %v5773, %v5815
        %v5846 = vadd.f32 %v5774, %v5814
        %v5847 = vadd.f32 %v5775, %v5813
        %v5848 = vadd.f32 %v5776, %v5812
        %v5849 = vadd.f32 %v5777, %v5811
        %v5850 = vadd.f32 %v5778, %v5810
        %v5851 = vadd.f32 %v5779, %v5809
        %v5852 = vadd.f32 %v5780, %v5808
        %v5853 = vadd.f32 %v5781, %v5807
        %v5854 = vadd.f32 %v5782, %v5830
        %5855 = vst [vmem:[#allocation4] sm:$0xff] %v5831
        %5856 = vst [vmem:[#allocation4 + $0x8] sm:$0xff] %v5832
        %5857 = vst [vmem:[#allocation4 + $0x10] sm:$0xff] %v5833
        %5858 = vst [vmem:[#allocation4 + $0x18] sm:$0xff] %v5834
        %5859 = vst [vmem:[#allocation4 + $0x20] sm:$0xff] %v5835
        %5860 = vst [vmem:[#allocation4 + $0x28] sm:$0xff] %v5836
        %5861 = vst [vmem:[#allocation4 + $0x30] sm:$0xff] %v5837
        %5862 = vst [vmem:[#allocation4 + $0x38] sm:$0xff] %v5838
        %5863 = vst [vmem:[#allocation4 + $0x40] sm:$0xff] %v5839
        %5864 = vst [vmem:[#allocation4 + $0x48] sm:$0xff] %v5840
        %5865 = vst [vmem:[#allocation4 + $0x50] sm:$0xff] %v5841
        %5866 = vst [vmem:[#allocation4 + $0x58] sm:$0xff] %v5842
        %5867 = vst [vmem:[#allocation4 + $0x60] sm:$0xff] %v5843
        %5868 = vst [vmem:[#allocation4 + $0x68] sm:$0xff] %v5844
        %5869 = vst [vmem:[#allocation4 + $0x70] sm:$0xff] %v5845
        %5870 = vst [vmem:[#allocation4 + $0x78] sm:$0xff] %v5846
        %5871 = vst [vmem:[#allocation4 + $0x80] sm:$0xff] %v5847
        %5872 = vst [vmem:[#allocation4 + $0x88] sm:$0xff] %v5848
        %5873 = vst [vmem:[#allocation4 + $0x90] sm:$0xff] %v5849
        %5874 = vst [vmem:[#allocation4 + $0x98] sm:$0xff] %v5850
        %5875 = vst [vmem:[#allocation4 + $0xa0] sm:$0xff] %v5851
        %5876 = vst [vmem:[#allocation4 + $0xa8] sm:$0xff] %v5852
        %5877 = vst [vmem:[#allocation4 + $0xb0] sm:$0xff] %v5853
        %5878 = vst [vmem:[#allocation4 + $0xb8] sm:$0xff] %v5854
        %v5879 = vld [vmem:[%s423 + $0x18] sm:$0xff]
        %v5880 = vld [vmem:[%s423 + $0x20] sm:$0xff]
        %v5881 = vld [vmem:[%s423 + $0x28] sm:$0xff]
        %v5882 = vld [vmem:[%s423 + $0x30] sm:$0xff]
        %v5883 = vld [vmem:[%s423 + $0x38] sm:$0xff]
        %v5884 = vld [vmem:[%s423 + $0x40] sm:$0xff]
        %v5885 = vld [vmem:[%s423 + $0x48] sm:$0xff]
        %v5886 = vld [vmem:[%s423 + $0x50] sm:$0xff]
        %v5887 = vld [vmem:[%s423 + $0x58] sm:$0xff]
        %v5888 = vld [vmem:[%s423 + $0x60] sm:$0xff]
        %v5889 = vld [vmem:[%s423 + $0x68] sm:$0xff]
        %v5890 = vld [vmem:[%s423 + $0x70] sm:$0xff]
        %v5891 = vunpack.c.l.bf16 %v5879
        %v5892 = vunpack.c.h.bf16 %v5879
        %v5893 = vunpack.c.l.bf16 %v5880
        %v5894 = vunpack.c.h.bf16 %v5880
        %v5895 = vunpack.c.l.bf16 %v5881
        %v5896 = vunpack.c.h.bf16 %v5881
        %v5897 = vunpack.c.l.bf16 %v5882
        %v5898 = vunpack.c.h.bf16 %v5882
        %v5899 = vunpack.c.l.bf16 %v5883
        %v5900 = vunpack.c.h.bf16 %v5883
        %v5901 = vunpack.c.l.bf16 %v5884
        %v5902 = vunpack.c.h.bf16 %v5884
        %v5903 = vunpack.c.l.bf16 %v5885
        %v5904 = vunpack.c.h.bf16 %v5885
        %v5905 = vunpack.c.l.bf16 %v5886
        %v5906 = vunpack.c.h.bf16 %v5886
        %v5907 = vunpack.c.l.bf16 %v5887
        %v5908 = vunpack.c.h.bf16 %v5887
        %v5909 = vunpack.c.l.bf16 %v5888
        %v5910 = vunpack.c.h.bf16 %v5888
        %v5911 = vunpack.c.l.bf16 %v5889
        %v5912 = vunpack.c.h.bf16 %v5889
        %v5913 = vunpack.c.l.bf16 %v5890
        %v5914 = vunpack.c.h.bf16 %v5890
        %v5915 = vrot.slane %v5891, 2
        %v5916 = vrot.slane %v5892, 2
        %v5917 = vrot.slane %v5893, 2
        %v5918 = vrot.slane %v5894, 2
        %v5919 = vrot.slane %v5895, 2
        %v5920 = vrot.slane %v5896, 2
        %v5921 = vrot.slane %v5897, 2
        %v5922 = vrot.slane %v5898, 2
        %v5923 = vrot.slane %v5899, 2
        %v5924 = vrot.slane %v5900, 2
        %v5925 = vrot.slane %v5901, 2
        %v5926 = vrot.slane %v5902, 2
        %v5927 = vrot.slane %v5903, 2
        %v5928 = vrot.slane %v5904, 2
        %v5929 = vrot.slane %v5905, 2
        %v5930 = vrot.slane %v5906, 2
        %v5931 = vrot.slane %v5907, 2
        %v5932 = vrot.slane %v5908, 2
        %v5933 = vrot.slane %v5909, 2
        %v5934 = vrot.slane %v5910, 2
        %v5935 = vrot.slane %v5911, 2
        %v5936 = vrot.slane %v5912, 2
        %v5937 = vrot.slane %v5913, 2
        %v5938 = vrot.slane %v5914, 2
        %v5939 = vsel %vm3102, %v5937, %v5938
        %v5940 = vsel %vm3102, %v5936, %v5937
        %v5941 = vsel %vm3102, %v5934, %v5935
        %v5942 = vsel %vm3102, %v5933, %v5934
        %v5943 = vsel %vm3102, %v5931, %v5932
        %v5944 = vsel %vm3102, %v5930, %v5931
        %v5945 = vsel %vm3102, %v5928, %v5929
        %v5946 = vsel %vm3102, %v5927, %v5928
        %v5947 = vsel %vm3102, %v5925, %v5926
        %v5948 = vsel %vm3102, %v5924, %v5925
        %v5949 = vsel %vm3102, %v5922, %v5923
        %v5950 = vsel %vm3102, %v5921, %v5922
        %v5951 = vsel %vm3102, %v5919, %v5920
        %v5952 = vsel %vm3102, %v5918, %v5919
        %v5953 = vsel %vm3102, %v5916, %v5917
        %v5954 = vsel %vm3102, %v5915, %v5916
        %v5955 = vld [vmem:[#allocation4] sm:$0xff]
        %v5956 = vld [vmem:[#allocation4 + $0x8] sm:$0xff]
        %v5957 = vld [vmem:[#allocation4 + $0x18] sm:$0xff]
        %v5958 = vld [vmem:[#allocation4 + $0x20] sm:$0xff]
        %v5959 = vld [vmem:[#allocation4 + $0x30] sm:$0xff]
        %v5960 = vld [vmem:[#allocation4 + $0x38] sm:$0xff]
        %v5961 = vld [vmem:[#allocation4 + $0x48] sm:$0xff]
        %v5962 = vld [vmem:[#allocation4 + $0x50] sm:$0xff]
        %v5963 = vld [vmem:[#allocation4 + $0x60] sm:$0xff]
        %v5964 = vld [vmem:[#allocation4 + $0x68] sm:$0xff]
        %v5965 = vld [vmem:[#allocation4 + $0x78] sm:$0xff]
        %v5966 = vld [vmem:[#allocation4 + $0x80] sm:$0xff]
        %v5967 = vld [vmem:[#allocation4 + $0x90] sm:$0xff]
        %v5968 = vld [vmem:[#allocation4 + $0x98] sm:$0xff]
        %v5969 = vld [vmem:[#allocation4 + $0xa8] sm:$0xff]
        %v5970 = vld [vmem:[#allocation4 + $0xb0] sm:$0xff]
        %v5971 = vld [vmem:[%s5] sm:$0x1]
        %v5973 = vlaneseq
        %v5974 = vshrl.u32 %v5973, 7
        %v5975 = vsub.s32 0, %v5974
        %v5976 = vrot.slane %v5971, %v5975
        %v5978 = vmul.f32 %v5955, %v5976
        %v5979 = vmul.f32 %v5956, %v5976
        %v5980 = vmul.f32 %v5957, %v5976
        %v5981 = vmul.f32 %v5958, %v5976
        %v5982 = vmul.f32 %v5959, %v5976
        %v5983 = vmul.f32 %v5960, %v5976
        %v5984 = vmul.f32 %v5961, %v5976
        %v5985 = vmul.f32 %v5962, %v5976
        %v5986 = vmul.f32 %v5963, %v5976
        %v5987 = vmul.f32 %v5964, %v5976
        %v5988 = vmul.f32 %v5965, %v5976
        %v5989 = vmul.f32 %v5966, %v5976
        %v5990 = vmul.f32 %v5967, %v5976
        %v5991 = vmul.f32 %v5968, %v5976
        %v5992 = vmul.f32 %v5969, %v5976
        %v5993 = vmul.f32 %v5970, %v5976
        %v5994 = vld [vmem:[%s6] sm:$0x1]
        %v5996 = vlaneseq
        %v5997 = vshrl.u32 %v5996, 7
        %v5998 = vsub.s32 0, %v5997
        %v5999 = vrot.slane %v5994, %v5998
        %v6001 = vadd.f32 %v5978, %v5999
        %v6002 = vadd.f32 %v5979, %v5999
        %v6003 = vadd.f32 %v5980, %v5999
        %v6004 = vadd.f32 %v5981, %v5999
        %v6005 = vadd.f32 %v5982, %v5999
        %v6006 = vadd.f32 %v5983, %v5999
        %v6007 = vadd.f32 %v5984, %v5999
        %v6008 = vadd.f32 %v5985, %v5999
        %v6009 = vadd.f32 %v5986, %v5999
        %v6010 = vadd.f32 %v5987, %v5999
        %v6011 = vadd.f32 %v5988, %v5999
        %v6012 = vadd.f32 %v5989, %v5999
        %v6013 = vadd.f32 %v5990, %v5999
        %v6014 = vadd.f32 %v5991, %v5999
        %v6015 = vadd.f32 %v5992, %v5999
        %v6016 = vadd.f32 %v5993, %v5999
        %v6017 = vadd.f32 %v6001, %v5954
        %v6018 = vadd.f32 %v6002, %v5953
        %v6019 = vadd.f32 %v6003, %v5952
        %v6020 = vadd.f32 %v6004, %v5951
        %v6021 = vadd.f32 %v6005, %v5950
        %v6022 = vadd.f32 %v6006, %v5949
        %v6023 = vadd.f32 %v6007, %v5948
        %v6024 = vadd.f32 %v6008, %v5947
        %v6025 = vadd.f32 %v6009, %v5946
        %v6026 = vadd.f32 %v6010, %v5945
        %v6027 = vadd.f32 %v6011, %v5944
        %v6028 = vadd.f32 %v6012, %v5943
        %v6029 = vadd.f32 %v6013, %v5942
        %v6030 = vadd.f32 %v6014, %v5941
        %v6031 = vadd.f32 %v6015, %v5940
        %v6032 = vadd.f32 %v6016, %v5939
        %v6033 = vmax.f32 %v6017, 0.0
        %v6034 = vmax.f32 %v6018, 0.0
        %v6035 = vmax.f32 %v6019, 0.0
        %v6036 = vmax.f32 %v6020, 0.0
        %v6037 = vmax.f32 %v6021, 0.0
        %v6038 = vmax.f32 %v6022, 0.0
        %v6039 = vmax.f32 %v6023, 0.0
        %v6040 = vmax.f32 %v6024, 0.0
        %v6041 = vmax.f32 %v6025, 0.0
        %v6042 = vmax.f32 %v6026, 0.0
        %v6043 = vmax.f32 %v6027, 0.0
        %v6044 = vmax.f32 %v6028, 0.0
        %v6045 = vmax.f32 %v6029, 0.0
        %v6046 = vmax.f32 %v6030, 0.0
        %v6047 = vmax.f32 %v6031, 0.0
        %v6048 = vmax.f32 %v6032, 0.0
        %6049 = vst [vmem:[%s316] sm:$0xff] %v6033
        %6050 = vst [vmem:[%s316 + $0x8] sm:$0xff] %v6034
        %6051 = vst [vmem:[%s316 + $0x10] sm:$0xff] %v6035
        %6052 = vst [vmem:[%s316 + $0x18] sm:$0xff] %v6036
        %6053 = vst [vmem:[%s316 + $0x20] sm:$0xff] %v6037
        %6054 = vst [vmem:[%s316 + $0x28] sm:$0xff] %v6038
        %6055 = vst [vmem:[%s316 + $0x30] sm:$0xff] %v6039
        %6056 = vst [vmem:[%s316 + $0x38] sm:$0xff] %v6040
        %6057 = vst [vmem:[%s316 + $0x40] sm:$0xff] %v6041
        %6058 = vst [vmem:[%s316 + $0x48] sm:$0xff] %v6042
        %6059 = vst [vmem:[%s316 + $0x50] sm:$0xff] %v6043
        %6060 = vst [vmem:[%s316 + $0x58] sm:$0xff] %v6044
        %6061 = vst [vmem:[%s316 + $0x60] sm:$0xff] %v6045
        %6062 = vst [vmem:[%s316 + $0x68] sm:$0xff] %v6046
        %6063 = vst [vmem:[%s316 + $0x70] sm:$0xff] %v6047
        %6064 = vst [vmem:[%s316 + $0x78] sm:$0xff] %v6048
        %s6065 = sand.u32 %s198, 1
        %s6066 = scalar_lea.sflag [#allocation9], %s6065
        %s6067 = sand.u32 %s198, 1
        %s6068 = smul.addr %s6067, 128
        %s6069 = scalar_lea.vmem [#allocation12], %s6068
        // Predicated region
        $region133: #{tpu_custom_call.1} parent=47 // pred_check
          %p6070 = pneg %p208
        $region134: #{tpu_custom_call.1} parent=47 // pred_check_branch
          %6072 = sbr.rel (%p6070) target = $region136
        $region135: #{tpu_custom_call.1} parent=47 // pred_region
          %s6073 = smul.u32 8, %s29
          %s6075 = ssub.s32 2048, 2048
          %6076 = vsyncadd %s6066, %s6075
          %s6077 = smul.addr %s6073, 2
          %s6078 = smul.addr %s28, 32
          %s6079 = sadd.s32 %s6077, %s6078
          %s6080 = smul.addr %s6079, 128
          %s6081 = scalar_lea.hbm %s8, %s6080
          %s6082 = sshll.u32 %s6069, 4
          %s6083 = int_to_ptr.vmem [resolvable:$true] %s6082
          %6088 = dma.vmem_to_hbm [thread:$0]  %s6083, 2048, %s6081, %s6066, 128, 128, 8
        $region136: #{tpu_custom_call.1} parent=47 // pred_fallthru
          _
      $region48: #{tpu_custom_call.1} parent=5 // pred_fallthru
        _
      %p6089 = scmp.le.s32.totalorder 2, %s19
      // Predicated region
      $region137: #{tpu_custom_call.1} parent=5 // pred_check
        %p6090 = pneg %p6089
      $region138: #{tpu_custom_call.1} parent=5 // pred_check_branch
        %6092 = sbr.rel (%p6090) target = $region140
      $region139: #{tpu_custom_call.1} parent=5 // pred_region
        %s6093 = ssub.s32 %s19, 2
        // Predicated region
        $region141: #{tpu_custom_call.1} parent=139 // pred_check
          %p6094 = pneg %p214
        $region142: #{tpu_custom_call.1} parent=139 // pred_check_branch
          %6096 = sbr.rel (%p6094) target = $region144
        $region143: #{tpu_custom_call.1} parent=139 // pred_region
          %s6097 = sand.u32 %s199, 1
          %s6098 = scalar_lea.sflag [#allocation9], %s6097
          %s6099 = sand.u32 %s199, 1
          %s6100 = smul.addr %s6099, 128
          %s6101 = scalar_lea.vmem [#allocation12], %s6100
          %6102 = dma.done %s6098, 2048
        $region144: #{tpu_custom_call.1} parent=139 // pred_fallthru
          _
      $region140: #{tpu_custom_call.1} parent=5 // pred_fallthru
        _
    $region6: #{tpu_custom_call.1} parent=1 // loop_footer
      %s23 = sadd.s32 1, %s19
    $region7: #{tpu_custom_call.1} parent=1 // loop_footer_branch
      %18 = sbr.rel target = $region3
    $region8: #{tpu_custom_call.1} parent=1 // loop_exit
      _
    %6103 = vsyncpa [#allocation8], 1
    %s6104 = scalar_lea.sflag [#allocation8], 1
    %6105 = vsyncpa %s6104, 1
    %6106 = vsyncpa [#allocation11], 1
    %6107 = vsyncpa [#allocation9], 1
    %s6108 = scalar_lea.sflag [#allocation9], 1
    %6109 = vsyncpa %s6108, 1
  %6110 = vsyncmov [#allocation6]
  %s6111 = vpop.sfrf %6110
  %p6112 = scmp.eq.s32.totalorder %s6111, 0
  %p6113 = pneg %p6112
  %6115 = shalt.err (%p6113)
  %s6116 = scalar_lea.sflag [#allocation6], 1
  %6117 = vsyncmov %s6116
  %s6118 = vpop.sfrf %6117
  %p6119 = scmp.eq.s32.totalorder %s6118, 0
  %p6120 = pneg %p6119
  %6122 = shalt.err (%p6120)

</llo_original>
